<compile_context>
chip_gen: v6e
topology: v6e:2x2x1
jax: 0.10.0
libtpu: 0.0.40
codegen_flags: <defaults>
</compile_context>

<pallas_src>
import functools

import jax
import jax.numpy as jnp
from jax import lax
from jax.experimental import pallas as pl
from jax.experimental.pallas import tpu as pltpu

_PAD = 128  # every layer's channel dims are padded to one 128x128 MXU tile


# ----------------------------------------------------------------------------
# Fused Pallas kernel: MLP stack + soft-SLIC.  One grid step = `bb` batch
# elements folded into the lane axis.
# ----------------------------------------------------------------------------
def _fused_kernel(x_ref, w_ref, b_ref, q_ref, c_ref, mfa_ref, *,
                  bb, channel, feature_dim, nspix, n_iter, n_layers, n_mfa):
    N = x_ref.shape[-1]
    C = channel
    F = feature_dim
    BN = bb * N

    # ---- fold batch into lanes: (C, bb*N); every dot below feeds bb*N columns ----
    xcat = jnp.concatenate([x_ref[i] for i in range(bb)], axis=1)        # (C, BN) f32

    # ---- layer 0 on the VPU: Cin=C is tiny -> C broadcast-FMAs, no MXU pass ----
    w0 = w_ref[0]                                                        # (128, 128) bf16
    b0 = b_ref[0]                                                        # (128, 1)  f32
    acc = jnp.zeros((_PAD, BN), jnp.float32)
    for c in range(C):
        acc = acc + w0[:, c:c + 1].astype(jnp.float32) * xcat[c:c + 1, :]
    h = jnp.maximum(acc + b0, 0.0)                                       # (128, BN) f32
    mfa_val = h if n_mfa == 1 else None

    # ---- remaining layers on the MXU: padded bf16 weights, f32 accumulation.
    # Padded weight rows/cols and biases are zero, so padded channels stay zero.
    for li in range(1, n_layers):
        w = w_ref[li]                                                    # (128, 128) bf16
        b = b_ref[li]                                                    # (128, 1)  f32
        y = jnp.dot(w, h.astype(jnp.bfloat16),
                    preferred_element_type=jnp.float32) + b
        if li < n_layers - 1:                                            # last ptnet layer is linear
            y = jnp.maximum(y, 0.0)
        h = y
        if li == n_mfa - 1:                                              # mfa features (first F rows valid)
            mfa_val = h

    # ---- store mfa lane-dense, (F, N) per batch element ----
    for j in range(bb):
        mfa_ref[j] = mfa_val[:F, j * N:(j + 1) * N].astype(mfa_ref.dtype)

    # ---- soft-SLIC per batch element, (S, N) layout keeps all 128 lanes live ----
    for j in range(bb):
        f_pn = h[:F, j * N:(j + 1) * N]                                  # (F, N) f32 "net" feats
        f_bf = f_pn.astype(jnp.bfloat16)                                 # MXU operand
        c_sf = jnp.transpose(f_pn[:, :nspix])                            # (S, F) init = first nspix pts

        def affinity(c):
            # softmax_S(-||c - f||^2); the ||f||^2 term is constant per column
            # and cancels in the softmax.  Centers pre-scaled by 2 once.
            csq = jnp.sum(c * c, axis=1, keepdims=True)                  # (S, 1) f32
            c2 = (c + c).astype(jnp.bfloat16)                            # 2*c, bf16 MXU operand
            logits = lax.dot_general(
                c2, f_bf, (((1,), (0,)), ((), ())),
                preferred_element_type=jnp.float32) - csq                # (S, N) f32
            m = jnp.max(logits, axis=0, keepdims=True)                   # (1, N)
            e = jnp.exp(logits - m)                                      # (S, N)
            s = jnp.sum(e, axis=0, keepdims=True)                        # (1, N)
            return e * pl.reciprocal(s + 1e-16, approx=True)             # (S, N)

        # n_iter is static -> full unroll so EUP / XLU / MXU work interleaves.
        for _ in range(n_iter):
            q_sn = affinity(c_sf)                                        # (S, N)
            num = lax.dot_general(
                q_sn.astype(jnp.bfloat16), f_bf, (((1,), (1,)), ((), ())),
                preferred_element_type=jnp.float32)                      # (S, F)
            den = jnp.sum(q_sn, axis=1, keepdims=True)                   # (S, 1)
            c_sf = num / (den + 1e-8)                                    # exact divide (only S values)

        q_fin = affinity(c_sf)                                           # (S, N)
        q_ref[j] = q_fin.astype(q_ref.dtype)                             # lane-dense
        c_ref[j] = jnp.transpose(c_sf).astype(c_ref.dtype)               # (F, S)


# ----------------------------------------------------------------------------
# Wrapper: packs parameters into 2 padded buffers and launches the fused call.
# ----------------------------------------------------------------------------
def fused_forward(x_bcn, params, *, nspix, n_iter, batch_block=None):
    """x_bcn: (B, C, N) f32 (PyTorch Conv1d convention).

    Returns ((Q, centers), mfa):
      Q:       (B, nspix, N)  soft superpixel assignment (softmax over nspix)
      centers: (B, F, nspix)  final superpixel feature centers
      mfa:     (B, F, N)      multi-scale per-point features
    """
    B, C, N = x_bcn.shape
    layers = params["mfa"] + params["ptnet"]
    n_layers = len(layers)
    n_mfa = len(params["mfa"])
    F = layers[n_mfa - 1][0].shape[0]

    # One grid step on single-TC v5e/v6e (default).  On v7x pass
    # batch_block=B//2 so the "parallel" axis shards across both TensorCores.
    bb = B if batch_block is None else batch_block
    assert B % bb == 0, "batch must be divisible by batch_block"

    # Pack the 8 weight matrices / biases into one padded buffer each
    # (17 tiny refs -> 3 kernel inputs).  Padding is zero -> exact.
    wp = jnp.zeros((n_layers, _PAD, _PAD), jnp.bfloat16)
    bp = jnp.zeros((n_layers, _PAD, 1), jnp.float32)
    for i, (w, b) in enumerate(layers):
        co, ci = w.shape
        wp = wp.at[i, :co, :ci].set(w.astype(jnp.bfloat16))
        bp = bp.at[i, :co, 0].set(b.astype(jnp.float32).reshape(co))

    out_shape = (
        jax.ShapeDtypeStruct((B, nspix, N), jnp.float32),
        jax.ShapeDtypeStruct((B, F, nspix), jnp.float32),
        jax.ShapeDtypeStruct((B, F, N), jnp.float32),
    )
    in_specs = [
        pl.BlockSpec((bb, C, N), lambda i: (i, 0, 0)),
        pl.BlockSpec((n_layers, _PAD, _PAD), lambda i: (0, 0, 0)),
        pl.BlockSpec((n_layers, _PAD, 1), lambda i: (0, 0, 0)),
    ]
    out_specs = (
        pl.BlockSpec((bb, nspix, N), lambda i: (i, 0, 0)),
        pl.BlockSpec((bb, F, nspix), lambda i: (i, 0, 0)),
        pl.BlockSpec((bb, F, N), lambda i: (i, 0, 0)),
    )

    # Advisory cost estimate for the single fused custom call.
    mlp_flops = 2 * B * N * n_layers * _PAD * _PAD
    slic_flops = 2 * B * (n_iter + 1) * (2 * nspix * F * N)
    transcendentals = B * (n_iter + 1) * (nspix * N + N)
    bytes_accessed = (4 * B * C * N + int(wp.size) * 2 + int(bp.size) * 4
                      + 4 * (B * nspix * N + B * F * nspix + B * F * N))
    cost = pl.CostEstimate(flops=int(mlp_flops + slic_flops),
                           transcendentals=int(transcendentals),
                           bytes_accessed=int(bytes_accessed))

    q, c, mfa = pl.pallas_call(
        functools.partial(_fused_kernel, bb=bb, channel=C, feature_dim=F,
                          nspix=nspix, n_iter=n_iter,
                          n_layers=n_layers, n_mfa=n_mfa),
        out_shape=out_shape,
        grid=(B // bb,),
        in_specs=in_specs,
        out_specs=out_specs,
        compiler_params=pltpu.CompilerParams(
            dimension_semantics=("parallel",)),
        cost_estimate=cost,
    )(x_bcn, wp, bp)
    return (q, c), mfa


# ----------------------------------------------------------------------------
# Parameter construction (deterministic, PyTorch-like fan-in scaling).
# Weights/biases are kept f32 here; the wrapper casts weights to bf16 when
# packing (bf16 is an MXU-operand choice only, elementwise math stays f32).
# ----------------------------------------------------------------------------
def make_params(key, channel, feature_dim):
    mfa_dims = [(channel, 32), (32, 128), (128, 64), (64, 64), (64, 64),
                (64, feature_dim)]
    ptnet_dims = [(feature_dim, feature_dim), (feature_dim, feature_dim)]

    def make_layer(k, cin, cout):
        kw, kb = jax.random.split(k)
        scale = 1.0 / jnp.sqrt(jnp.float32(cin))
        w = jax.random.uniform(kw, (cout, cin), jnp.float32, -scale, scale)
        b = jax.random.uniform(kb, (cout,), jnp.float32, -scale, scale)
        return w, b

    keys = jax.random.split(key, len(mfa_dims) + len(ptnet_dims))
    mfa = [make_layer(keys[i], *d) for i, d in enumerate(mfa_dims)]
    ptnet = [make_layer(keys[len(mfa_dims) + i], *d)
             for i, d in enumerate(ptnet_dims)]
    return {"mfa": mfa, "ptnet": ptnet}


if __name__ == "__main__":
    B, CHANNEL, N = 2, 3, 128      # batch, input channels (xyz), points
    FEATURE_DIM = 32
    NSPIX = 16
    N_ITER = 10

    root = jax.random.PRNGKey(0)
    k_x, k_p = jax.random.split(root)
    x = jax.random.normal(k_x, (B, CHANNEL, N), jnp.float32)
    params = make_params(k_p, CHANNEL, FEATURE_DIM)

    fwd = jax.jit(functools.partial(fused_forward, nspix=NSPIX, n_iter=N_ITER))
    (q, centers), mfa = fwd(x, params)
    jax.block_until_ready((q, centers, mfa))

    assert q.shape == (B, NSPIX, N)
    assert centers.shape == (B, FEATURE_DIM, NSPIX)
    assert mfa.shape == (B, FEATURE_DIM, N)
    # soft assignment sums to ~1 over the superpixel axis (approx reciprocal in
    # the softmax normalization -> slightly relaxed tolerance).
    assert jnp.allclose(jnp.sum(q, axis=1), 1.0, atol=2e-3)
    assert bool(jnp.all(jnp.isfinite(q)))
    assert bool(jnp.all(jnp.isfinite(centers)))
    assert bool(jnp.all(jnp.isfinite(mfa)))

    print("KERNEL_OK")
</pallas_src>

<mosaic_0001>
module attributes {stable_mosaic.version = 11 : i64} {
  func.func @_fused_kernel(%arg0: i32, %arg1: memref<2x3x128xf32, #tpu.memory_space<vmem>>, %arg2: memref<8x128x128xbf16, #tpu.memory_space<vmem>>, %arg3: memref<8x128x1xf32, #tpu.memory_space<vmem>>, %arg4: memref<2x16x128xf32, #tpu.memory_space<vmem>>, %arg5: memref<2x32x16xf32, #tpu.memory_space<vmem>>, %arg6: memref<2x32x128xf32, #tpu.memory_space<vmem>>) attributes {dimension_semantics = [#tpu.dimension_semantics<parallel>], iteration_bounds = array<i64: 1>, scalar_prefetch = 0 : i64, scratch_operands = 0 : i64, tpu.core_type = #tpu.core_type<tc>, window_params = [{transform_indices = @transform_0, window_bounds = array<i64: 2, 3, 128>}, {pipeline_mode = #tpu.pipeline_mode<synchronous>, transform_indices = @transform_1, window_bounds = array<i64: 8, 128, 128>}, {pipeline_mode = #tpu.pipeline_mode<synchronous>, transform_indices = @transform_2, window_bounds = array<i64: 8, 128, 1>}, {transform_indices = @transform_3, window_bounds = array<i64: 2, 16, 128>}, {transform_indices = @transform_4, window_bounds = array<i64: 2, 32, 16>}, {transform_indices = @transform_5, window_bounds = array<i64: 2, 32, 128>}]} {
    %c0 = arith.constant 0 : index
    %c0_0 = arith.constant 0 : index
    %c0_1 = arith.constant 0 : index
    %0 = vector.load %arg1[%c0, %c0_0, %c0_1] : memref<2x3x128xf32, #tpu.memory_space<vmem>>, vector<1x3x128xf32>
    %1 = vector.shape_cast %0 : vector<1x3x128xf32> to vector<3x128xf32>
    %c1 = arith.constant 1 : index
    %c0_2 = arith.constant 0 : index
    %c0_3 = arith.constant 0 : index
    %2 = vector.load %arg1[%c1, %c0_2, %c0_3] : memref<2x3x128xf32, #tpu.memory_space<vmem>>, vector<1x3x128xf32>
    %3 = vector.shape_cast %2 : vector<1x3x128xf32> to vector<3x128xf32>
    %4 = tpu.concatenate %1, %3 in 1 : vector<3x128xf32>, vector<3x128xf32> -> vector<3x256xf32>
    %c0_4 = arith.constant 0 : index
    %c0_5 = arith.constant 0 : index
    %c0_6 = arith.constant 0 : index
    %5 = vector.load %arg2[%c0_4, %c0_5, %c0_6] : memref<8x128x128xbf16, #tpu.memory_space<vmem>>, vector<1x128x128xbf16>
    %6 = vector.shape_cast %5 : vector<1x128x128xbf16> to vector<128x128xbf16>
    %c0_7 = arith.constant 0 : index
    %c0_8 = arith.constant 0 : index
    %c0_9 = arith.constant 0 : index
    %7 = vector.load %arg3[%c0_7, %c0_8, %c0_9] : memref<8x128x1xf32, #tpu.memory_space<vmem>>, vector<1x128x1xf32>
    %8 = vector.shape_cast %7 : vector<1x128x1xf32> to vector<128x1xf32>
    %cst = arith.constant 0.000000e+00 : f32
    %9 = vector.broadcast %cst : f32 to vector<128x256xf32>
    %10 = vector.extract_strided_slice %6 {offsets = [0, 0], sizes = [128, 1], strides = [1, 1]} : vector<128x128xbf16> to vector<128x1xbf16>
    %11 = arith.extf %10 : vector<128x1xbf16> to vector<128x1xf32>
    %12 = vector.extract_strided_slice %4 {offsets = [0, 0], sizes = [1, 256], strides = [1, 1]} : vector<3x256xf32> to vector<1x256xf32>
    %13 = vector.broadcast %11 : vector<128x1xf32> to vector<128x256xf32>
    %14 = vector.broadcast %12 : vector<1x256xf32> to vector<128x256xf32>
    %15 = arith.mulf %13, %14 : vector<128x256xf32>
    %16 = arith.addf %9, %15 : vector<128x256xf32>
    %17 = vector.extract_strided_slice %6 {offsets = [0, 1], sizes = [128, 1], strides = [1, 1]} : vector<128x128xbf16> to vector<128x1xbf16>
    %18 = arith.extf %17 : vector<128x1xbf16> to vector<128x1xf32>
    %19 = vector.extract_strided_slice %4 {offsets = [1, 0], sizes = [1, 256], strides = [1, 1]} : vector<3x256xf32> to vector<1x256xf32>
    %20 = vector.broadcast %18 : vector<128x1xf32> to vector<128x256xf32>
    %21 = vector.broadcast %19 : vector<1x256xf32> to vector<128x256xf32>
    %22 = arith.mulf %20, %21 : vector<128x256xf32>
    %23 = arith.addf %16, %22 : vector<128x256xf32>
    %24 = vector.extract_strided_slice %6 {offsets = [0, 2], sizes = [128, 1], strides = [1, 1]} : vector<128x128xbf16> to vector<128x1xbf16>
    %25 = arith.extf %24 : vector<128x1xbf16> to vector<128x1xf32>
    %26 = vector.extract_strided_slice %4 {offsets = [2, 0], sizes = [1, 256], strides = [1, 1]} : vector<3x256xf32> to vector<1x256xf32>
    %27 = vector.broadcast %25 : vector<128x1xf32> to vector<128x256xf32>
    %28 = vector.broadcast %26 : vector<1x256xf32> to vector<128x256xf32>
    %29 = arith.mulf %27, %28 : vector<128x256xf32>
    %30 = arith.addf %23, %29 : vector<128x256xf32>
    %31 = vector.broadcast %8 : vector<128x1xf32> to vector<128x256xf32>
    %32 = arith.addf %30, %31 : vector<128x256xf32>
    %cst_10 = arith.constant 0.000000e+00 : f32
    %33 = vector.broadcast %cst_10 : f32 to vector<128x256xf32>
    %34 = arith.maximumf %32, %33 : vector<128x256xf32>
    %c1_11 = arith.constant 1 : index
    %c0_12 = arith.constant 0 : index
    %c0_13 = arith.constant 0 : index
    %35 = vector.load %arg2[%c1_11, %c0_12, %c0_13] : memref<8x128x128xbf16, #tpu.memory_space<vmem>>, vector<1x128x128xbf16>
    %36 = vector.shape_cast %35 : vector<1x128x128xbf16> to vector<128x128xbf16>
    %c1_14 = arith.constant 1 : index
    %c0_15 = arith.constant 0 : index
    %c0_16 = arith.constant 0 : index
    %37 = vector.load %arg3[%c1_14, %c0_15, %c0_16] : memref<8x128x1xf32, #tpu.memory_space<vmem>>, vector<1x128x1xf32>
    %38 = vector.shape_cast %37 : vector<1x128x1xf32> to vector<128x1xf32>
    %39 = arith.truncf %34 : vector<128x256xf32> to vector<128x256xbf16>
    %cst_17 = arith.constant dense<0.000000e+00> : vector<128x256xf32>
    %40 = tpu.matmul %36, %39, %cst_17 {dimension_numbers = #tpu.dot_dimension_numbers<[1], [0], [0], [1], [0, 0, 1, 1], [], []>} : vector<128x128xbf16>, vector<128x256xbf16>, vector<128x256xf32> -> vector<128x256xf32>
    %41 = vector.broadcast %38 : vector<128x1xf32> to vector<128x256xf32>
    %42 = arith.addf %40, %41 : vector<128x256xf32>
    %cst_18 = arith.constant 0.000000e+00 : f32
    %43 = vector.broadcast %cst_18 : f32 to vector<128x256xf32>
    %44 = arith.maximumf %42, %43 : vector<128x256xf32>
    %c2 = arith.constant 2 : index
    %c0_19 = arith.constant 0 : index
    %c0_20 = arith.constant 0 : index
    %45 = vector.load %arg2[%c2, %c0_19, %c0_20] : memref<8x128x128xbf16, #tpu.memory_space<vmem>>, vector<1x128x128xbf16>
    %46 = vector.shape_cast %45 : vector<1x128x128xbf16> to vector<128x128xbf16>
    %c2_21 = arith.constant 2 : index
    %c0_22 = arith.constant 0 : index
    %c0_23 = arith.constant 0 : index
    %47 = vector.load %arg3[%c2_21, %c0_22, %c0_23] : memref<8x128x1xf32, #tpu.memory_space<vmem>>, vector<1x128x1xf32>
    %48 = vector.shape_cast %47 : vector<1x128x1xf32> to vector<128x1xf32>
    %49 = arith.truncf %44 : vector<128x256xf32> to vector<128x256xbf16>
    %cst_24 = arith.constant dense<0.000000e+00> : vector<128x256xf32>
    %50 = tpu.matmul %46, %49, %cst_24 {dimension_numbers = #tpu.dot_dimension_numbers<[1], [0], [0], [1], [0, 0, 1, 1], [], []>} : vector<128x128xbf16>, vector<128x256xbf16>, vector<128x256xf32> -> vector<128x256xf32>
    %51 = vector.broadcast %48 : vector<128x1xf32> to vector<128x256xf32>
    %52 = arith.addf %50, %51 : vector<128x256xf32>
    %cst_25 = arith.constant 0.000000e+00 : f32
    %53 = vector.broadcast %cst_25 : f32 to vector<128x256xf32>
    %54 = arith.maximumf %52, %53 : vector<128x256xf32>
    %c3 = arith.constant 3 : index
    %c0_26 = arith.constant 0 : index
    %c0_27 = arith.constant 0 : index
    %55 = vector.load %arg2[%c3, %c0_26, %c0_27] : memref<8x128x128xbf16, #tpu.memory_space<vmem>>, vector<1x128x128xbf16>
    %56 = vector.shape_cast %55 : vector<1x128x128xbf16> to vector<128x128xbf16>
    %c3_28 = arith.constant 3 : index
    %c0_29 = arith.constant 0 : index
    %c0_30 = arith.constant 0 : index
    %57 = vector.load %arg3[%c3_28, %c0_29, %c0_30] : memref<8x128x1xf32, #tpu.memory_space<vmem>>, vector<1x128x1xf32>
    %58 = vector.shape_cast %57 : vector<1x128x1xf32> to vector<128x1xf32>
    %59 = arith.truncf %54 : vector<128x256xf32> to vector<128x256xbf16>
    %cst_31 = arith.constant dense<0.000000e+00> : vector<128x256xf32>
    %60 = tpu.matmul %56, %59, %cst_31 {dimension_numbers = #tpu.dot_dimension_numbers<[1], [0], [0], [1], [0, 0, 1, 1], [], []>} : vector<128x128xbf16>, vector<128x256xbf16>, vector<128x256xf32> -> vector<128x256xf32>
    %61 = vector.broadcast %58 : vector<128x1xf32> to vector<128x256xf32>
    %62 = arith.addf %60, %61 : vector<128x256xf32>
    %cst_32 = arith.constant 0.000000e+00 : f32
    %63 = vector.broadcast %cst_32 : f32 to vector<128x256xf32>
    %64 = arith.maximumf %62, %63 : vector<128x256xf32>
    %c4 = arith.constant 4 : index
    %c0_33 = arith.constant 0 : index
    %c0_34 = arith.constant 0 : index
    %65 = vector.load %arg2[%c4, %c0_33, %c0_34] : memref<8x128x128xbf16, #tpu.memory_space<vmem>>, vector<1x128x128xbf16>
    %66 = vector.shape_cast %65 : vector<1x128x128xbf16> to vector<128x128xbf16>
    %c4_35 = arith.constant 4 : index
    %c0_36 = arith.constant 0 : index
    %c0_37 = arith.constant 0 : index
    %67 = vector.load %arg3[%c4_35, %c0_36, %c0_37] : memref<8x128x1xf32, #tpu.memory_space<vmem>>, vector<1x128x1xf32>
    %68 = vector.shape_cast %67 : vector<1x128x1xf32> to vector<128x1xf32>
    %69 = arith.truncf %64 : vector<128x256xf32> to vector<128x256xbf16>
    %cst_38 = arith.constant dense<0.000000e+00> : vector<128x256xf32>
    %70 = tpu.matmul %66, %69, %cst_38 {dimension_numbers = #tpu.dot_dimension_numbers<[1], [0], [0], [1], [0, 0, 1, 1], [], []>} : vector<128x128xbf16>, vector<128x256xbf16>, vector<128x256xf32> -> vector<128x256xf32>
    %71 = vector.broadcast %68 : vector<128x1xf32> to vector<128x256xf32>
    %72 = arith.addf %70, %71 : vector<128x256xf32>
    %cst_39 = arith.constant 0.000000e+00 : f32
    %73 = vector.broadcast %cst_39 : f32 to vector<128x256xf32>
    %74 = arith.maximumf %72, %73 : vector<128x256xf32>
    %c5 = arith.constant 5 : index
    %c0_40 = arith.constant 0 : index
    %c0_41 = arith.constant 0 : index
    %75 = vector.load %arg2[%c5, %c0_40, %c0_41] : memref<8x128x128xbf16, #tpu.memory_space<vmem>>, vector<1x128x128xbf16>
    %76 = vector.shape_cast %75 : vector<1x128x128xbf16> to vector<128x128xbf16>
    %c5_42 = arith.constant 5 : index
    %c0_43 = arith.constant 0 : index
    %c0_44 = arith.constant 0 : index
    %77 = vector.load %arg3[%c5_42, %c0_43, %c0_44] : memref<8x128x1xf32, #tpu.memory_space<vmem>>, vector<1x128x1xf32>
    %78 = vector.shape_cast %77 : vector<1x128x1xf32> to vector<128x1xf32>
    %79 = arith.truncf %74 : vector<128x256xf32> to vector<128x256xbf16>
    %cst_45 = arith.constant dense<0.000000e+00> : vector<128x256xf32>
    %80 = tpu.matmul %76, %79, %cst_45 {dimension_numbers = #tpu.dot_dimension_numbers<[1], [0], [0], [1], [0, 0, 1, 1], [], []>} : vector<128x128xbf16>, vector<128x256xbf16>, vector<128x256xf32> -> vector<128x256xf32>
    %81 = vector.broadcast %78 : vector<128x1xf32> to vector<128x256xf32>
    %82 = arith.addf %80, %81 : vector<128x256xf32>
    %cst_46 = arith.constant 0.000000e+00 : f32
    %83 = vector.broadcast %cst_46 : f32 to vector<128x256xf32>
    %84 = arith.maximumf %82, %83 : vector<128x256xf32>
    %c6 = arith.constant 6 : index
    %c0_47 = arith.constant 0 : index
    %c0_48 = arith.constant 0 : index
    %85 = vector.load %arg2[%c6, %c0_47, %c0_48] : memref<8x128x128xbf16, #tpu.memory_space<vmem>>, vector<1x128x128xbf16>
    %86 = vector.shape_cast %85 : vector<1x128x128xbf16> to vector<128x128xbf16>
    %c6_49 = arith.constant 6 : index
    %c0_50 = arith.constant 0 : index
    %c0_51 = arith.constant 0 : index
    %87 = vector.load %arg3[%c6_49, %c0_50, %c0_51] : memref<8x128x1xf32, #tpu.memory_space<vmem>>, vector<1x128x1xf32>
    %88 = vector.shape_cast %87 : vector<1x128x1xf32> to vector<128x1xf32>
    %89 = arith.truncf %84 : vector<128x256xf32> to vector<128x256xbf16>
    %cst_52 = arith.constant dense<0.000000e+00> : vector<128x256xf32>
    %90 = tpu.matmul %86, %89, %cst_52 {dimension_numbers = #tpu.dot_dimension_numbers<[1], [0], [0], [1], [0, 0, 1, 1], [], []>} : vector<128x128xbf16>, vector<128x256xbf16>, vector<128x256xf32> -> vector<128x256xf32>
    %91 = vector.broadcast %88 : vector<128x1xf32> to vector<128x256xf32>
    %92 = arith.addf %90, %91 : vector<128x256xf32>
    %cst_53 = arith.constant 0.000000e+00 : f32
    %93 = vector.broadcast %cst_53 : f32 to vector<128x256xf32>
    %94 = arith.maximumf %92, %93 : vector<128x256xf32>
    %c7 = arith.constant 7 : index
    %c0_54 = arith.constant 0 : index
    %c0_55 = arith.constant 0 : index
    %95 = vector.load %arg2[%c7, %c0_54, %c0_55] : memref<8x128x128xbf16, #tpu.memory_space<vmem>>, vector<1x128x128xbf16>
    %96 = vector.shape_cast %95 : vector<1x128x128xbf16> to vector<128x128xbf16>
    %c7_56 = arith.constant 7 : index
    %c0_57 = arith.constant 0 : index
    %c0_58 = arith.constant 0 : index
    %97 = vector.load %arg3[%c7_56, %c0_57, %c0_58] : memref<8x128x1xf32, #tpu.memory_space<vmem>>, vector<1x128x1xf32>
    %98 = vector.shape_cast %97 : vector<1x128x1xf32> to vector<128x1xf32>
    %99 = arith.truncf %94 : vector<128x256xf32> to vector<128x256xbf16>
    %cst_59 = arith.constant dense<0.000000e+00> : vector<128x256xf32>
    %100 = tpu.matmul %96, %99, %cst_59 {dimension_numbers = #tpu.dot_dimension_numbers<[1], [0], [0], [1], [0, 0, 1, 1], [], []>} : vector<128x128xbf16>, vector<128x256xbf16>, vector<128x256xf32> -> vector<128x256xf32>
    %101 = vector.broadcast %98 : vector<128x1xf32> to vector<128x256xf32>
    %102 = arith.addf %100, %101 : vector<128x256xf32>
    %103 = vector.extract_strided_slice %84 {offsets = [0, 0], sizes = [32, 128], strides = [1, 1]} : vector<128x256xf32> to vector<32x128xf32>
    %c0_60 = arith.constant 0 : index
    %c0_61 = arith.constant 0 : index
    %c0_62 = arith.constant 0 : index
    %104 = vector.load %arg6[%c0_60, %c0_61, %c0_62] : memref<2x32x128xf32, #tpu.memory_space<vmem>>, vector<1x32x128xf32>
    %105 = vector.shape_cast %104 : vector<1x32x128xf32> to vector<32x128xf32>
    %106 = vector.shape_cast %103 : vector<32x128xf32> to vector<1x32x128xf32>
    tpu.vector_store %arg6[%c0_60, %c0_61, %c0_62], %106 {strides = array<i32>} : memref<2x32x128xf32, #tpu.memory_space<vmem>>, vector<1x32x128xf32>,
    %107 = vector.extract_strided_slice %84 {offsets = [0, 128], sizes = [32, 128], strides = [1, 1]} : vector<128x256xf32> to vector<32x128xf32>
    %c1_63 = arith.constant 1 : index
    %c0_64 = arith.constant 0 : index
    %c0_65 = arith.constant 0 : index
    %108 = vector.load %arg6[%c1_63, %c0_64, %c0_65] : memref<2x32x128xf32, #tpu.memory_space<vmem>>, vector<1x32x128xf32>
    %109 = vector.shape_cast %108 : vector<1x32x128xf32> to vector<32x128xf32>
    %110 = vector.shape_cast %107 : vector<32x128xf32> to vector<1x32x128xf32>
    tpu.vector_store %arg6[%c1_63, %c0_64, %c0_65], %110 {strides = array<i32>} : memref<2x32x128xf32, #tpu.memory_space<vmem>>, vector<1x32x128xf32>,
    %111 = vector.extract_strided_slice %102 {offsets = [0, 0], sizes = [32, 128], strides = [1, 1]} : vector<128x256xf32> to vector<32x128xf32>
    %112 = arith.truncf %111 : vector<32x128xf32> to vector<32x128xbf16>
    %113 = vector.extract_strided_slice %111 {offsets = [0, 0], sizes = [32, 16], strides = [1, 1]} : vector<32x128xf32> to vector<32x16xf32>
    %114 = tpu.transpose %113, [1, 0] : vector<32x16xf32> -> vector<16x32xf32>
    %115 = arith.mulf %114, %114 : vector<16x32xf32>
    %cst_66 = arith.constant dense<0.000000e+00> : vector<16xf32>
    %116 = vector.multi_reduction <add>, %115, %cst_66 [1] : vector<16x32xf32> to vector<16xf32>
    %117 = vector.shape_cast %116 : vector<16xf32> to vector<16x1xf32>
    %118 = arith.addf %114, %114 : vector<16x32xf32>
    %119 = arith.truncf %118 : vector<16x32xf32> to vector<16x32xbf16>
    %cst_67 = arith.constant dense<0.000000e+00> : vector<16x128xf32>
    %120 = tpu.matmul %119, %112, %cst_67 {dimension_numbers = #tpu.dot_dimension_numbers<[1], [0], [0], [1], [0, 0, 1, 1], [], []>} : vector<16x32xbf16>, vector<32x128xbf16>, vector<16x128xf32> -> vector<16x128xf32>
    %121 = vector.broadcast %117 : vector<16x1xf32> to vector<16x128xf32>
    %122 = arith.subf %120, %121 : vector<16x128xf32>
    %cst_68 = arith.constant dense<0xFF800000> : vector<128xf32>
    %123 = vector.multi_reduction <maximumf>, %122, %cst_68 [0] : vector<16x128xf32> to vector<128xf32>
    %124 = vector.shape_cast %123 : vector<128xf32> to vector<1x128xf32>
    %125 = vector.broadcast %124 : vector<1x128xf32> to vector<16x128xf32>
    %126 = arith.subf %122, %125 : vector<16x128xf32>
    %127 = math.exp %126 : vector<16x128xf32>
    %cst_69 = arith.constant dense<0.000000e+00> : vector<128xf32>
    %128 = vector.multi_reduction <add>, %127, %cst_69 [0] : vector<16x128xf32> to vector<128xf32>
    %129 = vector.shape_cast %128 : vector<128xf32> to vector<1x128xf32>
    %cst_70 = arith.constant 1.000000e-16 : f32
    %130 = vector.broadcast %cst_70 : f32 to vector<1x128xf32>
    %131 = arith.addf %129, %130 : vector<1x128xf32>
    %132 = tpu.reciprocal %131 {approx = true} : vector<1x128xf32> -> vector<1x128xf32>
    %133 = vector.broadcast %132 : vector<1x128xf32> to vector<16x128xf32>
    %134 = arith.mulf %127, %133 : vector<16x128xf32>
    %135 = arith.truncf %134 : vector<16x128xf32> to vector<16x128xbf16>
    %cst_71 = arith.constant dense<0.000000e+00> : vector<16x32xf32>
    %136 = tpu.matmul %135, %112, %cst_71 {dimension_numbers = #tpu.dot_dimension_numbers<[1], [1], [0], [0], [0, 0, 1, 0], [], []>} : vector<16x128xbf16>, vector<32x128xbf16>, vector<16x32xf32> -> vector<16x32xf32>
    %cst_72 = arith.constant dense<0.000000e+00> : vector<16xf32>
    %137 = vector.multi_reduction <add>, %134, %cst_72 [1] : vector<16x128xf32> to vector<16xf32>
    %138 = vector.shape_cast %137 : vector<16xf32> to vector<16x1xf32>
    %cst_73 = arith.constant 9.99999993E-9 : f32
    %139 = vector.broadcast %cst_73 : f32 to vector<16x1xf32>
    %140 = arith.addf %138, %139 : vector<16x1xf32>
    %141 = vector.broadcast %140 : vector<16x1xf32> to vector<16x32xf32>
    %142 = arith.divf %136, %141 : vector<16x32xf32>
    %143 = arith.mulf %142, %142 : vector<16x32xf32>
    %cst_74 = arith.constant dense<0.000000e+00> : vector<16xf32>
    %144 = vector.multi_reduction <add>, %143, %cst_74 [1] : vector<16x32xf32> to vector<16xf32>
    %145 = vector.shape_cast %144 : vector<16xf32> to vector<16x1xf32>
    %146 = arith.addf %142, %142 : vector<16x32xf32>
    %147 = arith.truncf %146 : vector<16x32xf32> to vector<16x32xbf16>
    %cst_75 = arith.constant dense<0.000000e+00> : vector<16x128xf32>
    %148 = tpu.matmul %147, %112, %cst_75 {dimension_numbers = #tpu.dot_dimension_numbers<[1], [0], [0], [1], [0, 0, 1, 1], [], []>} : vector<16x32xbf16>, vector<32x128xbf16>, vector<16x128xf32> -> vector<16x128xf32>
    %149 = vector.broadcast %145 : vector<16x1xf32> to vector<16x128xf32>
    %150 = arith.subf %148, %149 : vector<16x128xf32>
    %cst_76 = arith.constant dense<0xFF800000> : vector<128xf32>
    %151 = vector.multi_reduction <maximumf>, %150, %cst_76 [0] : vector<16x128xf32> to vector<128xf32>
    %152 = vector.shape_cast %151 : vector<128xf32> to vector<1x128xf32>
    %153 = vector.broadcast %152 : vector<1x128xf32> to vector<16x128xf32>
    %154 = arith.subf %150, %153 : vector<16x128xf32>
    %155 = math.exp %154 : vector<16x128xf32>
    %cst_77 = arith.constant dense<0.000000e+00> : vector<128xf32>
    %156 = vector.multi_reduction <add>, %155, %cst_77 [0] : vector<16x128xf32> to vector<128xf32>
    %157 = vector.shape_cast %156 : vector<128xf32> to vector<1x128xf32>
    %cst_78 = arith.constant 1.000000e-16 : f32
    %158 = vector.broadcast %cst_78 : f32 to vector<1x128xf32>
    %159 = arith.addf %157, %158 : vector<1x128xf32>
    %160 = tpu.reciprocal %159 {approx = true} : vector<1x128xf32> -> vector<1x128xf32>
    %161 = vector.broadcast %160 : vector<1x128xf32> to vector<16x128xf32>
    %162 = arith.mulf %155, %161 : vector<16x128xf32>
    %163 = arith.truncf %162 : vector<16x128xf32> to vector<16x128xbf16>
    %cst_79 = arith.constant dense<0.000000e+00> : vector<16x32xf32>
    %164 = tpu.matmul %163, %112, %cst_79 {dimension_numbers = #tpu.dot_dimension_numbers<[1], [1], [0], [0], [0, 0, 1, 0], [], []>} : vector<16x128xbf16>, vector<32x128xbf16>, vector<16x32xf32> -> vector<16x32xf32>
    %cst_80 = arith.constant dense<0.000000e+00> : vector<16xf32>
    %165 = vector.multi_reduction <add>, %162, %cst_80 [1] : vector<16x128xf32> to vector<16xf32>
    %166 = vector.shape_cast %165 : vector<16xf32> to vector<16x1xf32>
    %cst_81 = arith.constant 9.99999993E-9 : f32
    %167 = vector.broadcast %cst_81 : f32 to vector<16x1xf32>
    %168 = arith.addf %166, %167 : vector<16x1xf32>
    %169 = vector.broadcast %168 : vector<16x1xf32> to vector<16x32xf32>
    %170 = arith.divf %164, %169 : vector<16x32xf32>
    %171 = arith.mulf %170, %170 : vector<16x32xf32>
    %cst_82 = arith.constant dense<0.000000e+00> : vector<16xf32>
    %172 = vector.multi_reduction <add>, %171, %cst_82 [1] : vector<16x32xf32> to vector<16xf32>
    %173 = vector.shape_cast %172 : vector<16xf32> to vector<16x1xf32>
    %174 = arith.addf %170, %170 : vector<16x32xf32>
    %175 = arith.truncf %174 : vector<16x32xf32> to vector<16x32xbf16>
    %cst_83 = arith.constant dense<0.000000e+00> : vector<16x128xf32>
    %176 = tpu.matmul %175, %112, %cst_83 {dimension_numbers = #tpu.dot_dimension_numbers<[1], [0], [0], [1], [0, 0, 1, 1], [], []>} : vector<16x32xbf16>, vector<32x128xbf16>, vector<16x128xf32> -> vector<16x128xf32>
    %177 = vector.broadcast %173 : vector<16x1xf32> to vector<16x128xf32>
    %178 = arith.subf %176, %177 : vector<16x128xf32>
    %cst_84 = arith.constant dense<0xFF800000> : vector<128xf32>
    %179 = vector.multi_reduction <maximumf>, %178, %cst_84 [0] : vector<16x128xf32> to vector<128xf32>
    %180 = vector.shape_cast %179 : vector<128xf32> to vector<1x128xf32>
    %181 = vector.broadcast %180 : vector<1x128xf32> to vector<16x128xf32>
    %182 = arith.subf %178, %181 : vector<16x128xf32>
    %183 = math.exp %182 : vector<16x128xf32>
    %cst_85 = arith.constant dense<0.000000e+00> : vector<128xf32>
    %184 = vector.multi_reduction <add>, %183, %cst_85 [0] : vector<16x128xf32> to vector<128xf32>
    %185 = vector.shape_cast %184 : vector<128xf32> to vector<1x128xf32>
    %cst_86 = arith.constant 1.000000e-16 : f32
    %186 = vector.broadcast %cst_86 : f32 to vector<1x128xf32>
    %187 = arith.addf %185, %186 : vector<1x128xf32>
    %188 = tpu.reciprocal %187 {approx = true} : vector<1x128xf32> -> vector<1x128xf32>
    %189 = vector.broadcast %188 : vector<1x128xf32> to vector<16x128xf32>
    %190 = arith.mulf %183, %189 : vector<16x128xf32>
    %191 = arith.truncf %190 : vector<16x128xf32> to vector<16x128xbf16>
    %cst_87 = arith.constant dense<0.000000e+00> : vector<16x32xf32>
    %192 = tpu.matmul %191, %112, %cst_87 {dimension_numbers = #tpu.dot_dimension_numbers<[1], [1], [0], [0], [0, 0, 1, 0], [], []>} : vector<16x128xbf16>, vector<32x128xbf16>, vector<16x32xf32> -> vector<16x32xf32>
    %cst_88 = arith.constant dense<0.000000e+00> : vector<16xf32>
    %193 = vector.multi_reduction <add>, %190, %cst_88 [1] : vector<16x128xf32> to vector<16xf32>
    %194 = vector.shape_cast %193 : vector<16xf32> to vector<16x1xf32>
    %cst_89 = arith.constant 9.99999993E-9 : f32
    %195 = vector.broadcast %cst_89 : f32 to vector<16x1xf32>
    %196 = arith.addf %194, %195 : vector<16x1xf32>
    %197 = vector.broadcast %196 : vector<16x1xf32> to vector<16x32xf32>
    %198 = arith.divf %192, %197 : vector<16x32xf32>
    %199 = arith.mulf %198, %198 : vector<16x32xf32>
    %cst_90 = arith.constant dense<0.000000e+00> : vector<16xf32>
    %200 = vector.multi_reduction <add>, %199, %cst_90 [1] : vector<16x32xf32> to vector<16xf32>
    %201 = vector.shape_cast %200 : vector<16xf32> to vector<16x1xf32>
    %202 = arith.addf %198, %198 : vector<16x32xf32>
    %203 = arith.truncf %202 : vector<16x32xf32> to vector<16x32xbf16>
    %cst_91 = arith.constant dense<0.000000e+00> : vector<16x128xf32>
    %204 = tpu.matmul %203, %112, %cst_91 {dimension_numbers = #tpu.dot_dimension_numbers<[1], [0], [0], [1], [0, 0, 1, 1], [], []>} : vector<16x32xbf16>, vector<32x128xbf16>, vector<16x128xf32> -> vector<16x128xf32>
    %205 = vector.broadcast %201 : vector<16x1xf32> to vector<16x128xf32>
    %206 = arith.subf %204, %205 : vector<16x128xf32>
    %cst_92 = arith.constant dense<0xFF800000> : vector<128xf32>
    %207 = vector.multi_reduction <maximumf>, %206, %cst_92 [0] : vector<16x128xf32> to vector<128xf32>
    %208 = vector.shape_cast %207 : vector<128xf32> to vector<1x128xf32>
    %209 = vector.broadcast %208 : vector<1x128xf32> to vector<16x128xf32>
    %210 = arith.subf %206, %209 : vector<16x128xf32>
    %211 = math.exp %210 : vector<16x128xf32>
    %cst_93 = arith.constant dense<0.000000e+00> : vector<128xf32>
    %212 = vector.multi_reduction <add>, %211, %cst_93 [0] : vector<16x128xf32> to vector<128xf32>
    %213 = vector.shape_cast %212 : vector<128xf32> to vector<1x128xf32>
    %cst_94 = arith.constant 1.000000e-16 : f32
    %214 = vector.broadcast %cst_94 : f32 to vector<1x128xf32>
    %215 = arith.addf %213, %214 : vector<1x128xf32>
    %216 = tpu.reciprocal %215 {approx = true} : vector<1x128xf32> -> vector<1x128xf32>
    %217 = vector.broadcast %216 : vector<1x128xf32> to vector<16x128xf32>
    %218 = arith.mulf %211, %217 : vector<16x128xf32>
    %219 = arith.truncf %218 : vector<16x128xf32> to vector<16x128xbf16>
    %cst_95 = arith.constant dense<0.000000e+00> : vector<16x32xf32>
    %220 = tpu.matmul %219, %112, %cst_95 {dimension_numbers = #tpu.dot_dimension_numbers<[1], [1], [0], [0], [0, 0, 1, 0], [], []>} : vector<16x128xbf16>, vector<32x128xbf16>, vector<16x32xf32> -> vector<16x32xf32>
    %cst_96 = arith.constant dense<0.000000e+00> : vector<16xf32>
    %221 = vector.multi_reduction <add>, %218, %cst_96 [1] : vector<16x128xf32> to vector<16xf32>
    %222 = vector.shape_cast %221 : vector<16xf32> to vector<16x1xf32>
    %cst_97 = arith.constant 9.99999993E-9 : f32
    %223 = vector.broadcast %cst_97 : f32 to vector<16x1xf32>
    %224 = arith.addf %222, %223 : vector<16x1xf32>
    %225 = vector.broadcast %224 : vector<16x1xf32> to vector<16x32xf32>
    %226 = arith.divf %220, %225 : vector<16x32xf32>
    %227 = arith.mulf %226, %226 : vector<16x32xf32>
    %cst_98 = arith.constant dense<0.000000e+00> : vector<16xf32>
    %228 = vector.multi_reduction <add>, %227, %cst_98 [1] : vector<16x32xf32> to vector<16xf32>
    %229 = vector.shape_cast %228 : vector<16xf32> to vector<16x1xf32>
    %230 = arith.addf %226, %226 : vector<16x32xf32>
    %231 = arith.truncf %230 : vector<16x32xf32> to vector<16x32xbf16>
    %cst_99 = arith.constant dense<0.000000e+00> : vector<16x128xf32>
    %232 = tpu.matmul %231, %112, %cst_99 {dimension_numbers = #tpu.dot_dimension_numbers<[1], [0], [0], [1], [0, 0, 1, 1], [], []>} : vector<16x32xbf16>, vector<32x128xbf16>, vector<16x128xf32> -> vector<16x128xf32>
    %233 = vector.broadcast %229 : vector<16x1xf32> to vector<16x128xf32>
    %234 = arith.subf %232, %233 : vector<16x128xf32>
    %cst_100 = arith.constant dense<0xFF800000> : vector<128xf32>
    %235 = vector.multi_reduction <maximumf>, %234, %cst_100 [0] : vector<16x128xf32> to vector<128xf32>
    %236 = vector.shape_cast %235 : vector<128xf32> to vector<1x128xf32>
    %237 = vector.broadcast %236 : vector<1x128xf32> to vector<16x128xf32>
    %238 = arith.subf %234, %237 : vector<16x128xf32>
    %239 = math.exp %238 : vector<16x128xf32>
    %cst_101 = arith.constant dense<0.000000e+00> : vector<128xf32>
    %240 = vector.multi_reduction <add>, %239, %cst_101 [0] : vector<16x128xf32> to vector<128xf32>
    %241 = vector.shape_cast %240 : vector<128xf32> to vector<1x128xf32>
    %cst_102 = arith.constant 1.000000e-16 : f32
    %242 = vector.broadcast %cst_102 : f32 to vector<1x128xf32>
    %243 = arith.addf %241, %242 : vector<1x128xf32>
    %244 = tpu.reciprocal %243 {approx = true} : vector<1x128xf32> -> vector<1x128xf32>
    %245 = vector.broadcast %244 : vector<1x128xf32> to vector<16x128xf32>
    %246 = arith.mulf %239, %245 : vector<16x128xf32>
    %247 = arith.truncf %246 : vector<16x128xf32> to vector<16x128xbf16>
    %cst_103 = arith.constant dense<0.000000e+00> : vector<16x32xf32>
    %248 = tpu.matmul %247, %112, %cst_103 {dimension_numbers = #tpu.dot_dimension_numbers<[1], [1], [0], [0], [0, 0, 1, 0], [], []>} : vector<16x128xbf16>, vector<32x128xbf16>, vector<16x32xf32> -> vector<16x32xf32>
    %cst_104 = arith.constant dense<0.000000e+00> : vector<16xf32>
    %249 = vector.multi_reduction <add>, %246, %cst_104 [1] : vector<16x128xf32> to vector<16xf32>
    %250 = vector.shape_cast %249 : vector<16xf32> to vector<16x1xf32>
    %cst_105 = arith.constant 9.99999993E-9 : f32
    %251 = vector.broadcast %cst_105 : f32 to vector<16x1xf32>
    %252 = arith.addf %250, %251 : vector<16x1xf32>
    %253 = vector.broadcast %252 : vector<16x1xf32> to vector<16x32xf32>
    %254 = arith.divf %248, %253 : vector<16x32xf32>
    %255 = arith.mulf %254, %254 : vector<16x32xf32>
    %cst_106 = arith.constant dense<0.000000e+00> : vector<16xf32>
    %256 = vector.multi_reduction <add>, %255, %cst_106 [1] : vector<16x32xf32> to vector<16xf32>
    %257 = vector.shape_cast %256 : vector<16xf32> to vector<16x1xf32>
    %258 = arith.addf %254, %254 : vector<16x32xf32>
    %259 = arith.truncf %258 : vector<16x32xf32> to vector<16x32xbf16>
    %cst_107 = arith.constant dense<0.000000e+00> : vector<16x128xf32>
    %260 = tpu.matmul %259, %112, %cst_107 {dimension_numbers = #tpu.dot_dimension_numbers<[1], [0], [0], [1], [0, 0, 1, 1], [], []>} : vector<16x32xbf16>, vector<32x128xbf16>, vector<16x128xf32> -> vector<16x128xf32>
    %261 = vector.broadcast %257 : vector<16x1xf32> to vector<16x128xf32>
    %262 = arith.subf %260, %261 : vector<16x128xf32>
    %cst_108 = arith.constant dense<0xFF800000> : vector<128xf32>
    %263 = vector.multi_reduction <maximumf>, %262, %cst_108 [0] : vector<16x128xf32> to vector<128xf32>
    %264 = vector.shape_cast %263 : vector<128xf32> to vector<1x128xf32>
    %265 = vector.broadcast %264 : vector<1x128xf32> to vector<16x128xf32>
    %266 = arith.subf %262, %265 : vector<16x128xf32>
    %267 = math.exp %266 : vector<16x128xf32>
    %cst_109 = arith.constant dense<0.000000e+00> : vector<128xf32>
    %268 = vector.multi_reduction <add>, %267, %cst_109 [0] : vector<16x128xf32> to vector<128xf32>
    %269 = vector.shape_cast %268 : vector<128xf32> to vector<1x128xf32>
    %cst_110 = arith.constant 1.000000e-16 : f32
    %270 = vector.broadcast %cst_110 : f32 to vector<1x128xf32>
    %271 = arith.addf %269, %270 : vector<1x128xf32>
    %272 = tpu.reciprocal %271 {approx = true} : vector<1x128xf32> -> vector<1x128xf32>
    %273 = vector.broadcast %272 : vector<1x128xf32> to vector<16x128xf32>
    %274 = arith.mulf %267, %273 : vector<16x128xf32>
    %275 = arith.truncf %274 : vector<16x128xf32> to vector<16x128xbf16>
    %cst_111 = arith.constant dense<0.000000e+00> : vector<16x32xf32>
    %276 = tpu.matmul %275, %112, %cst_111 {dimension_numbers = #tpu.dot_dimension_numbers<[1], [1], [0], [0], [0, 0, 1, 0], [], []>} : vector<16x128xbf16>, vector<32x128xbf16>, vector<16x32xf32> -> vector<16x32xf32>
    %cst_112 = arith.constant dense<0.000000e+00> : vector<16xf32>
    %277 = vector.multi_reduction <add>, %274, %cst_112 [1] : vector<16x128xf32> to vector<16xf32>
    %278 = vector.shape_cast %277 : vector<16xf32> to vector<16x1xf32>
    %cst_113 = arith.constant 9.99999993E-9 : f32
    %279 = vector.broadcast %cst_113 : f32 to vector<16x1xf32>
    %280 = arith.addf %278, %279 : vector<16x1xf32>
    %281 = vector.broadcast %280 : vector<16x1xf32> to vector<16x32xf32>
    %282 = arith.divf %276, %281 : vector<16x32xf32>
    %283 = arith.mulf %282, %282 : vector<16x32xf32>
    %cst_114 = arith.constant dense<0.000000e+00> : vector<16xf32>
    %284 = vector.multi_reduction <add>, %283, %cst_114 [1] : vector<16x32xf32> to vector<16xf32>
    %285 = vector.shape_cast %284 : vector<16xf32> to vector<16x1xf32>
    %286 = arith.addf %282, %282 : vector<16x32xf32>
    %287 = arith.truncf %286 : vector<16x32xf32> to vector<16x32xbf16>
    %cst_115 = arith.constant dense<0.000000e+00> : vector<16x128xf32>
    %288 = tpu.matmul %287, %112, %cst_115 {dimension_numbers = #tpu.dot_dimension_numbers<[1], [0], [0], [1], [0, 0, 1, 1], [], []>} : vector<16x32xbf16>, vector<32x128xbf16>, vector<16x128xf32> -> vector<16x128xf32>
    %289 = vector.broadcast %285 : vector<16x1xf32> to vector<16x128xf32>
    %290 = arith.subf %288, %289 : vector<16x128xf32>
    %cst_116 = arith.constant dense<0xFF800000> : vector<128xf32>
    %291 = vector.multi_reduction <maximumf>, %290, %cst_116 [0] : vector<16x128xf32> to vector<128xf32>
    %292 = vector.shape_cast %291 : vector<128xf32> to vector<1x128xf32>
    %293 = vector.broadcast %292 : vector<1x128xf32> to vector<16x128xf32>
    %294 = arith.subf %290, %293 : vector<16x128xf32>
    %295 = math.exp %294 : vector<16x128xf32>
    %cst_117 = arith.constant dense<0.000000e+00> : vector<128xf32>
    %296 = vector.multi_reduction <add>, %295, %cst_117 [0] : vector<16x128xf32> to vector<128xf32>
    %297 = vector.shape_cast %296 : vector<128xf32> to vector<1x128xf32>
    %cst_118 = arith.constant 1.000000e-16 : f32
    %298 = vector.broadcast %cst_118 : f32 to vector<1x128xf32>
    %299 = arith.addf %297, %298 : vector<1x128xf32>
    %300 = tpu.reciprocal %299 {approx = true} : vector<1x128xf32> -> vector<1x128xf32>
    %301 = vector.broadcast %300 : vector<1x128xf32> to vector<16x128xf32>
    %302 = arith.mulf %295, %301 : vector<16x128xf32>
    %303 = arith.truncf %302 : vector<16x128xf32> to vector<16x128xbf16>
    %cst_119 = arith.constant dense<0.000000e+00> : vector<16x32xf32>
    %304 = tpu.matmul %303, %112, %cst_119 {dimension_numbers = #tpu.dot_dimension_numbers<[1], [1], [0], [0], [0, 0, 1, 0], [], []>} : vector<16x128xbf16>, vector<32x128xbf16>, vector<16x32xf32> -> vector<16x32xf32>
    %cst_120 = arith.constant dense<0.000000e+00> : vector<16xf32>
    %305 = vector.multi_reduction <add>, %302, %cst_120 [1] : vector<16x128xf32> to vector<16xf32>
    %306 = vector.shape_cast %305 : vector<16xf32> to vector<16x1xf32>
    %cst_121 = arith.constant 9.99999993E-9 : f32
    %307 = vector.broadcast %cst_121 : f32 to vector<16x1xf32>
    %308 = arith.addf %306, %307 : vector<16x1xf32>
    %309 = vector.broadcast %308 : vector<16x1xf32> to vector<16x32xf32>
    %310 = arith.divf %304, %309 : vector<16x32xf32>
    %311 = arith.mulf %310, %310 : vector<16x32xf32>
    %cst_122 = arith.constant dense<0.000000e+00> : vector<16xf32>
    %312 = vector.multi_reduction <add>, %311, %cst_122 [1] : vector<16x32xf32> to vector<16xf32>
    %313 = vector.shape_cast %312 : vector<16xf32> to vector<16x1xf32>
    %314 = arith.addf %310, %310 : vector<16x32xf32>
    %315 = arith.truncf %314 : vector<16x32xf32> to vector<16x32xbf16>
    %cst_123 = arith.constant dense<0.000000e+00> : vector<16x128xf32>
    %316 = tpu.matmul %315, %112, %cst_123 {dimension_numbers = #tpu.dot_dimension_numbers<[1], [0], [0], [1], [0, 0, 1, 1], [], []>} : vector<16x32xbf16>, vector<32x128xbf16>, vector<16x128xf32> -> vector<16x128xf32>
    %317 = vector.broadcast %313 : vector<16x1xf32> to vector<16x128xf32>
    %318 = arith.subf %316, %317 : vector<16x128xf32>
    %cst_124 = arith.constant dense<0xFF800000> : vector<128xf32>
    %319 = vector.multi_reduction <maximumf>, %318, %cst_124 [0] : vector<16x128xf32> to vector<128xf32>
    %320 = vector.shape_cast %319 : vector<128xf32> to vector<1x128xf32>
    %321 = vector.broadcast %320 : vector<1x128xf32> to vector<16x128xf32>
    %322 = arith.subf %318, %321 : vector<16x128xf32>
    %323 = math.exp %322 : vector<16x128xf32>
    %cst_125 = arith.constant dense<0.000000e+00> : vector<128xf32>
    %324 = vector.multi_reduction <add>, %323, %cst_125 [0] : vector<16x128xf32> to vector<128xf32>
    %325 = vector.shape_cast %324 : vector<128xf32> to vector<1x128xf32>
    %cst_126 = arith.constant 1.000000e-16 : f32
    %326 = vector.broadcast %cst_126 : f32 to vector<1x128xf32>
    %327 = arith.addf %325, %326 : vector<1x128xf32>
    %328 = tpu.reciprocal %327 {approx = true} : vector<1x128xf32> -> vector<1x128xf32>
    %329 = vector.broadcast %328 : vector<1x128xf32> to vector<16x128xf32>
    %330 = arith.mulf %323, %329 : vector<16x128xf32>
    %331 = arith.truncf %330 : vector<16x128xf32> to vector<16x128xbf16>
    %cst_127 = arith.constant dense<0.000000e+00> : vector<16x32xf32>
    %332 = tpu.matmul %331, %112, %cst_127 {dimension_numbers = #tpu.dot_dimension_numbers<[1], [1], [0], [0], [0, 0, 1, 0], [], []>} : vector<16x128xbf16>, vector<32x128xbf16>, vector<16x32xf32> -> vector<16x32xf32>
    %cst_128 = arith.constant dense<0.000000e+00> : vector<16xf32>
    %333 = vector.multi_reduction <add>, %330, %cst_128 [1] : vector<16x128xf32> to vector<16xf32>
    %334 = vector.shape_cast %333 : vector<16xf32> to vector<16x1xf32>
    %cst_129 = arith.constant 9.99999993E-9 : f32
    %335 = vector.broadcast %cst_129 : f32 to vector<16x1xf32>
    %336 = arith.addf %334, %335 : vector<16x1xf32>
    %337 = vector.broadcast %336 : vector<16x1xf32> to vector<16x32xf32>
    %338 = arith.divf %332, %337 : vector<16x32xf32>
    %339 = arith.mulf %338, %338 : vector<16x32xf32>
    %cst_130 = arith.constant dense<0.000000e+00> : vector<16xf32>
    %340 = vector.multi_reduction <add>, %339, %cst_130 [1] : vector<16x32xf32> to vector<16xf32>
    %341 = vector.shape_cast %340 : vector<16xf32> to vector<16x1xf32>
    %342 = arith.addf %338, %338 : vector<16x32xf32>
    %343 = arith.truncf %342 : vector<16x32xf32> to vector<16x32xbf16>
    %cst_131 = arith.constant dense<0.000000e+00> : vector<16x128xf32>
    %344 = tpu.matmul %343, %112, %cst_131 {dimension_numbers = #tpu.dot_dimension_numbers<[1], [0], [0], [1], [0, 0, 1, 1], [], []>} : vector<16x32xbf16>, vector<32x128xbf16>, vector<16x128xf32> -> vector<16x128xf32>
    %345 = vector.broadcast %341 : vector<16x1xf32> to vector<16x128xf32>
    %346 = arith.subf %344, %345 : vector<16x128xf32>
    %cst_132 = arith.constant dense<0xFF800000> : vector<128xf32>
    %347 = vector.multi_reduction <maximumf>, %346, %cst_132 [0] : vector<16x128xf32> to vector<128xf32>
    %348 = vector.shape_cast %347 : vector<128xf32> to vector<1x128xf32>
    %349 = vector.broadcast %348 : vector<1x128xf32> to vector<16x128xf32>
    %350 = arith.subf %346, %349 : vector<16x128xf32>
    %351 = math.exp %350 : vector<16x128xf32>
    %cst_133 = arith.constant dense<0.000000e+00> : vector<128xf32>
    %352 = vector.multi_reduction <add>, %351, %cst_133 [0] : vector<16x128xf32> to vector<128xf32>
    %353 = vector.shape_cast %352 : vector<128xf32> to vector<1x128xf32>
    %cst_134 = arith.constant 1.000000e-16 : f32
    %354 = vector.broadcast %cst_134 : f32 to vector<1x128xf32>
    %355 = arith.addf %353, %354 : vector<1x128xf32>
    %356 = tpu.reciprocal %355 {approx = true} : vector<1x128xf32> -> vector<1x128xf32>
    %357 = vector.broadcast %356 : vector<1x128xf32> to vector<16x128xf32>
    %358 = arith.mulf %351, %357 : vector<16x128xf32>
    %359 = arith.truncf %358 : vector<16x128xf32> to vector<16x128xbf16>
    %cst_135 = arith.constant dense<0.000000e+00> : vector<16x32xf32>
    %360 = tpu.matmul %359, %112, %cst_135 {dimension_numbers = #tpu.dot_dimension_numbers<[1], [1], [0], [0], [0, 0, 1, 0], [], []>} : vector<16x128xbf16>, vector<32x128xbf16>, vector<16x32xf32> -> vector<16x32xf32>
    %cst_136 = arith.constant dense<0.000000e+00> : vector<16xf32>
    %361 = vector.multi_reduction <add>, %358, %cst_136 [1] : vector<16x128xf32> to vector<16xf32>
    %362 = vector.shape_cast %361 : vector<16xf32> to vector<16x1xf32>
    %cst_137 = arith.constant 9.99999993E-9 : f32
    %363 = vector.broadcast %cst_137 : f32 to vector<16x1xf32>
    %364 = arith.addf %362, %363 : vector<16x1xf32>
    %365 = vector.broadcast %364 : vector<16x1xf32> to vector<16x32xf32>
    %366 = arith.divf %360, %365 : vector<16x32xf32>
    %367 = arith.mulf %366, %366 : vector<16x32xf32>
    %cst_138 = arith.constant dense<0.000000e+00> : vector<16xf32>
    %368 = vector.multi_reduction <add>, %367, %cst_138 [1] : vector<16x32xf32> to vector<16xf32>
    %369 = vector.shape_cast %368 : vector<16xf32> to vector<16x1xf32>
    %370 = arith.addf %366, %366 : vector<16x32xf32>
    %371 = arith.truncf %370 : vector<16x32xf32> to vector<16x32xbf16>
    %cst_139 = arith.constant dense<0.000000e+00> : vector<16x128xf32>
    %372 = tpu.matmul %371, %112, %cst_139 {dimension_numbers = #tpu.dot_dimension_numbers<[1], [0], [0], [1], [0, 0, 1, 1], [], []>} : vector<16x32xbf16>, vector<32x128xbf16>, vector<16x128xf32> -> vector<16x128xf32>
    %373 = vector.broadcast %369 : vector<16x1xf32> to vector<16x128xf32>
    %374 = arith.subf %372, %373 : vector<16x128xf32>
    %cst_140 = arith.constant dense<0xFF800000> : vector<128xf32>
    %375 = vector.multi_reduction <maximumf>, %374, %cst_140 [0] : vector<16x128xf32> to vector<128xf32>
    %376 = vector.shape_cast %375 : vector<128xf32> to vector<1x128xf32>
    %377 = vector.broadcast %376 : vector<1x128xf32> to vector<16x128xf32>
    %378 = arith.subf %374, %377 : vector<16x128xf32>
    %379 = math.exp %378 : vector<16x128xf32>
    %cst_141 = arith.constant dense<0.000000e+00> : vector<128xf32>
    %380 = vector.multi_reduction <add>, %379, %cst_141 [0] : vector<16x128xf32> to vector<128xf32>
    %381 = vector.shape_cast %380 : vector<128xf32> to vector<1x128xf32>
    %cst_142 = arith.constant 1.000000e-16 : f32
    %382 = vector.broadcast %cst_142 : f32 to vector<1x128xf32>
    %383 = arith.addf %381, %382 : vector<1x128xf32>
    %384 = tpu.reciprocal %383 {approx = true} : vector<1x128xf32> -> vector<1x128xf32>
    %385 = vector.broadcast %384 : vector<1x128xf32> to vector<16x128xf32>
    %386 = arith.mulf %379, %385 : vector<16x128xf32>
    %387 = arith.truncf %386 : vector<16x128xf32> to vector<16x128xbf16>
    %cst_143 = arith.constant dense<0.000000e+00> : vector<16x32xf32>
    %388 = tpu.matmul %387, %112, %cst_143 {dimension_numbers = #tpu.dot_dimension_numbers<[1], [1], [0], [0], [0, 0, 1, 0], [], []>} : vector<16x128xbf16>, vector<32x128xbf16>, vector<16x32xf32> -> vector<16x32xf32>
    %cst_144 = arith.constant dense<0.000000e+00> : vector<16xf32>
    %389 = vector.multi_reduction <add>, %386, %cst_144 [1] : vector<16x128xf32> to vector<16xf32>
    %390 = vector.shape_cast %389 : vector<16xf32> to vector<16x1xf32>
    %cst_145 = arith.constant 9.99999993E-9 : f32
    %391 = vector.broadcast %cst_145 : f32 to vector<16x1xf32>
    %392 = arith.addf %390, %391 : vector<16x1xf32>
    %393 = vector.broadcast %392 : vector<16x1xf32> to vector<16x32xf32>
    %394 = arith.divf %388, %393 : vector<16x32xf32>
    %395 = arith.mulf %394, %394 : vector<16x32xf32>
    %cst_146 = arith.constant dense<0.000000e+00> : vector<16xf32>
    %396 = vector.multi_reduction <add>, %395, %cst_146 [1] : vector<16x32xf32> to vector<16xf32>
    %397 = vector.shape_cast %396 : vector<16xf32> to vector<16x1xf32>
    %398 = arith.addf %394, %394 : vector<16x32xf32>
    %399 = arith.truncf %398 : vector<16x32xf32> to vector<16x32xbf16>
    %cst_147 = arith.constant dense<0.000000e+00> : vector<16x128xf32>
    %400 = tpu.matmul %399, %112, %cst_147 {dimension_numbers = #tpu.dot_dimension_numbers<[1], [0], [0], [1], [0, 0, 1, 1], [], []>} : vector<16x32xbf16>, vector<32x128xbf16>, vector<16x128xf32> -> vector<16x128xf32>
    %401 = vector.broadcast %397 : vector<16x1xf32> to vector<16x128xf32>
    %402 = arith.subf %400, %401 : vector<16x128xf32>
    %cst_148 = arith.constant dense<0xFF800000> : vector<128xf32>
    %403 = vector.multi_reduction <maximumf>, %402, %cst_148 [0] : vector<16x128xf32> to vector<128xf32>
    %404 = vector.shape_cast %403 : vector<128xf32> to vector<1x128xf32>
    %405 = vector.broadcast %404 : vector<1x128xf32> to vector<16x128xf32>
    %406 = arith.subf %402, %405 : vector<16x128xf32>
    %407 = math.exp %406 : vector<16x128xf32>
    %cst_149 = arith.constant dense<0.000000e+00> : vector<128xf32>
    %408 = vector.multi_reduction <add>, %407, %cst_149 [0] : vector<16x128xf32> to vector<128xf32>
    %409 = vector.shape_cast %408 : vector<128xf32> to vector<1x128xf32>
    %cst_150 = arith.constant 1.000000e-16 : f32
    %410 = vector.broadcast %cst_150 : f32 to vector<1x128xf32>
    %411 = arith.addf %409, %410 : vector<1x128xf32>
    %412 = tpu.reciprocal %411 {approx = true} : vector<1x128xf32> -> vector<1x128xf32>
    %413 = vector.broadcast %412 : vector<1x128xf32> to vector<16x128xf32>
    %414 = arith.mulf %407, %413 : vector<16x128xf32>
    %c0_151 = arith.constant 0 : index
    %c0_152 = arith.constant 0 : index
    %c0_153 = arith.constant 0 : index
    %415 = vector.load %arg4[%c0_151, %c0_152, %c0_153] : memref<2x16x128xf32, #tpu.memory_space<vmem>>, vector<1x16x128xf32>
    %416 = vector.shape_cast %415 : vector<1x16x128xf32> to vector<16x128xf32>
    %417 = vector.shape_cast %414 : vector<16x128xf32> to vector<1x16x128xf32>
    tpu.vector_store %arg4[%c0_151, %c0_152, %c0_153], %417 {strides = array<i32>} : memref<2x16x128xf32, #tpu.memory_space<vmem>>, vector<1x16x128xf32>,
    %418 = tpu.transpose %394, [1, 0] : vector<16x32xf32> -> vector<32x16xf32>
    %c0_154 = arith.constant 0 : index
    %c0_155 = arith.constant 0 : index
    %c0_156 = arith.constant 0 : index
    %419 = vector.load %arg5[%c0_154, %c0_155, %c0_156] : memref<2x32x16xf32, #tpu.memory_space<vmem>>, vector<1x32x16xf32>
    %420 = vector.shape_cast %419 : vector<1x32x16xf32> to vector<32x16xf32>
    %421 = vector.shape_cast %418 : vector<32x16xf32> to vector<1x32x16xf32>
    tpu.vector_store %arg5[%c0_154, %c0_155, %c0_156], %421 {strides = array<i32>} : memref<2x32x16xf32, #tpu.memory_space<vmem>>, vector<1x32x16xf32>,
    %422 = vector.extract_strided_slice %102 {offsets = [0, 128], sizes = [32, 128], strides = [1, 1]} : vector<128x256xf32> to vector<32x128xf32>
    %423 = arith.truncf %422 : vector<32x128xf32> to vector<32x128xbf16>
    %424 = vector.extract_strided_slice %422 {offsets = [0, 0], sizes = [32, 16], strides = [1, 1]} : vector<32x128xf32> to vector<32x16xf32>
    %425 = tpu.transpose %424, [1, 0] : vector<32x16xf32> -> vector<16x32xf32>
    %426 = arith.mulf %425, %425 : vector<16x32xf32>
    %cst_157 = arith.constant dense<0.000000e+00> : vector<16xf32>
    %427 = vector.multi_reduction <add>, %426, %cst_157 [1] : vector<16x32xf32> to vector<16xf32>
    %428 = vector.shape_cast %427 : vector<16xf32> to vector<16x1xf32>
    %429 = arith.addf %425, %425 : vector<16x32xf32>
    %430 = arith.truncf %429 : vector<16x32xf32> to vector<16x32xbf16>
    %cst_158 = arith.constant dense<0.000000e+00> : vector<16x128xf32>
    %431 = tpu.matmul %430, %423, %cst_158 {dimension_numbers = #tpu.dot_dimension_numbers<[1], [0], [0], [1], [0, 0, 1, 1], [], []>} : vector<16x32xbf16>, vector<32x128xbf16>, vector<16x128xf32> -> vector<16x128xf32>
    %432 = vector.broadcast %428 : vector<16x1xf32> to vector<16x128xf32>
    %433 = arith.subf %431, %432 : vector<16x128xf32>
    %cst_159 = arith.constant dense<0xFF800000> : vector<128xf32>
    %434 = vector.multi_reduction <maximumf>, %433, %cst_159 [0] : vector<16x128xf32> to vector<128xf32>
    %435 = vector.shape_cast %434 : vector<128xf32> to vector<1x128xf32>
    %436 = vector.broadcast %435 : vector<1x128xf32> to vector<16x128xf32>
    %437 = arith.subf %433, %436 : vector<16x128xf32>
    %438 = math.exp %437 : vector<16x128xf32>
    %cst_160 = arith.constant dense<0.000000e+00> : vector<128xf32>
    %439 = vector.multi_reduction <add>, %438, %cst_160 [0] : vector<16x128xf32> to vector<128xf32>
    %440 = vector.shape_cast %439 : vector<128xf32> to vector<1x128xf32>
    %cst_161 = arith.constant 1.000000e-16 : f32
    %441 = vector.broadcast %cst_161 : f32 to vector<1x128xf32>
    %442 = arith.addf %440, %441 : vector<1x128xf32>
    %443 = tpu.reciprocal %442 {approx = true} : vector<1x128xf32> -> vector<1x128xf32>
    %444 = vector.broadcast %443 : vector<1x128xf32> to vector<16x128xf32>
    %445 = arith.mulf %438, %444 : vector<16x128xf32>
    %446 = arith.truncf %445 : vector<16x128xf32> to vector<16x128xbf16>
    %cst_162 = arith.constant dense<0.000000e+00> : vector<16x32xf32>
    %447 = tpu.matmul %446, %423, %cst_162 {dimension_numbers = #tpu.dot_dimension_numbers<[1], [1], [0], [0], [0, 0, 1, 0], [], []>} : vector<16x128xbf16>, vector<32x128xbf16>, vector<16x32xf32> -> vector<16x32xf32>
    %cst_163 = arith.constant dense<0.000000e+00> : vector<16xf32>
    %448 = vector.multi_reduction <add>, %445, %cst_163 [1] : vector<16x128xf32> to vector<16xf32>
    %449 = vector.shape_cast %448 : vector<16xf32> to vector<16x1xf32>
    %cst_164 = arith.constant 9.99999993E-9 : f32
    %450 = vector.broadcast %cst_164 : f32 to vector<16x1xf32>
    %451 = arith.addf %449, %450 : vector<16x1xf32>
    %452 = vector.broadcast %451 : vector<16x1xf32> to vector<16x32xf32>
    %453 = arith.divf %447, %452 : vector<16x32xf32>
    %454 = arith.mulf %453, %453 : vector<16x32xf32>
    %cst_165 = arith.constant dense<0.000000e+00> : vector<16xf32>
    %455 = vector.multi_reduction <add>, %454, %cst_165 [1] : vector<16x32xf32> to vector<16xf32>
    %456 = vector.shape_cast %455 : vector<16xf32> to vector<16x1xf32>
    %457 = arith.addf %453, %453 : vector<16x32xf32>
    %458 = arith.truncf %457 : vector<16x32xf32> to vector<16x32xbf16>
    %cst_166 = arith.constant dense<0.000000e+00> : vector<16x128xf32>
    %459 = tpu.matmul %458, %423, %cst_166 {dimension_numbers = #tpu.dot_dimension_numbers<[1], [0], [0], [1], [0, 0, 1, 1], [], []>} : vector<16x32xbf16>, vector<32x128xbf16>, vector<16x128xf32> -> vector<16x128xf32>
    %460 = vector.broadcast %456 : vector<16x1xf32> to vector<16x128xf32>
    %461 = arith.subf %459, %460 : vector<16x128xf32>
    %cst_167 = arith.constant dense<0xFF800000> : vector<128xf32>
    %462 = vector.multi_reduction <maximumf>, %461, %cst_167 [0] : vector<16x128xf32> to vector<128xf32>
    %463 = vector.shape_cast %462 : vector<128xf32> to vector<1x128xf32>
    %464 = vector.broadcast %463 : vector<1x128xf32> to vector<16x128xf32>
    %465 = arith.subf %461, %464 : vector<16x128xf32>
    %466 = math.exp %465 : vector<16x128xf32>
    %cst_168 = arith.constant dense<0.000000e+00> : vector<128xf32>
    %467 = vector.multi_reduction <add>, %466, %cst_168 [0] : vector<16x128xf32> to vector<128xf32>
    %468 = vector.shape_cast %467 : vector<128xf32> to vector<1x128xf32>
    %cst_169 = arith.constant 1.000000e-16 : f32
    %469 = vector.broadcast %cst_169 : f32 to vector<1x128xf32>
    %470 = arith.addf %468, %469 : vector<1x128xf32>
    %471 = tpu.reciprocal %470 {approx = true} : vector<1x128xf32> -> vector<1x128xf32>
    %472 = vector.broadcast %471 : vector<1x128xf32> to vector<16x128xf32>
    %473 = arith.mulf %466, %472 : vector<16x128xf32>
    %474 = arith.truncf %473 : vector<16x128xf32> to vector<16x128xbf16>
    %cst_170 = arith.constant dense<0.000000e+00> : vector<16x32xf32>
    %475 = tpu.matmul %474, %423, %cst_170 {dimension_numbers = #tpu.dot_dimension_numbers<[1], [1], [0], [0], [0, 0, 1, 0], [], []>} : vector<16x128xbf16>, vector<32x128xbf16>, vector<16x32xf32> -> vector<16x32xf32>
    %cst_171 = arith.constant dense<0.000000e+00> : vector<16xf32>
    %476 = vector.multi_reduction <add>, %473, %cst_171 [1] : vector<16x128xf32> to vector<16xf32>
    %477 = vector.shape_cast %476 : vector<16xf32> to vector<16x1xf32>
    %cst_172 = arith.constant 9.99999993E-9 : f32
    %478 = vector.broadcast %cst_172 : f32 to vector<16x1xf32>
    %479 = arith.addf %477, %478 : vector<16x1xf32>
    %480 = vector.broadcast %479 : vector<16x1xf32> to vector<16x32xf32>
    %481 = arith.divf %475, %480 : vector<16x32xf32>
    %482 = arith.mulf %481, %481 : vector<16x32xf32>
    %cst_173 = arith.constant dense<0.000000e+00> : vector<16xf32>
    %483 = vector.multi_reduction <add>, %482, %cst_173 [1] : vector<16x32xf32> to vector<16xf32>
    %484 = vector.shape_cast %483 : vector<16xf32> to vector<16x1xf32>
    %485 = arith.addf %481, %481 : vector<16x32xf32>
    %486 = arith.truncf %485 : vector<16x32xf32> to vector<16x32xbf16>
    %cst_174 = arith.constant dense<0.000000e+00> : vector<16x128xf32>
    %487 = tpu.matmul %486, %423, %cst_174 {dimension_numbers = #tpu.dot_dimension_numbers<[1], [0], [0], [1], [0, 0, 1, 1], [], []>} : vector<16x32xbf16>, vector<32x128xbf16>, vector<16x128xf32> -> vector<16x128xf32>
    %488 = vector.broadcast %484 : vector<16x1xf32> to vector<16x128xf32>
    %489 = arith.subf %487, %488 : vector<16x128xf32>
    %cst_175 = arith.constant dense<0xFF800000> : vector<128xf32>
    %490 = vector.multi_reduction <maximumf>, %489, %cst_175 [0] : vector<16x128xf32> to vector<128xf32>
    %491 = vector.shape_cast %490 : vector<128xf32> to vector<1x128xf32>
    %492 = vector.broadcast %491 : vector<1x128xf32> to vector<16x128xf32>
    %493 = arith.subf %489, %492 : vector<16x128xf32>
    %494 = math.exp %493 : vector<16x128xf32>
    %cst_176 = arith.constant dense<0.000000e+00> : vector<128xf32>
    %495 = vector.multi_reduction <add>, %494, %cst_176 [0] : vector<16x128xf32> to vector<128xf32>
    %496 = vector.shape_cast %495 : vector<128xf32> to vector<1x128xf32>
    %cst_177 = arith.constant 1.000000e-16 : f32
    %497 = vector.broadcast %cst_177 : f32 to vector<1x128xf32>
    %498 = arith.addf %496, %497 : vector<1x128xf32>
    %499 = tpu.reciprocal %498 {approx = true} : vector<1x128xf32> -> vector<1x128xf32>
    %500 = vector.broadcast %499 : vector<1x128xf32> to vector<16x128xf32>
    %501 = arith.mulf %494, %500 : vector<16x128xf32>
    %502 = arith.truncf %501 : vector<16x128xf32> to vector<16x128xbf16>
    %cst_178 = arith.constant dense<0.000000e+00> : vector<16x32xf32>
    %503 = tpu.matmul %502, %423, %cst_178 {dimension_numbers = #tpu.dot_dimension_numbers<[1], [1], [0], [0], [0, 0, 1, 0], [], []>} : vector<16x128xbf16>, vector<32x128xbf16>, vector<16x32xf32> -> vector<16x32xf32>
    %cst_179 = arith.constant dense<0.000000e+00> : vector<16xf32>
    %504 = vector.multi_reduction <add>, %501, %cst_179 [1] : vector<16x128xf32> to vector<16xf32>
    %505 = vector.shape_cast %504 : vector<16xf32> to vector<16x1xf32>
    %cst_180 = arith.constant 9.99999993E-9 : f32
    %506 = vector.broadcast %cst_180 : f32 to vector<16x1xf32>
    %507 = arith.addf %505, %506 : vector<16x1xf32>
    %508 = vector.broadcast %507 : vector<16x1xf32> to vector<16x32xf32>
    %509 = arith.divf %503, %508 : vector<16x32xf32>
    %510 = arith.mulf %509, %509 : vector<16x32xf32>
    %cst_181 = arith.constant dense<0.000000e+00> : vector<16xf32>
    %511 = vector.multi_reduction <add>, %510, %cst_181 [1] : vector<16x32xf32> to vector<16xf32>
    %512 = vector.shape_cast %511 : vector<16xf32> to vector<16x1xf32>
    %513 = arith.addf %509, %509 : vector<16x32xf32>
    %514 = arith.truncf %513 : vector<16x32xf32> to vector<16x32xbf16>
    %cst_182 = arith.constant dense<0.000000e+00> : vector<16x128xf32>
    %515 = tpu.matmul %514, %423, %cst_182 {dimension_numbers = #tpu.dot_dimension_numbers<[1], [0], [0], [1], [0, 0, 1, 1], [], []>} : vector<16x32xbf16>, vector<32x128xbf16>, vector<16x128xf32> -> vector<16x128xf32>
    %516 = vector.broadcast %512 : vector<16x1xf32> to vector<16x128xf32>
    %517 = arith.subf %515, %516 : vector<16x128xf32>
    %cst_183 = arith.constant dense<0xFF800000> : vector<128xf32>
    %518 = vector.multi_reduction <maximumf>, %517, %cst_183 [0] : vector<16x128xf32> to vector<128xf32>
    %519 = vector.shape_cast %518 : vector<128xf32> to vector<1x128xf32>
    %520 = vector.broadcast %519 : vector<1x128xf32> to vector<16x128xf32>
    %521 = arith.subf %517, %520 : vector<16x128xf32>
    %522 = math.exp %521 : vector<16x128xf32>
    %cst_184 = arith.constant dense<0.000000e+00> : vector<128xf32>
    %523 = vector.multi_reduction <add>, %522, %cst_184 [0] : vector<16x128xf32> to vector<128xf32>
    %524 = vector.shape_cast %523 : vector<128xf32> to vector<1x128xf32>
    %cst_185 = arith.constant 1.000000e-16 : f32
    %525 = vector.broadcast %cst_185 : f32 to vector<1x128xf32>
    %526 = arith.addf %524, %525 : vector<1x128xf32>
    %527 = tpu.reciprocal %526 {approx = true} : vector<1x128xf32> -> vector<1x128xf32>
    %528 = vector.broadcast %527 : vector<1x128xf32> to vector<16x128xf32>
    %529 = arith.mulf %522, %528 : vector<16x128xf32>
    %530 = arith.truncf %529 : vector<16x128xf32> to vector<16x128xbf16>
    %cst_186 = arith.constant dense<0.000000e+00> : vector<16x32xf32>
    %531 = tpu.matmul %530, %423, %cst_186 {dimension_numbers = #tpu.dot_dimension_numbers<[1], [1], [0], [0], [0, 0, 1, 0], [], []>} : vector<16x128xbf16>, vector<32x128xbf16>, vector<16x32xf32> -> vector<16x32xf32>
    %cst_187 = arith.constant dense<0.000000e+00> : vector<16xf32>
    %532 = vector.multi_reduction <add>, %529, %cst_187 [1] : vector<16x128xf32> to vector<16xf32>
    %533 = vector.shape_cast %532 : vector<16xf32> to vector<16x1xf32>
    %cst_188 = arith.constant 9.99999993E-9 : f32
    %534 = vector.broadcast %cst_188 : f32 to vector<16x1xf32>
    %535 = arith.addf %533, %534 : vector<16x1xf32>
    %536 = vector.broadcast %535 : vector<16x1xf32> to vector<16x32xf32>
    %537 = arith.divf %531, %536 : vector<16x32xf32>
    %538 = arith.mulf %537, %537 : vector<16x32xf32>
    %cst_189 = arith.constant dense<0.000000e+00> : vector<16xf32>
    %539 = vector.multi_reduction <add>, %538, %cst_189 [1] : vector<16x32xf32> to vector<16xf32>
    %540 = vector.shape_cast %539 : vector<16xf32> to vector<16x1xf32>
    %541 = arith.addf %537, %537 : vector<16x32xf32>
    %542 = arith.truncf %541 : vector<16x32xf32> to vector<16x32xbf16>
    %cst_190 = arith.constant dense<0.000000e+00> : vector<16x128xf32>
    %543 = tpu.matmul %542, %423, %cst_190 {dimension_numbers = #tpu.dot_dimension_numbers<[1], [0], [0], [1], [0, 0, 1, 1], [], []>} : vector<16x32xbf16>, vector<32x128xbf16>, vector<16x128xf32> -> vector<16x128xf32>
    %544 = vector.broadcast %540 : vector<16x1xf32> to vector<16x128xf32>
    %545 = arith.subf %543, %544 : vector<16x128xf32>
    %cst_191 = arith.constant dense<0xFF800000> : vector<128xf32>
    %546 = vector.multi_reduction <maximumf>, %545, %cst_191 [0] : vector<16x128xf32> to vector<128xf32>
    %547 = vector.shape_cast %546 : vector<128xf32> to vector<1x128xf32>
    %548 = vector.broadcast %547 : vector<1x128xf32> to vector<16x128xf32>
    %549 = arith.subf %545, %548 : vector<16x128xf32>
    %550 = math.exp %549 : vector<16x128xf32>
    %cst_192 = arith.constant dense<0.000000e+00> : vector<128xf32>
    %551 = vector.multi_reduction <add>, %550, %cst_192 [0] : vector<16x128xf32> to vector<128xf32>
    %552 = vector.shape_cast %551 : vector<128xf32> to vector<1x128xf32>
    %cst_193 = arith.constant 1.000000e-16 : f32
    %553 = vector.broadcast %cst_193 : f32 to vector<1x128xf32>
    %554 = arith.addf %552, %553 : vector<1x128xf32>
    %555 = tpu.reciprocal %554 {approx = true} : vector<1x128xf32> -> vector<1x128xf32>
    %556 = vector.broadcast %555 : vector<1x128xf32> to vector<16x128xf32>
    %557 = arith.mulf %550, %556 : vector<16x128xf32>
    %558 = arith.truncf %557 : vector<16x128xf32> to vector<16x128xbf16>
    %cst_194 = arith.constant dense<0.000000e+00> : vector<16x32xf32>
    %559 = tpu.matmul %558, %423, %cst_194 {dimension_numbers = #tpu.dot_dimension_numbers<[1], [1], [0], [0], [0, 0, 1, 0], [], []>} : vector<16x128xbf16>, vector<32x128xbf16>, vector<16x32xf32> -> vector<16x32xf32>
    %cst_195 = arith.constant dense<0.000000e+00> : vector<16xf32>
    %560 = vector.multi_reduction <add>, %557, %cst_195 [1] : vector<16x128xf32> to vector<16xf32>
    %561 = vector.shape_cast %560 : vector<16xf32> to vector<16x1xf32>
    %cst_196 = arith.constant 9.99999993E-9 : f32
    %562 = vector.broadcast %cst_196 : f32 to vector<16x1xf32>
    %563 = arith.addf %561, %562 : vector<16x1xf32>
    %564 = vector.broadcast %563 : vector<16x1xf32> to vector<16x32xf32>
    %565 = arith.divf %559, %564 : vector<16x32xf32>
    %566 = arith.mulf %565, %565 : vector<16x32xf32>
    %cst_197 = arith.constant dense<0.000000e+00> : vector<16xf32>
    %567 = vector.multi_reduction <add>, %566, %cst_197 [1] : vector<16x32xf32> to vector<16xf32>
    %568 = vector.shape_cast %567 : vector<16xf32> to vector<16x1xf32>
    %569 = arith.addf %565, %565 : vector<16x32xf32>
    %570 = arith.truncf %569 : vector<16x32xf32> to vector<16x32xbf16>
    %cst_198 = arith.constant dense<0.000000e+00> : vector<16x128xf32>
    %571 = tpu.matmul %570, %423, %cst_198 {dimension_numbers = #tpu.dot_dimension_numbers<[1], [0], [0], [1], [0, 0, 1, 1], [], []>} : vector<16x32xbf16>, vector<32x128xbf16>, vector<16x128xf32> -> vector<16x128xf32>
    %572 = vector.broadcast %568 : vector<16x1xf32> to vector<16x128xf32>
    %573 = arith.subf %571, %572 : vector<16x128xf32>
    %cst_199 = arith.constant dense<0xFF800000> : vector<128xf32>
    %574 = vector.multi_reduction <maximumf>, %573, %cst_199 [0] : vector<16x128xf32> to vector<128xf32>
    %575 = vector.shape_cast %574 : vector<128xf32> to vector<1x128xf32>
    %576 = vector.broadcast %575 : vector<1x128xf32> to vector<16x128xf32>
    %577 = arith.subf %573, %576 : vector<16x128xf32>
    %578 = math.exp %577 : vector<16x128xf32>
    %cst_200 = arith.constant dense<0.000000e+00> : vector<128xf32>
    %579 = vector.multi_reduction <add>, %578, %cst_200 [0] : vector<16x128xf32> to vector<128xf32>
    %580 = vector.shape_cast %579 : vector<128xf32> to vector<1x128xf32>
    %cst_201 = arith.constant 1.000000e-16 : f32
    %581 = vector.broadcast %cst_201 : f32 to vector<1x128xf32>
    %582 = arith.addf %580, %581 : vector<1x128xf32>
    %583 = tpu.reciprocal %582 {approx = true} : vector<1x128xf32> -> vector<1x128xf32>
    %584 = vector.broadcast %583 : vector<1x128xf32> to vector<16x128xf32>
    %585 = arith.mulf %578, %584 : vector<16x128xf32>
    %586 = arith.truncf %585 : vector<16x128xf32> to vector<16x128xbf16>
    %cst_202 = arith.constant dense<0.000000e+00> : vector<16x32xf32>
    %587 = tpu.matmul %586, %423, %cst_202 {dimension_numbers = #tpu.dot_dimension_numbers<[1], [1], [0], [0], [0, 0, 1, 0], [], []>} : vector<16x128xbf16>, vector<32x128xbf16>, vector<16x32xf32> -> vector<16x32xf32>
    %cst_203 = arith.constant dense<0.000000e+00> : vector<16xf32>
    %588 = vector.multi_reduction <add>, %585, %cst_203 [1] : vector<16x128xf32> to vector<16xf32>
    %589 = vector.shape_cast %588 : vector<16xf32> to vector<16x1xf32>
    %cst_204 = arith.constant 9.99999993E-9 : f32
    %590 = vector.broadcast %cst_204 : f32 to vector<16x1xf32>
    %591 = arith.addf %589, %590 : vector<16x1xf32>
    %592 = vector.broadcast %591 : vector<16x1xf32> to vector<16x32xf32>
    %593 = arith.divf %587, %592 : vector<16x32xf32>
    %594 = arith.mulf %593, %593 : vector<16x32xf32>
    %cst_205 = arith.constant dense<0.000000e+00> : vector<16xf32>
    %595 = vector.multi_reduction <add>, %594, %cst_205 [1] : vector<16x32xf32> to vector<16xf32>
    %596 = vector.shape_cast %595 : vector<16xf32> to vector<16x1xf32>
    %597 = arith.addf %593, %593 : vector<16x32xf32>
    %598 = arith.truncf %597 : vector<16x32xf32> to vector<16x32xbf16>
    %cst_206 = arith.constant dense<0.000000e+00> : vector<16x128xf32>
    %599 = tpu.matmul %598, %423, %cst_206 {dimension_numbers = #tpu.dot_dimension_numbers<[1], [0], [0], [1], [0, 0, 1, 1], [], []>} : vector<16x32xbf16>, vector<32x128xbf16>, vector<16x128xf32> -> vector<16x128xf32>
    %600 = vector.broadcast %596 : vector<16x1xf32> to vector<16x128xf32>
    %601 = arith.subf %599, %600 : vector<16x128xf32>
    %cst_207 = arith.constant dense<0xFF800000> : vector<128xf32>
    %602 = vector.multi_reduction <maximumf>, %601, %cst_207 [0] : vector<16x128xf32> to vector<128xf32>
    %603 = vector.shape_cast %602 : vector<128xf32> to vector<1x128xf32>
    %604 = vector.broadcast %603 : vector<1x128xf32> to vector<16x128xf32>
    %605 = arith.subf %601, %604 : vector<16x128xf32>
    %606 = math.exp %605 : vector<16x128xf32>
    %cst_208 = arith.constant dense<0.000000e+00> : vector<128xf32>
    %607 = vector.multi_reduction <add>, %606, %cst_208 [0] : vector<16x128xf32> to vector<128xf32>
    %608 = vector.shape_cast %607 : vector<128xf32> to vector<1x128xf32>
    %cst_209 = arith.constant 1.000000e-16 : f32
    %609 = vector.broadcast %cst_209 : f32 to vector<1x128xf32>
    %610 = arith.addf %608, %609 : vector<1x128xf32>
    %611 = tpu.reciprocal %610 {approx = true} : vector<1x128xf32> -> vector<1x128xf32>
    %612 = vector.broadcast %611 : vector<1x128xf32> to vector<16x128xf32>
    %613 = arith.mulf %606, %612 : vector<16x128xf32>
    %614 = arith.truncf %613 : vector<16x128xf32> to vector<16x128xbf16>
    %cst_210 = arith.constant dense<0.000000e+00> : vector<16x32xf32>
    %615 = tpu.matmul %614, %423, %cst_210 {dimension_numbers = #tpu.dot_dimension_numbers<[1], [1], [0], [0], [0, 0, 1, 0], [], []>} : vector<16x128xbf16>, vector<32x128xbf16>, vector<16x32xf32> -> vector<16x32xf32>
    %cst_211 = arith.constant dense<0.000000e+00> : vector<16xf32>
    %616 = vector.multi_reduction <add>, %613, %cst_211 [1] : vector<16x128xf32> to vector<16xf32>
    %617 = vector.shape_cast %616 : vector<16xf32> to vector<16x1xf32>
    %cst_212 = arith.constant 9.99999993E-9 : f32
    %618 = vector.broadcast %cst_212 : f32 to vector<16x1xf32>
    %619 = arith.addf %617, %618 : vector<16x1xf32>
    %620 = vector.broadcast %619 : vector<16x1xf32> to vector<16x32xf32>
    %621 = arith.divf %615, %620 : vector<16x32xf32>
    %622 = arith.mulf %621, %621 : vector<16x32xf32>
    %cst_213 = arith.constant dense<0.000000e+00> : vector<16xf32>
    %623 = vector.multi_reduction <add>, %622, %cst_213 [1] : vector<16x32xf32> to vector<16xf32>
    %624 = vector.shape_cast %623 : vector<16xf32> to vector<16x1xf32>
    %625 = arith.addf %621, %621 : vector<16x32xf32>
    %626 = arith.truncf %625 : vector<16x32xf32> to vector<16x32xbf16>
    %cst_214 = arith.constant dense<0.000000e+00> : vector<16x128xf32>
    %627 = tpu.matmul %626, %423, %cst_214 {dimension_numbers = #tpu.dot_dimension_numbers<[1], [0], [0], [1], [0, 0, 1, 1], [], []>} : vector<16x32xbf16>, vector<32x128xbf16>, vector<16x128xf32> -> vector<16x128xf32>
    %628 = vector.broadcast %624 : vector<16x1xf32> to vector<16x128xf32>
    %629 = arith.subf %627, %628 : vector<16x128xf32>
    %cst_215 = arith.constant dense<0xFF800000> : vector<128xf32>
    %630 = vector.multi_reduction <maximumf>, %629, %cst_215 [0] : vector<16x128xf32> to vector<128xf32>
    %631 = vector.shape_cast %630 : vector<128xf32> to vector<1x128xf32>
    %632 = vector.broadcast %631 : vector<1x128xf32> to vector<16x128xf32>
    %633 = arith.subf %629, %632 : vector<16x128xf32>
    %634 = math.exp %633 : vector<16x128xf32>
    %cst_216 = arith.constant dense<0.000000e+00> : vector<128xf32>
    %635 = vector.multi_reduction <add>, %634, %cst_216 [0] : vector<16x128xf32> to vector<128xf32>
    %636 = vector.shape_cast %635 : vector<128xf32> to vector<1x128xf32>
    %cst_217 = arith.constant 1.000000e-16 : f32
    %637 = vector.broadcast %cst_217 : f32 to vector<1x128xf32>
    %638 = arith.addf %636, %637 : vector<1x128xf32>
    %639 = tpu.reciprocal %638 {approx = true} : vector<1x128xf32> -> vector<1x128xf32>
    %640 = vector.broadcast %639 : vector<1x128xf32> to vector<16x128xf32>
    %641 = arith.mulf %634, %640 : vector<16x128xf32>
    %642 = arith.truncf %641 : vector<16x128xf32> to vector<16x128xbf16>
    %cst_218 = arith.constant dense<0.000000e+00> : vector<16x32xf32>
    %643 = tpu.matmul %642, %423, %cst_218 {dimension_numbers = #tpu.dot_dimension_numbers<[1], [1], [0], [0], [0, 0, 1, 0], [], []>} : vector<16x128xbf16>, vector<32x128xbf16>, vector<16x32xf32> -> vector<16x32xf32>
    %cst_219 = arith.constant dense<0.000000e+00> : vector<16xf32>
    %644 = vector.multi_reduction <add>, %641, %cst_219 [1] : vector<16x128xf32> to vector<16xf32>
    %645 = vector.shape_cast %644 : vector<16xf32> to vector<16x1xf32>
    %cst_220 = arith.constant 9.99999993E-9 : f32
    %646 = vector.broadcast %cst_220 : f32 to vector<16x1xf32>
    %647 = arith.addf %645, %646 : vector<16x1xf32>
    %648 = vector.broadcast %647 : vector<16x1xf32> to vector<16x32xf32>
    %649 = arith.divf %643, %648 : vector<16x32xf32>
    %650 = arith.mulf %649, %649 : vector<16x32xf32>
    %cst_221 = arith.constant dense<0.000000e+00> : vector<16xf32>
    %651 = vector.multi_reduction <add>, %650, %cst_221 [1] : vector<16x32xf32> to vector<16xf32>
    %652 = vector.shape_cast %651 : vector<16xf32> to vector<16x1xf32>
    %653 = arith.addf %649, %649 : vector<16x32xf32>
    %654 = arith.truncf %653 : vector<16x32xf32> to vector<16x32xbf16>
    %cst_222 = arith.constant dense<0.000000e+00> : vector<16x128xf32>
    %655 = tpu.matmul %654, %423, %cst_222 {dimension_numbers = #tpu.dot_dimension_numbers<[1], [0], [0], [1], [0, 0, 1, 1], [], []>} : vector<16x32xbf16>, vector<32x128xbf16>, vector<16x128xf32> -> vector<16x128xf32>
    %656 = vector.broadcast %652 : vector<16x1xf32> to vector<16x128xf32>
    %657 = arith.subf %655, %656 : vector<16x128xf32>
    %cst_223 = arith.constant dense<0xFF800000> : vector<128xf32>
    %658 = vector.multi_reduction <maximumf>, %657, %cst_223 [0] : vector<16x128xf32> to vector<128xf32>
    %659 = vector.shape_cast %658 : vector<128xf32> to vector<1x128xf32>
    %660 = vector.broadcast %659 : vector<1x128xf32> to vector<16x128xf32>
    %661 = arith.subf %657, %660 : vector<16x128xf32>
    %662 = math.exp %661 : vector<16x128xf32>
    %cst_224 = arith.constant dense<0.000000e+00> : vector<128xf32>
    %663 = vector.multi_reduction <add>, %662, %cst_224 [0] : vector<16x128xf32> to vector<128xf32>
    %664 = vector.shape_cast %663 : vector<128xf32> to vector<1x128xf32>
    %cst_225 = arith.constant 1.000000e-16 : f32
    %665 = vector.broadcast %cst_225 : f32 to vector<1x128xf32>
    %666 = arith.addf %664, %665 : vector<1x128xf32>
    %667 = tpu.reciprocal %666 {approx = true} : vector<1x128xf32> -> vector<1x128xf32>
    %668 = vector.broadcast %667 : vector<1x128xf32> to vector<16x128xf32>
    %669 = arith.mulf %662, %668 : vector<16x128xf32>
    %670 = arith.truncf %669 : vector<16x128xf32> to vector<16x128xbf16>
    %cst_226 = arith.constant dense<0.000000e+00> : vector<16x32xf32>
    %671 = tpu.matmul %670, %423, %cst_226 {dimension_numbers = #tpu.dot_dimension_numbers<[1], [1], [0], [0], [0, 0, 1, 0], [], []>} : vector<16x128xbf16>, vector<32x128xbf16>, vector<16x32xf32> -> vector<16x32xf32>
    %cst_227 = arith.constant dense<0.000000e+00> : vector<16xf32>
    %672 = vector.multi_reduction <add>, %669, %cst_227 [1] : vector<16x128xf32> to vector<16xf32>
    %673 = vector.shape_cast %672 : vector<16xf32> to vector<16x1xf32>
    %cst_228 = arith.constant 9.99999993E-9 : f32
    %674 = vector.broadcast %cst_228 : f32 to vector<16x1xf32>
    %675 = arith.addf %673, %674 : vector<16x1xf32>
    %676 = vector.broadcast %675 : vector<16x1xf32> to vector<16x32xf32>
    %677 = arith.divf %671, %676 : vector<16x32xf32>
    %678 = arith.mulf %677, %677 : vector<16x32xf32>
    %cst_229 = arith.constant dense<0.000000e+00> : vector<16xf32>
    %679 = vector.multi_reduction <add>, %678, %cst_229 [1] : vector<16x32xf32> to vector<16xf32>
    %680 = vector.shape_cast %679 : vector<16xf32> to vector<16x1xf32>
    %681 = arith.addf %677, %677 : vector<16x32xf32>
    %682 = arith.truncf %681 : vector<16x32xf32> to vector<16x32xbf16>
    %cst_230 = arith.constant dense<0.000000e+00> : vector<16x128xf32>
    %683 = tpu.matmul %682, %423, %cst_230 {dimension_numbers = #tpu.dot_dimension_numbers<[1], [0], [0], [1], [0, 0, 1, 1], [], []>} : vector<16x32xbf16>, vector<32x128xbf16>, vector<16x128xf32> -> vector<16x128xf32>
    %684 = vector.broadcast %680 : vector<16x1xf32> to vector<16x128xf32>
    %685 = arith.subf %683, %684 : vector<16x128xf32>
    %cst_231 = arith.constant dense<0xFF800000> : vector<128xf32>
    %686 = vector.multi_reduction <maximumf>, %685, %cst_231 [0] : vector<16x128xf32> to vector<128xf32>
    %687 = vector.shape_cast %686 : vector<128xf32> to vector<1x128xf32>
    %688 = vector.broadcast %687 : vector<1x128xf32> to vector<16x128xf32>
    %689 = arith.subf %685, %688 : vector<16x128xf32>
    %690 = math.exp %689 : vector<16x128xf32>
    %cst_232 = arith.constant dense<0.000000e+00> : vector<128xf32>
    %691 = vector.multi_reduction <add>, %690, %cst_232 [0] : vector<16x128xf32> to vector<128xf32>
    %692 = vector.shape_cast %691 : vector<128xf32> to vector<1x128xf32>
    %cst_233 = arith.constant 1.000000e-16 : f32
    %693 = vector.broadcast %cst_233 : f32 to vector<1x128xf32>
    %694 = arith.addf %692, %693 : vector<1x128xf32>
    %695 = tpu.reciprocal %694 {approx = true} : vector<1x128xf32> -> vector<1x128xf32>
    %696 = vector.broadcast %695 : vector<1x128xf32> to vector<16x128xf32>
    %697 = arith.mulf %690, %696 : vector<16x128xf32>
    %698 = arith.truncf %697 : vector<16x128xf32> to vector<16x128xbf16>
    %cst_234 = arith.constant dense<0.000000e+00> : vector<16x32xf32>
    %699 = tpu.matmul %698, %423, %cst_234 {dimension_numbers = #tpu.dot_dimension_numbers<[1], [1], [0], [0], [0, 0, 1, 0], [], []>} : vector<16x128xbf16>, vector<32x128xbf16>, vector<16x32xf32> -> vector<16x32xf32>
    %cst_235 = arith.constant dense<0.000000e+00> : vector<16xf32>
    %700 = vector.multi_reduction <add>, %697, %cst_235 [1] : vector<16x128xf32> to vector<16xf32>
    %701 = vector.shape_cast %700 : vector<16xf32> to vector<16x1xf32>
    %cst_236 = arith.constant 9.99999993E-9 : f32
    %702 = vector.broadcast %cst_236 : f32 to vector<16x1xf32>
    %703 = arith.addf %701, %702 : vector<16x1xf32>
    %704 = vector.broadcast %703 : vector<16x1xf32> to vector<16x32xf32>
    %705 = arith.divf %699, %704 : vector<16x32xf32>
    %706 = arith.mulf %705, %705 : vector<16x32xf32>
    %cst_237 = arith.constant dense<0.000000e+00> : vector<16xf32>
    %707 = vector.multi_reduction <add>, %706, %cst_237 [1] : vector<16x32xf32> to vector<16xf32>
    %708 = vector.shape_cast %707 : vector<16xf32> to vector<16x1xf32>
    %709 = arith.addf %705, %705 : vector<16x32xf32>
    %710 = arith.truncf %709 : vector<16x32xf32> to vector<16x32xbf16>
    %cst_238 = arith.constant dense<0.000000e+00> : vector<16x128xf32>
    %711 = tpu.matmul %710, %423, %cst_238 {dimension_numbers = #tpu.dot_dimension_numbers<[1], [0], [0], [1], [0, 0, 1, 1], [], []>} : vector<16x32xbf16>, vector<32x128xbf16>, vector<16x128xf32> -> vector<16x128xf32>
    %712 = vector.broadcast %708 : vector<16x1xf32> to vector<16x128xf32>
    %713 = arith.subf %711, %712 : vector<16x128xf32>
    %cst_239 = arith.constant dense<0xFF800000> : vector<128xf32>
    %714 = vector.multi_reduction <maximumf>, %713, %cst_239 [0] : vector<16x128xf32> to vector<128xf32>
    %715 = vector.shape_cast %714 : vector<128xf32> to vector<1x128xf32>
    %716 = vector.broadcast %715 : vector<1x128xf32> to vector<16x128xf32>
    %717 = arith.subf %713, %716 : vector<16x128xf32>
    %718 = math.exp %717 : vector<16x128xf32>
    %cst_240 = arith.constant dense<0.000000e+00> : vector<128xf32>
    %719 = vector.multi_reduction <add>, %718, %cst_240 [0] : vector<16x128xf32> to vector<128xf32>
    %720 = vector.shape_cast %719 : vector<128xf32> to vector<1x128xf32>
    %cst_241 = arith.constant 1.000000e-16 : f32
    %721 = vector.broadcast %cst_241 : f32 to vector<1x128xf32>
    %722 = arith.addf %720, %721 : vector<1x128xf32>
    %723 = tpu.reciprocal %722 {approx = true} : vector<1x128xf32> -> vector<1x128xf32>
    %724 = vector.broadcast %723 : vector<1x128xf32> to vector<16x128xf32>
    %725 = arith.mulf %718, %724 : vector<16x128xf32>
    %c1_242 = arith.constant 1 : index
    %c0_243 = arith.constant 0 : index
    %c0_244 = arith.constant 0 : index
    %726 = vector.load %arg4[%c1_242, %c0_243, %c0_244] : memref<2x16x128xf32, #tpu.memory_space<vmem>>, vector<1x16x128xf32>
    %727 = vector.shape_cast %726 : vector<1x16x128xf32> to vector<16x128xf32>
    %728 = vector.shape_cast %725 : vector<16x128xf32> to vector<1x16x128xf32>
    tpu.vector_store %arg4[%c1_242, %c0_243, %c0_244], %728 {strides = array<i32>} : memref<2x16x128xf32, #tpu.memory_space<vmem>>, vector<1x16x128xf32>,
    %729 = tpu.transpose %705, [1, 0] : vector<16x32xf32> -> vector<32x16xf32>
    %c1_245 = arith.constant 1 : index
    %c0_246 = arith.constant 0 : index
    %c0_247 = arith.constant 0 : index
    %730 = vector.load %arg5[%c1_245, %c0_246, %c0_247] : memref<2x32x16xf32, #tpu.memory_space<vmem>>, vector<1x32x16xf32>
    %731 = vector.shape_cast %730 : vector<1x32x16xf32> to vector<32x16xf32>
    %732 = vector.shape_cast %729 : vector<32x16xf32> to vector<1x32x16xf32>
    tpu.vector_store %arg5[%c1_245, %c0_246, %c0_247], %732 {strides = array<i32>} : memref<2x32x16xf32, #tpu.memory_space<vmem>>, vector<1x32x16xf32>,
    return
  }
  func.func @transform_0(%arg0: i32) -> (i32, i32, i32) {
    %c0_i32 = arith.constant 0 : i32
    %c0_i32_0 = arith.constant 0 : i32
    %c0_i32_1 = arith.constant 0 : i32
    return %arg0, %c0_i32, %c0_i32_0 : i32, i32, i32
  }
  func.func @transform_1(%arg0: i32) -> (i32, i32, i32) {
    %c0_i32 = arith.constant 0 : i32
    %c0_i32_0 = arith.constant 0 : i32
    %c0_i32_1 = arith.constant 0 : i32
    %c0_i32_2 = arith.constant 0 : i32
    return %c0_i32, %c0_i32_0, %c0_i32_1 : i32, i32, i32
  }
  func.func @transform_2(%arg0: i32) -> (i32, i32, i32) {
    %c0_i32 = arith.constant 0 : i32
    %c0_i32_0 = arith.constant 0 : i32
    %c0_i32_1 = arith.constant 0 : i32
    %c0_i32_2 = arith.constant 0 : i32
    return %c0_i32, %c0_i32_0, %c0_i32_1 : i32, i32, i32
  }
  func.func @transform_3(%arg0: i32) -> (i32, i32, i32) {
    %c0_i32 = arith.constant 0 : i32
    %c0_i32_0 = arith.constant 0 : i32
    %c0_i32_1 = arith.constant 0 : i32
    return %arg0, %c0_i32, %c0_i32_0 : i32, i32, i32
  }
  func.func @transform_4(%arg0: i32) -> (i32, i32, i32) {
    %c0_i32 = arith.constant 0 : i32
    %c0_i32_0 = arith.constant 0 : i32
    %c0_i32_1 = arith.constant 0 : i32
    return %arg0, %c0_i32, %c0_i32_0 : i32, i32, i32
  }
  func.func @transform_5(%arg0: i32) -> (i32, i32, i32) {
    %c0_i32 = arith.constant 0 : i32
    %c0_i32_0 = arith.constant 0 : i32
    %c0_i32_1 = arith.constant 0 : i32
    return %arg0, %c0_i32, %c0_i32_0 : i32, i32, i32
  }
}

</mosaic_0001>

<llo_original>
// kernel: fused_forward.1
$region0: #{fused_forward.1}
  #allocation0 [shape = 'u32[]', space=smem, size = 0x4, offset = 0x4, fixed_abs, tag = 'smem constant byte address 0x4 - core index']
  #allocation1 [shape = 'u32[144,128]{1,0:T(1,128)}', space=vmem, size = 0x12000, scoped, tag = 'internal scratch']
  %s0 = inlined_call_operand.vmem [shape: f32[2,3,128], index: 0, kind: input, shape index: {}]
  %s1 = inlined_call_operand.vmem [shape: bf16[8,128,128], index: 1, kind: input, shape index: {}]
  %s2 = inlined_call_operand.vmem [shape: f32[8,128,1], index: 2, kind: input, shape index: {}]
  %s3 = inlined_call_operand.hbm [shape: f32[2,16,128], index: 3, kind: output, shape index: {0}]
  %s4 = inlined_call_operand.vmem [shape: f32[2,32,16], index: 4, kind: output, shape index: {1}]
  %s5 = inlined_call_operand.hbm [shape: f32[2,32,128], index: 5, kind: output, shape index: {2}]
  %6 = xla_tuple %s3, %s4, %s5
  %s7 = sld [smem:[#allocation0]]
  $region38: #{fused_forward.1} parent=0
    _
  %s9 = ssub.s32 1, %s7
  %s10 = scalar_select 0, %s9, %s7
  $region1: #{fused_forward.1} parent=0
    #allocation2 [shape = 'u8[16384]{0}', space=vmem, size = 0x4000, scoped, tag = 'output window, operand 0, single buffered']
    #allocation3 [shape = 's32[1]{0}', space=sflag, size = 0x4, scoped, tag = 'scoped memory for fused_forward.1']
    #allocation4 [shape = 'u8[32768]{0}', space=vmem, size = 0x8000, scoped, tag = 'output window, operand 2, single buffered']
    #allocation5 [shape = 's32[1]{0}', space=sflag, size = 0x4, scoped, tag = 'scoped memory for fused_forward.1']
    %11 = vsyncpa [#allocation3], 0
    %12 = vsyncpa [#allocation5], 0
    // Predicated region
    $region2: #{fused_forward.1} parent=1 // pred_check
      _
    $region3: #{fused_forward.1} parent=1 // pred_check_branch
      %14 = sbr.rel (0) target = $region5
    $region4: #{fused_forward.1} parent=1 // pred_region
      _
    $region5: #{fused_forward.1} parent=1 // pred_fallthru
      _
    // Predicated region
    $region6: #{fused_forward.1} parent=1 // pred_check
      _
    $region7: #{fused_forward.1} parent=1 // pred_check_branch
      %16 = sbr.rel (0) target = $region9
    $region8: #{fused_forward.1} parent=1 // pred_region
      _
    $region9: #{fused_forward.1} parent=1 // pred_fallthru
      _
    // Predicated region
    $region10: #{fused_forward.1} parent=1 // pred_check
      _
    $region11: #{fused_forward.1} parent=1 // pred_check_branch
      %18 = sbr.rel (0) target = $region13
    $region12: #{fused_forward.1} parent=1 // pred_region
      _
    $region13: #{fused_forward.1} parent=1 // pred_fallthru
      _
    %v20 = vld [vmem:[%s0] sm:$0x7]
    %s21 = scalar_lea.vmem %s0, 4
    %v22 = vld [vmem:[%s21] sm:$0x7]
    %v23 = vld [vmem:[%s1] sm:$0xf]
    %v24 = vld [vmem:[%s1 + $0x4] sm:$0xf]
    %v25 = vld [vmem:[%s1 + $0x8] sm:$0xf]
    %v26 = vld [vmem:[%s1 + $0xc] sm:$0xf]
    %v27 = vld [vmem:[%s1 + $0x10] sm:$0xf]
    %v28 = vld [vmem:[%s1 + $0x14] sm:$0xf]
    %v29 = vld [vmem:[%s1 + $0x18] sm:$0xf]
    %v30 = vld [vmem:[%s1 + $0x1c] sm:$0xf]
    %v31 = vld [vmem:[%s1 + $0x20] sm:$0xf]
    %v32 = vld [vmem:[%s1 + $0x24] sm:$0xf]
    %v33 = vld [vmem:[%s1 + $0x28] sm:$0xf]
    %v34 = vld [vmem:[%s1 + $0x2c] sm:$0xf]
    %v35 = vld [vmem:[%s1 + $0x30] sm:$0xf]
    %v36 = vld [vmem:[%s1 + $0x34] sm:$0xf]
    %v37 = vld [vmem:[%s1 + $0x38] sm:$0xf]
    %v38 = vld [vmem:[%s1 + $0x3c] sm:$0xf]
    %v39 = vld [vmem:[%s2] sm:$0xff]
    %v40 = vld [vmem:[%s2 + $0x8] sm:$0xff]
    %v41 = vld [vmem:[%s2 + $0x10] sm:$0xff]
    %v42 = vld [vmem:[%s2 + $0x18] sm:$0xff]
    %v43 = vld [vmem:[%s2 + $0x20] sm:$0xff]
    %v44 = vld [vmem:[%s2 + $0x28] sm:$0xff]
    %v45 = vld [vmem:[%s2 + $0x30] sm:$0xff]
    %v46 = vld [vmem:[%s2 + $0x38] sm:$0xff]
    %v47 = vld [vmem:[%s2 + $0x40] sm:$0xff]
    %v48 = vld [vmem:[%s2 + $0x48] sm:$0xff]
    %v49 = vld [vmem:[%s2 + $0x50] sm:$0xff]
    %v50 = vld [vmem:[%s2 + $0x58] sm:$0xff]
    %v51 = vld [vmem:[%s2 + $0x60] sm:$0xff]
    %v52 = vld [vmem:[%s2 + $0x68] sm:$0xff]
    %v53 = vld [vmem:[%s2 + $0x70] sm:$0xff]
    %v54 = vld [vmem:[%s2 + $0x78] sm:$0xff]
    %v55 = vunpack.c.l.bf16 %v23
    %v56 = vunpack.c.l.bf16 %v24
    %v57 = vunpack.c.l.bf16 %v25
    %v58 = vunpack.c.l.bf16 %v26
    %v59 = vunpack.c.l.bf16 %v27
    %v60 = vunpack.c.l.bf16 %v28
    %v61 = vunpack.c.l.bf16 %v29
    %v62 = vunpack.c.l.bf16 %v30
    %v63 = vunpack.c.l.bf16 %v31
    %v64 = vunpack.c.l.bf16 %v32
    %v65 = vunpack.c.l.bf16 %v33
    %v66 = vunpack.c.l.bf16 %v34
    %v67 = vunpack.c.l.bf16 %v35
    %v68 = vunpack.c.l.bf16 %v36
    %v69 = vunpack.c.l.bf16 %v37
    %v70 = vunpack.c.l.bf16 %v38
    %72 = vset.pattern.permute.xlu0 0
    %73 = vperm.xlu0 %72, %v55
    %v74 = vpop.permute.xlu0 %73
    %77 = vset.pattern.permute.xlu0 0
    %78 = vperm.xlu0 %77, %v56
    %v79 = vpop.permute.xlu0 %78
    %82 = vset.pattern.permute.xlu0 0
    %83 = vperm.xlu0 %82, %v57
    %v84 = vpop.permute.xlu0 %83
    %87 = vset.pattern.permute.xlu0 0
    %88 = vperm.xlu0 %87, %v58
    %v89 = vpop.permute.xlu0 %88
    %92 = vset.pattern.permute.xlu0 0
    %93 = vperm.xlu0 %92, %v59
    %v94 = vpop.permute.xlu0 %93
    %97 = vset.pattern.permute.xlu0 0
    %98 = vperm.xlu0 %97, %v60
    %v99 = vpop.permute.xlu0 %98
    %102 = vset.pattern.permute.xlu0 0
    %103 = vperm.xlu0 %102, %v61
    %v104 = vpop.permute.xlu0 %103
    %107 = vset.pattern.permute.xlu0 0
    %108 = vperm.xlu0 %107, %v62
    %v109 = vpop.permute.xlu0 %108
    %112 = vset.pattern.permute.xlu0 0
    %113 = vperm.xlu0 %112, %v63
    %v114 = vpop.permute.xlu0 %113
    %117 = vset.pattern.permute.xlu0 0
    %118 = vperm.xlu0 %117, %v64
    %v119 = vpop.permute.xlu0 %118
    %122 = vset.pattern.permute.xlu0 0
    %123 = vperm.xlu0 %122, %v65
    %v124 = vpop.permute.xlu0 %123
    %127 = vset.pattern.permute.xlu0 0
    %128 = vperm.xlu0 %127, %v66
    %v129 = vpop.permute.xlu0 %128
    %132 = vset.pattern.permute.xlu0 0
    %133 = vperm.xlu0 %132, %v67
    %v134 = vpop.permute.xlu0 %133
    %137 = vset.pattern.permute.xlu0 0
    %138 = vperm.xlu0 %137, %v68
    %v139 = vpop.permute.xlu0 %138
    %142 = vset.pattern.permute.xlu0 0
    %143 = vperm.xlu0 %142, %v69
    %v144 = vpop.permute.xlu0 %143
    %147 = vset.pattern.permute.xlu0 0
    %148 = vperm.xlu0 %147, %v70
    %v149 = vpop.permute.xlu0 %148
    %v151 = vlaneseq
    %v152 = vshrl.u32 %v151, 7
    %v153 = vsub.s32 0, %v152
    %v154 = vrot.slane %v20, %v153
    %v155 = vlaneseq
    %v156 = vshrl.u32 %v155, 7
    %v157 = vsub.s32 0, %v156
    %v158 = vrot.slane %v22, %v157
    %v159 = vmul.f32 %v74, %v154
    %v160 = vmul.f32 %v74, %v158
    %v161 = vmul.f32 %v79, %v154
    %v162 = vmul.f32 %v79, %v158
    %v163 = vmul.f32 %v84, %v154
    %v164 = vmul.f32 %v84, %v158
    %v165 = vmul.f32 %v89, %v154
    %v166 = vmul.f32 %v89, %v158
    %v167 = vmul.f32 %v94, %v154
    %v168 = vmul.f32 %v94, %v158
    %v169 = vmul.f32 %v99, %v154
    %v170 = vmul.f32 %v99, %v158
    %v171 = vmul.f32 %v104, %v154
    %v172 = vmul.f32 %v104, %v158
    %v173 = vmul.f32 %v109, %v154
    %v174 = vmul.f32 %v109, %v158
    %v175 = vmul.f32 %v114, %v154
    %v176 = vmul.f32 %v114, %v158
    %v177 = vmul.f32 %v119, %v154
    %v178 = vmul.f32 %v119, %v158
    %v179 = vmul.f32 %v124, %v154
    %v180 = vmul.f32 %v124, %v158
    %v181 = vmul.f32 %v129, %v154
    %v182 = vmul.f32 %v129, %v158
    %v183 = vmul.f32 %v134, %v154
    %v184 = vmul.f32 %v134, %v158
    %v185 = vmul.f32 %v139, %v154
    %v186 = vmul.f32 %v139, %v158
    %v187 = vmul.f32 %v144, %v154
    %v188 = vmul.f32 %v144, %v158
    %v189 = vmul.f32 %v149, %v154
    %v190 = vmul.f32 %v149, %v158
    %v191 = vadd.f32 %v159, 0.0
    %v192 = vadd.f32 %v160, 0.0
    %v193 = vadd.f32 %v161, 0.0
    %v194 = vadd.f32 %v162, 0.0
    %v195 = vadd.f32 %v163, 0.0
    %v196 = vadd.f32 %v164, 0.0
    %v197 = vadd.f32 %v165, 0.0
    %v198 = vadd.f32 %v166, 0.0
    %v199 = vadd.f32 %v167, 0.0
    %v200 = vadd.f32 %v168, 0.0
    %v201 = vadd.f32 %v169, 0.0
    %v202 = vadd.f32 %v170, 0.0
    %v203 = vadd.f32 %v171, 0.0
    %v204 = vadd.f32 %v172, 0.0
    %v205 = vadd.f32 %v173, 0.0
    %v206 = vadd.f32 %v174, 0.0
    %v207 = vadd.f32 %v175, 0.0
    %v208 = vadd.f32 %v176, 0.0
    %v209 = vadd.f32 %v177, 0.0
    %v210 = vadd.f32 %v178, 0.0
    %v211 = vadd.f32 %v179, 0.0
    %v212 = vadd.f32 %v180, 0.0
    %v213 = vadd.f32 %v181, 0.0
    %v214 = vadd.f32 %v182, 0.0
    %v215 = vadd.f32 %v183, 0.0
    %v216 = vadd.f32 %v184, 0.0
    %v217 = vadd.f32 %v185, 0.0
    %v218 = vadd.f32 %v186, 0.0
    %v219 = vadd.f32 %v187, 0.0
    %v220 = vadd.f32 %v188, 0.0
    %v221 = vadd.f32 %v189, 0.0
    %v222 = vadd.f32 %v190, 0.0
    %223 = vset.pattern.permute.xlu0 1
    %224 = vperm.xlu0 %223, %v55
    %v225 = vpop.permute.xlu0 %224
    %227 = vset.pattern.permute.xlu0 1
    %228 = vperm.xlu0 %227, %v56
    %v229 = vpop.permute.xlu0 %228
    %231 = vset.pattern.permute.xlu0 1
    %232 = vperm.xlu0 %231, %v57
    %v233 = vpop.permute.xlu0 %232
    %235 = vset.pattern.permute.xlu0 1
    %236 = vperm.xlu0 %235, %v58
    %v237 = vpop.permute.xlu0 %236
    %239 = vset.pattern.permute.xlu0 1
    %240 = vperm.xlu0 %239, %v59
    %v241 = vpop.permute.xlu0 %240
    %243 = vset.pattern.permute.xlu0 1
    %244 = vperm.xlu0 %243, %v60
    %v245 = vpop.permute.xlu0 %244
    %247 = vset.pattern.permute.xlu0 1
    %248 = vperm.xlu0 %247, %v61
    %v249 = vpop.permute.xlu0 %248
    %251 = vset.pattern.permute.xlu0 1
    %252 = vperm.xlu0 %251, %v62
    %v253 = vpop.permute.xlu0 %252
    %255 = vset.pattern.permute.xlu0 1
    %256 = vperm.xlu0 %255, %v63
    %v257 = vpop.permute.xlu0 %256
    %259 = vset.pattern.permute.xlu0 1
    %260 = vperm.xlu0 %259, %v64
    %v261 = vpop.permute.xlu0 %260
    %263 = vset.pattern.permute.xlu0 1
    %264 = vperm.xlu0 %263, %v65
    %v265 = vpop.permute.xlu0 %264
    %267 = vset.pattern.permute.xlu0 1
    %268 = vperm.xlu0 %267, %v66
    %v269 = vpop.permute.xlu0 %268
    %271 = vset.pattern.permute.xlu0 1
    %272 = vperm.xlu0 %271, %v67
    %v273 = vpop.permute.xlu0 %272
    %275 = vset.pattern.permute.xlu0 1
    %276 = vperm.xlu0 %275, %v68
    %v277 = vpop.permute.xlu0 %276
    %279 = vset.pattern.permute.xlu0 1
    %280 = vperm.xlu0 %279, %v69
    %v281 = vpop.permute.xlu0 %280
    %283 = vset.pattern.permute.xlu0 1
    %284 = vperm.xlu0 %283, %v70
    %v285 = vpop.permute.xlu0 %284
    %v287 = vlaneseq
    %v288 = vshrl.u32 %v287, 7
    %v289 = vsub.s32 1, %v288
    %v290 = vrot.slane %v20, %v289
    %v291 = vlaneseq
    %v292 = vshrl.u32 %v291, 7
    %v293 = vsub.s32 1, %v292
    %v294 = vrot.slane %v22, %v293
    %v295 = vmul.f32 %v225, %v290
    %v296 = vmul.f32 %v225, %v294
    %v297 = vmul.f32 %v229, %v290
    %v298 = vmul.f32 %v229, %v294
    %v299 = vmul.f32 %v233, %v290
    %v300 = vmul.f32 %v233, %v294
    %v301 = vmul.f32 %v237, %v290
    %v302 = vmul.f32 %v237, %v294
    %v303 = vmul.f32 %v241, %v290
    %v304 = vmul.f32 %v241, %v294
    %v305 = vmul.f32 %v245, %v290
    %v306 = vmul.f32 %v245, %v294
    %v307 = vmul.f32 %v249, %v290
    %v308 = vmul.f32 %v249, %v294
    %v309 = vmul.f32 %v253, %v290
    %v310 = vmul.f32 %v253, %v294
    %v311 = vmul.f32 %v257, %v290
    %v312 = vmul.f32 %v257, %v294
    %v313 = vmul.f32 %v261, %v290
    %v314 = vmul.f32 %v261, %v294
    %v315 = vmul.f32 %v265, %v290
    %v316 = vmul.f32 %v265, %v294
    %v317 = vmul.f32 %v269, %v290
    %v318 = vmul.f32 %v269, %v294
    %v319 = vmul.f32 %v273, %v290
    %v320 = vmul.f32 %v273, %v294
    %v321 = vmul.f32 %v277, %v290
    %v322 = vmul.f32 %v277, %v294
    %v323 = vmul.f32 %v281, %v290
    %v324 = vmul.f32 %v281, %v294
    %v325 = vmul.f32 %v285, %v290
    %v326 = vmul.f32 %v285, %v294
    %v327 = vadd.f32 %v191, %v295
    %v328 = vadd.f32 %v192, %v296
    %v329 = vadd.f32 %v193, %v297
    %v330 = vadd.f32 %v194, %v298
    %v331 = vadd.f32 %v195, %v299
    %v332 = vadd.f32 %v196, %v300
    %v333 = vadd.f32 %v197, %v301
    %v334 = vadd.f32 %v198, %v302
    %v335 = vadd.f32 %v199, %v303
    %v336 = vadd.f32 %v200, %v304
    %v337 = vadd.f32 %v201, %v305
    %v338 = vadd.f32 %v202, %v306
    %v339 = vadd.f32 %v203, %v307
    %v340 = vadd.f32 %v204, %v308
    %v341 = vadd.f32 %v205, %v309
    %v342 = vadd.f32 %v206, %v310
    %v343 = vadd.f32 %v207, %v311
    %v344 = vadd.f32 %v208, %v312
    %v345 = vadd.f32 %v209, %v313
    %v346 = vadd.f32 %v210, %v314
    %v347 = vadd.f32 %v211, %v315
    %v348 = vadd.f32 %v212, %v316
    %v349 = vadd.f32 %v213, %v317
    %v350 = vadd.f32 %v214, %v318
    %v351 = vadd.f32 %v215, %v319
    %v352 = vadd.f32 %v216, %v320
    %v353 = vadd.f32 %v217, %v321
    %v354 = vadd.f32 %v218, %v322
    %v355 = vadd.f32 %v219, %v323
    %v356 = vadd.f32 %v220, %v324
    %v357 = vadd.f32 %v221, %v325
    %v358 = vadd.f32 %v222, %v326
    %359 = vset.pattern.permute.xlu0 2
    %360 = vperm.xlu0 %359, %v55
    %v361 = vpop.permute.xlu0 %360
    %363 = vset.pattern.permute.xlu0 2
    %364 = vperm.xlu0 %363, %v56
    %v365 = vpop.permute.xlu0 %364
    %367 = vset.pattern.permute.xlu0 2
    %368 = vperm.xlu0 %367, %v57
    %v369 = vpop.permute.xlu0 %368
    %371 = vset.pattern.permute.xlu0 2
    %372 = vperm.xlu0 %371, %v58
    %v373 = vpop.permute.xlu0 %372
    %375 = vset.pattern.permute.xlu0 2
    %376 = vperm.xlu0 %375, %v59
    %v377 = vpop.permute.xlu0 %376
    %379 = vset.pattern.permute.xlu0 2
    %380 = vperm.xlu0 %379, %v60
    %v381 = vpop.permute.xlu0 %380
    %383 = vset.pattern.permute.xlu0 2
    %384 = vperm.xlu0 %383, %v61
    %v385 = vpop.permute.xlu0 %384
    %387 = vset.pattern.permute.xlu0 2
    %388 = vperm.xlu0 %387, %v62
    %v389 = vpop.permute.xlu0 %388
    %391 = vset.pattern.permute.xlu0 2
    %392 = vperm.xlu0 %391, %v63
    %v393 = vpop.permute.xlu0 %392
    %395 = vset.pattern.permute.xlu0 2
    %396 = vperm.xlu0 %395, %v64
    %v397 = vpop.permute.xlu0 %396
    %399 = vset.pattern.permute.xlu0 2
    %400 = vperm.xlu0 %399, %v65
    %v401 = vpop.permute.xlu0 %400
    %403 = vset.pattern.permute.xlu0 2
    %404 = vperm.xlu0 %403, %v66
    %v405 = vpop.permute.xlu0 %404
    %407 = vset.pattern.permute.xlu0 2
    %408 = vperm.xlu0 %407, %v67
    %v409 = vpop.permute.xlu0 %408
    %411 = vset.pattern.permute.xlu0 2
    %412 = vperm.xlu0 %411, %v68
    %v413 = vpop.permute.xlu0 %412
    %415 = vset.pattern.permute.xlu0 2
    %416 = vperm.xlu0 %415, %v69
    %v417 = vpop.permute.xlu0 %416
    %419 = vset.pattern.permute.xlu0 2
    %420 = vperm.xlu0 %419, %v70
    %v421 = vpop.permute.xlu0 %420
    %v423 = vlaneseq
    %v424 = vshrl.u32 %v423, 7
    %v425 = vsub.s32 2, %v424
    %v426 = vrot.slane %v20, %v425
    %v427 = vlaneseq
    %v428 = vshrl.u32 %v427, 7
    %v429 = vsub.s32 2, %v428
    %v430 = vrot.slane %v22, %v429
    %v431 = vmul.f32 %v361, %v426
    %v432 = vmul.f32 %v361, %v430
    %v433 = vmul.f32 %v365, %v426
    %v434 = vmul.f32 %v365, %v430
    %v435 = vmul.f32 %v369, %v426
    %v436 = vmul.f32 %v369, %v430
    %v437 = vmul.f32 %v373, %v426
    %v438 = vmul.f32 %v373, %v430
    %v439 = vmul.f32 %v377, %v426
    %v440 = vmul.f32 %v377, %v430
    %v441 = vmul.f32 %v381, %v426
    %v442 = vmul.f32 %v381, %v430
    %v443 = vmul.f32 %v385, %v426
    %v444 = vmul.f32 %v385, %v430
    %v445 = vmul.f32 %v389, %v426
    %v446 = vmul.f32 %v389, %v430
    %v447 = vmul.f32 %v393, %v426
    %v448 = vmul.f32 %v393, %v430
    %v449 = vmul.f32 %v397, %v426
    %v450 = vmul.f32 %v397, %v430
    %v451 = vmul.f32 %v401, %v426
    %v452 = vmul.f32 %v401, %v430
    %v453 = vmul.f32 %v405, %v426
    %v454 = vmul.f32 %v405, %v430
    %v455 = vmul.f32 %v409, %v426
    %v456 = vmul.f32 %v409, %v430
    %v457 = vmul.f32 %v413, %v426
    %v458 = vmul.f32 %v413, %v430
    %v459 = vmul.f32 %v417, %v426
    %v460 = vmul.f32 %v417, %v430
    %v461 = vmul.f32 %v421, %v426
    %v462 = vmul.f32 %v421, %v430
    %v463 = vadd.f32 %v327, %v431
    %v464 = vadd.f32 %v328, %v432
    %v465 = vadd.f32 %v329, %v433
    %v466 = vadd.f32 %v330, %v434
    %v467 = vadd.f32 %v331, %v435
    %v468 = vadd.f32 %v332, %v436
    %v469 = vadd.f32 %v333, %v437
    %v470 = vadd.f32 %v334, %v438
    %v471 = vadd.f32 %v335, %v439
    %v472 = vadd.f32 %v336, %v440
    %v473 = vadd.f32 %v337, %v441
    %v474 = vadd.f32 %v338, %v442
    %v475 = vadd.f32 %v339, %v443
    %v476 = vadd.f32 %v340, %v444
    %v477 = vadd.f32 %v341, %v445
    %v478 = vadd.f32 %v342, %v446
    %v479 = vadd.f32 %v343, %v447
    %v480 = vadd.f32 %v344, %v448
    %v481 = vadd.f32 %v345, %v449
    %v482 = vadd.f32 %v346, %v450
    %v483 = vadd.f32 %v347, %v451
    %v484 = vadd.f32 %v348, %v452
    %v485 = vadd.f32 %v349, %v453
    %v486 = vadd.f32 %v350, %v454
    %v487 = vadd.f32 %v351, %v455
    %v488 = vadd.f32 %v352, %v456
    %v489 = vadd.f32 %v353, %v457
    %v490 = vadd.f32 %v354, %v458
    %v491 = vadd.f32 %v355, %v459
    %v492 = vadd.f32 %v356, %v460
    %v493 = vadd.f32 %v357, %v461
    %v494 = vadd.f32 %v358, %v462
    %496 = vset.pattern.permute.xlu0 0
    %497 = vperm.xlu0 %496, %v39
    %v498 = vpop.permute.xlu0 %497
    %501 = vset.pattern.permute.xlu0 0
    %502 = vperm.xlu0 %501, %v40
    %v503 = vpop.permute.xlu0 %502
    %506 = vset.pattern.permute.xlu0 0
    %507 = vperm.xlu0 %506, %v41
    %v508 = vpop.permute.xlu0 %507
    %511 = vset.pattern.permute.xlu0 0
    %512 = vperm.xlu0 %511, %v42
    %v513 = vpop.permute.xlu0 %512
    %516 = vset.pattern.permute.xlu0 0
    %517 = vperm.xlu0 %516, %v43
    %v518 = vpop.permute.xlu0 %517
    %521 = vset.pattern.permute.xlu0 0
    %522 = vperm.xlu0 %521, %v44
    %v523 = vpop.permute.xlu0 %522
    %526 = vset.pattern.permute.xlu0 0
    %527 = vperm.xlu0 %526, %v45
    %v528 = vpop.permute.xlu0 %527
    %531 = vset.pattern.permute.xlu0 0
    %532 = vperm.xlu0 %531, %v46
    %v533 = vpop.permute.xlu0 %532
    %536 = vset.pattern.permute.xlu0 0
    %537 = vperm.xlu0 %536, %v47
    %v538 = vpop.permute.xlu0 %537
    %541 = vset.pattern.permute.xlu0 0
    %542 = vperm.xlu0 %541, %v48
    %v543 = vpop.permute.xlu0 %542
    %546 = vset.pattern.permute.xlu0 0
    %547 = vperm.xlu0 %546, %v49
    %v548 = vpop.permute.xlu0 %547
    %551 = vset.pattern.permute.xlu0 0
    %552 = vperm.xlu0 %551, %v50
    %v553 = vpop.permute.xlu0 %552
    %556 = vset.pattern.permute.xlu0 0
    %557 = vperm.xlu0 %556, %v51
    %v558 = vpop.permute.xlu0 %557
    %561 = vset.pattern.permute.xlu0 0
    %562 = vperm.xlu0 %561, %v52
    %v563 = vpop.permute.xlu0 %562
    %566 = vset.pattern.permute.xlu0 0
    %567 = vperm.xlu0 %566, %v53
    %v568 = vpop.permute.xlu0 %567
    %571 = vset.pattern.permute.xlu0 0
    %572 = vperm.xlu0 %571, %v54
    %v573 = vpop.permute.xlu0 %572
    %v575 = vadd.f32 %v463, %v498
    %v576 = vadd.f32 %v464, %v498
    %v577 = vadd.f32 %v465, %v503
    %v578 = vadd.f32 %v466, %v503
    %v579 = vadd.f32 %v467, %v508
    %v580 = vadd.f32 %v468, %v508
    %v581 = vadd.f32 %v469, %v513
    %v582 = vadd.f32 %v470, %v513
    %v583 = vadd.f32 %v471, %v518
    %v584 = vadd.f32 %v472, %v518
    %v585 = vadd.f32 %v473, %v523
    %v586 = vadd.f32 %v474, %v523
    %v587 = vadd.f32 %v475, %v528
    %v588 = vadd.f32 %v476, %v528
    %v589 = vadd.f32 %v477, %v533
    %v590 = vadd.f32 %v478, %v533
    %v591 = vadd.f32 %v479, %v538
    %v592 = vadd.f32 %v480, %v538
    %v593 = vadd.f32 %v481, %v543
    %v594 = vadd.f32 %v482, %v543
    %v595 = vadd.f32 %v483, %v548
    %v596 = vadd.f32 %v484, %v548
    %v597 = vadd.f32 %v485, %v553
    %v598 = vadd.f32 %v486, %v553
    %v599 = vadd.f32 %v487, %v558
    %v600 = vadd.f32 %v488, %v558
    %v601 = vadd.f32 %v489, %v563
    %v602 = vadd.f32 %v490, %v563
    %v603 = vadd.f32 %v491, %v568
    %v604 = vadd.f32 %v492, %v568
    %v605 = vadd.f32 %v493, %v573
    %v606 = vadd.f32 %v494, %v573
    %v607 = vmax.f32 %v575, 0.0
    %v608 = vmax.f32 %v576, 0.0
    %v609 = vmax.f32 %v577, 0.0
    %v610 = vmax.f32 %v578, 0.0
    %v611 = vmax.f32 %v579, 0.0
    %v612 = vmax.f32 %v580, 0.0
    %v613 = vmax.f32 %v581, 0.0
    %v614 = vmax.f32 %v582, 0.0
    %v615 = vmax.f32 %v583, 0.0
    %v616 = vmax.f32 %v584, 0.0
    %v617 = vmax.f32 %v585, 0.0
    %v618 = vmax.f32 %v586, 0.0
    %v619 = vmax.f32 %v587, 0.0
    %v620 = vmax.f32 %v588, 0.0
    %v621 = vmax.f32 %v589, 0.0
    %v622 = vmax.f32 %v590, 0.0
    %v623 = vmax.f32 %v591, 0.0
    %v624 = vmax.f32 %v592, 0.0
    %v625 = vmax.f32 %v593, 0.0
    %v626 = vmax.f32 %v594, 0.0
    %v627 = vmax.f32 %v595, 0.0
    %v628 = vmax.f32 %v596, 0.0
    %v629 = vmax.f32 %v597, 0.0
    %v630 = vmax.f32 %v598, 0.0
    %v631 = vmax.f32 %v599, 0.0
    %v632 = vmax.f32 %v600, 0.0
    %v633 = vmax.f32 %v601, 0.0
    %v634 = vmax.f32 %v602, 0.0
    %v635 = vmax.f32 %v603, 0.0
    %v636 = vmax.f32 %v604, 0.0
    %v637 = vmax.f32 %v605, 0.0
    %v638 = vmax.f32 %v606, 0.0
    %s639 = scalar_lea.vmem %s1, 64
    %v640 = vld [vmem:[%s639] sm:$0xf]
    %v641 = vld [vmem:[%s639 + $0x4] sm:$0xf]
    %v642 = vld [vmem:[%s639 + $0x8] sm:$0xf]
    %v643 = vld [vmem:[%s639 + $0xc] sm:$0xf]
    %v644 = vld [vmem:[%s639 + $0x10] sm:$0xf]
    %v645 = vld [vmem:[%s639 + $0x14] sm:$0xf]
    %v646 = vld [vmem:[%s639 + $0x18] sm:$0xf]
    %v647 = vld [vmem:[%s639 + $0x1c] sm:$0xf]
    %v648 = vld [vmem:[%s639 + $0x20] sm:$0xf]
    %v649 = vld [vmem:[%s639 + $0x24] sm:$0xf]
    %v650 = vld [vmem:[%s639 + $0x28] sm:$0xf]
    %v651 = vld [vmem:[%s639 + $0x2c] sm:$0xf]
    %v652 = vld [vmem:[%s639 + $0x30] sm:$0xf]
    %v653 = vld [vmem:[%s639 + $0x34] sm:$0xf]
    %v654 = vld [vmem:[%s639 + $0x38] sm:$0xf]
    %v655 = vld [vmem:[%s639 + $0x3c] sm:$0xf]
    %s656 = scalar_lea.vmem %s2, 128
    %v657 = vld [vmem:[%s656] sm:$0xff]
    %v658 = vld [vmem:[%s656 + $0x8] sm:$0xff]
    %v659 = vld [vmem:[%s656 + $0x10] sm:$0xff]
    %v660 = vld [vmem:[%s656 + $0x18] sm:$0xff]
    %v661 = vld [vmem:[%s656 + $0x20] sm:$0xff]
    %v662 = vld [vmem:[%s656 + $0x28] sm:$0xff]
    %v663 = vld [vmem:[%s656 + $0x30] sm:$0xff]
    %v664 = vld [vmem:[%s656 + $0x38] sm:$0xff]
    %v665 = vld [vmem:[%s656 + $0x40] sm:$0xff]
    %v666 = vld [vmem:[%s656 + $0x48] sm:$0xff]
    %v667 = vld [vmem:[%s656 + $0x50] sm:$0xff]
    %v668 = vld [vmem:[%s656 + $0x58] sm:$0xff]
    %v669 = vld [vmem:[%s656 + $0x60] sm:$0xff]
    %v670 = vld [vmem:[%s656 + $0x68] sm:$0xff]
    %v671 = vld [vmem:[%s656 + $0x70] sm:$0xff]
    %v672 = vld [vmem:[%s656 + $0x78] sm:$0xff]
    %v673 = vpack.c.bf16 %v609, %v607
    %v674 = vpack.c.bf16 %v610, %v608
    %v675 = vpack.c.bf16 %v613, %v611
    %v676 = vpack.c.bf16 %v614, %v612
    %v677 = vpack.c.bf16 %v617, %v615
    %v678 = vpack.c.bf16 %v618, %v616
    %v679 = vpack.c.bf16 %v621, %v619
    %v680 = vpack.c.bf16 %v622, %v620
    %v681 = vpack.c.bf16 %v625, %v623
    %v682 = vpack.c.bf16 %v626, %v624
    %v683 = vpack.c.bf16 %v629, %v627
    %v684 = vpack.c.bf16 %v630, %v628
    %v685 = vpack.c.bf16 %v633, %v631
    %v686 = vpack.c.bf16 %v634, %v632
    %v687 = vpack.c.bf16 %v637, %v635
    %v688 = vpack.c.bf16 %v638, %v636
    %690 = vset.pattern.permute.xlu0 0
    %691 = vperm.xlu0 %690, %v657
    %v692 = vpop.permute.xlu0 %691
    %695 = vset.pattern.permute.xlu0 0
    %696 = vperm.xlu0 %695, %v658
    %v697 = vpop.permute.xlu0 %696
    %700 = vset.pattern.permute.xlu0 0
    %701 = vperm.xlu0 %700, %v659
    %v702 = vpop.permute.xlu0 %701
    %705 = vset.pattern.permute.xlu0 0
    %706 = vperm.xlu0 %705, %v660
    %v707 = vpop.permute.xlu0 %706
    %710 = vset.pattern.permute.xlu0 0
    %711 = vperm.xlu0 %710, %v661
    %v712 = vpop.permute.xlu0 %711
    %715 = vset.pattern.permute.xlu0 0
    %716 = vperm.xlu0 %715, %v662
    %v717 = vpop.permute.xlu0 %716
    %720 = vset.pattern.permute.xlu0 0
    %721 = vperm.xlu0 %720, %v663
    %v722 = vpop.permute.xlu0 %721
    %725 = vset.pattern.permute.xlu0 0
    %726 = vperm.xlu0 %725, %v664
    %v727 = vpop.permute.xlu0 %726
    %730 = vset.pattern.permute.xlu0 0
    %731 = vperm.xlu0 %730, %v665
    %v732 = vpop.permute.xlu0 %731
    %735 = vset.pattern.permute.xlu0 0
    %736 = vperm.xlu0 %735, %v666
    %v737 = vpop.permute.xlu0 %736
    %740 = vset.pattern.permute.xlu0 0
    %741 = vperm.xlu0 %740, %v667
    %v742 = vpop.permute.xlu0 %741
    %745 = vset.pattern.permute.xlu0 0
    %746 = vperm.xlu0 %745, %v668
    %v747 = vpop.permute.xlu0 %746
    %750 = vset.pattern.permute.xlu0 0
    %751 = vperm.xlu0 %750, %v669
    %v752 = vpop.permute.xlu0 %751
    %755 = vset.pattern.permute.xlu0 0
    %756 = vperm.xlu0 %755, %v670
    %v757 = vpop.permute.xlu0 %756
    %760 = vset.pattern.permute.xlu0 0
    %761 = vperm.xlu0 %760, %v671
    %v762 = vpop.permute.xlu0 %761
    %765 = vset.pattern.permute.xlu0 0
    %766 = vperm.xlu0 %765, %v672
    %v767 = vpop.permute.xlu0 %766
    %v785 = vunpack.c.l.b16 %v640
    %v786 = vunpack.c.l.b16 %v641
    %v787 = vunpack.c.l.b16 %v642
    %v788 = vunpack.c.l.b16 %v643
    %v789 = vunpack.c.l.b16 %v644
    %v790 = vunpack.c.l.b16 %v645
    %v791 = vunpack.c.l.b16 %v646
    %v792 = vunpack.c.l.b16 %v647
    %v793 = vunpack.c.l.b16 %v648
    %v794 = vunpack.c.l.b16 %v649
    %v795 = vunpack.c.l.b16 %v650
    %v796 = vunpack.c.l.b16 %v651
    %v797 = vunpack.c.l.b16 %v652
    %v798 = vunpack.c.l.b16 %v653
    %v799 = vunpack.c.l.b16 %v654
    %v800 = vunpack.c.l.b16 %v655
    %v801 = vpack.c.b16 %v786, %v785
    %v802 = vpack.c.b16 %v788, %v787
    %v803 = vpack.c.b16 %v790, %v789
    %v804 = vpack.c.b16 %v792, %v791
    %v805 = vpack.c.b16 %v794, %v793
    %v806 = vpack.c.b16 %v796, %v795
    %v807 = vpack.c.b16 %v798, %v797
    %v808 = vpack.c.b16 %v800, %v799
    %817 = vmatprep.subr.bf16.mxu0 %v688
    %818 = vmatpush1.bf16.msra.mxu0 %v687
    %819 = vmatprep.subr.bf16.mxu0 %v686
    %820 = vmatpush1.bf16.msra.mxu0 %v685
    %821 = vmatprep.subr.bf16.mxu0 %v684
    %822 = vmatpush1.bf16.msra.mxu0 %v683
    %823 = vmatprep.subr.bf16.mxu0 %v682
    %824 = vmatpush1.bf16.msra.mxu0 %v681
    %825 = vmatprep.subr.bf16.mxu0 %v680
    %826 = vmatpush1.bf16.msra.mxu0 %v679
    %827 = vmatprep.subr.bf16.mxu0 %v678
    %828 = vmatpush1.bf16.msra.mxu0 %v677
    %829 = vmatprep.subr.bf16.mxu0 %v676
    %830 = vmatpush1.bf16.msra.mxu0 %v675
    %831 = vmatprep.subr.bf16.mxu0 %v674
    %832 = vmatpush1.bf16.msra.mxu0 %v673
    %833 = vmatprep.subr.bf16.mxu0 0
    %834 = vmatpush2.bf16.msra.mxu0 0
    %835 = vmatprep.subr.bf16.mxu0 0
    %836 = vmatpush2.bf16.msra.mxu0 0
    %837 = vmatprep.subr.bf16.mxu0 0
    %838 = vmatpush2.bf16.msra.mxu0 0
    %839 = vmatprep.subr.bf16.mxu0 0
    %840 = vmatpush2.bf16.msra.mxu0 0
    %841 = vmatprep.subr.bf16.mxu0 0
    %842 = vmatpush2.bf16.msra.mxu0 0
    %843 = vmatprep.subr.bf16.mxu0 0
    %844 = vmatpush2.bf16.msra.mxu0 0
    %845 = vmatprep.subr.bf16.mxu0 0
    %846 = vmatpush2.bf16.msra.mxu0 0
    %847 = vmatprep.subr.bf16.mxu0 0
    %848 = vmatpush2.bf16.msra.mxu0 0
    %849 = vmatprep.mubr.bf16.mxu0 0
    %850 = vmatmul.mubr.bf16.gmra.mxu0 %v801
    %v851 = vpop.f32.mrf.mxu0
    %v852 = vadd.f32 %v692, %v851
    %v853 = vpop.f32.mrf.mxu0
    %v854 = vadd.f32 %v692, %v853
    %v855 = vpop.f32.mrf.mxu0
    %v856 = vadd.f32 %v697, %v855
    %v857 = vpop.f32.mrf.mxu0
    %v858 = vadd.f32 %v697, %v857
    %859 = vmatprep.mubr.bf16.mxu0 0
    %860 = vmatmul.mubr.bf16.gmra.mxu0 %v802
    %v861 = vpop.f32.mrf.mxu0
    %v862 = vadd.f32 %v702, %v861
    %v863 = vpop.f32.mrf.mxu0
    %v864 = vadd.f32 %v702, %v863
    %v865 = vpop.f32.mrf.mxu0
    %v866 = vadd.f32 %v707, %v865
    %v867 = vpop.f32.mrf.mxu0
    %v868 = vadd.f32 %v707, %v867
    %869 = vmatprep.mubr.bf16.mxu0 0
    %870 = vmatmul.mubr.bf16.gmra.mxu0 %v803
    %v871 = vpop.f32.mrf.mxu0
    %v872 = vadd.f32 %v712, %v871
    %v873 = vpop.f32.mrf.mxu0
    %v874 = vadd.f32 %v712, %v873
    %v875 = vpop.f32.mrf.mxu0
    %v876 = vadd.f32 %v717, %v875
    %v877 = vpop.f32.mrf.mxu0
    %v878 = vadd.f32 %v717, %v877
    %879 = vmatprep.mubr.bf16.mxu0 0
    %880 = vmatmul.mubr.bf16.gmra.mxu0 %v804
    %v881 = vpop.f32.mrf.mxu0
    %v882 = vadd.f32 %v722, %v881
    %v883 = vpop.f32.mrf.mxu0
    %v884 = vadd.f32 %v722, %v883
    %v885 = vpop.f32.mrf.mxu0
    %v886 = vadd.f32 %v727, %v885
    %v887 = vpop.f32.mrf.mxu0
    %v888 = vadd.f32 %v727, %v887
    %889 = vmatprep.mubr.bf16.mxu0 0
    %890 = vmatmul.mubr.bf16.gmra.mxu0 %v805
    %v891 = vpop.f32.mrf.mxu0
    %v892 = vadd.f32 %v732, %v891
    %v893 = vpop.f32.mrf.mxu0
    %v894 = vadd.f32 %v732, %v893
    %v895 = vpop.f32.mrf.mxu0
    %v896 = vadd.f32 %v737, %v895
    %v897 = vpop.f32.mrf.mxu0
    %v898 = vadd.f32 %v737, %v897
    %899 = vmatprep.mubr.bf16.mxu0 0
    %900 = vmatmul.mubr.bf16.gmra.mxu0 %v806
    %v901 = vpop.f32.mrf.mxu0
    %v902 = vadd.f32 %v742, %v901
    %v903 = vpop.f32.mrf.mxu0
    %v904 = vadd.f32 %v742, %v903
    %v905 = vpop.f32.mrf.mxu0
    %v906 = vadd.f32 %v747, %v905
    %v907 = vpop.f32.mrf.mxu0
    %v908 = vadd.f32 %v747, %v907
    %909 = vmatprep.mubr.bf16.mxu0 0
    %910 = vmatmul.mubr.bf16.gmra.mxu0 %v807
    %v911 = vpop.f32.mrf.mxu0
    %v912 = vadd.f32 %v752, %v911
    %v913 = vpop.f32.mrf.mxu0
    %v914 = vadd.f32 %v752, %v913
    %v915 = vpop.f32.mrf.mxu0
    %v916 = vadd.f32 %v757, %v915
    %v917 = vpop.f32.mrf.mxu0
    %v918 = vadd.f32 %v757, %v917
    %919 = vmatprep.mubr.bf16.mxu0 0
    %920 = vmatmul.mubr.bf16.gmra.mxu0 %v808
    %v921 = vpop.f32.mrf.mxu0
    %v922 = vadd.f32 %v762, %v921
    %v923 = vpop.f32.mrf.mxu0
    %v924 = vadd.f32 %v762, %v923
    %v925 = vpop.f32.mrf.mxu0
    %v926 = vadd.f32 %v767, %v925
    %v927 = vpop.f32.mrf.mxu0
    %v928 = vadd.f32 %v767, %v927
    %929 = vdwg.mxu0
    %v930 = vmax.f32 %v852, 0.0
    %v931 = vmax.f32 %v854, 0.0
    %v932 = vmax.f32 %v856, 0.0
    %v933 = vmax.f32 %v858, 0.0
    %v934 = vmax.f32 %v862, 0.0
    %v935 = vmax.f32 %v864, 0.0
    %v936 = vmax.f32 %v866, 0.0
    %v937 = vmax.f32 %v868, 0.0
    %v938 = vmax.f32 %v872, 0.0
    %v939 = vmax.f32 %v874, 0.0
    %v940 = vmax.f32 %v876, 0.0
    %v941 = vmax.f32 %v878, 0.0
    %v942 = vmax.f32 %v882, 0.0
    %v943 = vmax.f32 %v884, 0.0
    %v944 = vmax.f32 %v886, 0.0
    %v945 = vmax.f32 %v888, 0.0
    %v946 = vmax.f32 %v892, 0.0
    %v947 = vmax.f32 %v894, 0.0
    %v948 = vmax.f32 %v896, 0.0
    %v949 = vmax.f32 %v898, 0.0
    %v950 = vmax.f32 %v902, 0.0
    %v951 = vmax.f32 %v904, 0.0
    %v952 = vmax.f32 %v906, 0.0
    %v953 = vmax.f32 %v908, 0.0
    %v954 = vmax.f32 %v912, 0.0
    %v955 = vmax.f32 %v914, 0.0
    %v956 = vmax.f32 %v916, 0.0
    %v957 = vmax.f32 %v918, 0.0
    %v958 = vmax.f32 %v922, 0.0
    %v959 = vmax.f32 %v924, 0.0
    %v960 = vmax.f32 %v926, 0.0
    %v961 = vmax.f32 %v928, 0.0
    %s962 = scalar_lea.vmem %s1, 128
    %v963 = vld [vmem:[%s962] sm:$0xf]
    %v964 = vld [vmem:[%s962 + $0x4] sm:$0xf]
    %v965 = vld [vmem:[%s962 + $0x8] sm:$0xf]
    %v966 = vld [vmem:[%s962 + $0xc] sm:$0xf]
    %v967 = vld [vmem:[%s962 + $0x10] sm:$0xf]
    %v968 = vld [vmem:[%s962 + $0x14] sm:$0xf]
    %v969 = vld [vmem:[%s962 + $0x18] sm:$0xf]
    %v970 = vld [vmem:[%s962 + $0x1c] sm:$0xf]
    %v971 = vld [vmem:[%s962 + $0x20] sm:$0xf]
    %v972 = vld [vmem:[%s962 + $0x24] sm:$0xf]
    %v973 = vld [vmem:[%s962 + $0x28] sm:$0xf]
    %v974 = vld [vmem:[%s962 + $0x2c] sm:$0xf]
    %v975 = vld [vmem:[%s962 + $0x30] sm:$0xf]
    %v976 = vld [vmem:[%s962 + $0x34] sm:$0xf]
    %v977 = vld [vmem:[%s962 + $0x38] sm:$0xf]
    %v978 = vld [vmem:[%s962 + $0x3c] sm:$0xf]
    %s979 = scalar_lea.vmem %s2, 256
    %v980 = vld [vmem:[%s979] sm:$0xff]
    %v981 = vld [vmem:[%s979 + $0x8] sm:$0xff]
    %v982 = vld [vmem:[%s979 + $0x10] sm:$0xff]
    %v983 = vld [vmem:[%s979 + $0x18] sm:$0xff]
    %v984 = vld [vmem:[%s979 + $0x20] sm:$0xff]
    %v985 = vld [vmem:[%s979 + $0x28] sm:$0xff]
    %v986 = vld [vmem:[%s979 + $0x30] sm:$0xff]
    %v987 = vld [vmem:[%s979 + $0x38] sm:$0xff]
    %v988 = vld [vmem:[%s979 + $0x40] sm:$0xff]
    %v989 = vld [vmem:[%s979 + $0x48] sm:$0xff]
    %v990 = vld [vmem:[%s979 + $0x50] sm:$0xff]
    %v991 = vld [vmem:[%s979 + $0x58] sm:$0xff]
    %v992 = vld [vmem:[%s979 + $0x60] sm:$0xff]
    %v993 = vld [vmem:[%s979 + $0x68] sm:$0xff]
    %v994 = vld [vmem:[%s979 + $0x70] sm:$0xff]
    %v995 = vld [vmem:[%s979 + $0x78] sm:$0xff]
    %v996 = vpack.c.bf16 %v932, %v930
    %v997 = vpack.c.bf16 %v933, %v931
    %v998 = vpack.c.bf16 %v936, %v934
    %v999 = vpack.c.bf16 %v937, %v935
    %v1000 = vpack.c.bf16 %v940, %v938
    %v1001 = vpack.c.bf16 %v941, %v939
    %v1002 = vpack.c.bf16 %v944, %v942
    %v1003 = vpack.c.bf16 %v945, %v943
    %v1004 = vpack.c.bf16 %v948, %v946
    %v1005 = vpack.c.bf16 %v949, %v947
    %v1006 = vpack.c.bf16 %v952, %v950
    %v1007 = vpack.c.bf16 %v953, %v951
    %v1008 = vpack.c.bf16 %v956, %v954
    %v1009 = vpack.c.bf16 %v957, %v955
    %v1010 = vpack.c.bf16 %v960, %v958
    %v1011 = vpack.c.bf16 %v961, %v959
    %1013 = vset.pattern.permute.xlu0 0
    %1014 = vperm.xlu0 %1013, %v980
    %v1015 = vpop.permute.xlu0 %1014
    %1018 = vset.pattern.permute.xlu0 0
    %1019 = vperm.xlu0 %1018, %v981
    %v1020 = vpop.permute.xlu0 %1019
    %1023 = vset.pattern.permute.xlu0 0
    %1024 = vperm.xlu0 %1023, %v982
    %v1025 = vpop.permute.xlu0 %1024
    %1028 = vset.pattern.permute.xlu0 0
    %1029 = vperm.xlu0 %1028, %v983
    %v1030 = vpop.permute.xlu0 %1029
    %1033 = vset.pattern.permute.xlu0 0
    %1034 = vperm.xlu0 %1033, %v984
    %v1035 = vpop.permute.xlu0 %1034
    %1038 = vset.pattern.permute.xlu0 0
    %1039 = vperm.xlu0 %1038, %v985
    %v1040 = vpop.permute.xlu0 %1039
    %1043 = vset.pattern.permute.xlu0 0
    %1044 = vperm.xlu0 %1043, %v986
    %v1045 = vpop.permute.xlu0 %1044
    %1048 = vset.pattern.permute.xlu0 0
    %1049 = vperm.xlu0 %1048, %v987
    %v1050 = vpop.permute.xlu0 %1049
    %1053 = vset.pattern.permute.xlu0 0
    %1054 = vperm.xlu0 %1053, %v988
    %v1055 = vpop.permute.xlu0 %1054
    %1058 = vset.pattern.permute.xlu0 0
    %1059 = vperm.xlu0 %1058, %v989
    %v1060 = vpop.permute.xlu0 %1059
    %1063 = vset.pattern.permute.xlu0 0
    %1064 = vperm.xlu0 %1063, %v990
    %v1065 = vpop.permute.xlu0 %1064
    %1068 = vset.pattern.permute.xlu0 0
    %1069 = vperm.xlu0 %1068, %v991
    %v1070 = vpop.permute.xlu0 %1069
    %1073 = vset.pattern.permute.xlu0 0
    %1074 = vperm.xlu0 %1073, %v992
    %v1075 = vpop.permute.xlu0 %1074
    %1078 = vset.pattern.permute.xlu0 0
    %1079 = vperm.xlu0 %1078, %v993
    %v1080 = vpop.permute.xlu0 %1079
    %1083 = vset.pattern.permute.xlu0 0
    %1084 = vperm.xlu0 %1083, %v994
    %v1085 = vpop.permute.xlu0 %1084
    %1088 = vset.pattern.permute.xlu0 0
    %1089 = vperm.xlu0 %1088, %v995
    %v1090 = vpop.permute.xlu0 %1089
    %v1108 = vunpack.c.l.b16 %v963
    %v1109 = vunpack.c.l.b16 %v964
    %v1110 = vunpack.c.l.b16 %v965
    %v1111 = vunpack.c.l.b16 %v966
    %v1112 = vunpack.c.l.b16 %v967
    %v1113 = vunpack.c.l.b16 %v968
    %v1114 = vunpack.c.l.b16 %v969
    %v1115 = vunpack.c.l.b16 %v970
    %v1116 = vunpack.c.l.b16 %v971
    %v1117 = vunpack.c.l.b16 %v972
    %v1118 = vunpack.c.l.b16 %v973
    %v1119 = vunpack.c.l.b16 %v974
    %v1120 = vunpack.c.l.b16 %v975
    %v1121 = vunpack.c.l.b16 %v976
    %v1122 = vunpack.c.l.b16 %v977
    %v1123 = vunpack.c.l.b16 %v978
    %v1124 = vpack.c.b16 %v1109, %v1108
    %v1125 = vpack.c.b16 %v1111, %v1110
    %v1126 = vpack.c.b16 %v1113, %v1112
    %v1127 = vpack.c.b16 %v1115, %v1114
    %v1128 = vpack.c.b16 %v1117, %v1116
    %v1129 = vpack.c.b16 %v1119, %v1118
    %v1130 = vpack.c.b16 %v1121, %v1120
    %v1131 = vpack.c.b16 %v1123, %v1122
    %1140 = vmatprep.subr.bf16.mxu0 %v1011
    %1141 = vmatpush1.bf16.msra.mxu0 %v1010
    %1142 = vmatprep.subr.bf16.mxu0 %v1009
    %1143 = vmatpush1.bf16.msra.mxu0 %v1008
    %1144 = vmatprep.subr.bf16.mxu0 %v1007
    %1145 = vmatpush1.bf16.msra.mxu0 %v1006
    %1146 = vmatprep.subr.bf16.mxu0 %v1005
    %1147 = vmatpush1.bf16.msra.mxu0 %v1004
    %1148 = vmatprep.subr.bf16.mxu0 %v1003
    %1149 = vmatpush1.bf16.msra.mxu0 %v1002
    %1150 = vmatprep.subr.bf16.mxu0 %v1001
    %1151 = vmatpush1.bf16.msra.mxu0 %v1000
    %1152 = vmatprep.subr.bf16.mxu0 %v999
    %1153 = vmatpush1.bf16.msra.mxu0 %v998
    %1154 = vmatprep.subr.bf16.mxu0 %v997
    %1155 = vmatpush1.bf16.msra.mxu0 %v996
    %1156 = vmatprep.subr.bf16.mxu0 0
    %1157 = vmatpush2.bf16.msra.mxu0 0
    %1158 = vmatprep.subr.bf16.mxu0 0
    %1159 = vmatpush2.bf16.msra.mxu0 0
    %1160 = vmatprep.subr.bf16.mxu0 0
    %1161 = vmatpush2.bf16.msra.mxu0 0
    %1162 = vmatprep.subr.bf16.mxu0 0
    %1163 = vmatpush2.bf16.msra.mxu0 0
    %1164 = vmatprep.subr.bf16.mxu0 0
    %1165 = vmatpush2.bf16.msra.mxu0 0
    %1166 = vmatprep.subr.bf16.mxu0 0
    %1167 = vmatpush2.bf16.msra.mxu0 0
    %1168 = vmatprep.subr.bf16.mxu0 0
    %1169 = vmatpush2.bf16.msra.mxu0 0
    %1170 = vmatprep.subr.bf16.mxu0 0
    %1171 = vmatpush2.bf16.msra.mxu0 0
    %1172 = vmatprep.mubr.bf16.mxu0 0
    %1173 = vmatmul.mubr.bf16.gmra.mxu0 %v1124
    %v1174 = vpop.f32.mrf.mxu0
    %v1175 = vadd.f32 %v1015, %v1174
    %v1176 = vpop.f32.mrf.mxu0
    %v1177 = vadd.f32 %v1015, %v1176
    %v1178 = vpop.f32.mrf.mxu0
    %v1179 = vadd.f32 %v1020, %v1178
    %v1180 = vpop.f32.mrf.mxu0
    %v1181 = vadd.f32 %v1020, %v1180
    %1182 = vmatprep.mubr.bf16.mxu0 0
    %1183 = vmatmul.mubr.bf16.gmra.mxu0 %v1125
    %v1184 = vpop.f32.mrf.mxu0
    %v1185 = vadd.f32 %v1025, %v1184
    %v1186 = vpop.f32.mrf.mxu0
    %v1187 = vadd.f32 %v1025, %v1186
    %v1188 = vpop.f32.mrf.mxu0
    %v1189 = vadd.f32 %v1030, %v1188
    %v1190 = vpop.f32.mrf.mxu0
    %v1191 = vadd.f32 %v1030, %v1190
    %1192 = vmatprep.mubr.bf16.mxu0 0
    %1193 = vmatmul.mubr.bf16.gmra.mxu0 %v1126
    %v1194 = vpop.f32.mrf.mxu0
    %v1195 = vadd.f32 %v1035, %v1194
    %v1196 = vpop.f32.mrf.mxu0
    %v1197 = vadd.f32 %v1035, %v1196
    %v1198 = vpop.f32.mrf.mxu0
    %v1199 = vadd.f32 %v1040, %v1198
    %v1200 = vpop.f32.mrf.mxu0
    %v1201 = vadd.f32 %v1040, %v1200
    %1202 = vmatprep.mubr.bf16.mxu0 0
    %1203 = vmatmul.mubr.bf16.gmra.mxu0 %v1127
    %v1204 = vpop.f32.mrf.mxu0
    %v1205 = vadd.f32 %v1045, %v1204
    %v1206 = vpop.f32.mrf.mxu0
    %v1207 = vadd.f32 %v1045, %v1206
    %v1208 = vpop.f32.mrf.mxu0
    %v1209 = vadd.f32 %v1050, %v1208
    %v1210 = vpop.f32.mrf.mxu0
    %v1211 = vadd.f32 %v1050, %v1210
    %1212 = vmatprep.mubr.bf16.mxu0 0
    %1213 = vmatmul.mubr.bf16.gmra.mxu0 %v1128
    %v1214 = vpop.f32.mrf.mxu0
    %v1215 = vadd.f32 %v1055, %v1214
    %v1216 = vpop.f32.mrf.mxu0
    %v1217 = vadd.f32 %v1055, %v1216
    %v1218 = vpop.f32.mrf.mxu0
    %v1219 = vadd.f32 %v1060, %v1218
    %v1220 = vpop.f32.mrf.mxu0
    %v1221 = vadd.f32 %v1060, %v1220
    %1222 = vmatprep.mubr.bf16.mxu0 0
    %1223 = vmatmul.mubr.bf16.gmra.mxu0 %v1129
    %v1224 = vpop.f32.mrf.mxu0
    %v1225 = vadd.f32 %v1065, %v1224
    %v1226 = vpop.f32.mrf.mxu0
    %v1227 = vadd.f32 %v1065, %v1226
    %v1228 = vpop.f32.mrf.mxu0
    %v1229 = vadd.f32 %v1070, %v1228
    %v1230 = vpop.f32.mrf.mxu0
    %v1231 = vadd.f32 %v1070, %v1230
    %1232 = vmatprep.mubr.bf16.mxu0 0
    %1233 = vmatmul.mubr.bf16.gmra.mxu0 %v1130
    %v1234 = vpop.f32.mrf.mxu0
    %v1235 = vadd.f32 %v1075, %v1234
    %v1236 = vpop.f32.mrf.mxu0
    %v1237 = vadd.f32 %v1075, %v1236
    %v1238 = vpop.f32.mrf.mxu0
    %v1239 = vadd.f32 %v1080, %v1238
    %v1240 = vpop.f32.mrf.mxu0
    %v1241 = vadd.f32 %v1080, %v1240
    %1242 = vmatprep.mubr.bf16.mxu0 0
    %1243 = vmatmul.mubr.bf16.gmra.mxu0 %v1131
    %v1244 = vpop.f32.mrf.mxu0
    %v1245 = vadd.f32 %v1085, %v1244
    %v1246 = vpop.f32.mrf.mxu0
    %v1247 = vadd.f32 %v1085, %v1246
    %v1248 = vpop.f32.mrf.mxu0
    %v1249 = vadd.f32 %v1090, %v1248
    %v1250 = vpop.f32.mrf.mxu0
    %v1251 = vadd.f32 %v1090, %v1250
    %1252 = vdwg.mxu0
    %v1253 = vmax.f32 %v1175, 0.0
    %v1254 = vmax.f32 %v1177, 0.0
    %v1255 = vmax.f32 %v1179, 0.0
    %v1256 = vmax.f32 %v1181, 0.0
    %v1257 = vmax.f32 %v1185, 0.0
    %v1258 = vmax.f32 %v1187, 0.0
    %v1259 = vmax.f32 %v1189, 0.0
    %v1260 = vmax.f32 %v1191, 0.0
    %v1261 = vmax.f32 %v1195, 0.0
    %v1262 = vmax.f32 %v1197, 0.0
    %v1263 = vmax.f32 %v1199, 0.0
    %v1264 = vmax.f32 %v1201, 0.0
    %v1265 = vmax.f32 %v1205, 0.0
    %v1266 = vmax.f32 %v1207, 0.0
    %v1267 = vmax.f32 %v1209, 0.0
    %v1268 = vmax.f32 %v1211, 0.0
    %v1269 = vmax.f32 %v1215, 0.0
    %v1270 = vmax.f32 %v1217, 0.0
    %v1271 = vmax.f32 %v1219, 0.0
    %v1272 = vmax.f32 %v1221, 0.0
    %v1273 = vmax.f32 %v1225, 0.0
    %v1274 = vmax.f32 %v1227, 0.0
    %v1275 = vmax.f32 %v1229, 0.0
    %v1276 = vmax.f32 %v1231, 0.0
    %v1277 = vmax.f32 %v1235, 0.0
    %v1278 = vmax.f32 %v1237, 0.0
    %v1279 = vmax.f32 %v1239, 0.0
    %v1280 = vmax.f32 %v1241, 0.0
    %v1281 = vmax.f32 %v1245, 0.0
    %v1282 = vmax.f32 %v1247, 0.0
    %v1283 = vmax.f32 %v1249, 0.0
    %v1284 = vmax.f32 %v1251, 0.0
    %s1285 = scalar_lea.vmem %s1, 192
    %v1286 = vld [vmem:[%s1285] sm:$0xf]
    %v1287 = vld [vmem:[%s1285 + $0x4] sm:$0xf]
    %v1288 = vld [vmem:[%s1285 + $0x8] sm:$0xf]
    %v1289 = vld [vmem:[%s1285 + $0xc] sm:$0xf]
    %v1290 = vld [vmem:[%s1285 + $0x10] sm:$0xf]
    %v1291 = vld [vmem:[%s1285 + $0x14] sm:$0xf]
    %v1292 = vld [vmem:[%s1285 + $0x18] sm:$0xf]
    %v1293 = vld [vmem:[%s1285 + $0x1c] sm:$0xf]
    %v1294 = vld [vmem:[%s1285 + $0x20] sm:$0xf]
    %v1295 = vld [vmem:[%s1285 + $0x24] sm:$0xf]
    %v1296 = vld [vmem:[%s1285 + $0x28] sm:$0xf]
    %v1297 = vld [vmem:[%s1285 + $0x2c] sm:$0xf]
    %v1298 = vld [vmem:[%s1285 + $0x30] sm:$0xf]
    %v1299 = vld [vmem:[%s1285 + $0x34] sm:$0xf]
    %v1300 = vld [vmem:[%s1285 + $0x38] sm:$0xf]
    %v1301 = vld [vmem:[%s1285 + $0x3c] sm:$0xf]
    %s1302 = scalar_lea.vmem %s2, 384
    %v1303 = vld [vmem:[%s1302] sm:$0xff]
    %v1304 = vld [vmem:[%s1302 + $0x8] sm:$0xff]
    %v1305 = vld [vmem:[%s1302 + $0x10] sm:$0xff]
    %v1306 = vld [vmem:[%s1302 + $0x18] sm:$0xff]
    %v1307 = vld [vmem:[%s1302 + $0x20] sm:$0xff]
    %v1308 = vld [vmem:[%s1302 + $0x28] sm:$0xff]
    %v1309 = vld [vmem:[%s1302 + $0x30] sm:$0xff]
    %v1310 = vld [vmem:[%s1302 + $0x38] sm:$0xff]
    %v1311 = vld [vmem:[%s1302 + $0x40] sm:$0xff]
    %v1312 = vld [vmem:[%s1302 + $0x48] sm:$0xff]
    %v1313 = vld [vmem:[%s1302 + $0x50] sm:$0xff]
    %v1314 = vld [vmem:[%s1302 + $0x58] sm:$0xff]
    %v1315 = vld [vmem:[%s1302 + $0x60] sm:$0xff]
    %v1316 = vld [vmem:[%s1302 + $0x68] sm:$0xff]
    %v1317 = vld [vmem:[%s1302 + $0x70] sm:$0xff]
    %v1318 = vld [vmem:[%s1302 + $0x78] sm:$0xff]
    %v1319 = vpack.c.bf16 %v1255, %v1253
    %v1320 = vpack.c.bf16 %v1256, %v1254
    %v1321 = vpack.c.bf16 %v1259, %v1257
    %v1322 = vpack.c.bf16 %v1260, %v1258
    %v1323 = vpack.c.bf16 %v1263, %v1261
    %v1324 = vpack.c.bf16 %v1264, %v1262
    %v1325 = vpack.c.bf16 %v1267, %v1265
    %v1326 = vpack.c.bf16 %v1268, %v1266
    %v1327 = vpack.c.bf16 %v1271, %v1269
    %v1328 = vpack.c.bf16 %v1272, %v1270
    %v1329 = vpack.c.bf16 %v1275, %v1273
    %v1330 = vpack.c.bf16 %v1276, %v1274
    %v1331 = vpack.c.bf16 %v1279, %v1277
    %v1332 = vpack.c.bf16 %v1280, %v1278
    %v1333 = vpack.c.bf16 %v1283, %v1281
    %v1334 = vpack.c.bf16 %v1284, %v1282
    %1336 = vset.pattern.permute.xlu0 0
    %1337 = vperm.xlu0 %1336, %v1303
    %v1338 = vpop.permute.xlu0 %1337
    %1341 = vset.pattern.permute.xlu0 0
    %1342 = vperm.xlu0 %1341, %v1304
    %v1343 = vpop.permute.xlu0 %1342
    %1346 = vset.pattern.permute.xlu0 0
    %1347 = vperm.xlu0 %1346, %v1305
    %v1348 = vpop.permute.xlu0 %1347
    %1351 = vset.pattern.permute.xlu0 0
    %1352 = vperm.xlu0 %1351, %v1306
    %v1353 = vpop.permute.xlu0 %1352
    %1356 = vset.pattern.permute.xlu0 0
    %1357 = vperm.xlu0 %1356, %v1307
    %v1358 = vpop.permute.xlu0 %1357
    %1361 = vset.pattern.permute.xlu0 0
    %1362 = vperm.xlu0 %1361, %v1308
    %v1363 = vpop.permute.xlu0 %1362
    %1366 = vset.pattern.permute.xlu0 0
    %1367 = vperm.xlu0 %1366, %v1309
    %v1368 = vpop.permute.xlu0 %1367
    %1371 = vset.pattern.permute.xlu0 0
    %1372 = vperm.xlu0 %1371, %v1310
    %v1373 = vpop.permute.xlu0 %1372
    %1376 = vset.pattern.permute.xlu0 0
    %1377 = vperm.xlu0 %1376, %v1311
    %v1378 = vpop.permute.xlu0 %1377
    %1381 = vset.pattern.permute.xlu0 0
    %1382 = vperm.xlu0 %1381, %v1312
    %v1383 = vpop.permute.xlu0 %1382
    %1386 = vset.pattern.permute.xlu0 0
    %1387 = vperm.xlu0 %1386, %v1313
    %v1388 = vpop.permute.xlu0 %1387
    %1391 = vset.pattern.permute.xlu0 0
    %1392 = vperm.xlu0 %1391, %v1314
    %v1393 = vpop.permute.xlu0 %1392
    %1396 = vset.pattern.permute.xlu0 0
    %1397 = vperm.xlu0 %1396, %v1315
    %v1398 = vpop.permute.xlu0 %1397
    %1401 = vset.pattern.permute.xlu0 0
    %1402 = vperm.xlu0 %1401, %v1316
    %v1403 = vpop.permute.xlu0 %1402
    %1406 = vset.pattern.permute.xlu0 0
    %1407 = vperm.xlu0 %1406, %v1317
    %v1408 = vpop.permute.xlu0 %1407
    %1411 = vset.pattern.permute.xlu0 0
    %1412 = vperm.xlu0 %1411, %v1318
    %v1413 = vpop.permute.xlu0 %1412
    %v1431 = vunpack.c.l.b16 %v1286
    %v1432 = vunpack.c.l.b16 %v1287
    %v1433 = vunpack.c.l.b16 %v1288
    %v1434 = vunpack.c.l.b16 %v1289
    %v1435 = vunpack.c.l.b16 %v1290
    %v1436 = vunpack.c.l.b16 %v1291
    %v1437 = vunpack.c.l.b16 %v1292
    %v1438 = vunpack.c.l.b16 %v1293
    %v1439 = vunpack.c.l.b16 %v1294
    %v1440 = vunpack.c.l.b16 %v1295
    %v1441 = vunpack.c.l.b16 %v1296
    %v1442 = vunpack.c.l.b16 %v1297
    %v1443 = vunpack.c.l.b16 %v1298
    %v1444 = vunpack.c.l.b16 %v1299
    %v1445 = vunpack.c.l.b16 %v1300
    %v1446 = vunpack.c.l.b16 %v1301
    %v1447 = vpack.c.b16 %v1432, %v1431
    %v1448 = vpack.c.b16 %v1434, %v1433
    %v1449 = vpack.c.b16 %v1436, %v1435
    %v1450 = vpack.c.b16 %v1438, %v1437
    %v1451 = vpack.c.b16 %v1440, %v1439
    %v1452 = vpack.c.b16 %v1442, %v1441
    %v1453 = vpack.c.b16 %v1444, %v1443
    %v1454 = vpack.c.b16 %v1446, %v1445
    %1463 = vmatprep.subr.bf16.mxu0 %v1334
    %1464 = vmatpush1.bf16.msra.mxu0 %v1333
    %1465 = vmatprep.subr.bf16.mxu0 %v1332
    %1466 = vmatpush1.bf16.msra.mxu0 %v1331
    %1467 = vmatprep.subr.bf16.mxu0 %v1330
    %1468 = vmatpush1.bf16.msra.mxu0 %v1329
    %1469 = vmatprep.subr.bf16.mxu0 %v1328
    %1470 = vmatpush1.bf16.msra.mxu0 %v1327
    %1471 = vmatprep.subr.bf16.mxu0 %v1326
    %1472 = vmatpush1.bf16.msra.mxu0 %v1325
    %1473 = vmatprep.subr.bf16.mxu0 %v1324
    %1474 = vmatpush1.bf16.msra.mxu0 %v1323
    %1475 = vmatprep.subr.bf16.mxu0 %v1322
    %1476 = vmatpush1.bf16.msra.mxu0 %v1321
    %1477 = vmatprep.subr.bf16.mxu0 %v1320
    %1478 = vmatpush1.bf16.msra.mxu0 %v1319
    %1479 = vmatprep.subr.bf16.mxu0 0
    %1480 = vmatpush2.bf16.msra.mxu0 0
    %1481 = vmatprep.subr.bf16.mxu0 0
    %1482 = vmatpush2.bf16.msra.mxu0 0
    %1483 = vmatprep.subr.bf16.mxu0 0
    %1484 = vmatpush2.bf16.msra.mxu0 0
    %1485 = vmatprep.subr.bf16.mxu0 0
    %1486 = vmatpush2.bf16.msra.mxu0 0
    %1487 = vmatprep.subr.bf16.mxu0 0
    %1488 = vmatpush2.bf16.msra.mxu0 0
    %1489 = vmatprep.subr.bf16.mxu0 0
    %1490 = vmatpush2.bf16.msra.mxu0 0
    %1491 = vmatprep.subr.bf16.mxu0 0
    %1492 = vmatpush2.bf16.msra.mxu0 0
    %1493 = vmatprep.subr.bf16.mxu0 0
    %1494 = vmatpush2.bf16.msra.mxu0 0
    %1495 = vmatprep.mubr.bf16.mxu0 0
    %1496 = vmatmul.mubr.bf16.gmra.mxu0 %v1447
    %v1497 = vpop.f32.mrf.mxu0
    %v1498 = vadd.f32 %v1338, %v1497
    %v1499 = vpop.f32.mrf.mxu0
    %v1500 = vadd.f32 %v1338, %v1499
    %v1501 = vpop.f32.mrf.mxu0
    %v1502 = vadd.f32 %v1343, %v1501
    %v1503 = vpop.f32.mrf.mxu0
    %v1504 = vadd.f32 %v1343, %v1503
    %1505 = vmatprep.mubr.bf16.mxu0 0
    %1506 = vmatmul.mubr.bf16.gmra.mxu0 %v1448
    %v1507 = vpop.f32.mrf.mxu0
    %v1508 = vadd.f32 %v1348, %v1507
    %v1509 = vpop.f32.mrf.mxu0
    %v1510 = vadd.f32 %v1348, %v1509
    %v1511 = vpop.f32.mrf.mxu0
    %v1512 = vadd.f32 %v1353, %v1511
    %v1513 = vpop.f32.mrf.mxu0
    %v1514 = vadd.f32 %v1353, %v1513
    %1515 = vmatprep.mubr.bf16.mxu0 0
    %1516 = vmatmul.mubr.bf16.gmra.mxu0 %v1449
    %v1517 = vpop.f32.mrf.mxu0
    %v1518 = vadd.f32 %v1358, %v1517
    %v1519 = vpop.f32.mrf.mxu0
    %v1520 = vadd.f32 %v1358, %v1519
    %v1521 = vpop.f32.mrf.mxu0
    %v1522 = vadd.f32 %v1363, %v1521
    %v1523 = vpop.f32.mrf.mxu0
    %v1524 = vadd.f32 %v1363, %v1523
    %1525 = vmatprep.mubr.bf16.mxu0 0
    %1526 = vmatmul.mubr.bf16.gmra.mxu0 %v1450
    %v1527 = vpop.f32.mrf.mxu0
    %v1528 = vadd.f32 %v1368, %v1527
    %v1529 = vpop.f32.mrf.mxu0
    %v1530 = vadd.f32 %v1368, %v1529
    %v1531 = vpop.f32.mrf.mxu0
    %v1532 = vadd.f32 %v1373, %v1531
    %v1533 = vpop.f32.mrf.mxu0
    %v1534 = vadd.f32 %v1373, %v1533
    %1535 = vmatprep.mubr.bf16.mxu0 0
    %1536 = vmatmul.mubr.bf16.gmra.mxu0 %v1451
    %v1537 = vpop.f32.mrf.mxu0
    %v1538 = vadd.f32 %v1378, %v1537
    %v1539 = vpop.f32.mrf.mxu0
    %v1540 = vadd.f32 %v1378, %v1539
    %v1541 = vpop.f32.mrf.mxu0
    %v1542 = vadd.f32 %v1383, %v1541
    %v1543 = vpop.f32.mrf.mxu0
    %v1544 = vadd.f32 %v1383, %v1543
    %1545 = vmatprep.mubr.bf16.mxu0 0
    %1546 = vmatmul.mubr.bf16.gmra.mxu0 %v1452
    %v1547 = vpop.f32.mrf.mxu0
    %v1548 = vadd.f32 %v1388, %v1547
    %v1549 = vpop.f32.mrf.mxu0
    %v1550 = vadd.f32 %v1388, %v1549
    %v1551 = vpop.f32.mrf.mxu0
    %v1552 = vadd.f32 %v1393, %v1551
    %v1553 = vpop.f32.mrf.mxu0
    %v1554 = vadd.f32 %v1393, %v1553
    %1555 = vmatprep.mubr.bf16.mxu0 0
    %1556 = vmatmul.mubr.bf16.gmra.mxu0 %v1453
    %v1557 = vpop.f32.mrf.mxu0
    %v1558 = vadd.f32 %v1398, %v1557
    %v1559 = vpop.f32.mrf.mxu0
    %v1560 = vadd.f32 %v1398, %v1559
    %v1561 = vpop.f32.mrf.mxu0
    %v1562 = vadd.f32 %v1403, %v1561
    %v1563 = vpop.f32.mrf.mxu0
    %v1564 = vadd.f32 %v1403, %v1563
    %1565 = vmatprep.mubr.bf16.mxu0 0
    %1566 = vmatmul.mubr.bf16.gmra.mxu0 %v1454
    %v1567 = vpop.f32.mrf.mxu0
    %v1568 = vadd.f32 %v1408, %v1567
    %v1569 = vpop.f32.mrf.mxu0
    %v1570 = vadd.f32 %v1408, %v1569
    %v1571 = vpop.f32.mrf.mxu0
    %v1572 = vadd.f32 %v1413, %v1571
    %v1573 = vpop.f32.mrf.mxu0
    %v1574 = vadd.f32 %v1413, %v1573
    %1575 = vdwg.mxu0
    %v1576 = vmax.f32 %v1498, 0.0
    %v1577 = vmax.f32 %v1500, 0.0
    %v1578 = vmax.f32 %v1502, 0.0
    %v1579 = vmax.f32 %v1504, 0.0
    %v1580 = vmax.f32 %v1508, 0.0
    %v1581 = vmax.f32 %v1510, 0.0
    %v1582 = vmax.f32 %v1512, 0.0
    %v1583 = vmax.f32 %v1514, 0.0
    %v1584 = vmax.f32 %v1518, 0.0
    %v1585 = vmax.f32 %v1520, 0.0
    %v1586 = vmax.f32 %v1522, 0.0
    %v1587 = vmax.f32 %v1524, 0.0
    %v1588 = vmax.f32 %v1528, 0.0
    %v1589 = vmax.f32 %v1530, 0.0
    %v1590 = vmax.f32 %v1532, 0.0
    %v1591 = vmax.f32 %v1534, 0.0
    %v1592 = vmax.f32 %v1538, 0.0
    %v1593 = vmax.f32 %v1540, 0.0
    %v1594 = vmax.f32 %v1542, 0.0
    %v1595 = vmax.f32 %v1544, 0.0
    %v1596 = vmax.f32 %v1548, 0.0
    %v1597 = vmax.f32 %v1550, 0.0
    %v1598 = vmax.f32 %v1552, 0.0
    %v1599 = vmax.f32 %v1554, 0.0
    %v1600 = vmax.f32 %v1558, 0.0
    %v1601 = vmax.f32 %v1560, 0.0
    %v1602 = vmax.f32 %v1562, 0.0
    %v1603 = vmax.f32 %v1564, 0.0
    %v1604 = vmax.f32 %v1568, 0.0
    %v1605 = vmax.f32 %v1570, 0.0
    %v1606 = vmax.f32 %v1572, 0.0
    %v1607 = vmax.f32 %v1574, 0.0
    %s1608 = scalar_lea.vmem %s1, 256
    %v1609 = vld [vmem:[%s1608] sm:$0xf]
    %v1610 = vld [vmem:[%s1608 + $0x4] sm:$0xf]
    %v1611 = vld [vmem:[%s1608 + $0x8] sm:$0xf]
    %v1612 = vld [vmem:[%s1608 + $0xc] sm:$0xf]
    %v1613 = vld [vmem:[%s1608 + $0x10] sm:$0xf]
    %v1614 = vld [vmem:[%s1608 + $0x14] sm:$0xf]
    %v1615 = vld [vmem:[%s1608 + $0x18] sm:$0xf]
    %v1616 = vld [vmem:[%s1608 + $0x1c] sm:$0xf]
    %v1617 = vld [vmem:[%s1608 + $0x20] sm:$0xf]
    %v1618 = vld [vmem:[%s1608 + $0x24] sm:$0xf]
    %v1619 = vld [vmem:[%s1608 + $0x28] sm:$0xf]
    %v1620 = vld [vmem:[%s1608 + $0x2c] sm:$0xf]
    %v1621 = vld [vmem:[%s1608 + $0x30] sm:$0xf]
    %v1622 = vld [vmem:[%s1608 + $0x34] sm:$0xf]
    %v1623 = vld [vmem:[%s1608 + $0x38] sm:$0xf]
    %v1624 = vld [vmem:[%s1608 + $0x3c] sm:$0xf]
    %s1625 = scalar_lea.vmem %s2, 512
    %v1626 = vld [vmem:[%s1625] sm:$0xff]
    %v1627 = vld [vmem:[%s1625 + $0x8] sm:$0xff]
    %v1628 = vld [vmem:[%s1625 + $0x10] sm:$0xff]
    %v1629 = vld [vmem:[%s1625 + $0x18] sm:$0xff]
    %v1630 = vld [vmem:[%s1625 + $0x20] sm:$0xff]
    %v1631 = vld [vmem:[%s1625 + $0x28] sm:$0xff]
    %v1632 = vld [vmem:[%s1625 + $0x30] sm:$0xff]
    %v1633 = vld [vmem:[%s1625 + $0x38] sm:$0xff]
    %v1634 = vld [vmem:[%s1625 + $0x40] sm:$0xff]
    %v1635 = vld [vmem:[%s1625 + $0x48] sm:$0xff]
    %v1636 = vld [vmem:[%s1625 + $0x50] sm:$0xff]
    %v1637 = vld [vmem:[%s1625 + $0x58] sm:$0xff]
    %v1638 = vld [vmem:[%s1625 + $0x60] sm:$0xff]
    %v1639 = vld [vmem:[%s1625 + $0x68] sm:$0xff]
    %v1640 = vld [vmem:[%s1625 + $0x70] sm:$0xff]
    %v1641 = vld [vmem:[%s1625 + $0x78] sm:$0xff]
    %v1642 = vpack.c.bf16 %v1578, %v1576
    %v1643 = vpack.c.bf16 %v1579, %v1577
    %v1644 = vpack.c.bf16 %v1582, %v1580
    %v1645 = vpack.c.bf16 %v1583, %v1581
    %v1646 = vpack.c.bf16 %v1586, %v1584
    %v1647 = vpack.c.bf16 %v1587, %v1585
    %v1648 = vpack.c.bf16 %v1590, %v1588
    %v1649 = vpack.c.bf16 %v1591, %v1589
    %v1650 = vpack.c.bf16 %v1594, %v1592
    %v1651 = vpack.c.bf16 %v1595, %v1593
    %v1652 = vpack.c.bf16 %v1598, %v1596
    %v1653 = vpack.c.bf16 %v1599, %v1597
    %v1654 = vpack.c.bf16 %v1602, %v1600
    %v1655 = vpack.c.bf16 %v1603, %v1601
    %v1656 = vpack.c.bf16 %v1606, %v1604
    %v1657 = vpack.c.bf16 %v1607, %v1605
    %1659 = vset.pattern.permute.xlu0 0
    %1660 = vperm.xlu0 %1659, %v1626
    %v1661 = vpop.permute.xlu0 %1660
    %1664 = vset.pattern.permute.xlu0 0
    %1665 = vperm.xlu0 %1664, %v1627
    %v1666 = vpop.permute.xlu0 %1665
    %1669 = vset.pattern.permute.xlu0 0
    %1670 = vperm.xlu0 %1669, %v1628
    %v1671 = vpop.permute.xlu0 %1670
    %1674 = vset.pattern.permute.xlu0 0
    %1675 = vperm.xlu0 %1674, %v1629
    %v1676 = vpop.permute.xlu0 %1675
    %1679 = vset.pattern.permute.xlu0 0
    %1680 = vperm.xlu0 %1679, %v1630
    %v1681 = vpop.permute.xlu0 %1680
    %1684 = vset.pattern.permute.xlu0 0
    %1685 = vperm.xlu0 %1684, %v1631
    %v1686 = vpop.permute.xlu0 %1685
    %1689 = vset.pattern.permute.xlu0 0
    %1690 = vperm.xlu0 %1689, %v1632
    %v1691 = vpop.permute.xlu0 %1690
    %1694 = vset.pattern.permute.xlu0 0
    %1695 = vperm.xlu0 %1694, %v1633
    %v1696 = vpop.permute.xlu0 %1695
    %1699 = vset.pattern.permute.xlu0 0
    %1700 = vperm.xlu0 %1699, %v1634
    %v1701 = vpop.permute.xlu0 %1700
    %1704 = vset.pattern.permute.xlu0 0
    %1705 = vperm.xlu0 %1704, %v1635
    %v1706 = vpop.permute.xlu0 %1705
    %1709 = vset.pattern.permute.xlu0 0
    %1710 = vperm.xlu0 %1709, %v1636
    %v1711 = vpop.permute.xlu0 %1710
    %1714 = vset.pattern.permute.xlu0 0
    %1715 = vperm.xlu0 %1714, %v1637
    %v1716 = vpop.permute.xlu0 %1715
    %1719 = vset.pattern.permute.xlu0 0
    %1720 = vperm.xlu0 %1719, %v1638
    %v1721 = vpop.permute.xlu0 %1720
    %1724 = vset.pattern.permute.xlu0 0
    %1725 = vperm.xlu0 %1724, %v1639
    %v1726 = vpop.permute.xlu0 %1725
    %1729 = vset.pattern.permute.xlu0 0
    %1730 = vperm.xlu0 %1729, %v1640
    %v1731 = vpop.permute.xlu0 %1730
    %1734 = vset.pattern.permute.xlu0 0
    %1735 = vperm.xlu0 %1734, %v1641
    %v1736 = vpop.permute.xlu0 %1735
    %v1754 = vunpack.c.l.b16 %v1609
    %v1755 = vunpack.c.l.b16 %v1610
    %v1756 = vunpack.c.l.b16 %v1611
    %v1757 = vunpack.c.l.b16 %v1612
    %v1758 = vunpack.c.l.b16 %v1613
    %v1759 = vunpack.c.l.b16 %v1614
    %v1760 = vunpack.c.l.b16 %v1615
    %v1761 = vunpack.c.l.b16 %v1616
    %v1762 = vunpack.c.l.b16 %v1617
    %v1763 = vunpack.c.l.b16 %v1618
    %v1764 = vunpack.c.l.b16 %v1619
    %v1765 = vunpack.c.l.b16 %v1620
    %v1766 = vunpack.c.l.b16 %v1621
    %v1767 = vunpack.c.l.b16 %v1622
    %v1768 = vunpack.c.l.b16 %v1623
    %v1769 = vunpack.c.l.b16 %v1624
    %v1770 = vpack.c.b16 %v1755, %v1754
    %v1771 = vpack.c.b16 %v1757, %v1756
    %v1772 = vpack.c.b16 %v1759, %v1758
    %v1773 = vpack.c.b16 %v1761, %v1760
    %v1774 = vpack.c.b16 %v1763, %v1762
    %v1775 = vpack.c.b16 %v1765, %v1764
    %v1776 = vpack.c.b16 %v1767, %v1766
    %v1777 = vpack.c.b16 %v1769, %v1768
    %1786 = vmatprep.subr.bf16.mxu0 %v1657
    %1787 = vmatpush1.bf16.msra.mxu0 %v1656
    %1788 = vmatprep.subr.bf16.mxu0 %v1655
    %1789 = vmatpush1.bf16.msra.mxu0 %v1654
    %1790 = vmatprep.subr.bf16.mxu0 %v1653
    %1791 = vmatpush1.bf16.msra.mxu0 %v1652
    %1792 = vmatprep.subr.bf16.mxu0 %v1651
    %1793 = vmatpush1.bf16.msra.mxu0 %v1650
    %1794 = vmatprep.subr.bf16.mxu0 %v1649
    %1795 = vmatpush1.bf16.msra.mxu0 %v1648
    %1796 = vmatprep.subr.bf16.mxu0 %v1647
    %1797 = vmatpush1.bf16.msra.mxu0 %v1646
    %1798 = vmatprep.subr.bf16.mxu0 %v1645
    %1799 = vmatpush1.bf16.msra.mxu0 %v1644
    %1800 = vmatprep.subr.bf16.mxu0 %v1643
    %1801 = vmatpush1.bf16.msra.mxu0 %v1642
    %1802 = vmatprep.subr.bf16.mxu0 0
    %1803 = vmatpush2.bf16.msra.mxu0 0
    %1804 = vmatprep.subr.bf16.mxu0 0
    %1805 = vmatpush2.bf16.msra.mxu0 0
    %1806 = vmatprep.subr.bf16.mxu0 0
    %1807 = vmatpush2.bf16.msra.mxu0 0
    %1808 = vmatprep.subr.bf16.mxu0 0
    %1809 = vmatpush2.bf16.msra.mxu0 0
    %1810 = vmatprep.subr.bf16.mxu0 0
    %1811 = vmatpush2.bf16.msra.mxu0 0
    %1812 = vmatprep.subr.bf16.mxu0 0
    %1813 = vmatpush2.bf16.msra.mxu0 0
    %1814 = vmatprep.subr.bf16.mxu0 0
    %1815 = vmatpush2.bf16.msra.mxu0 0
    %1816 = vmatprep.subr.bf16.mxu0 0
    %1817 = vmatpush2.bf16.msra.mxu0 0
    %1818 = vmatprep.mubr.bf16.mxu0 0
    %1819 = vmatmul.mubr.bf16.gmra.mxu0 %v1770
    %v1820 = vpop.f32.mrf.mxu0
    %v1821 = vadd.f32 %v1661, %v1820
    %v1822 = vpop.f32.mrf.mxu0
    %v1823 = vadd.f32 %v1661, %v1822
    %v1824 = vpop.f32.mrf.mxu0
    %v1825 = vadd.f32 %v1666, %v1824
    %v1826 = vpop.f32.mrf.mxu0
    %v1827 = vadd.f32 %v1666, %v1826
    %1828 = vmatprep.mubr.bf16.mxu0 0
    %1829 = vmatmul.mubr.bf16.gmra.mxu0 %v1771
    %v1830 = vpop.f32.mrf.mxu0
    %v1831 = vadd.f32 %v1671, %v1830
    %v1832 = vpop.f32.mrf.mxu0
    %v1833 = vadd.f32 %v1671, %v1832
    %v1834 = vpop.f32.mrf.mxu0
    %v1835 = vadd.f32 %v1676, %v1834
    %v1836 = vpop.f32.mrf.mxu0
    %v1837 = vadd.f32 %v1676, %v1836
    %1838 = vmatprep.mubr.bf16.mxu0 0
    %1839 = vmatmul.mubr.bf16.gmra.mxu0 %v1772
    %v1840 = vpop.f32.mrf.mxu0
    %v1841 = vadd.f32 %v1681, %v1840
    %v1842 = vpop.f32.mrf.mxu0
    %v1843 = vadd.f32 %v1681, %v1842
    %v1844 = vpop.f32.mrf.mxu0
    %v1845 = vadd.f32 %v1686, %v1844
    %v1846 = vpop.f32.mrf.mxu0
    %v1847 = vadd.f32 %v1686, %v1846
    %1848 = vmatprep.mubr.bf16.mxu0 0
    %1849 = vmatmul.mubr.bf16.gmra.mxu0 %v1773
    %v1850 = vpop.f32.mrf.mxu0
    %v1851 = vadd.f32 %v1691, %v1850
    %v1852 = vpop.f32.mrf.mxu0
    %v1853 = vadd.f32 %v1691, %v1852
    %v1854 = vpop.f32.mrf.mxu0
    %v1855 = vadd.f32 %v1696, %v1854
    %v1856 = vpop.f32.mrf.mxu0
    %v1857 = vadd.f32 %v1696, %v1856
    %1858 = vmatprep.mubr.bf16.mxu0 0
    %1859 = vmatmul.mubr.bf16.gmra.mxu0 %v1774
    %v1860 = vpop.f32.mrf.mxu0
    %v1861 = vadd.f32 %v1701, %v1860
    %v1862 = vpop.f32.mrf.mxu0
    %v1863 = vadd.f32 %v1701, %v1862
    %v1864 = vpop.f32.mrf.mxu0
    %v1865 = vadd.f32 %v1706, %v1864
    %v1866 = vpop.f32.mrf.mxu0
    %v1867 = vadd.f32 %v1706, %v1866
    %1868 = vmatprep.mubr.bf16.mxu0 0
    %1869 = vmatmul.mubr.bf16.gmra.mxu0 %v1775
    %v1870 = vpop.f32.mrf.mxu0
    %v1871 = vadd.f32 %v1711, %v1870
    %v1872 = vpop.f32.mrf.mxu0
    %v1873 = vadd.f32 %v1711, %v1872
    %v1874 = vpop.f32.mrf.mxu0
    %v1875 = vadd.f32 %v1716, %v1874
    %v1876 = vpop.f32.mrf.mxu0
    %v1877 = vadd.f32 %v1716, %v1876
    %1878 = vmatprep.mubr.bf16.mxu0 0
    %1879 = vmatmul.mubr.bf16.gmra.mxu0 %v1776
    %v1880 = vpop.f32.mrf.mxu0
    %v1881 = vadd.f32 %v1721, %v1880
    %v1882 = vpop.f32.mrf.mxu0
    %v1883 = vadd.f32 %v1721, %v1882
    %v1884 = vpop.f32.mrf.mxu0
    %v1885 = vadd.f32 %v1726, %v1884
    %v1886 = vpop.f32.mrf.mxu0
    %v1887 = vadd.f32 %v1726, %v1886
    %1888 = vmatprep.mubr.bf16.mxu0 0
    %1889 = vmatmul.mubr.bf16.gmra.mxu0 %v1777
    %v1890 = vpop.f32.mrf.mxu0
    %v1891 = vadd.f32 %v1731, %v1890
    %v1892 = vpop.f32.mrf.mxu0
    %v1893 = vadd.f32 %v1731, %v1892
    %v1894 = vpop.f32.mrf.mxu0
    %v1895 = vadd.f32 %v1736, %v1894
    %v1896 = vpop.f32.mrf.mxu0
    %v1897 = vadd.f32 %v1736, %v1896
    %1898 = vdwg.mxu0
    %v1899 = vmax.f32 %v1821, 0.0
    %v1900 = vmax.f32 %v1823, 0.0
    %v1901 = vmax.f32 %v1825, 0.0
    %v1902 = vmax.f32 %v1827, 0.0
    %v1903 = vmax.f32 %v1831, 0.0
    %v1904 = vmax.f32 %v1833, 0.0
    %v1905 = vmax.f32 %v1835, 0.0
    %v1906 = vmax.f32 %v1837, 0.0
    %v1907 = vmax.f32 %v1841, 0.0
    %v1908 = vmax.f32 %v1843, 0.0
    %v1909 = vmax.f32 %v1845, 0.0
    %v1910 = vmax.f32 %v1847, 0.0
    %v1911 = vmax.f32 %v1851, 0.0
    %v1912 = vmax.f32 %v1853, 0.0
    %v1913 = vmax.f32 %v1855, 0.0
    %v1914 = vmax.f32 %v1857, 0.0
    %v1915 = vmax.f32 %v1861, 0.0
    %v1916 = vmax.f32 %v1863, 0.0
    %v1917 = vmax.f32 %v1865, 0.0
    %v1918 = vmax.f32 %v1867, 0.0
    %v1919 = vmax.f32 %v1871, 0.0
    %v1920 = vmax.f32 %v1873, 0.0
    %v1921 = vmax.f32 %v1875, 0.0
    %v1922 = vmax.f32 %v1877, 0.0
    %v1923 = vmax.f32 %v1881, 0.0
    %v1924 = vmax.f32 %v1883, 0.0
    %v1925 = vmax.f32 %v1885, 0.0
    %v1926 = vmax.f32 %v1887, 0.0
    %v1927 = vmax.f32 %v1891, 0.0
    %v1928 = vmax.f32 %v1893, 0.0
    %v1929 = vmax.f32 %v1895, 0.0
    %v1930 = vmax.f32 %v1897, 0.0
    %s1931 = scalar_lea.vmem %s1, 320
    %v1932 = vld [vmem:[%s1931] sm:$0xf]
    %v1933 = vld [vmem:[%s1931 + $0x4] sm:$0xf]
    %v1934 = vld [vmem:[%s1931 + $0x8] sm:$0xf]
    %v1935 = vld [vmem:[%s1931 + $0xc] sm:$0xf]
    %v1936 = vld [vmem:[%s1931 + $0x10] sm:$0xf]
    %v1937 = vld [vmem:[%s1931 + $0x14] sm:$0xf]
    %v1938 = vld [vmem:[%s1931 + $0x18] sm:$0xf]
    %v1939 = vld [vmem:[%s1931 + $0x1c] sm:$0xf]
    %v1940 = vld [vmem:[%s1931 + $0x20] sm:$0xf]
    %v1941 = vld [vmem:[%s1931 + $0x24] sm:$0xf]
    %v1942 = vld [vmem:[%s1931 + $0x28] sm:$0xf]
    %v1943 = vld [vmem:[%s1931 + $0x2c] sm:$0xf]
    %v1944 = vld [vmem:[%s1931 + $0x30] sm:$0xf]
    %v1945 = vld [vmem:[%s1931 + $0x34] sm:$0xf]
    %v1946 = vld [vmem:[%s1931 + $0x38] sm:$0xf]
    %v1947 = vld [vmem:[%s1931 + $0x3c] sm:$0xf]
    %s1948 = scalar_lea.vmem %s2, 640
    %v1949 = vld [vmem:[%s1948] sm:$0xff]
    %v1950 = vld [vmem:[%s1948 + $0x8] sm:$0xff]
    %v1951 = vld [vmem:[%s1948 + $0x10] sm:$0xff]
    %v1952 = vld [vmem:[%s1948 + $0x18] sm:$0xff]
    %v1953 = vld [vmem:[%s1948 + $0x20] sm:$0xff]
    %v1954 = vld [vmem:[%s1948 + $0x28] sm:$0xff]
    %v1955 = vld [vmem:[%s1948 + $0x30] sm:$0xff]
    %v1956 = vld [vmem:[%s1948 + $0x38] sm:$0xff]
    %v1957 = vld [vmem:[%s1948 + $0x40] sm:$0xff]
    %v1958 = vld [vmem:[%s1948 + $0x48] sm:$0xff]
    %v1959 = vld [vmem:[%s1948 + $0x50] sm:$0xff]
    %v1960 = vld [vmem:[%s1948 + $0x58] sm:$0xff]
    %v1961 = vld [vmem:[%s1948 + $0x60] sm:$0xff]
    %v1962 = vld [vmem:[%s1948 + $0x68] sm:$0xff]
    %v1963 = vld [vmem:[%s1948 + $0x70] sm:$0xff]
    %v1964 = vld [vmem:[%s1948 + $0x78] sm:$0xff]
    %v1965 = vpack.c.bf16 %v1901, %v1899
    %v1966 = vpack.c.bf16 %v1902, %v1900
    %v1967 = vpack.c.bf16 %v1905, %v1903
    %v1968 = vpack.c.bf16 %v1906, %v1904
    %v1969 = vpack.c.bf16 %v1909, %v1907
    %v1970 = vpack.c.bf16 %v1910, %v1908
    %v1971 = vpack.c.bf16 %v1913, %v1911
    %v1972 = vpack.c.bf16 %v1914, %v1912
    %v1973 = vpack.c.bf16 %v1917, %v1915
    %v1974 = vpack.c.bf16 %v1918, %v1916
    %v1975 = vpack.c.bf16 %v1921, %v1919
    %v1976 = vpack.c.bf16 %v1922, %v1920
    %v1977 = vpack.c.bf16 %v1925, %v1923
    %v1978 = vpack.c.bf16 %v1926, %v1924
    %v1979 = vpack.c.bf16 %v1929, %v1927
    %v1980 = vpack.c.bf16 %v1930, %v1928
    %1982 = vset.pattern.permute.xlu0 0
    %1983 = vperm.xlu0 %1982, %v1949
    %v1984 = vpop.permute.xlu0 %1983
    %1987 = vset.pattern.permute.xlu0 0
    %1988 = vperm.xlu0 %1987, %v1950
    %v1989 = vpop.permute.xlu0 %1988
    %1992 = vset.pattern.permute.xlu0 0
    %1993 = vperm.xlu0 %1992, %v1951
    %v1994 = vpop.permute.xlu0 %1993
    %1997 = vset.pattern.permute.xlu0 0
    %1998 = vperm.xlu0 %1997, %v1952
    %v1999 = vpop.permute.xlu0 %1998
    %2002 = vset.pattern.permute.xlu0 0
    %2003 = vperm.xlu0 %2002, %v1953
    %v2004 = vpop.permute.xlu0 %2003
    %2007 = vset.pattern.permute.xlu0 0
    %2008 = vperm.xlu0 %2007, %v1954
    %v2009 = vpop.permute.xlu0 %2008
    %2012 = vset.pattern.permute.xlu0 0
    %2013 = vperm.xlu0 %2012, %v1955
    %v2014 = vpop.permute.xlu0 %2013
    %2017 = vset.pattern.permute.xlu0 0
    %2018 = vperm.xlu0 %2017, %v1956
    %v2019 = vpop.permute.xlu0 %2018
    %2022 = vset.pattern.permute.xlu0 0
    %2023 = vperm.xlu0 %2022, %v1957
    %v2024 = vpop.permute.xlu0 %2023
    %2027 = vset.pattern.permute.xlu0 0
    %2028 = vperm.xlu0 %2027, %v1958
    %v2029 = vpop.permute.xlu0 %2028
    %2032 = vset.pattern.permute.xlu0 0
    %2033 = vperm.xlu0 %2032, %v1959
    %v2034 = vpop.permute.xlu0 %2033
    %2037 = vset.pattern.permute.xlu0 0
    %2038 = vperm.xlu0 %2037, %v1960
    %v2039 = vpop.permute.xlu0 %2038
    %2042 = vset.pattern.permute.xlu0 0
    %2043 = vperm.xlu0 %2042, %v1961
    %v2044 = vpop.permute.xlu0 %2043
    %2047 = vset.pattern.permute.xlu0 0
    %2048 = vperm.xlu0 %2047, %v1962
    %v2049 = vpop.permute.xlu0 %2048
    %2052 = vset.pattern.permute.xlu0 0
    %2053 = vperm.xlu0 %2052, %v1963
    %v2054 = vpop.permute.xlu0 %2053
    %2057 = vset.pattern.permute.xlu0 0
    %2058 = vperm.xlu0 %2057, %v1964
    %v2059 = vpop.permute.xlu0 %2058
    %v2077 = vunpack.c.l.b16 %v1932
    %v2078 = vunpack.c.l.b16 %v1933
    %v2079 = vunpack.c.l.b16 %v1934
    %v2080 = vunpack.c.l.b16 %v1935
    %v2081 = vunpack.c.l.b16 %v1936
    %v2082 = vunpack.c.l.b16 %v1937
    %v2083 = vunpack.c.l.b16 %v1938
    %v2084 = vunpack.c.l.b16 %v1939
    %v2085 = vunpack.c.l.b16 %v1940
    %v2086 = vunpack.c.l.b16 %v1941
    %v2087 = vunpack.c.l.b16 %v1942
    %v2088 = vunpack.c.l.b16 %v1943
    %v2089 = vunpack.c.l.b16 %v1944
    %v2090 = vunpack.c.l.b16 %v1945
    %v2091 = vunpack.c.l.b16 %v1946
    %v2092 = vunpack.c.l.b16 %v1947
    %v2093 = vpack.c.b16 %v2078, %v2077
    %v2094 = vpack.c.b16 %v2080, %v2079
    %v2095 = vpack.c.b16 %v2082, %v2081
    %v2096 = vpack.c.b16 %v2084, %v2083
    %v2097 = vpack.c.b16 %v2086, %v2085
    %v2098 = vpack.c.b16 %v2088, %v2087
    %v2099 = vpack.c.b16 %v2090, %v2089
    %v2100 = vpack.c.b16 %v2092, %v2091
    %2109 = vmatprep.subr.bf16.mxu0 %v1980
    %2110 = vmatpush1.bf16.msra.mxu0 %v1979
    %2111 = vmatprep.subr.bf16.mxu0 %v1978
    %2112 = vmatpush1.bf16.msra.mxu0 %v1977
    %2113 = vmatprep.subr.bf16.mxu0 %v1976
    %2114 = vmatpush1.bf16.msra.mxu0 %v1975
    %2115 = vmatprep.subr.bf16.mxu0 %v1974
    %2116 = vmatpush1.bf16.msra.mxu0 %v1973
    %2117 = vmatprep.subr.bf16.mxu0 %v1972
    %2118 = vmatpush1.bf16.msra.mxu0 %v1971
    %2119 = vmatprep.subr.bf16.mxu0 %v1970
    %2120 = vmatpush1.bf16.msra.mxu0 %v1969
    %2121 = vmatprep.subr.bf16.mxu0 %v1968
    %2122 = vmatpush1.bf16.msra.mxu0 %v1967
    %2123 = vmatprep.subr.bf16.mxu0 %v1966
    %2124 = vmatpush1.bf16.msra.mxu0 %v1965
    %2125 = vmatprep.subr.bf16.mxu0 0
    %2126 = vmatpush2.bf16.msra.mxu0 0
    %2127 = vmatprep.subr.bf16.mxu0 0
    %2128 = vmatpush2.bf16.msra.mxu0 0
    %2129 = vmatprep.subr.bf16.mxu0 0
    %2130 = vmatpush2.bf16.msra.mxu0 0
    %2131 = vmatprep.subr.bf16.mxu0 0
    %2132 = vmatpush2.bf16.msra.mxu0 0
    %2133 = vmatprep.subr.bf16.mxu0 0
    %2134 = vmatpush2.bf16.msra.mxu0 0
    %2135 = vmatprep.subr.bf16.mxu0 0
    %2136 = vmatpush2.bf16.msra.mxu0 0
    %2137 = vmatprep.subr.bf16.mxu0 0
    %2138 = vmatpush2.bf16.msra.mxu0 0
    %2139 = vmatprep.subr.bf16.mxu0 0
    %2140 = vmatpush2.bf16.msra.mxu0 0
    %2141 = vmatprep.mubr.bf16.mxu0 0
    %2142 = vmatmul.mubr.bf16.gmra.mxu0 %v2093
    %v2143 = vpop.f32.mrf.mxu0
    %v2144 = vadd.f32 %v1984, %v2143
    %v2145 = vpop.f32.mrf.mxu0
    %v2146 = vadd.f32 %v1984, %v2145
    %v2147 = vpop.f32.mrf.mxu0
    %v2148 = vadd.f32 %v1989, %v2147
    %v2149 = vpop.f32.mrf.mxu0
    %v2150 = vadd.f32 %v1989, %v2149
    %2151 = vmatprep.mubr.bf16.mxu0 0
    %2152 = vmatmul.mubr.bf16.gmra.mxu0 %v2094
    %v2153 = vpop.f32.mrf.mxu0
    %v2154 = vadd.f32 %v1994, %v2153
    %v2155 = vpop.f32.mrf.mxu0
    %v2156 = vadd.f32 %v1994, %v2155
    %v2157 = vpop.f32.mrf.mxu0
    %v2158 = vadd.f32 %v1999, %v2157
    %v2159 = vpop.f32.mrf.mxu0
    %v2160 = vadd.f32 %v1999, %v2159
    %2161 = vmatprep.mubr.bf16.mxu0 0
    %2162 = vmatmul.mubr.bf16.gmra.mxu0 %v2095
    %v2163 = vpop.f32.mrf.mxu0
    %v2164 = vadd.f32 %v2004, %v2163
    %v2165 = vpop.f32.mrf.mxu0
    %v2166 = vadd.f32 %v2004, %v2165
    %v2167 = vpop.f32.mrf.mxu0
    %v2168 = vadd.f32 %v2009, %v2167
    %v2169 = vpop.f32.mrf.mxu0
    %v2170 = vadd.f32 %v2009, %v2169
    %2171 = vmatprep.mubr.bf16.mxu0 0
    %2172 = vmatmul.mubr.bf16.gmra.mxu0 %v2096
    %v2173 = vpop.f32.mrf.mxu0
    %v2174 = vadd.f32 %v2014, %v2173
    %v2175 = vpop.f32.mrf.mxu0
    %v2176 = vadd.f32 %v2014, %v2175
    %v2177 = vpop.f32.mrf.mxu0
    %v2178 = vadd.f32 %v2019, %v2177
    %v2179 = vpop.f32.mrf.mxu0
    %v2180 = vadd.f32 %v2019, %v2179
    %2181 = vmatprep.mubr.bf16.mxu0 0
    %2182 = vmatmul.mubr.bf16.gmra.mxu0 %v2097
    %v2183 = vpop.f32.mrf.mxu0
    %v2184 = vadd.f32 %v2024, %v2183
    %v2185 = vpop.f32.mrf.mxu0
    %v2186 = vadd.f32 %v2024, %v2185
    %v2187 = vpop.f32.mrf.mxu0
    %v2188 = vadd.f32 %v2029, %v2187
    %v2189 = vpop.f32.mrf.mxu0
    %v2190 = vadd.f32 %v2029, %v2189
    %2191 = vmatprep.mubr.bf16.mxu0 0
    %2192 = vmatmul.mubr.bf16.gmra.mxu0 %v2098
    %v2193 = vpop.f32.mrf.mxu0
    %v2194 = vadd.f32 %v2034, %v2193
    %v2195 = vpop.f32.mrf.mxu0
    %v2196 = vadd.f32 %v2034, %v2195
    %v2197 = vpop.f32.mrf.mxu0
    %v2198 = vadd.f32 %v2039, %v2197
    %v2199 = vpop.f32.mrf.mxu0
    %v2200 = vadd.f32 %v2039, %v2199
    %2201 = vmatprep.mubr.bf16.mxu0 0
    %2202 = vmatmul.mubr.bf16.gmra.mxu0 %v2099
    %v2203 = vpop.f32.mrf.mxu0
    %v2204 = vadd.f32 %v2044, %v2203
    %v2205 = vpop.f32.mrf.mxu0
    %v2206 = vadd.f32 %v2044, %v2205
    %v2207 = vpop.f32.mrf.mxu0
    %v2208 = vadd.f32 %v2049, %v2207
    %v2209 = vpop.f32.mrf.mxu0
    %v2210 = vadd.f32 %v2049, %v2209
    %2211 = vmatprep.mubr.bf16.mxu0 0
    %2212 = vmatmul.mubr.bf16.gmra.mxu0 %v2100
    %v2213 = vpop.f32.mrf.mxu0
    %v2214 = vadd.f32 %v2054, %v2213
    %v2215 = vpop.f32.mrf.mxu0
    %v2216 = vadd.f32 %v2054, %v2215
    %v2217 = vpop.f32.mrf.mxu0
    %v2218 = vadd.f32 %v2059, %v2217
    %v2219 = vpop.f32.mrf.mxu0
    %v2220 = vadd.f32 %v2059, %v2219
    %2221 = vdwg.mxu0
    %v2222 = vmax.f32 %v2144, 0.0
    %v2223 = vmax.f32 %v2146, 0.0
    %v2224 = vmax.f32 %v2148, 0.0
    %v2225 = vmax.f32 %v2150, 0.0
    %v2226 = vmax.f32 %v2154, 0.0
    %v2227 = vmax.f32 %v2156, 0.0
    %v2228 = vmax.f32 %v2158, 0.0
    %v2229 = vmax.f32 %v2160, 0.0
    %v2230 = vmax.f32 %v2164, 0.0
    %v2231 = vmax.f32 %v2166, 0.0
    %v2232 = vmax.f32 %v2168, 0.0
    %v2233 = vmax.f32 %v2170, 0.0
    %v2234 = vmax.f32 %v2174, 0.0
    %v2235 = vmax.f32 %v2176, 0.0
    %v2236 = vmax.f32 %v2178, 0.0
    %v2237 = vmax.f32 %v2180, 0.0
    %v2238 = vmax.f32 %v2184, 0.0
    %v2239 = vmax.f32 %v2186, 0.0
    %v2240 = vmax.f32 %v2188, 0.0
    %v2241 = vmax.f32 %v2190, 0.0
    %v2242 = vmax.f32 %v2194, 0.0
    %v2243 = vmax.f32 %v2196, 0.0
    %v2244 = vmax.f32 %v2198, 0.0
    %v2245 = vmax.f32 %v2200, 0.0
    %v2246 = vmax.f32 %v2204, 0.0
    %v2247 = vmax.f32 %v2206, 0.0
    %v2248 = vmax.f32 %v2208, 0.0
    %v2249 = vmax.f32 %v2210, 0.0
    %v2250 = vmax.f32 %v2214, 0.0
    %v2251 = vmax.f32 %v2216, 0.0
    %v2252 = vmax.f32 %v2218, 0.0
    %v2253 = vmax.f32 %v2220, 0.0
    %s2254 = scalar_lea.vmem %s1, 384
    %v2255 = vld [vmem:[%s2254] sm:$0xf]
    %v2256 = vld [vmem:[%s2254 + $0x4] sm:$0xf]
    %v2257 = vld [vmem:[%s2254 + $0x8] sm:$0xf]
    %v2258 = vld [vmem:[%s2254 + $0xc] sm:$0xf]
    %v2259 = vld [vmem:[%s2254 + $0x10] sm:$0xf]
    %v2260 = vld [vmem:[%s2254 + $0x14] sm:$0xf]
    %v2261 = vld [vmem:[%s2254 + $0x18] sm:$0xf]
    %v2262 = vld [vmem:[%s2254 + $0x1c] sm:$0xf]
    %v2263 = vld [vmem:[%s2254 + $0x20] sm:$0xf]
    %v2264 = vld [vmem:[%s2254 + $0x24] sm:$0xf]
    %v2265 = vld [vmem:[%s2254 + $0x28] sm:$0xf]
    %v2266 = vld [vmem:[%s2254 + $0x2c] sm:$0xf]
    %v2267 = vld [vmem:[%s2254 + $0x30] sm:$0xf]
    %v2268 = vld [vmem:[%s2254 + $0x34] sm:$0xf]
    %v2269 = vld [vmem:[%s2254 + $0x38] sm:$0xf]
    %v2270 = vld [vmem:[%s2254 + $0x3c] sm:$0xf]
    %s2271 = scalar_lea.vmem %s2, 768
    %v2272 = vld [vmem:[%s2271] sm:$0xff]
    %v2273 = vld [vmem:[%s2271 + $0x8] sm:$0xff]
    %v2274 = vld [vmem:[%s2271 + $0x10] sm:$0xff]
    %v2275 = vld [vmem:[%s2271 + $0x18] sm:$0xff]
    %v2276 = vld [vmem:[%s2271 + $0x20] sm:$0xff]
    %v2277 = vld [vmem:[%s2271 + $0x28] sm:$0xff]
    %v2278 = vld [vmem:[%s2271 + $0x30] sm:$0xff]
    %v2279 = vld [vmem:[%s2271 + $0x38] sm:$0xff]
    %v2280 = vld [vmem:[%s2271 + $0x40] sm:$0xff]
    %v2281 = vld [vmem:[%s2271 + $0x48] sm:$0xff]
    %v2282 = vld [vmem:[%s2271 + $0x50] sm:$0xff]
    %v2283 = vld [vmem:[%s2271 + $0x58] sm:$0xff]
    %v2284 = vld [vmem:[%s2271 + $0x60] sm:$0xff]
    %v2285 = vld [vmem:[%s2271 + $0x68] sm:$0xff]
    %v2286 = vld [vmem:[%s2271 + $0x70] sm:$0xff]
    %v2287 = vld [vmem:[%s2271 + $0x78] sm:$0xff]
    %v2288 = vpack.c.bf16 %v2224, %v2222
    %v2289 = vpack.c.bf16 %v2225, %v2223
    %v2290 = vpack.c.bf16 %v2228, %v2226
    %v2291 = vpack.c.bf16 %v2229, %v2227
    %v2292 = vpack.c.bf16 %v2232, %v2230
    %v2293 = vpack.c.bf16 %v2233, %v2231
    %v2294 = vpack.c.bf16 %v2236, %v2234
    %v2295 = vpack.c.bf16 %v2237, %v2235
    %v2296 = vpack.c.bf16 %v2240, %v2238
    %v2297 = vpack.c.bf16 %v2241, %v2239
    %v2298 = vpack.c.bf16 %v2244, %v2242
    %v2299 = vpack.c.bf16 %v2245, %v2243
    %v2300 = vpack.c.bf16 %v2248, %v2246
    %v2301 = vpack.c.bf16 %v2249, %v2247
    %v2302 = vpack.c.bf16 %v2252, %v2250
    %v2303 = vpack.c.bf16 %v2253, %v2251
    %2305 = vset.pattern.permute.xlu0 0
    %2306 = vperm.xlu0 %2305, %v2272
    %v2307 = vpop.permute.xlu0 %2306
    %2310 = vset.pattern.permute.xlu0 0
    %2311 = vperm.xlu0 %2310, %v2273
    %v2312 = vpop.permute.xlu0 %2311
    %2315 = vset.pattern.permute.xlu0 0
    %2316 = vperm.xlu0 %2315, %v2274
    %v2317 = vpop.permute.xlu0 %2316
    %2320 = vset.pattern.permute.xlu0 0
    %2321 = vperm.xlu0 %2320, %v2275
    %v2322 = vpop.permute.xlu0 %2321
    %2325 = vset.pattern.permute.xlu0 0
    %2326 = vperm.xlu0 %2325, %v2276
    %v2327 = vpop.permute.xlu0 %2326
    %2330 = vset.pattern.permute.xlu0 0
    %2331 = vperm.xlu0 %2330, %v2277
    %v2332 = vpop.permute.xlu0 %2331
    %2335 = vset.pattern.permute.xlu0 0
    %2336 = vperm.xlu0 %2335, %v2278
    %v2337 = vpop.permute.xlu0 %2336
    %2340 = vset.pattern.permute.xlu0 0
    %2341 = vperm.xlu0 %2340, %v2279
    %v2342 = vpop.permute.xlu0 %2341
    %2345 = vset.pattern.permute.xlu0 0
    %2346 = vperm.xlu0 %2345, %v2280
    %v2347 = vpop.permute.xlu0 %2346
    %2350 = vset.pattern.permute.xlu0 0
    %2351 = vperm.xlu0 %2350, %v2281
    %v2352 = vpop.permute.xlu0 %2351
    %2355 = vset.pattern.permute.xlu0 0
    %2356 = vperm.xlu0 %2355, %v2282
    %v2357 = vpop.permute.xlu0 %2356
    %2360 = vset.pattern.permute.xlu0 0
    %2361 = vperm.xlu0 %2360, %v2283
    %v2362 = vpop.permute.xlu0 %2361
    %2365 = vset.pattern.permute.xlu0 0
    %2366 = vperm.xlu0 %2365, %v2284
    %v2367 = vpop.permute.xlu0 %2366
    %2370 = vset.pattern.permute.xlu0 0
    %2371 = vperm.xlu0 %2370, %v2285
    %v2372 = vpop.permute.xlu0 %2371
    %2375 = vset.pattern.permute.xlu0 0
    %2376 = vperm.xlu0 %2375, %v2286
    %v2377 = vpop.permute.xlu0 %2376
    %2380 = vset.pattern.permute.xlu0 0
    %2381 = vperm.xlu0 %2380, %v2287
    %v2382 = vpop.permute.xlu0 %2381
    %v2400 = vunpack.c.l.b16 %v2255
    %v2401 = vunpack.c.l.b16 %v2256
    %v2402 = vunpack.c.l.b16 %v2257
    %v2403 = vunpack.c.l.b16 %v2258
    %v2404 = vunpack.c.l.b16 %v2259
    %v2405 = vunpack.c.l.b16 %v2260
    %v2406 = vunpack.c.l.b16 %v2261
    %v2407 = vunpack.c.l.b16 %v2262
    %v2408 = vunpack.c.l.b16 %v2263
    %v2409 = vunpack.c.l.b16 %v2264
    %v2410 = vunpack.c.l.b16 %v2265
    %v2411 = vunpack.c.l.b16 %v2266
    %v2412 = vunpack.c.l.b16 %v2267
    %v2413 = vunpack.c.l.b16 %v2268
    %v2414 = vunpack.c.l.b16 %v2269
    %v2415 = vunpack.c.l.b16 %v2270
    %v2416 = vpack.c.b16 %v2401, %v2400
    %v2417 = vpack.c.b16 %v2403, %v2402
    %v2418 = vpack.c.b16 %v2405, %v2404
    %v2419 = vpack.c.b16 %v2407, %v2406
    %v2420 = vpack.c.b16 %v2409, %v2408
    %v2421 = vpack.c.b16 %v2411, %v2410
    %v2422 = vpack.c.b16 %v2413, %v2412
    %v2423 = vpack.c.b16 %v2415, %v2414
    %2432 = vmatprep.subr.bf16.mxu0 %v2303
    %2433 = vmatpush1.bf16.msra.mxu0 %v2302
    %2434 = vmatprep.subr.bf16.mxu0 %v2301
    %2435 = vmatpush1.bf16.msra.mxu0 %v2300
    %2436 = vmatprep.subr.bf16.mxu0 %v2299
    %2437 = vmatpush1.bf16.msra.mxu0 %v2298
    %2438 = vmatprep.subr.bf16.mxu0 %v2297
    %2439 = vmatpush1.bf16.msra.mxu0 %v2296
    %2440 = vmatprep.subr.bf16.mxu0 %v2295
    %2441 = vmatpush1.bf16.msra.mxu0 %v2294
    %2442 = vmatprep.subr.bf16.mxu0 %v2293
    %2443 = vmatpush1.bf16.msra.mxu0 %v2292
    %2444 = vmatprep.subr.bf16.mxu0 %v2291
    %2445 = vmatpush1.bf16.msra.mxu0 %v2290
    %2446 = vmatprep.subr.bf16.mxu0 %v2289
    %2447 = vmatpush1.bf16.msra.mxu0 %v2288
    %2448 = vmatprep.subr.bf16.mxu0 0
    %2449 = vmatpush2.bf16.msra.mxu0 0
    %2450 = vmatprep.subr.bf16.mxu0 0
    %2451 = vmatpush2.bf16.msra.mxu0 0
    %2452 = vmatprep.subr.bf16.mxu0 0
    %2453 = vmatpush2.bf16.msra.mxu0 0
    %2454 = vmatprep.subr.bf16.mxu0 0
    %2455 = vmatpush2.bf16.msra.mxu0 0
    %2456 = vmatprep.subr.bf16.mxu0 0
    %2457 = vmatpush2.bf16.msra.mxu0 0
    %2458 = vmatprep.subr.bf16.mxu0 0
    %2459 = vmatpush2.bf16.msra.mxu0 0
    %2460 = vmatprep.subr.bf16.mxu0 0
    %2461 = vmatpush2.bf16.msra.mxu0 0
    %2462 = vmatprep.subr.bf16.mxu0 0
    %2463 = vmatpush2.bf16.msra.mxu0 0
    %2464 = vmatprep.mubr.bf16.mxu0 0
    %2465 = vmatmul.mubr.bf16.gmra.mxu0 %v2416
    %v2466 = vpop.f32.mrf.mxu0
    %v2467 = vadd.f32 %v2307, %v2466
    %v2468 = vpop.f32.mrf.mxu0
    %v2469 = vadd.f32 %v2307, %v2468
    %v2470 = vpop.f32.mrf.mxu0
    %v2471 = vadd.f32 %v2312, %v2470
    %v2472 = vpop.f32.mrf.mxu0
    %v2473 = vadd.f32 %v2312, %v2472
    %2474 = vmatprep.mubr.bf16.mxu0 0
    %2475 = vmatmul.mubr.bf16.gmra.mxu0 %v2417
    %v2476 = vpop.f32.mrf.mxu0
    %v2477 = vadd.f32 %v2317, %v2476
    %v2478 = vpop.f32.mrf.mxu0
    %v2479 = vadd.f32 %v2317, %v2478
    %v2480 = vpop.f32.mrf.mxu0
    %v2481 = vadd.f32 %v2322, %v2480
    %v2482 = vpop.f32.mrf.mxu0
    %v2483 = vadd.f32 %v2322, %v2482
    %2484 = vmatprep.mubr.bf16.mxu0 0
    %2485 = vmatmul.mubr.bf16.gmra.mxu0 %v2418
    %v2486 = vpop.f32.mrf.mxu0
    %v2487 = vadd.f32 %v2327, %v2486
    %v2488 = vpop.f32.mrf.mxu0
    %v2489 = vadd.f32 %v2327, %v2488
    %v2490 = vpop.f32.mrf.mxu0
    %v2491 = vadd.f32 %v2332, %v2490
    %v2492 = vpop.f32.mrf.mxu0
    %v2493 = vadd.f32 %v2332, %v2492
    %2494 = vmatprep.mubr.bf16.mxu0 0
    %2495 = vmatmul.mubr.bf16.gmra.mxu0 %v2419
    %v2496 = vpop.f32.mrf.mxu0
    %v2497 = vadd.f32 %v2337, %v2496
    %v2498 = vpop.f32.mrf.mxu0
    %v2499 = vadd.f32 %v2337, %v2498
    %v2500 = vpop.f32.mrf.mxu0
    %v2501 = vadd.f32 %v2342, %v2500
    %v2502 = vpop.f32.mrf.mxu0
    %v2503 = vadd.f32 %v2342, %v2502
    %2504 = vmatprep.mubr.bf16.mxu0 0
    %2505 = vmatmul.mubr.bf16.gmra.mxu0 %v2420
    %v2506 = vpop.f32.mrf.mxu0
    %v2507 = vadd.f32 %v2347, %v2506
    %v2508 = vpop.f32.mrf.mxu0
    %v2509 = vadd.f32 %v2347, %v2508
    %v2510 = vpop.f32.mrf.mxu0
    %v2511 = vadd.f32 %v2352, %v2510
    %v2512 = vpop.f32.mrf.mxu0
    %v2513 = vadd.f32 %v2352, %v2512
    %2514 = vmatprep.mubr.bf16.mxu0 0
    %2515 = vmatmul.mubr.bf16.gmra.mxu0 %v2421
    %v2516 = vpop.f32.mrf.mxu0
    %v2517 = vadd.f32 %v2357, %v2516
    %v2518 = vpop.f32.mrf.mxu0
    %v2519 = vadd.f32 %v2357, %v2518
    %v2520 = vpop.f32.mrf.mxu0
    %v2521 = vadd.f32 %v2362, %v2520
    %v2522 = vpop.f32.mrf.mxu0
    %v2523 = vadd.f32 %v2362, %v2522
    %2524 = vmatprep.mubr.bf16.mxu0 0
    %2525 = vmatmul.mubr.bf16.gmra.mxu0 %v2422
    %v2526 = vpop.f32.mrf.mxu0
    %v2527 = vadd.f32 %v2367, %v2526
    %v2528 = vpop.f32.mrf.mxu0
    %v2529 = vadd.f32 %v2367, %v2528
    %v2530 = vpop.f32.mrf.mxu0
    %v2531 = vadd.f32 %v2372, %v2530
    %v2532 = vpop.f32.mrf.mxu0
    %v2533 = vadd.f32 %v2372, %v2532
    %2534 = vmatprep.mubr.bf16.mxu0 0
    %2535 = vmatmul.mubr.bf16.gmra.mxu0 %v2423
    %v2536 = vpop.f32.mrf.mxu0
    %v2537 = vadd.f32 %v2377, %v2536
    %v2538 = vpop.f32.mrf.mxu0
    %v2539 = vadd.f32 %v2377, %v2538
    %v2540 = vpop.f32.mrf.mxu0
    %v2541 = vadd.f32 %v2382, %v2540
    %v2542 = vpop.f32.mrf.mxu0
    %v2543 = vadd.f32 %v2382, %v2542
    %2544 = vdwg.mxu0
    %v2545 = vmax.f32 %v2467, 0.0
    %v2546 = vmax.f32 %v2469, 0.0
    %v2547 = vmax.f32 %v2471, 0.0
    %v2548 = vmax.f32 %v2473, 0.0
    %v2549 = vmax.f32 %v2477, 0.0
    %v2550 = vmax.f32 %v2479, 0.0
    %v2551 = vmax.f32 %v2481, 0.0
    %v2552 = vmax.f32 %v2483, 0.0
    %v2553 = vmax.f32 %v2487, 0.0
    %v2554 = vmax.f32 %v2489, 0.0
    %v2555 = vmax.f32 %v2491, 0.0
    %v2556 = vmax.f32 %v2493, 0.0
    %v2557 = vmax.f32 %v2497, 0.0
    %v2558 = vmax.f32 %v2499, 0.0
    %v2559 = vmax.f32 %v2501, 0.0
    %v2560 = vmax.f32 %v2503, 0.0
    %v2561 = vmax.f32 %v2507, 0.0
    %v2562 = vmax.f32 %v2509, 0.0
    %v2563 = vmax.f32 %v2511, 0.0
    %v2564 = vmax.f32 %v2513, 0.0
    %v2565 = vmax.f32 %v2517, 0.0
    %v2566 = vmax.f32 %v2519, 0.0
    %v2567 = vmax.f32 %v2521, 0.0
    %v2568 = vmax.f32 %v2523, 0.0
    %v2569 = vmax.f32 %v2527, 0.0
    %v2570 = vmax.f32 %v2529, 0.0
    %v2571 = vmax.f32 %v2531, 0.0
    %v2572 = vmax.f32 %v2533, 0.0
    %v2573 = vmax.f32 %v2537, 0.0
    %v2574 = vmax.f32 %v2539, 0.0
    %v2575 = vmax.f32 %v2541, 0.0
    %v2576 = vmax.f32 %v2543, 0.0
    %s2577 = scalar_lea.vmem %s1, 448
    %v2578 = vld [vmem:[%s2577] sm:$0xf]
    %v2579 = vld [vmem:[%s2577 + $0x4] sm:$0xf]
    %v2580 = vld [vmem:[%s2577 + $0x8] sm:$0xf]
    %v2581 = vld [vmem:[%s2577 + $0xc] sm:$0xf]
    %v2582 = vld [vmem:[%s2577 + $0x10] sm:$0xf]
    %v2583 = vld [vmem:[%s2577 + $0x14] sm:$0xf]
    %v2584 = vld [vmem:[%s2577 + $0x18] sm:$0xf]
    %v2585 = vld [vmem:[%s2577 + $0x1c] sm:$0xf]
    %v2586 = vld [vmem:[%s2577 + $0x20] sm:$0xf]
    %v2587 = vld [vmem:[%s2577 + $0x24] sm:$0xf]
    %v2588 = vld [vmem:[%s2577 + $0x28] sm:$0xf]
    %v2589 = vld [vmem:[%s2577 + $0x2c] sm:$0xf]
    %v2590 = vld [vmem:[%s2577 + $0x30] sm:$0xf]
    %v2591 = vld [vmem:[%s2577 + $0x34] sm:$0xf]
    %v2592 = vld [vmem:[%s2577 + $0x38] sm:$0xf]
    %v2593 = vld [vmem:[%s2577 + $0x3c] sm:$0xf]
    %s2594 = scalar_lea.vmem %s2, 896
    %v2595 = vld [vmem:[%s2594] sm:$0xff]
    %v2596 = vld [vmem:[%s2594 + $0x8] sm:$0xff]
    %v2597 = vld [vmem:[%s2594 + $0x10] sm:$0xff]
    %v2598 = vld [vmem:[%s2594 + $0x18] sm:$0xff]
    %v2599 = vld [vmem:[%s2594 + $0x20] sm:$0xff]
    %v2600 = vld [vmem:[%s2594 + $0x28] sm:$0xff]
    %v2601 = vld [vmem:[%s2594 + $0x30] sm:$0xff]
    %v2602 = vld [vmem:[%s2594 + $0x38] sm:$0xff]
    %v2603 = vld [vmem:[%s2594 + $0x40] sm:$0xff]
    %v2604 = vld [vmem:[%s2594 + $0x48] sm:$0xff]
    %v2605 = vld [vmem:[%s2594 + $0x50] sm:$0xff]
    %v2606 = vld [vmem:[%s2594 + $0x58] sm:$0xff]
    %v2607 = vld [vmem:[%s2594 + $0x60] sm:$0xff]
    %v2608 = vld [vmem:[%s2594 + $0x68] sm:$0xff]
    %v2609 = vld [vmem:[%s2594 + $0x70] sm:$0xff]
    %v2610 = vld [vmem:[%s2594 + $0x78] sm:$0xff]
    %v2611 = vpack.c.bf16 %v2547, %v2545
    %v2612 = vpack.c.bf16 %v2548, %v2546
    %v2613 = vpack.c.bf16 %v2551, %v2549
    %v2614 = vpack.c.bf16 %v2552, %v2550
    %v2615 = vpack.c.bf16 %v2555, %v2553
    %v2616 = vpack.c.bf16 %v2556, %v2554
    %v2617 = vpack.c.bf16 %v2559, %v2557
    %v2618 = vpack.c.bf16 %v2560, %v2558
    %v2619 = vpack.c.bf16 %v2563, %v2561
    %v2620 = vpack.c.bf16 %v2564, %v2562
    %v2621 = vpack.c.bf16 %v2567, %v2565
    %v2622 = vpack.c.bf16 %v2568, %v2566
    %v2623 = vpack.c.bf16 %v2571, %v2569
    %v2624 = vpack.c.bf16 %v2572, %v2570
    %v2625 = vpack.c.bf16 %v2575, %v2573
    %v2626 = vpack.c.bf16 %v2576, %v2574
    %2628 = vset.pattern.permute.xlu0 0
    %2629 = vperm.xlu0 %2628, %v2595
    %v2630 = vpop.permute.xlu0 %2629
    %2633 = vset.pattern.permute.xlu0 0
    %2634 = vperm.xlu0 %2633, %v2596
    %v2635 = vpop.permute.xlu0 %2634
    %2638 = vset.pattern.permute.xlu0 0
    %2639 = vperm.xlu0 %2638, %v2597
    %v2640 = vpop.permute.xlu0 %2639
    %2643 = vset.pattern.permute.xlu0 0
    %2644 = vperm.xlu0 %2643, %v2598
    %v2645 = vpop.permute.xlu0 %2644
    %2648 = vset.pattern.permute.xlu0 0
    %2649 = vperm.xlu0 %2648, %v2599
    %v2650 = vpop.permute.xlu0 %2649
    %2652 = vset.pattern.permute.xlu0 0
    %2653 = vperm.xlu0 %2652, %v2600
    %v2654 = vpop.permute.xlu0 %2653
    %2656 = vset.pattern.permute.xlu0 0
    %2657 = vperm.xlu0 %2656, %v2601
    %v2658 = vpop.permute.xlu0 %2657
    %2660 = vset.pattern.permute.xlu0 0
    %2661 = vperm.xlu0 %2660, %v2602
    %v2662 = vpop.permute.xlu0 %2661
    %2664 = vset.pattern.permute.xlu0 0
    %2665 = vperm.xlu0 %2664, %v2603
    %v2666 = vpop.permute.xlu0 %2665
    %2668 = vset.pattern.permute.xlu0 0
    %2669 = vperm.xlu0 %2668, %v2604
    %v2670 = vpop.permute.xlu0 %2669
    %2672 = vset.pattern.permute.xlu0 0
    %2673 = vperm.xlu0 %2672, %v2605
    %v2674 = vpop.permute.xlu0 %2673
    %2676 = vset.pattern.permute.xlu0 0
    %2677 = vperm.xlu0 %2676, %v2606
    %v2678 = vpop.permute.xlu0 %2677
    %2680 = vset.pattern.permute.xlu0 0
    %2681 = vperm.xlu0 %2680, %v2607
    %v2682 = vpop.permute.xlu0 %2681
    %2684 = vset.pattern.permute.xlu0 0
    %2685 = vperm.xlu0 %2684, %v2608
    %v2686 = vpop.permute.xlu0 %2685
    %2688 = vset.pattern.permute.xlu0 0
    %2689 = vperm.xlu0 %2688, %v2609
    %v2690 = vpop.permute.xlu0 %2689
    %2692 = vset.pattern.permute.xlu0 0
    %2693 = vperm.xlu0 %2692, %v2610
    %v2694 = vpop.permute.xlu0 %2693
    %v2711 = vunpack.c.l.b16 %v2578
    %v2712 = vunpack.c.l.b16 %v2579
    %v2713 = vunpack.c.l.b16 %v2580
    %v2714 = vunpack.c.l.b16 %v2581
    %v2715 = vunpack.c.l.b16 %v2582
    %v2716 = vunpack.c.l.b16 %v2583
    %v2717 = vunpack.c.l.b16 %v2584
    %v2718 = vunpack.c.l.b16 %v2585
    %v2719 = vunpack.c.l.b16 %v2586
    %v2720 = vunpack.c.l.b16 %v2587
    %v2721 = vunpack.c.l.b16 %v2588
    %v2722 = vunpack.c.l.b16 %v2589
    %v2723 = vunpack.c.l.b16 %v2590
    %v2724 = vunpack.c.l.b16 %v2591
    %v2725 = vunpack.c.l.b16 %v2592
    %v2726 = vunpack.c.l.b16 %v2593
    %v2727 = vpack.c.b16 %v2712, %v2711
    %v2728 = vpack.c.b16 %v2714, %v2713
    %v2729 = vpack.c.b16 %v2716, %v2715
    %v2730 = vpack.c.b16 %v2718, %v2717
    %v2731 = vpack.c.b16 %v2720, %v2719
    %v2732 = vpack.c.b16 %v2722, %v2721
    %v2733 = vpack.c.b16 %v2724, %v2723
    %v2734 = vpack.c.b16 %v2726, %v2725
    %2743 = vmatprep.subr.bf16.mxu0 %v2626
    %2744 = vmatpush1.bf16.msra.mxu0 %v2625
    %2745 = vmatprep.subr.bf16.mxu0 %v2624
    %2746 = vmatpush1.bf16.msra.mxu0 %v2623
    %2747 = vmatprep.subr.bf16.mxu0 %v2622
    %2748 = vmatpush1.bf16.msra.mxu0 %v2621
    %2749 = vmatprep.subr.bf16.mxu0 %v2620
    %2750 = vmatpush1.bf16.msra.mxu0 %v2619
    %2751 = vmatprep.subr.bf16.mxu0 %v2618
    %2752 = vmatpush1.bf16.msra.mxu0 %v2617
    %2753 = vmatprep.subr.bf16.mxu0 %v2616
    %2754 = vmatpush1.bf16.msra.mxu0 %v2615
    %2755 = vmatprep.subr.bf16.mxu0 %v2614
    %2756 = vmatpush1.bf16.msra.mxu0 %v2613
    %2757 = vmatprep.subr.bf16.mxu0 %v2612
    %2758 = vmatpush1.bf16.msra.mxu0 %v2611
    %2759 = vmatprep.subr.bf16.mxu0 0
    %2760 = vmatpush2.bf16.msra.mxu0 0
    %2761 = vmatprep.subr.bf16.mxu0 0
    %2762 = vmatpush2.bf16.msra.mxu0 0
    %2763 = vmatprep.subr.bf16.mxu0 0
    %2764 = vmatpush2.bf16.msra.mxu0 0
    %2765 = vmatprep.subr.bf16.mxu0 0
    %2766 = vmatpush2.bf16.msra.mxu0 0
    %2767 = vmatprep.subr.bf16.mxu0 0
    %2768 = vmatpush2.bf16.msra.mxu0 0
    %2769 = vmatprep.subr.bf16.mxu0 0
    %2770 = vmatpush2.bf16.msra.mxu0 0
    %2771 = vmatprep.subr.bf16.mxu0 0
    %2772 = vmatpush2.bf16.msra.mxu0 0
    %2773 = vmatprep.subr.bf16.mxu0 0
    %2774 = vmatpush2.bf16.msra.mxu0 0
    %2775 = vmatprep.mubr.bf16.mxu0 0
    %2776 = vmatmul.mubr.bf16.gmra.mxu0 %v2727
    %v2777 = vpop.f32.mrf.mxu0
    %v2778 = vadd.f32 %v2630, %v2777
    %v2779 = vpop.f32.mrf.mxu0
    %v2780 = vadd.f32 %v2630, %v2779
    %v2781 = vpop.f32.mrf.mxu0
    %v2782 = vadd.f32 %v2635, %v2781
    %v2783 = vpop.f32.mrf.mxu0
    %v2784 = vadd.f32 %v2635, %v2783
    %2785 = vmatprep.mubr.bf16.mxu0 0
    %2786 = vmatmul.mubr.bf16.gmra.mxu0 %v2728
    %v2787 = vpop.f32.mrf.mxu0
    %v2788 = vadd.f32 %v2640, %v2787
    %v2789 = vpop.f32.mrf.mxu0
    %v2790 = vadd.f32 %v2640, %v2789
    %v2791 = vpop.f32.mrf.mxu0
    %v2792 = vadd.f32 %v2645, %v2791
    %v2793 = vpop.f32.mrf.mxu0
    %v2794 = vadd.f32 %v2645, %v2793
    %2795 = vmatprep.mubr.bf16.mxu0 0
    %2796 = vmatmul.mubr.bf16.gmra.mxu0 %v2729
    %v2797 = vpop.f32.mrf.mxu0
    %v2798 = vpop.f32.mrf.mxu0
    %v2799 = vpop.f32.mrf.mxu0
    %v2800 = vpop.f32.mrf.mxu0
    %2801 = vmatprep.mubr.bf16.mxu0 0
    %2802 = vmatmul.mubr.bf16.gmra.mxu0 %v2730
    %v2803 = vpop.f32.mrf.mxu0
    %v2804 = vpop.f32.mrf.mxu0
    %v2805 = vpop.f32.mrf.mxu0
    %v2806 = vpop.f32.mrf.mxu0
    %2807 = vmatprep.mubr.bf16.mxu0 0
    %2808 = vmatmul.mubr.bf16.gmra.mxu0 %v2731
    %v2809 = vpop.f32.mrf.mxu0
    %v2810 = vpop.f32.mrf.mxu0
    %v2811 = vpop.f32.mrf.mxu0
    %v2812 = vpop.f32.mrf.mxu0
    %2813 = vmatprep.mubr.bf16.mxu0 0
    %2814 = vmatmul.mubr.bf16.gmra.mxu0 %v2732
    %v2815 = vpop.f32.mrf.mxu0
    %v2816 = vpop.f32.mrf.mxu0
    %v2817 = vpop.f32.mrf.mxu0
    %v2818 = vpop.f32.mrf.mxu0
    %2819 = vmatprep.mubr.bf16.mxu0 0
    %2820 = vmatmul.mubr.bf16.gmra.mxu0 %v2733
    %v2821 = vpop.f32.mrf.mxu0
    %v2822 = vpop.f32.mrf.mxu0
    %v2823 = vpop.f32.mrf.mxu0
    %v2824 = vpop.f32.mrf.mxu0
    %2825 = vmatprep.mubr.bf16.mxu0 0
    %2826 = vmatmul.mubr.bf16.gmra.mxu0 %v2734
    %v2827 = vpop.f32.mrf.mxu0
    %v2828 = vpop.f32.mrf.mxu0
    %v2829 = vpop.f32.mrf.mxu0
    %v2830 = vpop.f32.mrf.mxu0
    %2831 = vdwg.mxu0
    %2832 = vst [vmem:[#allocation4] sm:$0xff] %v2222
    %2833 = vst [vmem:[#allocation4 + $0x8] sm:$0xff] %v2224
    %2834 = vst [vmem:[#allocation4 + $0x10] sm:$0xff] %v2226
    %2835 = vst [vmem:[#allocation4 + $0x18] sm:$0xff] %v2228
    %s2836 = scalar_lea.vmem [#allocation4], 32
    %2837 = vst [vmem:[%s2836] sm:$0xff] %v2223
    %2838 = vst [vmem:[%s2836 + $0x8] sm:$0xff] %v2225
    %2839 = vst [vmem:[%s2836 + $0x10] sm:$0xff] %v2227
    %2840 = vst [vmem:[%s2836 + $0x18] sm:$0xff] %v2229
    %v2841 = vpack.c.bf16 %v2782, %v2778
    %v2842 = vpack.c.bf16 %v2792, %v2788
    %2843 = vxpose.xlu0.b32.start [1/16] %v2778, 128
    %2844 = vxpose.xlu0.b32.cont [2/16] %v2782, 128
    %2845 = vxpose.xlu0.b32.cont [3/16] %v2788, 128
    %2846 = vxpose.xlu0.b32.cont [4/16] %v2792, 128
    %2847 = vxpose.xlu0.b32.cont [5/16] 0.0, 128
    %2848 = vxpose.xlu0.b32.cont [6/16] 0.0, 128
    %2849 = vxpose.xlu0.b32.cont [7/16] 0.0, 128
    %2850 = vxpose.xlu0.b32.cont [8/16] 0.0, 128
    %2851 = vxpose.xlu0.b32.cont [9/16] 0.0, 128
    %2852 = vxpose.xlu0.b32.cont [10/16] 0.0, 128
    %2853 = vxpose.xlu0.b32.cont [11/16] 0.0, 128
    %2854 = vxpose.xlu0.b32.cont [12/16] 0.0, 128
    %2855 = vxpose.xlu0.b32.cont [13/16] 0.0, 128
    %2856 = vxpose.xlu0.b32.cont [14/16] 0.0, 128
    %2857 = vxpose.xlu0.b32.cont [15/16] 0.0, 128
    %2858 = vxpose.xlu0.b32.end [16/16] 0.0, 128
    %v2859 = vpop.trf.xlu0
    %v2860 = vpop.trf.xlu0
    %v2861 = vpop.trf.xlu0
    %v2862 = vpop.trf.xlu0
    %v2863 = vpop.trf.xlu0
    %v2864 = vpop.trf.xlu0
    %v2865 = vpop.trf.xlu0
    %v2866 = vpop.trf.xlu0
    %v2867 = vpop.trf.xlu0
    %v2868 = vpop.trf.xlu0
    %v2869 = vpop.trf.xlu0
    %v2870 = vpop.trf.xlu0
    %v2871 = vpop.trf.xlu0
    %v2872 = vpop.trf.xlu0
    %v2873 = vpop.trf.xlu0
    %v2874 = vpop.trf.xlu0
    %v2875 = vmul.f32 %v2859, %v2859
    %v2876 = vmul.f32 %v2860, %v2860
    %vm2877 = vcmask 261120
    %v2878 = vsel %vm2877, %v2875, 0.0
    %2879 = vadd.xlane.f32.xlu0 %v2878
    %v2880 = vpop.xlane.xlu0 %2879
    %v2881 = vsel %vm2877, %v2876, 0.0
    %2882 = vadd.xlane.f32.xlu0 %v2881
    %v2883 = vpop.xlane.xlu0 %2882
    %v2884 = vadd.f32 %v2859, %v2859
    %v2885 = vadd.f32 %v2860, %v2860
    %v2886 = vpack.c.bf16 %v2885, %v2884
    %v2888 = vsel %vm2877, %v2886, 0
    %2890 = vmatprep.subr.bf16.mxu0 0
    %2891 = vmatpush1.bf16.msra.mxu0 0
    %2892 = vmatprep.subr.bf16.mxu0 0
    %2893 = vmatpush1.bf16.msra.mxu0 0
    %2894 = vmatprep.subr.bf16.mxu0 0
    %2895 = vmatpush1.bf16.msra.mxu0 0
    %2896 = vmatprep.subr.bf16.mxu0 0
    %2897 = vmatpush1.bf16.msra.mxu0 0
    %2898 = vmatprep.subr.bf16.mxu0 0
    %2899 = vmatpush1.bf16.msra.mxu0 0
    %2900 = vmatprep.subr.bf16.mxu0 0
    %2901 = vmatpush1.bf16.msra.mxu0 0
    %2902 = vmatprep.subr.bf16.mxu0 0
    %2903 = vmatpush1.bf16.msra.mxu0 %v2842
    %2904 = vmatprep.subr.bf16.mxu0 0
    %2905 = vmatpush1.bf16.msra.mxu0 %v2841
    %2906 = vmatprep.subr.bf16.mxu0 0
    %2907 = vmatpush2.bf16.msra.mxu0 0
    %2908 = vmatprep.subr.bf16.mxu0 0
    %2909 = vmatpush2.bf16.msra.mxu0 0
    %2910 = vmatprep.subr.bf16.mxu0 0
    %2911 = vmatpush2.bf16.msra.mxu0 0
    %2912 = vmatprep.subr.bf16.mxu0 0
    %2913 = vmatpush2.bf16.msra.mxu0 0
    %2914 = vmatprep.subr.bf16.mxu0 0
    %2915 = vmatpush2.bf16.msra.mxu0 0
    %2916 = vmatprep.subr.bf16.mxu0 0
    %2917 = vmatpush2.bf16.msra.mxu0 0
    %2918 = vmatprep.subr.bf16.mxu0 0
    %2919 = vmatpush2.bf16.msra.mxu0 0
    %2920 = vmatprep.subr.bf16.mxu0 0
    %2921 = vmatpush2.bf16.msra.mxu0 0
    %2922 = vmatprep.mubr.bf16.mxu0 0
    %2923 = vmatmul.mubr.bf16.gmra.mxu0 %v2888
    %v2924 = vpop.f32.mrf.mxu0
    %v2925 = vadd.f32 0.0, %v2924
    %v2926 = vpop.f32.mrf.mxu0
    %v2927 = vpop.f32.mrf.mxu0
    %v2928 = vadd.f32 0.0, %v2927
    %v2929 = vpop.f32.mrf.mxu0
    %2930 = vdwg.mxu0
    %v2931 = vsub.f32 %v2925, %v2880
    %v2932 = vsub.f32 %v2928, %v2883
    %v2933 = vmax.f32 %v2931, %v2932
    %v2934 = vrot.slane %v2933, 4
    %v2935 = vmax.f32 %v2933, %v2934
    %v2936 = vrot.slane %v2935, 2
    %v2937 = vmax.f32 %v2935, %v2936
    %v2938 = vrot.slane %v2937, 1
    %v2939 = vmax.f32 %v2937, %v2938
    %v2940 = vsub.f32 %v2931, %v2939
    %v2941 = vsub.f32 %v2932, %v2939
    %v2942 = vmul.f32 %v2940, 1.442695
    %v2943 = vpow.pop %v2942
    %v2944 = vmul.f32 %v2941, 1.442695
    %v2945 = vpow.pop %v2944
    %v2946 = vadd.f32 %v2943, %v2945
    %v2947 = vrot.slane %v2946, 4
    %v2948 = vadd.f32 %v2946, %v2947
    %v2949 = vrot.slane %v2948, 2
    %v2950 = vadd.f32 %v2948, %v2949
    %v2951 = vrot.slane %v2950, 1
    %v2952 = vadd.f32 %v2950, %v2951
    %v2953 = vadd.f32 %v2952, 1e-16
    %v2954 = vrcp.pop %v2953
    %v2955 = vmul.f32 %v2943, %v2954
    %v2956 = vmul.f32 %v2945, %v2954
    %v2957 = vpack.c.bf16 %v2956, %v2955
    %2958 = vmatprep.subr.bf16.mxu0 0
    %2959 = vmatpush1.bf16.xpose.msra.mxu0 0
    %2960 = vmatprep.subr.bf16.mxu0 0
    %2961 = vmatpush1.bf16.xpose.msra.mxu0 0
    %2962 = vmatprep.subr.bf16.mxu0 0
    %2963 = vmatpush1.bf16.xpose.msra.mxu0 0
    %2964 = vmatprep.subr.bf16.mxu0 0
    %2965 = vmatpush1.bf16.xpose.msra.mxu0 0
    %2966 = vmatprep.subr.bf16.mxu0 0
    %2967 = vmatpush1.bf16.xpose.msra.mxu0 0
    %2968 = vmatprep.subr.bf16.mxu0 0
    %2969 = vmatpush1.bf16.xpose.msra.mxu0 0
    %2970 = vmatprep.subr.bf16.mxu0 0
    %2971 = vmatpush1.bf16.xpose.msra.mxu0 %v2842
    %2972 = vmatprep.subr.bf16.mxu0 0
    %2973 = vmatpush1.bf16.xpose.msra.mxu0 %v2841
    %2974 = vmatprep.subr.bf16.mxu0 0
    %2975 = vmatpush2.bf16.xpose.msra.mxu0 0
    %2976 = vmatprep.subr.bf16.mxu0 0
    %2977 = vmatpush2.bf16.xpose.msra.mxu0 0
    %2978 = vmatprep.subr.bf16.mxu0 0
    %2979 = vmatpush2.bf16.xpose.msra.mxu0 0
    %2980 = vmatprep.subr.bf16.mxu0 0
    %2981 = vmatpush2.bf16.xpose.msra.mxu0 0
    %2982 = vmatprep.subr.bf16.mxu0 0
    %2983 = vmatpush2.bf16.xpose.msra.mxu0 0
    %2984 = vmatprep.subr.bf16.mxu0 0
    %2985 = vmatpush2.bf16.xpose.msra.mxu0 0
    %2986 = vmatprep.subr.bf16.mxu0 0
    %2987 = vmatpush2.bf16.xpose.msra.mxu0 0
    %2988 = vmatprep.subr.bf16.mxu0 0
    %2989 = vmatpush2.bf16.xpose.msra.mxu0 0
    %2990 = vmatprep.mubr.bf16.mxu0 0
    %2991 = vmatmul.mubr.bf16.gmra.mxu0 %v2957
    %v2992 = vpop.f32.mrf.mxu0
    %v2993 = vadd.f32 0.0, %v2992
    %v2994 = vpop.f32.mrf.mxu0
    %v2995 = vpop.f32.mrf.mxu0
    %v2996 = vadd.f32 0.0, %v2995
    %v2997 = vpop.f32.mrf.mxu0
    %2998 = vdwg.mxu0
    %2999 = vadd.xlane.f32.xlu0 %v2955
    %v3000 = vpop.xlane.xlu0 %2999
    %3001 = vadd.xlane.f32.xlu0 %v2956
    %v3002 = vpop.xlane.xlu0 %3001
    %v3003 = vadd.f32 %v3000, 1e-08
    %v3004 = vadd.f32 %v3002, 1e-08
    %v3005 = vrcp.pop %v3003
    %v3006 = vmul.f32 %v2993, %v3005
    %v3007 = vrcp.pop %v3004
    %v3008 = vmul.f32 %v2996, %v3007
    %v3009 = vmul.f32 %v3006, %v3006
    %v3010 = vmul.f32 %v3008, %v3008
    %v3011 = vsel %vm2877, %v3009, 0.0
    %3012 = vadd.xlane.f32.xlu0 %v3011
    %v3013 = vpop.xlane.xlu0 %3012
    %v3014 = vsel %vm2877, %v3010, 0.0
    %3015 = vadd.xlane.f32.xlu0 %v3014
    %v3016 = vpop.xlane.xlu0 %3015
    %v3017 = vadd.f32 %v3006, %v3006
    %v3018 = vadd.f32 %v3008, %v3008
    %v3019 = vpack.c.bf16 %v3018, %v3017
    %v3021 = vsel %vm2877, %v3019, 0
    %3023 = vmatprep.subr.bf16.mxu0 0
    %3024 = vmatpush1.bf16.msra.mxu0 0
    %3025 = vmatprep.subr.bf16.mxu0 0
    %3026 = vmatpush1.bf16.msra.mxu0 0
    %3027 = vmatprep.subr.bf16.mxu0 0
    %3028 = vmatpush1.bf16.msra.mxu0 0
    %3029 = vmatprep.subr.bf16.mxu0 0
    %3030 = vmatpush1.bf16.msra.mxu0 0
    %3031 = vmatprep.subr.bf16.mxu0 0
    %3032 = vmatpush1.bf16.msra.mxu0 0
    %3033 = vmatprep.subr.bf16.mxu0 0
    %3034 = vmatpush1.bf16.msra.mxu0 0
    %3035 = vmatprep.subr.bf16.mxu0 0
    %3036 = vmatpush1.bf16.msra.mxu0 %v2842
    %3037 = vmatprep.subr.bf16.mxu0 0
    %3038 = vmatpush1.bf16.msra.mxu0 %v2841
    %3039 = vmatprep.subr.bf16.mxu0 0
    %3040 = vmatpush2.bf16.msra.mxu0 0
    %3041 = vmatprep.subr.bf16.mxu0 0
    %3042 = vmatpush2.bf16.msra.mxu0 0
    %3043 = vmatprep.subr.bf16.mxu0 0
    %3044 = vmatpush2.bf16.msra.mxu0 0
    %3045 = vmatprep.subr.bf16.mxu0 0
    %3046 = vmatpush2.bf16.msra.mxu0 0
    %3047 = vmatprep.subr.bf16.mxu0 0
    %3048 = vmatpush2.bf16.msra.mxu0 0
    %3049 = vmatprep.subr.bf16.mxu0 0
    %3050 = vmatpush2.bf16.msra.mxu0 0
    %3051 = vmatprep.subr.bf16.mxu0 0
    %3052 = vmatpush2.bf16.msra.mxu0 0
    %3053 = vmatprep.subr.bf16.mxu0 0
    %3054 = vmatpush2.bf16.msra.mxu0 0
    %3055 = vmatprep.mubr.bf16.mxu0 0
    %3056 = vmatmul.mubr.bf16.gmra.mxu0 %v3021
    %v3057 = vpop.f32.mrf.mxu0
    %v3058 = vadd.f32 0.0, %v3057
    %v3059 = vpop.f32.mrf.mxu0
    %v3060 = vpop.f32.mrf.mxu0
    %v3061 = vadd.f32 0.0, %v3060
    %v3062 = vpop.f32.mrf.mxu0
    %3063 = vdwg.mxu0
    %v3064 = vsub.f32 %v3058, %v3013
    %v3065 = vsub.f32 %v3061, %v3016
    %v3066 = vmax.f32 %v3064, %v3065
    %v3067 = vrot.slane %v3066, 4
    %v3068 = vmax.f32 %v3066, %v3067
    %v3069 = vrot.slane %v3068, 2
    %v3070 = vmax.f32 %v3068, %v3069
    %v3071 = vrot.slane %v3070, 1
    %v3072 = vmax.f32 %v3070, %v3071
    %v3073 = vsub.f32 %v3064, %v3072
    %v3074 = vsub.f32 %v3065, %v3072
    %v3075 = vmul.f32 %v3073, 1.442695
    %v3076 = vpow.pop %v3075
    %v3077 = vmul.f32 %v3074, 1.442695
    %v3078 = vpow.pop %v3077
    %v3079 = vadd.f32 %v3076, %v3078
    %v3080 = vrot.slane %v3079, 4
    %v3081 = vadd.f32 %v3079, %v3080
    %v3082 = vrot.slane %v3081, 2
    %v3083 = vadd.f32 %v3081, %v3082
    %v3084 = vrot.slane %v3083, 1
    %v3085 = vadd.f32 %v3083, %v3084
    %v3086 = vadd.f32 %v3085, 1e-16
    %v3087 = vrcp.pop %v3086
    %v3088 = vmul.f32 %v3076, %v3087
    %v3089 = vmul.f32 %v3078, %v3087
    %v3090 = vpack.c.bf16 %v3089, %v3088
    %3091 = vmatprep.subr.bf16.mxu0 0
    %3092 = vmatpush1.bf16.xpose.msra.mxu0 0
    %3093 = vmatprep.subr.bf16.mxu0 0
    %3094 = vmatpush1.bf16.xpose.msra.mxu0 0
    %3095 = vmatprep.subr.bf16.mxu0 0
    %3096 = vmatpush1.bf16.xpose.msra.mxu0 0
    %3097 = vmatprep.subr.bf16.mxu0 0
    %3098 = vmatpush1.bf16.xpose.msra.mxu0 0
    %3099 = vmatprep.subr.bf16.mxu0 0
    %3100 = vmatpush1.bf16.xpose.msra.mxu0 0
    %3101 = vmatprep.subr.bf16.mxu0 0
    %3102 = vmatpush1.bf16.xpose.msra.mxu0 0
    %3103 = vmatprep.subr.bf16.mxu0 0
    %3104 = vmatpush1.bf16.xpose.msra.mxu0 %v2842
    %3105 = vmatprep.subr.bf16.mxu0 0
    %3106 = vmatpush1.bf16.xpose.msra.mxu0 %v2841
    %3107 = vmatprep.subr.bf16.mxu0 0
    %3108 = vmatpush2.bf16.xpose.msra.mxu0 0
    %3109 = vmatprep.subr.bf16.mxu0 0
    %3110 = vmatpush2.bf16.xpose.msra.mxu0 0
    %3111 = vmatprep.subr.bf16.mxu0 0
    %3112 = vmatpush2.bf16.xpose.msra.mxu0 0
    %3113 = vmatprep.subr.bf16.mxu0 0
    %3114 = vmatpush2.bf16.xpose.msra.mxu0 0
    %3115 = vmatprep.subr.bf16.mxu0 0
    %3116 = vmatpush2.bf16.xpose.msra.mxu0 0
    %3117 = vmatprep.subr.bf16.mxu0 0
    %3118 = vmatpush2.bf16.xpose.msra.mxu0 0
    %3119 = vmatprep.subr.bf16.mxu0 0
    %3120 = vmatpush2.bf16.xpose.msra.mxu0 0
    %3121 = vmatprep.subr.bf16.mxu0 0
    %3122 = vmatpush2.bf16.xpose.msra.mxu0 0
    %3123 = vmatprep.mubr.bf16.mxu0 0
    %3124 = vmatmul.mubr.bf16.gmra.mxu0 %v3090
    %v3125 = vpop.f32.mrf.mxu0
    %v3126 = vadd.f32 0.0, %v3125
    %v3127 = vpop.f32.mrf.mxu0
    %v3128 = vpop.f32.mrf.mxu0
    %v3129 = vadd.f32 0.0, %v3128
    %v3130 = vpop.f32.mrf.mxu0
    %3131 = vdwg.mxu0
    %3132 = vadd.xlane.f32.xlu0 %v3088
    %v3133 = vpop.xlane.xlu0 %3132
    %3134 = vadd.xlane.f32.xlu0 %v3089
    %v3135 = vpop.xlane.xlu0 %3134
    %v3136 = vadd.f32 %v3133, 1e-08
    %v3137 = vadd.f32 %v3135, 1e-08
    %v3138 = vrcp.pop %v3136
    %v3139 = vmul.f32 %v3126, %v3138
    %v3140 = vrcp.pop %v3137
    %v3141 = vmul.f32 %v3129, %v3140
    %v3142 = vmul.f32 %v3139, %v3139
    %v3143 = vmul.f32 %v3141, %v3141
    %v3144 = vsel %vm2877, %v3142, 0.0
    %3145 = vadd.xlane.f32.xlu0 %v3144
    %v3146 = vpop.xlane.xlu0 %3145
    %v3147 = vsel %vm2877, %v3143, 0.0
    %3148 = vadd.xlane.f32.xlu0 %v3147
    %v3149 = vpop.xlane.xlu0 %3148
    %v3150 = vadd.f32 %v3139, %v3139
    %v3151 = vadd.f32 %v3141, %v3141
    %v3152 = vpack.c.bf16 %v3151, %v3150
    %v3154 = vsel %vm2877, %v3152, 0
    %3156 = vmatprep.subr.bf16.mxu0 0
    %3157 = vmatpush1.bf16.msra.mxu0 0
    %3158 = vmatprep.subr.bf16.mxu0 0
    %3159 = vmatpush1.bf16.msra.mxu0 0
    %3160 = vmatprep.subr.bf16.mxu0 0
    %3161 = vmatpush1.bf16.msra.mxu0 0
    %3162 = vmatprep.subr.bf16.mxu0 0
    %3163 = vmatpush1.bf16.msra.mxu0 0
    %3164 = vmatprep.subr.bf16.mxu0 0
    %3165 = vmatpush1.bf16.msra.mxu0 0
    %3166 = vmatprep.subr.bf16.mxu0 0
    %3167 = vmatpush1.bf16.msra.mxu0 0
    %3168 = vmatprep.subr.bf16.mxu0 0
    %3169 = vmatpush1.bf16.msra.mxu0 %v2842
    %3170 = vmatprep.subr.bf16.mxu0 0
    %3171 = vmatpush1.bf16.msra.mxu0 %v2841
    %3172 = vmatprep.subr.bf16.mxu0 0
    %3173 = vmatpush2.bf16.msra.mxu0 0
    %3174 = vmatprep.subr.bf16.mxu0 0
    %3175 = vmatpush2.bf16.msra.mxu0 0
    %3176 = vmatprep.subr.bf16.mxu0 0
    %3177 = vmatpush2.bf16.msra.mxu0 0
    %3178 = vmatprep.subr.bf16.mxu0 0
    %3179 = vmatpush2.bf16.msra.mxu0 0
    %3180 = vmatprep.subr.bf16.mxu0 0
    %3181 = vmatpush2.bf16.msra.mxu0 0
    %3182 = vmatprep.subr.bf16.mxu0 0
    %3183 = vmatpush2.bf16.msra.mxu0 0
    %3184 = vmatprep.subr.bf16.mxu0 0
    %3185 = vmatpush2.bf16.msra.mxu0 0
    %3186 = vmatprep.subr.bf16.mxu0 0
    %3187 = vmatpush2.bf16.msra.mxu0 0
    %3188 = vmatprep.mubr.bf16.mxu0 0
    %3189 = vmatmul.mubr.bf16.gmra.mxu0 %v3154
    %v3190 = vpop.f32.mrf.mxu0
    %v3191 = vadd.f32 0.0, %v3190
    %v3192 = vpop.f32.mrf.mxu0
    %v3193 = vpop.f32.mrf.mxu0
    %v3194 = vadd.f32 0.0, %v3193
    %v3195 = vpop.f32.mrf.mxu0
    %3196 = vdwg.mxu0
    %v3197 = vsub.f32 %v3191, %v3146
    %v3198 = vsub.f32 %v3194, %v3149
    %v3199 = vmax.f32 %v3197, %v3198
    %v3200 = vrot.slane %v3199, 4
    %v3201 = vmax.f32 %v3199, %v3200
    %v3202 = vrot.slane %v3201, 2
    %v3203 = vmax.f32 %v3201, %v3202
    %v3204 = vrot.slane %v3203, 1
    %v3205 = vmax.f32 %v3203, %v3204
    %v3206 = vsub.f32 %v3197, %v3205
    %v3207 = vsub.f32 %v3198, %v3205
    %v3208 = vmul.f32 %v3206, 1.442695
    %v3209 = vpow.pop %v3208
    %v3210 = vmul.f32 %v3207, 1.442695
    %v3211 = vpow.pop %v3210
    %v3212 = vadd.f32 %v3209, %v3211
    %v3213 = vrot.slane %v3212, 4
    %v3214 = vadd.f32 %v3212, %v3213
    %v3215 = vrot.slane %v3214, 2
    %v3216 = vadd.f32 %v3214, %v3215
    %v3217 = vrot.slane %v3216, 1
    %v3218 = vadd.f32 %v3216, %v3217
    %v3219 = vadd.f32 %v3218, 1e-16
    %v3220 = vrcp.pop %v3219
    %v3221 = vmul.f32 %v3209, %v3220
    %v3222 = vmul.f32 %v3211, %v3220
    %v3223 = vpack.c.bf16 %v3222, %v3221
    %3224 = vmatprep.subr.bf16.mxu0 0
    %3225 = vmatpush1.bf16.xpose.msra.mxu0 0
    %3226 = vmatprep.subr.bf16.mxu0 0
    %3227 = vmatpush1.bf16.xpose.msra.mxu0 0
    %3228 = vmatprep.subr.bf16.mxu0 0
    %3229 = vmatpush1.bf16.xpose.msra.mxu0 0
    %3230 = vmatprep.subr.bf16.mxu0 0
    %3231 = vmatpush1.bf16.xpose.msra.mxu0 0
    %3232 = vmatprep.subr.bf16.mxu0 0
    %3233 = vmatpush1.bf16.xpose.msra.mxu0 0
    %3234 = vmatprep.subr.bf16.mxu0 0
    %3235 = vmatpush1.bf16.xpose.msra.mxu0 0
    %3236 = vmatprep.subr.bf16.mxu0 0
    %3237 = vmatpush1.bf16.xpose.msra.mxu0 %v2842
    %3238 = vmatprep.subr.bf16.mxu0 0
    %3239 = vmatpush1.bf16.xpose.msra.mxu0 %v2841
    %3240 = vmatprep.subr.bf16.mxu0 0
    %3241 = vmatpush2.bf16.xpose.msra.mxu0 0
    %3242 = vmatprep.subr.bf16.mxu0 0
    %3243 = vmatpush2.bf16.xpose.msra.mxu0 0
    %3244 = vmatprep.subr.bf16.mxu0 0
    %3245 = vmatpush2.bf16.xpose.msra.mxu0 0
    %3246 = vmatprep.subr.bf16.mxu0 0
    %3247 = vmatpush2.bf16.xpose.msra.mxu0 0
    %3248 = vmatprep.subr.bf16.mxu0 0
    %3249 = vmatpush2.bf16.xpose.msra.mxu0 0
    %3250 = vmatprep.subr.bf16.mxu0 0
    %3251 = vmatpush2.bf16.xpose.msra.mxu0 0
    %3252 = vmatprep.subr.bf16.mxu0 0
    %3253 = vmatpush2.bf16.xpose.msra.mxu0 0
    %3254 = vmatprep.subr.bf16.mxu0 0
    %3255 = vmatpush2.bf16.xpose.msra.mxu0 0
    %3256 = vmatprep.mubr.bf16.mxu0 0
    %3257 = vmatmul.mubr.bf16.gmra.mxu0 %v3223
    %v3258 = vpop.f32.mrf.mxu0
    %v3259 = vadd.f32 0.0, %v3258
    %v3260 = vpop.f32.mrf.mxu0
    %v3261 = vpop.f32.mrf.mxu0
    %v3262 = vadd.f32 0.0, %v3261
    %v3263 = vpop.f32.mrf.mxu0
    %3264 = vdwg.mxu0
    %3265 = vadd.xlane.f32.xlu0 %v3221
    %v3266 = vpop.xlane.xlu0 %3265
    %3267 = vadd.xlane.f32.xlu0 %v3222
    %v3268 = vpop.xlane.xlu0 %3267
    %v3269 = vadd.f32 %v3266, 1e-08
    %v3270 = vadd.f32 %v3268, 1e-08
    %v3271 = vrcp.pop %v3269
    %v3272 = vmul.f32 %v3259, %v3271
    %v3273 = vrcp.pop %v3270
    %v3274 = vmul.f32 %v3262, %v3273
    %v3275 = vmul.f32 %v3272, %v3272
    %v3276 = vmul.f32 %v3274, %v3274
    %v3277 = vsel %vm2877, %v3275, 0.0
    %3278 = vadd.xlane.f32.xlu0 %v3277
    %v3279 = vpop.xlane.xlu0 %3278
    %v3280 = vsel %vm2877, %v3276, 0.0
    %3281 = vadd.xlane.f32.xlu0 %v3280
    %v3282 = vpop.xlane.xlu0 %3281
    %v3283 = vadd.f32 %v3272, %v3272
    %v3284 = vadd.f32 %v3274, %v3274
    %v3285 = vpack.c.bf16 %v3284, %v3283
    %v3287 = vsel %vm2877, %v3285, 0
    %3289 = vmatprep.subr.bf16.mxu0 0
    %3290 = vmatpush1.bf16.msra.mxu0 0
    %3291 = vmatprep.subr.bf16.mxu0 0
    %3292 = vmatpush1.bf16.msra.mxu0 0
    %3293 = vmatprep.subr.bf16.mxu0 0
    %3294 = vmatpush1.bf16.msra.mxu0 0
    %3295 = vmatprep.subr.bf16.mxu0 0
    %3296 = vmatpush1.bf16.msra.mxu0 0
    %3297 = vmatprep.subr.bf16.mxu0 0
    %3298 = vmatpush1.bf16.msra.mxu0 0
    %3299 = vmatprep.subr.bf16.mxu0 0
    %3300 = vmatpush1.bf16.msra.mxu0 0
    %3301 = vmatprep.subr.bf16.mxu0 0
    %3302 = vmatpush1.bf16.msra.mxu0 %v2842
    %3303 = vmatprep.subr.bf16.mxu0 0
    %3304 = vmatpush1.bf16.msra.mxu0 %v2841
    %3305 = vmatprep.subr.bf16.mxu0 0
    %3306 = vmatpush2.bf16.msra.mxu0 0
    %3307 = vmatprep.subr.bf16.mxu0 0
    %3308 = vmatpush2.bf16.msra.mxu0 0
    %3309 = vmatprep.subr.bf16.mxu0 0
    %3310 = vmatpush2.bf16.msra.mxu0 0
    %3311 = vmatprep.subr.bf16.mxu0 0
    %3312 = vmatpush2.bf16.msra.mxu0 0
    %3313 = vmatprep.subr.bf16.mxu0 0
    %3314 = vmatpush2.bf16.msra.mxu0 0
    %3315 = vmatprep.subr.bf16.mxu0 0
    %3316 = vmatpush2.bf16.msra.mxu0 0
    %3317 = vmatprep.subr.bf16.mxu0 0
    %3318 = vmatpush2.bf16.msra.mxu0 0
    %3319 = vmatprep.subr.bf16.mxu0 0
    %3320 = vmatpush2.bf16.msra.mxu0 0
    %3321 = vmatprep.mubr.bf16.mxu0 0
    %3322 = vmatmul.mubr.bf16.gmra.mxu0 %v3287
    %v3323 = vpop.f32.mrf.mxu0
    %v3324 = vadd.f32 0.0, %v3323
    %v3325 = vpop.f32.mrf.mxu0
    %v3326 = vpop.f32.mrf.mxu0
    %v3327 = vadd.f32 0.0, %v3326
    %v3328 = vpop.f32.mrf.mxu0
    %3329 = vdwg.mxu0
    %v3330 = vsub.f32 %v3324, %v3279
    %v3331 = vsub.f32 %v3327, %v3282
    %v3332 = vmax.f32 %v3330, %v3331
    %v3333 = vrot.slane %v3332, 4
    %v3334 = vmax.f32 %v3332, %v3333
    %v3335 = vrot.slane %v3334, 2
    %v3336 = vmax.f32 %v3334, %v3335
    %v3337 = vrot.slane %v3336, 1
    %v3338 = vmax.f32 %v3336, %v3337
    %v3339 = vsub.f32 %v3330, %v3338
    %v3340 = vsub.f32 %v3331, %v3338
    %v3341 = vmul.f32 %v3339, 1.442695
    %v3342 = vpow.pop %v3341
    %v3343 = vmul.f32 %v3340, 1.442695
    %v3344 = vpow.pop %v3343
    %v3345 = vadd.f32 %v3342, %v3344
    %v3346 = vrot.slane %v3345, 4
    %v3347 = vadd.f32 %v3345, %v3346
    %v3348 = vrot.slane %v3347, 2
    %v3349 = vadd.f32 %v3347, %v3348
    %v3350 = vrot.slane %v3349, 1
    %v3351 = vadd.f32 %v3349, %v3350
    %v3352 = vadd.f32 %v3351, 1e-16
    %v3353 = vrcp.pop %v3352
    %v3354 = vmul.f32 %v3342, %v3353
    %v3355 = vmul.f32 %v3344, %v3353
    %v3356 = vpack.c.bf16 %v3355, %v3354
    %3357 = vmatprep.subr.bf16.mxu0 0
    %3358 = vmatpush1.bf16.xpose.msra.mxu0 0
    %3359 = vmatprep.subr.bf16.mxu0 0
    %3360 = vmatpush1.bf16.xpose.msra.mxu0 0
    %3361 = vmatprep.subr.bf16.mxu0 0
    %3362 = vmatpush1.bf16.xpose.msra.mxu0 0
    %3363 = vmatprep.subr.bf16.mxu0 0
    %3364 = vmatpush1.bf16.xpose.msra.mxu0 0
    %3365 = vmatprep.subr.bf16.mxu0 0
    %3366 = vmatpush1.bf16.xpose.msra.mxu0 0
    %3367 = vmatprep.subr.bf16.mxu0 0
    %3368 = vmatpush1.bf16.xpose.msra.mxu0 0
    %3369 = vmatprep.subr.bf16.mxu0 0
    %3370 = vmatpush1.bf16.xpose.msra.mxu0 %v2842
    %3371 = vmatprep.subr.bf16.mxu0 0
    %3372 = vmatpush1.bf16.xpose.msra.mxu0 %v2841
    %3373 = vmatprep.subr.bf16.mxu0 0
    %3374 = vmatpush2.bf16.xpose.msra.mxu0 0
    %3375 = vmatprep.subr.bf16.mxu0 0
    %3376 = vmatpush2.bf16.xpose.msra.mxu0 0
    %3377 = vmatprep.subr.bf16.mxu0 0
    %3378 = vmatpush2.bf16.xpose.msra.mxu0 0
    %3379 = vmatprep.subr.bf16.mxu0 0
    %3380 = vmatpush2.bf16.xpose.msra.mxu0 0
    %3381 = vmatprep.subr.bf16.mxu0 0
    %3382 = vmatpush2.bf16.xpose.msra.mxu0 0
    %3383 = vmatprep.subr.bf16.mxu0 0
    %3384 = vmatpush2.bf16.xpose.msra.mxu0 0
    %3385 = vmatprep.subr.bf16.mxu0 0
    %3386 = vmatpush2.bf16.xpose.msra.mxu0 0
    %3387 = vmatprep.subr.bf16.mxu0 0
    %3388 = vmatpush2.bf16.xpose.msra.mxu0 0
    %3389 = vmatprep.mubr.bf16.mxu0 0
    %3390 = vmatmul.mubr.bf16.gmra.mxu0 %v3356
    %v3391 = vpop.f32.mrf.mxu0
    %v3392 = vadd.f32 0.0, %v3391
    %v3393 = vpop.f32.mrf.mxu0
    %v3394 = vpop.f32.mrf.mxu0
    %v3395 = vadd.f32 0.0, %v3394
    %v3396 = vpop.f32.mrf.mxu0
    %3397 = vdwg.mxu0
    %3398 = vadd.xlane.f32.xlu0 %v3354
    %v3399 = vpop.xlane.xlu0 %3398
    %3400 = vadd.xlane.f32.xlu0 %v3355
    %v3401 = vpop.xlane.xlu0 %3400
    %v3402 = vadd.f32 %v3399, 1e-08
    %v3403 = vadd.f32 %v3401, 1e-08
    %v3404 = vrcp.pop %v3402
    %v3405 = vmul.f32 %v3392, %v3404
    %v3406 = vrcp.pop %v3403
    %v3407 = vmul.f32 %v3395, %v3406
    %v3408 = vmul.f32 %v3405, %v3405
    %v3409 = vmul.f32 %v3407, %v3407
    %v3410 = vsel %vm2877, %v3408, 0.0
    %3411 = vadd.xlane.f32.xlu0 %v3410
    %v3412 = vpop.xlane.xlu0 %3411
    %v3413 = vsel %vm2877, %v3409, 0.0
    %3414 = vadd.xlane.f32.xlu0 %v3413
    %v3415 = vpop.xlane.xlu0 %3414
    %v3416 = vadd.f32 %v3405, %v3405
    %v3417 = vadd.f32 %v3407, %v3407
    %v3418 = vpack.c.bf16 %v3417, %v3416
    %v3420 = vsel %vm2877, %v3418, 0
    %3422 = vmatprep.subr.bf16.mxu0 0
    %3423 = vmatpush1.bf16.msra.mxu0 0
    %3424 = vmatprep.subr.bf16.mxu0 0
    %3425 = vmatpush1.bf16.msra.mxu0 0
    %3426 = vmatprep.subr.bf16.mxu0 0
    %3427 = vmatpush1.bf16.msra.mxu0 0
    %3428 = vmatprep.subr.bf16.mxu0 0
    %3429 = vmatpush1.bf16.msra.mxu0 0
    %3430 = vmatprep.subr.bf16.mxu0 0
    %3431 = vmatpush1.bf16.msra.mxu0 0
    %3432 = vmatprep.subr.bf16.mxu0 0
    %3433 = vmatpush1.bf16.msra.mxu0 0
    %3434 = vmatprep.subr.bf16.mxu0 0
    %3435 = vmatpush1.bf16.msra.mxu0 %v2842
    %3436 = vmatprep.subr.bf16.mxu0 0
    %3437 = vmatpush1.bf16.msra.mxu0 %v2841
    %3438 = vmatprep.subr.bf16.mxu0 0
    %3439 = vmatpush2.bf16.msra.mxu0 0
    %3440 = vmatprep.subr.bf16.mxu0 0
    %3441 = vmatpush2.bf16.msra.mxu0 0
    %3442 = vmatprep.subr.bf16.mxu0 0
    %3443 = vmatpush2.bf16.msra.mxu0 0
    %3444 = vmatprep.subr.bf16.mxu0 0
    %3445 = vmatpush2.bf16.msra.mxu0 0
    %3446 = vmatprep.subr.bf16.mxu0 0
    %3447 = vmatpush2.bf16.msra.mxu0 0
    %3448 = vmatprep.subr.bf16.mxu0 0
    %3449 = vmatpush2.bf16.msra.mxu0 0
    %3450 = vmatprep.subr.bf16.mxu0 0
    %3451 = vmatpush2.bf16.msra.mxu0 0
    %3452 = vmatprep.subr.bf16.mxu0 0
    %3453 = vmatpush2.bf16.msra.mxu0 0
    %3454 = vmatprep.mubr.bf16.mxu0 0
    %3455 = vmatmul.mubr.bf16.gmra.mxu0 %v3420
    %v3456 = vpop.f32.mrf.mxu0
    %v3457 = vadd.f32 0.0, %v3456
    %v3458 = vpop.f32.mrf.mxu0
    %v3459 = vpop.f32.mrf.mxu0
    %v3460 = vadd.f32 0.0, %v3459
    %v3461 = vpop.f32.mrf.mxu0
    %3462 = vdwg.mxu0
    %v3463 = vsub.f32 %v3457, %v3412
    %v3464 = vsub.f32 %v3460, %v3415
    %v3465 = vmax.f32 %v3463, %v3464
    %v3466 = vrot.slane %v3465, 4
    %v3467 = vmax.f32 %v3465, %v3466
    %v3468 = vrot.slane %v3467, 2
    %v3469 = vmax.f32 %v3467, %v3468
    %v3470 = vrot.slane %v3469, 1
    %v3471 = vmax.f32 %v3469, %v3470
    %v3472 = vsub.f32 %v3463, %v3471
    %v3473 = vsub.f32 %v3464, %v3471
    %v3474 = vmul.f32 %v3472, 1.442695
    %v3475 = vpow.pop %v3474
    %v3476 = vmul.f32 %v3473, 1.442695
    %v3477 = vpow.pop %v3476
    %v3478 = vadd.f32 %v3475, %v3477
    %v3479 = vrot.slane %v3478, 4
    %v3480 = vadd.f32 %v3478, %v3479
    %v3481 = vrot.slane %v3480, 2
    %v3482 = vadd.f32 %v3480, %v3481
    %v3483 = vrot.slane %v3482, 1
    %v3484 = vadd.f32 %v3482, %v3483
    %v3485 = vadd.f32 %v3484, 1e-16
    %v3486 = vrcp.pop %v3485
    %v3487 = vmul.f32 %v3475, %v3486
    %v3488 = vmul.f32 %v3477, %v3486
    %v3489 = vpack.c.bf16 %v3488, %v3487
    %3490 = vmatprep.subr.bf16.mxu0 0
    %3491 = vmatpush1.bf16.xpose.msra.mxu0 0
    %3492 = vmatprep.subr.bf16.mxu0 0
    %3493 = vmatpush1.bf16.xpose.msra.mxu0 0
    %3494 = vmatprep.subr.bf16.mxu0 0
    %3495 = vmatpush1.bf16.xpose.msra.mxu0 0
    %3496 = vmatprep.subr.bf16.mxu0 0
    %3497 = vmatpush1.bf16.xpose.msra.mxu0 0
    %3498 = vmatprep.subr.bf16.mxu0 0
    %3499 = vmatpush1.bf16.xpose.msra.mxu0 0
    %3500 = vmatprep.subr.bf16.mxu0 0
    %3501 = vmatpush1.bf16.xpose.msra.mxu0 0
    %3502 = vmatprep.subr.bf16.mxu0 0
    %3503 = vmatpush1.bf16.xpose.msra.mxu0 %v2842
    %3504 = vmatprep.subr.bf16.mxu0 0
    %3505 = vmatpush1.bf16.xpose.msra.mxu0 %v2841
    %3506 = vmatprep.subr.bf16.mxu0 0
    %3507 = vmatpush2.bf16.xpose.msra.mxu0 0
    %3508 = vmatprep.subr.bf16.mxu0 0
    %3509 = vmatpush2.bf16.xpose.msra.mxu0 0
    %3510 = vmatprep.subr.bf16.mxu0 0
    %3511 = vmatpush2.bf16.xpose.msra.mxu0 0
    %3512 = vmatprep.subr.bf16.mxu0 0
    %3513 = vmatpush2.bf16.xpose.msra.mxu0 0
    %3514 = vmatprep.subr.bf16.mxu0 0
    %3515 = vmatpush2.bf16.xpose.msra.mxu0 0
    %3516 = vmatprep.subr.bf16.mxu0 0
    %3517 = vmatpush2.bf16.xpose.msra.mxu0 0
    %3518 = vmatprep.subr.bf16.mxu0 0
    %3519 = vmatpush2.bf16.xpose.msra.mxu0 0
    %3520 = vmatprep.subr.bf16.mxu0 0
    %3521 = vmatpush2.bf16.xpose.msra.mxu0 0
    %3522 = vmatprep.mubr.bf16.mxu0 0
    %3523 = vmatmul.mubr.bf16.gmra.mxu0 %v3489
    %v3524 = vpop.f32.mrf.mxu0
    %v3525 = vadd.f32 0.0, %v3524
    %v3526 = vpop.f32.mrf.mxu0
    %v3527 = vpop.f32.mrf.mxu0
    %v3528 = vadd.f32 0.0, %v3527
    %v3529 = vpop.f32.mrf.mxu0
    %3530 = vdwg.mxu0
    %3531 = vadd.xlane.f32.xlu0 %v3487
    %v3532 = vpop.xlane.xlu0 %3531
    %3533 = vadd.xlane.f32.xlu0 %v3488
    %v3534 = vpop.xlane.xlu0 %3533
    %v3535 = vadd.f32 %v3532, 1e-08
    %v3536 = vadd.f32 %v3534, 1e-08
    %v3537 = vrcp.pop %v3535
    %v3538 = vmul.f32 %v3525, %v3537
    %v3539 = vrcp.pop %v3536
    %v3540 = vmul.f32 %v3528, %v3539
    %v3541 = vmul.f32 %v3538, %v3538
    %v3542 = vmul.f32 %v3540, %v3540
    %v3543 = vsel %vm2877, %v3541, 0.0
    %3544 = vadd.xlane.f32.xlu0 %v3543
    %v3545 = vpop.xlane.xlu0 %3544
    %v3546 = vsel %vm2877, %v3542, 0.0
    %3547 = vadd.xlane.f32.xlu0 %v3546
    %v3548 = vpop.xlane.xlu0 %3547
    %v3549 = vadd.f32 %v3538, %v3538
    %v3550 = vadd.f32 %v3540, %v3540
    %v3551 = vpack.c.bf16 %v3550, %v3549
    %v3553 = vsel %vm2877, %v3551, 0
    %3555 = vmatprep.subr.bf16.mxu0 0
    %3556 = vmatpush1.bf16.msra.mxu0 0
    %3557 = vmatprep.subr.bf16.mxu0 0
    %3558 = vmatpush1.bf16.msra.mxu0 0
    %3559 = vmatprep.subr.bf16.mxu0 0
    %3560 = vmatpush1.bf16.msra.mxu0 0
    %3561 = vmatprep.subr.bf16.mxu0 0
    %3562 = vmatpush1.bf16.msra.mxu0 0
    %3563 = vmatprep.subr.bf16.mxu0 0
    %3564 = vmatpush1.bf16.msra.mxu0 0
    %3565 = vmatprep.subr.bf16.mxu0 0
    %3566 = vmatpush1.bf16.msra.mxu0 0
    %3567 = vmatprep.subr.bf16.mxu0 0
    %3568 = vmatpush1.bf16.msra.mxu0 %v2842
    %3569 = vmatprep.subr.bf16.mxu0 0
    %3570 = vmatpush1.bf16.msra.mxu0 %v2841
    %3571 = vmatprep.subr.bf16.mxu0 0
    %3572 = vmatpush2.bf16.msra.mxu0 0
    %3573 = vmatprep.subr.bf16.mxu0 0
    %3574 = vmatpush2.bf16.msra.mxu0 0
    %3575 = vmatprep.subr.bf16.mxu0 0
    %3576 = vmatpush2.bf16.msra.mxu0 0
    %3577 = vmatprep.subr.bf16.mxu0 0
    %3578 = vmatpush2.bf16.msra.mxu0 0
    %3579 = vmatprep.subr.bf16.mxu0 0
    %3580 = vmatpush2.bf16.msra.mxu0 0
    %3581 = vmatprep.subr.bf16.mxu0 0
    %3582 = vmatpush2.bf16.msra.mxu0 0
    %3583 = vmatprep.subr.bf16.mxu0 0
    %3584 = vmatpush2.bf16.msra.mxu0 0
    %3585 = vmatprep.subr.bf16.mxu0 0
    %3586 = vmatpush2.bf16.msra.mxu0 0
    %3587 = vmatprep.mubr.bf16.mxu0 0
    %3588 = vmatmul.mubr.bf16.gmra.mxu0 %v3553
    %v3589 = vpop.f32.mrf.mxu0
    %v3590 = vadd.f32 0.0, %v3589
    %v3591 = vpop.f32.mrf.mxu0
    %v3592 = vpop.f32.mrf.mxu0
    %v3593 = vadd.f32 0.0, %v3592
    %v3594 = vpop.f32.mrf.mxu0
    %3595 = vdwg.mxu0
    %v3596 = vsub.f32 %v3590, %v3545
    %v3597 = vsub.f32 %v3593, %v3548
    %v3598 = vmax.f32 %v3596, %v3597
    %v3599 = vrot.slane %v3598, 4
    %v3600 = vmax.f32 %v3598, %v3599
    %v3601 = vrot.slane %v3600, 2
    %v3602 = vmax.f32 %v3600, %v3601
    %v3603 = vrot.slane %v3602, 1
    %v3604 = vmax.f32 %v3602, %v3603
    %v3605 = vsub.f32 %v3596, %v3604
    %v3606 = vsub.f32 %v3597, %v3604
    %v3607 = vmul.f32 %v3605, 1.442695
    %v3608 = vpow.pop %v3607
    %v3609 = vmul.f32 %v3606, 1.442695
    %v3610 = vpow.pop %v3609
    %v3611 = vadd.f32 %v3608, %v3610
    %v3612 = vrot.slane %v3611, 4
    %v3613 = vadd.f32 %v3611, %v3612
    %v3614 = vrot.slane %v3613, 2
    %v3615 = vadd.f32 %v3613, %v3614
    %v3616 = vrot.slane %v3615, 1
    %v3617 = vadd.f32 %v3615, %v3616
    %v3618 = vadd.f32 %v3617, 1e-16
    %v3619 = vrcp.pop %v3618
    %v3620 = vmul.f32 %v3608, %v3619
    %v3621 = vmul.f32 %v3610, %v3619
    %v3622 = vpack.c.bf16 %v3621, %v3620
    %3623 = vmatprep.subr.bf16.mxu0 0
    %3624 = vmatpush1.bf16.xpose.msra.mxu0 0
    %3625 = vmatprep.subr.bf16.mxu0 0
    %3626 = vmatpush1.bf16.xpose.msra.mxu0 0
    %3627 = vmatprep.subr.bf16.mxu0 0
    %3628 = vmatpush1.bf16.xpose.msra.mxu0 0
    %3629 = vmatprep.subr.bf16.mxu0 0
    %3630 = vmatpush1.bf16.xpose.msra.mxu0 0
    %3631 = vmatprep.subr.bf16.mxu0 0
    %3632 = vmatpush1.bf16.xpose.msra.mxu0 0
    %3633 = vmatprep.subr.bf16.mxu0 0
    %3634 = vmatpush1.bf16.xpose.msra.mxu0 0
    %3635 = vmatprep.subr.bf16.mxu0 0
    %3636 = vmatpush1.bf16.xpose.msra.mxu0 %v2842
    %3637 = vmatprep.subr.bf16.mxu0 0
    %3638 = vmatpush1.bf16.xpose.msra.mxu0 %v2841
    %3639 = vmatprep.subr.bf16.mxu0 0
    %3640 = vmatpush2.bf16.xpose.msra.mxu0 0
    %3641 = vmatprep.subr.bf16.mxu0 0
    %3642 = vmatpush2.bf16.xpose.msra.mxu0 0
    %3643 = vmatprep.subr.bf16.mxu0 0
    %3644 = vmatpush2.bf16.xpose.msra.mxu0 0
    %3645 = vmatprep.subr.bf16.mxu0 0
    %3646 = vmatpush2.bf16.xpose.msra.mxu0 0
    %3647 = vmatprep.subr.bf16.mxu0 0
    %3648 = vmatpush2.bf16.xpose.msra.mxu0 0
    %3649 = vmatprep.subr.bf16.mxu0 0
    %3650 = vmatpush2.bf16.xpose.msra.mxu0 0
    %3651 = vmatprep.subr.bf16.mxu0 0
    %3652 = vmatpush2.bf16.xpose.msra.mxu0 0
    %3653 = vmatprep.subr.bf16.mxu0 0
    %3654 = vmatpush2.bf16.xpose.msra.mxu0 0
    %3655 = vmatprep.mubr.bf16.mxu0 0
    %3656 = vmatmul.mubr.bf16.gmra.mxu0 %v3622
    %v3657 = vpop.f32.mrf.mxu0
    %v3658 = vadd.f32 0.0, %v3657
    %v3659 = vpop.f32.mrf.mxu0
    %v3660 = vpop.f32.mrf.mxu0
    %v3661 = vadd.f32 0.0, %v3660
    %v3662 = vpop.f32.mrf.mxu0
    %3663 = vdwg.mxu0
    %3664 = vadd.xlane.f32.xlu0 %v3620
    %v3665 = vpop.xlane.xlu0 %3664
    %3666 = vadd.xlane.f32.xlu0 %v3621
    %v3667 = vpop.xlane.xlu0 %3666
    %v3668 = vadd.f32 %v3665, 1e-08
    %v3669 = vadd.f32 %v3667, 1e-08
    %v3670 = vrcp.pop %v3668
    %v3671 = vmul.f32 %v3658, %v3670
    %v3672 = vrcp.pop %v3669
    %v3673 = vmul.f32 %v3661, %v3672
    %v3674 = vmul.f32 %v3671, %v3671
    %v3675 = vmul.f32 %v3673, %v3673
    %v3676 = vsel %vm2877, %v3674, 0.0
    %3677 = vadd.xlane.f32.xlu0 %v3676
    %v3678 = vpop.xlane.xlu0 %3677
    %v3679 = vsel %vm2877, %v3675, 0.0
    %3680 = vadd.xlane.f32.xlu0 %v3679
    %v3681 = vpop.xlane.xlu0 %3680
    %v3682 = vadd.f32 %v3671, %v3671
    %v3683 = vadd.f32 %v3673, %v3673
    %v3684 = vpack.c.bf16 %v3683, %v3682
    %v3686 = vsel %vm2877, %v3684, 0
    %3688 = vmatprep.subr.bf16.mxu0 0
    %3689 = vmatpush1.bf16.msra.mxu0 0
    %3690 = vmatprep.subr.bf16.mxu0 0
    %3691 = vmatpush1.bf16.msra.mxu0 0
    %3692 = vmatprep.subr.bf16.mxu0 0
    %3693 = vmatpush1.bf16.msra.mxu0 0
    %3694 = vmatprep.subr.bf16.mxu0 0
    %3695 = vmatpush1.bf16.msra.mxu0 0
    %3696 = vmatprep.subr.bf16.mxu0 0
    %3697 = vmatpush1.bf16.msra.mxu0 0
    %3698 = vmatprep.subr.bf16.mxu0 0
    %3699 = vmatpush1.bf16.msra.mxu0 0
    %3700 = vmatprep.subr.bf16.mxu0 0
    %3701 = vmatpush1.bf16.msra.mxu0 %v2842
    %3702 = vmatprep.subr.bf16.mxu0 0
    %3703 = vmatpush1.bf16.msra.mxu0 %v2841
    %3704 = vmatprep.subr.bf16.mxu0 0
    %3705 = vmatpush2.bf16.msra.mxu0 0
    %3706 = vmatprep.subr.bf16.mxu0 0
    %3707 = vmatpush2.bf16.msra.mxu0 0
    %3708 = vmatprep.subr.bf16.mxu0 0
    %3709 = vmatpush2.bf16.msra.mxu0 0
    %3710 = vmatprep.subr.bf16.mxu0 0
    %3711 = vmatpush2.bf16.msra.mxu0 0
    %3712 = vmatprep.subr.bf16.mxu0 0
    %3713 = vmatpush2.bf16.msra.mxu0 0
    %3714 = vmatprep.subr.bf16.mxu0 0
    %3715 = vmatpush2.bf16.msra.mxu0 0
    %3716 = vmatprep.subr.bf16.mxu0 0
    %3717 = vmatpush2.bf16.msra.mxu0 0
    %3718 = vmatprep.subr.bf16.mxu0 0
    %3719 = vmatpush2.bf16.msra.mxu0 0
    %3720 = vmatprep.mubr.bf16.mxu0 0
    %3721 = vmatmul.mubr.bf16.gmra.mxu0 %v3686
    %v3722 = vpop.f32.mrf.mxu0
    %v3723 = vadd.f32 0.0, %v3722
    %v3724 = vpop.f32.mrf.mxu0
    %v3725 = vpop.f32.mrf.mxu0
    %v3726 = vadd.f32 0.0, %v3725
    %v3727 = vpop.f32.mrf.mxu0
    %3728 = vdwg.mxu0
    %v3729 = vsub.f32 %v3723, %v3678
    %v3730 = vsub.f32 %v3726, %v3681
    %v3731 = vmax.f32 %v3729, %v3730
    %v3732 = vrot.slane %v3731, 4
    %v3733 = vmax.f32 %v3731, %v3732
    %v3734 = vrot.slane %v3733, 2
    %v3735 = vmax.f32 %v3733, %v3734
    %v3736 = vrot.slane %v3735, 1
    %v3737 = vmax.f32 %v3735, %v3736
    %v3738 = vsub.f32 %v3729, %v3737
    %v3739 = vsub.f32 %v3730, %v3737
    %v3740 = vmul.f32 %v3738, 1.442695
    %v3741 = vpow.pop %v3740
    %v3742 = vmul.f32 %v3739, 1.442695
    %v3743 = vpow.pop %v3742
    %v3744 = vadd.f32 %v3741, %v3743
    %v3745 = vrot.slane %v3744, 4
    %v3746 = vadd.f32 %v3744, %v3745
    %v3747 = vrot.slane %v3746, 2
    %v3748 = vadd.f32 %v3746, %v3747
    %v3749 = vrot.slane %v3748, 1
    %v3750 = vadd.f32 %v3748, %v3749
    %v3751 = vadd.f32 %v3750, 1e-16
    %v3752 = vrcp.pop %v3751
    %v3753 = vmul.f32 %v3741, %v3752
    %v3754 = vmul.f32 %v3743, %v3752
    %v3755 = vpack.c.bf16 %v3754, %v3753
    %3756 = vmatprep.subr.bf16.mxu0 0
    %3757 = vmatpush1.bf16.xpose.msra.mxu0 0
    %3758 = vmatprep.subr.bf16.mxu0 0
    %3759 = vmatpush1.bf16.xpose.msra.mxu0 0
    %3760 = vmatprep.subr.bf16.mxu0 0
    %3761 = vmatpush1.bf16.xpose.msra.mxu0 0
    %3762 = vmatprep.subr.bf16.mxu0 0
    %3763 = vmatpush1.bf16.xpose.msra.mxu0 0
    %3764 = vmatprep.subr.bf16.mxu0 0
    %3765 = vmatpush1.bf16.xpose.msra.mxu0 0
    %3766 = vmatprep.subr.bf16.mxu0 0
    %3767 = vmatpush1.bf16.xpose.msra.mxu0 0
    %3768 = vmatprep.subr.bf16.mxu0 0
    %3769 = vmatpush1.bf16.xpose.msra.mxu0 %v2842
    %3770 = vmatprep.subr.bf16.mxu0 0
    %3771 = vmatpush1.bf16.xpose.msra.mxu0 %v2841
    %3772 = vmatprep.subr.bf16.mxu0 0
    %3773 = vmatpush2.bf16.xpose.msra.mxu0 0
    %3774 = vmatprep.subr.bf16.mxu0 0
    %3775 = vmatpush2.bf16.xpose.msra.mxu0 0
    %3776 = vmatprep.subr.bf16.mxu0 0
    %3777 = vmatpush2.bf16.xpose.msra.mxu0 0
    %3778 = vmatprep.subr.bf16.mxu0 0
    %3779 = vmatpush2.bf16.xpose.msra.mxu0 0
    %3780 = vmatprep.subr.bf16.mxu0 0
    %3781 = vmatpush2.bf16.xpose.msra.mxu0 0
    %3782 = vmatprep.subr.bf16.mxu0 0
    %3783 = vmatpush2.bf16.xpose.msra.mxu0 0
    %3784 = vmatprep.subr.bf16.mxu0 0
    %3785 = vmatpush2.bf16.xpose.msra.mxu0 0
    %3786 = vmatprep.subr.bf16.mxu0 0
    %3787 = vmatpush2.bf16.xpose.msra.mxu0 0
    %3788 = vmatprep.mubr.bf16.mxu0 0
    %3789 = vmatmul.mubr.bf16.gmra.mxu0 %v3755
    %v3790 = vpop.f32.mrf.mxu0
    %v3791 = vadd.f32 0.0, %v3790
    %v3792 = vpop.f32.mrf.mxu0
    %v3793 = vpop.f32.mrf.mxu0
    %v3794 = vadd.f32 0.0, %v3793
    %v3795 = vpop.f32.mrf.mxu0
    %3796 = vdwg.mxu0
    %3797 = vadd.xlane.f32.xlu0 %v3753
    %v3798 = vpop.xlane.xlu0 %3797
    %3799 = vadd.xlane.f32.xlu0 %v3754
    %v3800 = vpop.xlane.xlu0 %3799
    %v3801 = vadd.f32 %v3798, 1e-08
    %v3802 = vadd.f32 %v3800, 1e-08
    %v3803 = vrcp.pop %v3801
    %v3804 = vmul.f32 %v3791, %v3803
    %v3805 = vrcp.pop %v3802
    %v3806 = vmul.f32 %v3794, %v3805
    %v3807 = vmul.f32 %v3804, %v3804
    %v3808 = vmul.f32 %v3806, %v3806
    %v3809 = vsel %vm2877, %v3807, 0.0
    %3810 = vadd.xlane.f32.xlu0 %v3809
    %v3811 = vpop.xlane.xlu0 %3810
    %v3812 = vsel %vm2877, %v3808, 0.0
    %3813 = vadd.xlane.f32.xlu0 %v3812
    %v3814 = vpop.xlane.xlu0 %3813
    %v3815 = vadd.f32 %v3804, %v3804
    %v3816 = vadd.f32 %v3806, %v3806
    %v3817 = vpack.c.bf16 %v3816, %v3815
    %v3819 = vsel %vm2877, %v3817, 0
    %3821 = vmatprep.subr.bf16.mxu0 0
    %3822 = vmatpush1.bf16.msra.mxu0 0
    %3823 = vmatprep.subr.bf16.mxu0 0
    %3824 = vmatpush1.bf16.msra.mxu0 0
    %3825 = vmatprep.subr.bf16.mxu0 0
    %3826 = vmatpush1.bf16.msra.mxu0 0
    %3827 = vmatprep.subr.bf16.mxu0 0
    %3828 = vmatpush1.bf16.msra.mxu0 0
    %3829 = vmatprep.subr.bf16.mxu0 0
    %3830 = vmatpush1.bf16.msra.mxu0 0
    %3831 = vmatprep.subr.bf16.mxu0 0
    %3832 = vmatpush1.bf16.msra.mxu0 0
    %3833 = vmatprep.subr.bf16.mxu0 0
    %3834 = vmatpush1.bf16.msra.mxu0 %v2842
    %3835 = vmatprep.subr.bf16.mxu0 0
    %3836 = vmatpush1.bf16.msra.mxu0 %v2841
    %3837 = vmatprep.subr.bf16.mxu0 0
    %3838 = vmatpush2.bf16.msra.mxu0 0
    %3839 = vmatprep.subr.bf16.mxu0 0
    %3840 = vmatpush2.bf16.msra.mxu0 0
    %3841 = vmatprep.subr.bf16.mxu0 0
    %3842 = vmatpush2.bf16.msra.mxu0 0
    %3843 = vmatprep.subr.bf16.mxu0 0
    %3844 = vmatpush2.bf16.msra.mxu0 0
    %3845 = vmatprep.subr.bf16.mxu0 0
    %3846 = vmatpush2.bf16.msra.mxu0 0
    %3847 = vmatprep.subr.bf16.mxu0 0
    %3848 = vmatpush2.bf16.msra.mxu0 0
    %3849 = vmatprep.subr.bf16.mxu0 0
    %3850 = vmatpush2.bf16.msra.mxu0 0
    %3851 = vmatprep.subr.bf16.mxu0 0
    %3852 = vmatpush2.bf16.msra.mxu0 0
    %3853 = vmatprep.mubr.bf16.mxu0 0
    %3854 = vmatmul.mubr.bf16.gmra.mxu0 %v3819
    %v3855 = vpop.f32.mrf.mxu0
    %v3856 = vadd.f32 0.0, %v3855
    %v3857 = vpop.f32.mrf.mxu0
    %v3858 = vpop.f32.mrf.mxu0
    %v3859 = vadd.f32 0.0, %v3858
    %v3860 = vpop.f32.mrf.mxu0
    %3861 = vdwg.mxu0
    %v3862 = vsub.f32 %v3856, %v3811
    %v3863 = vsub.f32 %v3859, %v3814
    %v3864 = vmax.f32 %v3862, %v3863
    %v3865 = vrot.slane %v3864, 4
    %v3866 = vmax.f32 %v3864, %v3865
    %v3867 = vrot.slane %v3866, 2
    %v3868 = vmax.f32 %v3866, %v3867
    %v3869 = vrot.slane %v3868, 1
    %v3870 = vmax.f32 %v3868, %v3869
    %v3871 = vsub.f32 %v3862, %v3870
    %v3872 = vsub.f32 %v3863, %v3870
    %v3873 = vmul.f32 %v3871, 1.442695
    %v3874 = vpow.pop %v3873
    %v3875 = vmul.f32 %v3872, 1.442695
    %v3876 = vpow.pop %v3875
    %v3877 = vadd.f32 %v3874, %v3876
    %v3878 = vrot.slane %v3877, 4
    %v3879 = vadd.f32 %v3877, %v3878
    %v3880 = vrot.slane %v3879, 2
    %v3881 = vadd.f32 %v3879, %v3880
    %v3882 = vrot.slane %v3881, 1
    %v3883 = vadd.f32 %v3881, %v3882
    %v3884 = vadd.f32 %v3883, 1e-16
    %v3885 = vrcp.pop %v3884
    %v3886 = vmul.f32 %v3874, %v3885
    %v3887 = vmul.f32 %v3876, %v3885
    %v3888 = vpack.c.bf16 %v3887, %v3886
    %3889 = vmatprep.subr.bf16.mxu0 0
    %3890 = vmatpush1.bf16.xpose.msra.mxu0 0
    %3891 = vmatprep.subr.bf16.mxu0 0
    %3892 = vmatpush1.bf16.xpose.msra.mxu0 0
    %3893 = vmatprep.subr.bf16.mxu0 0
    %3894 = vmatpush1.bf16.xpose.msra.mxu0 0
    %3895 = vmatprep.subr.bf16.mxu0 0
    %3896 = vmatpush1.bf16.xpose.msra.mxu0 0
    %3897 = vmatprep.subr.bf16.mxu0 0
    %3898 = vmatpush1.bf16.xpose.msra.mxu0 0
    %3899 = vmatprep.subr.bf16.mxu0 0
    %3900 = vmatpush1.bf16.xpose.msra.mxu0 0
    %3901 = vmatprep.subr.bf16.mxu0 0
    %3902 = vmatpush1.bf16.xpose.msra.mxu0 %v2842
    %3903 = vmatprep.subr.bf16.mxu0 0
    %3904 = vmatpush1.bf16.xpose.msra.mxu0 %v2841
    %3905 = vmatprep.subr.bf16.mxu0 0
    %3906 = vmatpush2.bf16.xpose.msra.mxu0 0
    %3907 = vmatprep.subr.bf16.mxu0 0
    %3908 = vmatpush2.bf16.xpose.msra.mxu0 0
    %3909 = vmatprep.subr.bf16.mxu0 0
    %3910 = vmatpush2.bf16.xpose.msra.mxu0 0
    %3911 = vmatprep.subr.bf16.mxu0 0
    %3912 = vmatpush2.bf16.xpose.msra.mxu0 0
    %3913 = vmatprep.subr.bf16.mxu0 0
    %3914 = vmatpush2.bf16.xpose.msra.mxu0 0
    %3915 = vmatprep.subr.bf16.mxu0 0
    %3916 = vmatpush2.bf16.xpose.msra.mxu0 0
    %3917 = vmatprep.subr.bf16.mxu0 0
    %3918 = vmatpush2.bf16.xpose.msra.mxu0 0
    %3919 = vmatprep.subr.bf16.mxu0 0
    %3920 = vmatpush2.bf16.xpose.msra.mxu0 0
    %3921 = vmatprep.mubr.bf16.mxu0 0
    %3922 = vmatmul.mubr.bf16.gmra.mxu0 %v3888
    %v3923 = vpop.f32.mrf.mxu0
    %v3924 = vadd.f32 0.0, %v3923
    %v3925 = vpop.f32.mrf.mxu0
    %v3926 = vpop.f32.mrf.mxu0
    %v3927 = vadd.f32 0.0, %v3926
    %v3928 = vpop.f32.mrf.mxu0
    %3929 = vdwg.mxu0
    %3930 = vadd.xlane.f32.xlu0 %v3886
    %v3931 = vpop.xlane.xlu0 %3930
    %3932 = vadd.xlane.f32.xlu0 %v3887
    %v3933 = vpop.xlane.xlu0 %3932
    %v3934 = vadd.f32 %v3931, 1e-08
    %v3935 = vadd.f32 %v3933, 1e-08
    %v3936 = vrcp.pop %v3934
    %v3937 = vmul.f32 %v3924, %v3936
    %v3938 = vrcp.pop %v3935
    %v3939 = vmul.f32 %v3927, %v3938
    %v3940 = vmul.f32 %v3937, %v3937
    %v3941 = vmul.f32 %v3939, %v3939
    %v3942 = vsel %vm2877, %v3940, 0.0
    %3943 = vadd.xlane.f32.xlu0 %v3942
    %v3944 = vpop.xlane.xlu0 %3943
    %v3945 = vsel %vm2877, %v3941, 0.0
    %3946 = vadd.xlane.f32.xlu0 %v3945
    %v3947 = vpop.xlane.xlu0 %3946
    %v3948 = vadd.f32 %v3937, %v3937
    %v3949 = vadd.f32 %v3939, %v3939
    %v3950 = vpack.c.bf16 %v3949, %v3948
    %v3952 = vsel %vm2877, %v3950, 0
    %3954 = vmatprep.subr.bf16.mxu0 0
    %3955 = vmatpush1.bf16.msra.mxu0 0
    %3956 = vmatprep.subr.bf16.mxu0 0
    %3957 = vmatpush1.bf16.msra.mxu0 0
    %3958 = vmatprep.subr.bf16.mxu0 0
    %3959 = vmatpush1.bf16.msra.mxu0 0
    %3960 = vmatprep.subr.bf16.mxu0 0
    %3961 = vmatpush1.bf16.msra.mxu0 0
    %3962 = vmatprep.subr.bf16.mxu0 0
    %3963 = vmatpush1.bf16.msra.mxu0 0
    %3964 = vmatprep.subr.bf16.mxu0 0
    %3965 = vmatpush1.bf16.msra.mxu0 0
    %3966 = vmatprep.subr.bf16.mxu0 0
    %3967 = vmatpush1.bf16.msra.mxu0 %v2842
    %3968 = vmatprep.subr.bf16.mxu0 0
    %3969 = vmatpush1.bf16.msra.mxu0 %v2841
    %3970 = vmatprep.subr.bf16.mxu0 0
    %3971 = vmatpush2.bf16.msra.mxu0 0
    %3972 = vmatprep.subr.bf16.mxu0 0
    %3973 = vmatpush2.bf16.msra.mxu0 0
    %3974 = vmatprep.subr.bf16.mxu0 0
    %3975 = vmatpush2.bf16.msra.mxu0 0
    %3976 = vmatprep.subr.bf16.mxu0 0
    %3977 = vmatpush2.bf16.msra.mxu0 0
    %3978 = vmatprep.subr.bf16.mxu0 0
    %3979 = vmatpush2.bf16.msra.mxu0 0
    %3980 = vmatprep.subr.bf16.mxu0 0
    %3981 = vmatpush2.bf16.msra.mxu0 0
    %3982 = vmatprep.subr.bf16.mxu0 0
    %3983 = vmatpush2.bf16.msra.mxu0 0
    %3984 = vmatprep.subr.bf16.mxu0 0
    %3985 = vmatpush2.bf16.msra.mxu0 0
    %3986 = vmatprep.mubr.bf16.mxu0 0
    %3987 = vmatmul.mubr.bf16.gmra.mxu0 %v3952
    %v3988 = vpop.f32.mrf.mxu0
    %v3989 = vadd.f32 0.0, %v3988
    %v3990 = vpop.f32.mrf.mxu0
    %v3991 = vpop.f32.mrf.mxu0
    %v3992 = vadd.f32 0.0, %v3991
    %v3993 = vpop.f32.mrf.mxu0
    %3994 = vdwg.mxu0
    %v3995 = vsub.f32 %v3989, %v3944
    %v3996 = vsub.f32 %v3992, %v3947
    %v3997 = vmax.f32 %v3995, %v3996
    %v3998 = vrot.slane %v3997, 4
    %v3999 = vmax.f32 %v3997, %v3998
    %v4000 = vrot.slane %v3999, 2
    %v4001 = vmax.f32 %v3999, %v4000
    %v4002 = vrot.slane %v4001, 1
    %v4003 = vmax.f32 %v4001, %v4002
    %v4004 = vsub.f32 %v3995, %v4003
    %v4005 = vsub.f32 %v3996, %v4003
    %v4006 = vmul.f32 %v4004, 1.442695
    %v4007 = vpow.pop %v4006
    %v4008 = vmul.f32 %v4005, 1.442695
    %v4009 = vpow.pop %v4008
    %v4010 = vadd.f32 %v4007, %v4009
    %v4011 = vrot.slane %v4010, 4
    %v4012 = vadd.f32 %v4010, %v4011
    %v4013 = vrot.slane %v4012, 2
    %v4014 = vadd.f32 %v4012, %v4013
    %v4015 = vrot.slane %v4014, 1
    %v4016 = vadd.f32 %v4014, %v4015
    %v4017 = vadd.f32 %v4016, 1e-16
    %v4018 = vrcp.pop %v4017
    %v4019 = vmul.f32 %v4007, %v4018
    %v4020 = vmul.f32 %v4009, %v4018
    %v4021 = vpack.c.bf16 %v4020, %v4019
    %4022 = vmatprep.subr.bf16.mxu0 0
    %4023 = vmatpush1.bf16.xpose.msra.mxu0 0
    %4024 = vmatprep.subr.bf16.mxu0 0
    %4025 = vmatpush1.bf16.xpose.msra.mxu0 0
    %4026 = vmatprep.subr.bf16.mxu0 0
    %4027 = vmatpush1.bf16.xpose.msra.mxu0 0
    %4028 = vmatprep.subr.bf16.mxu0 0
    %4029 = vmatpush1.bf16.xpose.msra.mxu0 0
    %4030 = vmatprep.subr.bf16.mxu0 0
    %4031 = vmatpush1.bf16.xpose.msra.mxu0 0
    %4032 = vmatprep.subr.bf16.mxu0 0
    %4033 = vmatpush1.bf16.xpose.msra.mxu0 0
    %4034 = vmatprep.subr.bf16.mxu0 0
    %4035 = vmatpush1.bf16.xpose.msra.mxu0 %v2842
    %4036 = vmatprep.subr.bf16.mxu0 0
    %4037 = vmatpush1.bf16.xpose.msra.mxu0 %v2841
    %4038 = vmatprep.subr.bf16.mxu0 0
    %4039 = vmatpush2.bf16.xpose.msra.mxu0 0
    %4040 = vmatprep.subr.bf16.mxu0 0
    %4041 = vmatpush2.bf16.xpose.msra.mxu0 0
    %4042 = vmatprep.subr.bf16.mxu0 0
    %4043 = vmatpush2.bf16.xpose.msra.mxu0 0
    %4044 = vmatprep.subr.bf16.mxu0 0
    %4045 = vmatpush2.bf16.xpose.msra.mxu0 0
    %4046 = vmatprep.subr.bf16.mxu0 0
    %4047 = vmatpush2.bf16.xpose.msra.mxu0 0
    %4048 = vmatprep.subr.bf16.mxu0 0
    %4049 = vmatpush2.bf16.xpose.msra.mxu0 0
    %4050 = vmatprep.subr.bf16.mxu0 0
    %4051 = vmatpush2.bf16.xpose.msra.mxu0 0
    %4052 = vmatprep.subr.bf16.mxu0 0
    %4053 = vmatpush2.bf16.xpose.msra.mxu0 0
    %4054 = vmatprep.mubr.bf16.mxu0 0
    %4055 = vmatmul.mubr.bf16.gmra.mxu0 %v4021
    %v4056 = vpop.f32.mrf.mxu0
    %v4057 = vadd.f32 0.0, %v4056
    %v4058 = vpop.f32.mrf.mxu0
    %v4059 = vpop.f32.mrf.mxu0
    %v4060 = vadd.f32 0.0, %v4059
    %v4061 = vpop.f32.mrf.mxu0
    %4062 = vdwg.mxu0
    %4063 = vadd.xlane.f32.xlu0 %v4019
    %v4064 = vpop.xlane.xlu0 %4063
    %4065 = vadd.xlane.f32.xlu0 %v4020
    %v4066 = vpop.xlane.xlu0 %4065
    %v4067 = vadd.f32 %v4064, 1e-08
    %v4068 = vadd.f32 %v4066, 1e-08
    %v4069 = vrcp.pop %v4067
    %v4070 = vmul.f32 %v4057, %v4069
    %v4071 = vrcp.pop %v4068
    %v4072 = vmul.f32 %v4060, %v4071
    %v4073 = vmul.f32 %v4070, %v4070
    %v4074 = vmul.f32 %v4072, %v4072
    %v4075 = vsel %vm2877, %v4073, 0.0
    %4076 = vadd.xlane.f32.xlu0 %v4075
    %v4077 = vpop.xlane.xlu0 %4076
    %v4078 = vsel %vm2877, %v4074, 0.0
    %4079 = vadd.xlane.f32.xlu0 %v4078
    %v4080 = vpop.xlane.xlu0 %4079
    %v4081 = vadd.f32 %v4070, %v4070
    %v4082 = vadd.f32 %v4072, %v4072
    %v4083 = vpack.c.bf16 %v4082, %v4081
    %v4085 = vsel %vm2877, %v4083, 0
    %4087 = vmatprep.subr.bf16.mxu0 0
    %4088 = vmatpush1.bf16.msra.mxu0 0
    %4089 = vmatprep.subr.bf16.mxu0 0
    %4090 = vmatpush1.bf16.msra.mxu0 0
    %4091 = vmatprep.subr.bf16.mxu0 0
    %4092 = vmatpush1.bf16.msra.mxu0 0
    %4093 = vmatprep.subr.bf16.mxu0 0
    %4094 = vmatpush1.bf16.msra.mxu0 0
    %4095 = vmatprep.subr.bf16.mxu0 0
    %4096 = vmatpush1.bf16.msra.mxu0 0
    %4097 = vmatprep.subr.bf16.mxu0 0
    %4098 = vmatpush1.bf16.msra.mxu0 0
    %4099 = vmatprep.subr.bf16.mxu0 0
    %4100 = vmatpush1.bf16.msra.mxu0 %v2842
    %4101 = vmatprep.subr.bf16.mxu0 0
    %4102 = vmatpush1.bf16.msra.mxu0 %v2841
    %4103 = vmatprep.subr.bf16.mxu0 0
    %4104 = vmatpush2.bf16.msra.mxu0 0
    %4105 = vmatprep.subr.bf16.mxu0 0
    %4106 = vmatpush2.bf16.msra.mxu0 0
    %4107 = vmatprep.subr.bf16.mxu0 0
    %4108 = vmatpush2.bf16.msra.mxu0 0
    %4109 = vmatprep.subr.bf16.mxu0 0
    %4110 = vmatpush2.bf16.msra.mxu0 0
    %4111 = vmatprep.subr.bf16.mxu0 0
    %4112 = vmatpush2.bf16.msra.mxu0 0
    %4113 = vmatprep.subr.bf16.mxu0 0
    %4114 = vmatpush2.bf16.msra.mxu0 0
    %4115 = vmatprep.subr.bf16.mxu0 0
    %4116 = vmatpush2.bf16.msra.mxu0 0
    %4117 = vmatprep.subr.bf16.mxu0 0
    %4118 = vmatpush2.bf16.msra.mxu0 0
    %4119 = vmatprep.mubr.bf16.mxu0 0
    %4120 = vmatmul.mubr.bf16.gmra.mxu0 %v4085
    %v4121 = vpop.f32.mrf.mxu0
    %v4122 = vadd.f32 0.0, %v4121
    %v4123 = vpop.f32.mrf.mxu0
    %v4124 = vpop.f32.mrf.mxu0
    %v4125 = vadd.f32 0.0, %v4124
    %v4126 = vpop.f32.mrf.mxu0
    %4127 = vdwg.mxu0
    %v4128 = vsub.f32 %v4122, %v4077
    %v4129 = vsub.f32 %v4125, %v4080
    %v4130 = vmax.f32 %v4128, %v4129
    %v4131 = vrot.slane %v4130, 4
    %v4132 = vmax.f32 %v4130, %v4131
    %v4133 = vrot.slane %v4132, 2
    %v4134 = vmax.f32 %v4132, %v4133
    %v4135 = vrot.slane %v4134, 1
    %v4136 = vmax.f32 %v4134, %v4135
    %v4137 = vsub.f32 %v4128, %v4136
    %v4138 = vsub.f32 %v4129, %v4136
    %v4139 = vmul.f32 %v4137, 1.442695
    %v4140 = vpow.pop %v4139
    %v4141 = vmul.f32 %v4138, 1.442695
    %v4142 = vpow.pop %v4141
    %v4143 = vadd.f32 %v4140, %v4142
    %v4144 = vrot.slane %v4143, 4
    %v4145 = vadd.f32 %v4143, %v4144
    %v4146 = vrot.slane %v4145, 2
    %v4147 = vadd.f32 %v4145, %v4146
    %v4148 = vrot.slane %v4147, 1
    %v4149 = vadd.f32 %v4147, %v4148
    %v4150 = vadd.f32 %v4149, 1e-16
    %v4151 = vrcp.pop %v4150
    %v4152 = vmul.f32 %v4140, %v4151
    %v4153 = vmul.f32 %v4142, %v4151
    %v4154 = vpack.c.bf16 %v4153, %v4152
    %4155 = vmatprep.subr.bf16.mxu0 0
    %4156 = vmatpush1.bf16.xpose.msra.mxu0 0
    %4157 = vmatprep.subr.bf16.mxu0 0
    %4158 = vmatpush1.bf16.xpose.msra.mxu0 0
    %4159 = vmatprep.subr.bf16.mxu0 0
    %4160 = vmatpush1.bf16.xpose.msra.mxu0 0
    %4161 = vmatprep.subr.bf16.mxu0 0
    %4162 = vmatpush1.bf16.xpose.msra.mxu0 0
    %4163 = vmatprep.subr.bf16.mxu0 0
    %4164 = vmatpush1.bf16.xpose.msra.mxu0 0
    %4165 = vmatprep.subr.bf16.mxu0 0
    %4166 = vmatpush1.bf16.xpose.msra.mxu0 0
    %4167 = vmatprep.subr.bf16.mxu0 0
    %4168 = vmatpush1.bf16.xpose.msra.mxu0 %v2842
    %4169 = vmatprep.subr.bf16.mxu0 0
    %4170 = vmatpush1.bf16.xpose.msra.mxu0 %v2841
    %4171 = vmatprep.subr.bf16.mxu0 0
    %4172 = vmatpush2.bf16.xpose.msra.mxu0 0
    %4173 = vmatprep.subr.bf16.mxu0 0
    %4174 = vmatpush2.bf16.xpose.msra.mxu0 0
    %4175 = vmatprep.subr.bf16.mxu0 0
    %4176 = vmatpush2.bf16.xpose.msra.mxu0 0
    %4177 = vmatprep.subr.bf16.mxu0 0
    %4178 = vmatpush2.bf16.xpose.msra.mxu0 0
    %4179 = vmatprep.subr.bf16.mxu0 0
    %4180 = vmatpush2.bf16.xpose.msra.mxu0 0
    %4181 = vmatprep.subr.bf16.mxu0 0
    %4182 = vmatpush2.bf16.xpose.msra.mxu0 0
    %4183 = vmatprep.subr.bf16.mxu0 0
    %4184 = vmatpush2.bf16.xpose.msra.mxu0 0
    %4185 = vmatprep.subr.bf16.mxu0 0
    %4186 = vmatpush2.bf16.xpose.msra.mxu0 0
    %4187 = vmatprep.mubr.bf16.mxu0 0
    %4188 = vmatmul.mubr.bf16.gmra.mxu0 %v4154
    %v4189 = vpop.f32.mrf.mxu0
    %v4190 = vadd.f32 0.0, %v4189
    %v4191 = vpop.f32.mrf.mxu0
    %v4192 = vpop.f32.mrf.mxu0
    %v4193 = vadd.f32 0.0, %v4192
    %v4194 = vpop.f32.mrf.mxu0
    %4195 = vdwg.mxu0
    %4196 = vadd.xlane.f32.xlu0 %v4152
    %v4197 = vpop.xlane.xlu0 %4196
    %4198 = vadd.xlane.f32.xlu0 %v4153
    %v4199 = vpop.xlane.xlu0 %4198
    %v4200 = vadd.f32 %v4197, 1e-08
    %v4201 = vadd.f32 %v4199, 1e-08
    %v4202 = vrcp.pop %v4200
    %v4203 = vmul.f32 %v4190, %v4202
    %v4204 = vrcp.pop %v4201
    %v4205 = vmul.f32 %v4193, %v4204
    %v4206 = vmul.f32 %v4203, %v4203
    %v4207 = vmul.f32 %v4205, %v4205
    %v4208 = vsel %vm2877, %v4206, 0.0
    %4209 = vadd.xlane.f32.xlu0 %v4208
    %v4210 = vpop.xlane.xlu0 %4209
    %v4211 = vsel %vm2877, %v4207, 0.0
    %4212 = vadd.xlane.f32.xlu0 %v4211
    %v4213 = vpop.xlane.xlu0 %4212
    %v4214 = vadd.f32 %v4203, %v4203
    %v4215 = vadd.f32 %v4205, %v4205
    %v4216 = vpack.c.bf16 %v4215, %v4214
    %v4218 = vsel %vm2877, %v4216, 0
    %4220 = vmatprep.subr.bf16.mxu0 0
    %4221 = vmatpush1.bf16.msra.mxu0 0
    %4222 = vmatprep.subr.bf16.mxu0 0
    %4223 = vmatpush1.bf16.msra.mxu0 0
    %4224 = vmatprep.subr.bf16.mxu0 0
    %4225 = vmatpush1.bf16.msra.mxu0 0
    %4226 = vmatprep.subr.bf16.mxu0 0
    %4227 = vmatpush1.bf16.msra.mxu0 0
    %4228 = vmatprep.subr.bf16.mxu0 0
    %4229 = vmatpush1.bf16.msra.mxu0 0
    %4230 = vmatprep.subr.bf16.mxu0 0
    %4231 = vmatpush1.bf16.msra.mxu0 0
    %4232 = vmatprep.subr.bf16.mxu0 0
    %4233 = vmatpush1.bf16.msra.mxu0 %v2842
    %4234 = vmatprep.subr.bf16.mxu0 0
    %4235 = vmatpush1.bf16.msra.mxu0 %v2841
    %4236 = vmatprep.subr.bf16.mxu0 0
    %4237 = vmatpush2.bf16.msra.mxu0 0
    %4238 = vmatprep.subr.bf16.mxu0 0
    %4239 = vmatpush2.bf16.msra.mxu0 0
    %4240 = vmatprep.subr.bf16.mxu0 0
    %4241 = vmatpush2.bf16.msra.mxu0 0
    %4242 = vmatprep.subr.bf16.mxu0 0
    %4243 = vmatpush2.bf16.msra.mxu0 0
    %4244 = vmatprep.subr.bf16.mxu0 0
    %4245 = vmatpush2.bf16.msra.mxu0 0
    %4246 = vmatprep.subr.bf16.mxu0 0
    %4247 = vmatpush2.bf16.msra.mxu0 0
    %4248 = vmatprep.subr.bf16.mxu0 0
    %4249 = vmatpush2.bf16.msra.mxu0 0
    %4250 = vmatprep.subr.bf16.mxu0 0
    %4251 = vmatpush2.bf16.msra.mxu0 0
    %4252 = vmatprep.mubr.bf16.mxu0 0
    %4253 = vmatmul.mubr.bf16.gmra.mxu0 %v4218
    %v4254 = vpop.f32.mrf.mxu0
    %v4255 = vadd.f32 0.0, %v4254
    %v4256 = vpop.f32.mrf.mxu0
    %v4257 = vpop.f32.mrf.mxu0
    %v4258 = vadd.f32 0.0, %v4257
    %v4259 = vpop.f32.mrf.mxu0
    %4260 = vdwg.mxu0
    %v4261 = vsub.f32 %v4255, %v4210
    %v4262 = vsub.f32 %v4258, %v4213
    %v4263 = vmax.f32 %v4261, %v4262
    %v4264 = vrot.slane %v4263, 4
    %v4265 = vmax.f32 %v4263, %v4264
    %v4266 = vrot.slane %v4265, 2
    %v4267 = vmax.f32 %v4265, %v4266
    %v4268 = vrot.slane %v4267, 1
    %v4269 = vmax.f32 %v4267, %v4268
    %v4270 = vsub.f32 %v4261, %v4269
    %v4271 = vsub.f32 %v4262, %v4269
    %v4272 = vmul.f32 %v4270, 1.442695
    %v4273 = vpow.pop %v4272
    %v4274 = vmul.f32 %v4271, 1.442695
    %v4275 = vpow.pop %v4274
    %v4276 = vadd.f32 %v4273, %v4275
    %v4277 = vrot.slane %v4276, 4
    %v4278 = vadd.f32 %v4276, %v4277
    %v4279 = vrot.slane %v4278, 2
    %v4280 = vadd.f32 %v4278, %v4279
    %v4281 = vrot.slane %v4280, 1
    %v4282 = vadd.f32 %v4280, %v4281
    %v4283 = vadd.f32 %v4282, 1e-16
    %v4284 = vrcp.pop %v4283
    %v4285 = vmul.f32 %v4273, %v4284
    %v4286 = vmul.f32 %v4275, %v4284
    %4287 = vst [vmem:[#allocation2] sm:$0xff] %v4285
    %4288 = vst [vmem:[#allocation2 + $0x8] sm:$0xff] %v4286
    %4289 = vxpose.xlu0.b32.start [1/16] %v4203, 128
    %4290 = vxpose.xlu0.b32.cont [2/16] %v4205, 128
    %4291 = vxpose.xlu0.b32.cont [3/16] 0.0, 128
    %4292 = vxpose.xlu0.b32.cont [4/16] 0.0, 128
    %4293 = vxpose.xlu0.b32.cont [5/16] 0.0, 128
    %4294 = vxpose.xlu0.b32.cont [6/16] 0.0, 128
    %4295 = vxpose.xlu0.b32.cont [7/16] 0.0, 128
    %4296 = vxpose.xlu0.b32.cont [8/16] 0.0, 128
    %4297 = vxpose.xlu0.b32.cont [9/16] 0.0, 128
    %4298 = vxpose.xlu0.b32.cont [10/16] 0.0, 128
    %4299 = vxpose.xlu0.b32.cont [11/16] 0.0, 128
    %4300 = vxpose.xlu0.b32.cont [12/16] 0.0, 128
    %4301 = vxpose.xlu0.b32.cont [13/16] 0.0, 128
    %4302 = vxpose.xlu0.b32.cont [14/16] 0.0, 128
    %4303 = vxpose.xlu0.b32.cont [15/16] 0.0, 128
    %4304 = vxpose.xlu0.b32.end [16/16] 0.0, 128
    %v4305 = vpop.trf.xlu0
    %v4306 = vpop.trf.xlu0
    %v4307 = vpop.trf.xlu0
    %v4308 = vpop.trf.xlu0
    %v4309 = vpop.trf.xlu0
    %v4310 = vpop.trf.xlu0
    %v4311 = vpop.trf.xlu0
    %v4312 = vpop.trf.xlu0
    %v4313 = vpop.trf.xlu0
    %v4314 = vpop.trf.xlu0
    %v4315 = vpop.trf.xlu0
    %v4316 = vpop.trf.xlu0
    %v4317 = vpop.trf.xlu0
    %v4318 = vpop.trf.xlu0
    %v4319 = vpop.trf.xlu0
    %v4320 = vpop.trf.xlu0
    %vm4321 = vcmask 130048
    %4322 = vst.msk [vmem:[%s4] sm:$0xff] %vm4321, %v4305
    %4323 = vst.msk [vmem:[%s4 + $0x8] sm:$0xff] %vm4321, %v4306
    %4324 = vst.msk [vmem:[%s4 + $0x10] sm:$0xff] %vm4321, %v4307
    %4325 = vst.msk [vmem:[%s4 + $0x18] sm:$0xff] %vm4321, %v4308
    %v4326 = vpack.c.bf16 %v2784, %v2780
    %v4327 = vpack.c.bf16 %v2794, %v2790
    %4328 = vxpose.xlu0.b32.start [1/16] %v2780, 128
    %4329 = vxpose.xlu0.b32.cont [2/16] %v2784, 128
    %4330 = vxpose.xlu0.b32.cont [3/16] %v2790, 128
    %4331 = vxpose.xlu0.b32.cont [4/16] %v2794, 128
    %4332 = vxpose.xlu0.b32.cont [5/16] 0.0, 128
    %4333 = vxpose.xlu0.b32.cont [6/16] 0.0, 128
    %4334 = vxpose.xlu0.b32.cont [7/16] 0.0, 128
    %4335 = vxpose.xlu0.b32.cont [8/16] 0.0, 128
    %4336 = vxpose.xlu0.b32.cont [9/16] 0.0, 128
    %4337 = vxpose.xlu0.b32.cont [10/16] 0.0, 128
    %4338 = vxpose.xlu0.b32.cont [11/16] 0.0, 128
    %4339 = vxpose.xlu0.b32.cont [12/16] 0.0, 128
    %4340 = vxpose.xlu0.b32.cont [13/16] 0.0, 128
    %4341 = vxpose.xlu0.b32.cont [14/16] 0.0, 128
    %4342 = vxpose.xlu0.b32.cont [15/16] 0.0, 128
    %4343 = vxpose.xlu0.b32.end [16/16] 0.0, 128
    %v4344 = vpop.trf.xlu0
    %v4345 = vpop.trf.xlu0
    %v4346 = vpop.trf.xlu0
    %v4347 = vpop.trf.xlu0
    %v4348 = vpop.trf.xlu0
    %v4349 = vpop.trf.xlu0
    %v4350 = vpop.trf.xlu0
    %v4351 = vpop.trf.xlu0
    %v4352 = vpop.trf.xlu0
    %v4353 = vpop.trf.xlu0
    %v4354 = vpop.trf.xlu0
    %v4355 = vpop.trf.xlu0
    %v4356 = vpop.trf.xlu0
    %v4357 = vpop.trf.xlu0
    %v4358 = vpop.trf.xlu0
    %v4359 = vpop.trf.xlu0
    %v4360 = vmul.f32 %v4344, %v4344
    %v4361 = vmul.f32 %v4345, %v4345
    %v4362 = vsel %vm2877, %v4360, 0.0
    %4363 = vadd.xlane.f32.xlu0 %v4362
    %v4364 = vpop.xlane.xlu0 %4363
    %v4365 = vsel %vm2877, %v4361, 0.0
    %4366 = vadd.xlane.f32.xlu0 %v4365
    %v4367 = vpop.xlane.xlu0 %4366
    %v4368 = vadd.f32 %v4344, %v4344
    %v4369 = vadd.f32 %v4345, %v4345
    %v4370 = vpack.c.bf16 %v4369, %v4368
    %v4372 = vsel %vm2877, %v4370, 0
    %4374 = vmatprep.subr.bf16.mxu0 0
    %4375 = vmatpush1.bf16.msra.mxu0 0
    %4376 = vmatprep.subr.bf16.mxu0 0
    %4377 = vmatpush1.bf16.msra.mxu0 0
    %4378 = vmatprep.subr.bf16.mxu0 0
    %4379 = vmatpush1.bf16.msra.mxu0 0
    %4380 = vmatprep.subr.bf16.mxu0 0
    %4381 = vmatpush1.bf16.msra.mxu0 0
    %4382 = vmatprep.subr.bf16.mxu0 0
    %4383 = vmatpush1.bf16.msra.mxu0 0
    %4384 = vmatprep.subr.bf16.mxu0 0
    %4385 = vmatpush1.bf16.msra.mxu0 0
    %4386 = vmatprep.subr.bf16.mxu0 0
    %4387 = vmatpush1.bf16.msra.mxu0 %v4327
    %4388 = vmatprep.subr.bf16.mxu0 0
    %4389 = vmatpush1.bf16.msra.mxu0 %v4326
    %4390 = vmatprep.subr.bf16.mxu0 0
    %4391 = vmatpush2.bf16.msra.mxu0 0
    %4392 = vmatprep.subr.bf16.mxu0 0
    %4393 = vmatpush2.bf16.msra.mxu0 0
    %4394 = vmatprep.subr.bf16.mxu0 0
    %4395 = vmatpush2.bf16.msra.mxu0 0
    %4396 = vmatprep.subr.bf16.mxu0 0
    %4397 = vmatpush2.bf16.msra.mxu0 0
    %4398 = vmatprep.subr.bf16.mxu0 0
    %4399 = vmatpush2.bf16.msra.mxu0 0
    %4400 = vmatprep.subr.bf16.mxu0 0
    %4401 = vmatpush2.bf16.msra.mxu0 0
    %4402 = vmatprep.subr.bf16.mxu0 0
    %4403 = vmatpush2.bf16.msra.mxu0 0
    %4404 = vmatprep.subr.bf16.mxu0 0
    %4405 = vmatpush2.bf16.msra.mxu0 0
    %4406 = vmatprep.mubr.bf16.mxu0 0
    %4407 = vmatmul.mubr.bf16.gmra.mxu0 %v4372
    %v4408 = vpop.f32.mrf.mxu0
    %v4409 = vadd.f32 0.0, %v4408
    %v4410 = vpop.f32.mrf.mxu0
    %v4411 = vpop.f32.mrf.mxu0
    %v4412 = vadd.f32 0.0, %v4411
    %v4413 = vpop.f32.mrf.mxu0
    %4414 = vdwg.mxu0
    %v4415 = vsub.f32 %v4409, %v4364
    %v4416 = vsub.f32 %v4412, %v4367
    %v4417 = vmax.f32 %v4415, %v4416
    %v4418 = vrot.slane %v4417, 4
    %v4419 = vmax.f32 %v4417, %v4418
    %v4420 = vrot.slane %v4419, 2
    %v4421 = vmax.f32 %v4419, %v4420
    %v4422 = vrot.slane %v4421, 1
    %v4423 = vmax.f32 %v4421, %v4422
    %v4424 = vsub.f32 %v4415, %v4423
    %v4425 = vsub.f32 %v4416, %v4423
    %v4426 = vmul.f32 %v4424, 1.442695
    %v4427 = vpow.pop %v4426
    %v4428 = vmul.f32 %v4425, 1.442695
    %v4429 = vpow.pop %v4428
    %v4430 = vadd.f32 %v4427, %v4429
    %v4431 = vrot.slane %v4430, 4
    %v4432 = vadd.f32 %v4430, %v4431
    %v4433 = vrot.slane %v4432, 2
    %v4434 = vadd.f32 %v4432, %v4433
    %v4435 = vrot.slane %v4434, 1
    %v4436 = vadd.f32 %v4434, %v4435
    %v4437 = vadd.f32 %v4436, 1e-16
    %v4438 = vrcp.pop %v4437
    %v4439 = vmul.f32 %v4427, %v4438
    %v4440 = vmul.f32 %v4429, %v4438
    %v4441 = vpack.c.bf16 %v4440, %v4439
    %4442 = vmatprep.subr.bf16.mxu0 0
    %4443 = vmatpush1.bf16.xpose.msra.mxu0 0
    %4444 = vmatprep.subr.bf16.mxu0 0
    %4445 = vmatpush1.bf16.xpose.msra.mxu0 0
    %4446 = vmatprep.subr.bf16.mxu0 0
    %4447 = vmatpush1.bf16.xpose.msra.mxu0 0
    %4448 = vmatprep.subr.bf16.mxu0 0
    %4449 = vmatpush1.bf16.xpose.msra.mxu0 0
    %4450 = vmatprep.subr.bf16.mxu0 0
    %4451 = vmatpush1.bf16.xpose.msra.mxu0 0
    %4452 = vmatprep.subr.bf16.mxu0 0
    %4453 = vmatpush1.bf16.xpose.msra.mxu0 0
    %4454 = vmatprep.subr.bf16.mxu0 0
    %4455 = vmatpush1.bf16.xpose.msra.mxu0 %v4327
    %4456 = vmatprep.subr.bf16.mxu0 0
    %4457 = vmatpush1.bf16.xpose.msra.mxu0 %v4326
    %4458 = vmatprep.subr.bf16.mxu0 0
    %4459 = vmatpush2.bf16.xpose.msra.mxu0 0
    %4460 = vmatprep.subr.bf16.mxu0 0
    %4461 = vmatpush2.bf16.xpose.msra.mxu0 0
    %4462 = vmatprep.subr.bf16.mxu0 0
    %4463 = vmatpush2.bf16.xpose.msra.mxu0 0
    %4464 = vmatprep.subr.bf16.mxu0 0
    %4465 = vmatpush2.bf16.xpose.msra.mxu0 0
    %4466 = vmatprep.subr.bf16.mxu0 0
    %4467 = vmatpush2.bf16.xpose.msra.mxu0 0
    %4468 = vmatprep.subr.bf16.mxu0 0
    %4469 = vmatpush2.bf16.xpose.msra.mxu0 0
    %4470 = vmatprep.subr.bf16.mxu0 0
    %4471 = vmatpush2.bf16.xpose.msra.mxu0 0
    %4472 = vmatprep.subr.bf16.mxu0 0
    %4473 = vmatpush2.bf16.xpose.msra.mxu0 0
    %4474 = vmatprep.mubr.bf16.mxu0 0
    %4475 = vmatmul.mubr.bf16.gmra.mxu0 %v4441
    %v4476 = vpop.f32.mrf.mxu0
    %v4477 = vadd.f32 0.0, %v4476
    %v4478 = vpop.f32.mrf.mxu0
    %v4479 = vpop.f32.mrf.mxu0
    %v4480 = vadd.f32 0.0, %v4479
    %v4481 = vpop.f32.mrf.mxu0
    %4482 = vdwg.mxu0
    %4483 = vadd.xlane.f32.xlu0 %v4439
    %v4484 = vpop.xlane.xlu0 %4483
    %4485 = vadd.xlane.f32.xlu0 %v4440
    %v4486 = vpop.xlane.xlu0 %4485
    %v4487 = vadd.f32 %v4484, 1e-08
    %v4488 = vadd.f32 %v4486, 1e-08
    %v4489 = vrcp.pop %v4487
    %v4490 = vmul.f32 %v4477, %v4489
    %v4491 = vrcp.pop %v4488
    %v4492 = vmul.f32 %v4480, %v4491
    %v4493 = vmul.f32 %v4490, %v4490
    %v4494 = vmul.f32 %v4492, %v4492
    %v4495 = vsel %vm2877, %v4493, 0.0
    %4496 = vadd.xlane.f32.xlu0 %v4495
    %v4497 = vpop.xlane.xlu0 %4496
    %v4498 = vsel %vm2877, %v4494, 0.0
    %4499 = vadd.xlane.f32.xlu0 %v4498
    %v4500 = vpop.xlane.xlu0 %4499
    %v4501 = vadd.f32 %v4490, %v4490
    %v4502 = vadd.f32 %v4492, %v4492
    %v4503 = vpack.c.bf16 %v4502, %v4501
    %v4505 = vsel %vm2877, %v4503, 0
    %4507 = vmatprep.subr.bf16.mxu0 0
    %4508 = vmatpush1.bf16.msra.mxu0 0
    %4509 = vmatprep.subr.bf16.mxu0 0
    %4510 = vmatpush1.bf16.msra.mxu0 0
    %4511 = vmatprep.subr.bf16.mxu0 0
    %4512 = vmatpush1.bf16.msra.mxu0 0
    %4513 = vmatprep.subr.bf16.mxu0 0
    %4514 = vmatpush1.bf16.msra.mxu0 0
    %4515 = vmatprep.subr.bf16.mxu0 0
    %4516 = vmatpush1.bf16.msra.mxu0 0
    %4517 = vmatprep.subr.bf16.mxu0 0
    %4518 = vmatpush1.bf16.msra.mxu0 0
    %4519 = vmatprep.subr.bf16.mxu0 0
    %4520 = vmatpush1.bf16.msra.mxu0 %v4327
    %4521 = vmatprep.subr.bf16.mxu0 0
    %4522 = vmatpush1.bf16.msra.mxu0 %v4326
    %4523 = vmatprep.subr.bf16.mxu0 0
    %4524 = vmatpush2.bf16.msra.mxu0 0
    %4525 = vmatprep.subr.bf16.mxu0 0
    %4526 = vmatpush2.bf16.msra.mxu0 0
    %4527 = vmatprep.subr.bf16.mxu0 0
    %4528 = vmatpush2.bf16.msra.mxu0 0
    %4529 = vmatprep.subr.bf16.mxu0 0
    %4530 = vmatpush2.bf16.msra.mxu0 0
    %4531 = vmatprep.subr.bf16.mxu0 0
    %4532 = vmatpush2.bf16.msra.mxu0 0
    %4533 = vmatprep.subr.bf16.mxu0 0
    %4534 = vmatpush2.bf16.msra.mxu0 0
    %4535 = vmatprep.subr.bf16.mxu0 0
    %4536 = vmatpush2.bf16.msra.mxu0 0
    %4537 = vmatprep.subr.bf16.mxu0 0
    %4538 = vmatpush2.bf16.msra.mxu0 0
    %4539 = vmatprep.mubr.bf16.mxu0 0
    %4540 = vmatmul.mubr.bf16.gmra.mxu0 %v4505
    %v4541 = vpop.f32.mrf.mxu0
    %v4542 = vadd.f32 0.0, %v4541
    %v4543 = vpop.f32.mrf.mxu0
    %v4544 = vpop.f32.mrf.mxu0
    %v4545 = vadd.f32 0.0, %v4544
    %v4546 = vpop.f32.mrf.mxu0
    %4547 = vdwg.mxu0
    %v4548 = vsub.f32 %v4542, %v4497
    %v4549 = vsub.f32 %v4545, %v4500
    %v4550 = vmax.f32 %v4548, %v4549
    %v4551 = vrot.slane %v4550, 4
    %v4552 = vmax.f32 %v4550, %v4551
    %v4553 = vrot.slane %v4552, 2
    %v4554 = vmax.f32 %v4552, %v4553
    %v4555 = vrot.slane %v4554, 1
    %v4556 = vmax.f32 %v4554, %v4555
    %v4557 = vsub.f32 %v4548, %v4556
    %v4558 = vsub.f32 %v4549, %v4556
    %v4559 = vmul.f32 %v4557, 1.442695
    %v4560 = vpow.pop %v4559
    %v4561 = vmul.f32 %v4558, 1.442695
    %v4562 = vpow.pop %v4561
    %v4563 = vadd.f32 %v4560, %v4562
    %v4564 = vrot.slane %v4563, 4
    %v4565 = vadd.f32 %v4563, %v4564
    %v4566 = vrot.slane %v4565, 2
    %v4567 = vadd.f32 %v4565, %v4566
    %v4568 = vrot.slane %v4567, 1
    %v4569 = vadd.f32 %v4567, %v4568
    %v4570 = vadd.f32 %v4569, 1e-16
    %v4571 = vrcp.pop %v4570
    %v4572 = vmul.f32 %v4560, %v4571
    %v4573 = vmul.f32 %v4562, %v4571
    %v4574 = vpack.c.bf16 %v4573, %v4572
    %4575 = vmatprep.subr.bf16.mxu0 0
    %4576 = vmatpush1.bf16.xpose.msra.mxu0 0
    %4577 = vmatprep.subr.bf16.mxu0 0
    %4578 = vmatpush1.bf16.xpose.msra.mxu0 0
    %4579 = vmatprep.subr.bf16.mxu0 0
    %4580 = vmatpush1.bf16.xpose.msra.mxu0 0
    %4581 = vmatprep.subr.bf16.mxu0 0
    %4582 = vmatpush1.bf16.xpose.msra.mxu0 0
    %4583 = vmatprep.subr.bf16.mxu0 0
    %4584 = vmatpush1.bf16.xpose.msra.mxu0 0
    %4585 = vmatprep.subr.bf16.mxu0 0
    %4586 = vmatpush1.bf16.xpose.msra.mxu0 0
    %4587 = vmatprep.subr.bf16.mxu0 0
    %4588 = vmatpush1.bf16.xpose.msra.mxu0 %v4327
    %4589 = vmatprep.subr.bf16.mxu0 0
    %4590 = vmatpush1.bf16.xpose.msra.mxu0 %v4326
    %4591 = vmatprep.subr.bf16.mxu0 0
    %4592 = vmatpush2.bf16.xpose.msra.mxu0 0
    %4593 = vmatprep.subr.bf16.mxu0 0
    %4594 = vmatpush2.bf16.xpose.msra.mxu0 0
    %4595 = vmatprep.subr.bf16.mxu0 0
    %4596 = vmatpush2.bf16.xpose.msra.mxu0 0
    %4597 = vmatprep.subr.bf16.mxu0 0
    %4598 = vmatpush2.bf16.xpose.msra.mxu0 0
    %4599 = vmatprep.subr.bf16.mxu0 0
    %4600 = vmatpush2.bf16.xpose.msra.mxu0 0
    %4601 = vmatprep.subr.bf16.mxu0 0
    %4602 = vmatpush2.bf16.xpose.msra.mxu0 0
    %4603 = vmatprep.subr.bf16.mxu0 0
    %4604 = vmatpush2.bf16.xpose.msra.mxu0 0
    %4605 = vmatprep.subr.bf16.mxu0 0
    %4606 = vmatpush2.bf16.xpose.msra.mxu0 0
    %4607 = vmatprep.mubr.bf16.mxu0 0
    %4608 = vmatmul.mubr.bf16.gmra.mxu0 %v4574
    %v4609 = vpop.f32.mrf.mxu0
    %v4610 = vadd.f32 0.0, %v4609
    %v4611 = vpop.f32.mrf.mxu0
    %v4612 = vpop.f32.mrf.mxu0
    %v4613 = vadd.f32 0.0, %v4612
    %v4614 = vpop.f32.mrf.mxu0
    %4615 = vdwg.mxu0
    %4616 = vadd.xlane.f32.xlu0 %v4572
    %v4617 = vpop.xlane.xlu0 %4616
    %4618 = vadd.xlane.f32.xlu0 %v4573
    %v4619 = vpop.xlane.xlu0 %4618
    %v4620 = vadd.f32 %v4617, 1e-08
    %v4621 = vadd.f32 %v4619, 1e-08
    %v4622 = vrcp.pop %v4620
    %v4623 = vmul.f32 %v4610, %v4622
    %v4624 = vrcp.pop %v4621
    %v4625 = vmul.f32 %v4613, %v4624
    %v4626 = vmul.f32 %v4623, %v4623
    %v4627 = vmul.f32 %v4625, %v4625
    %v4628 = vsel %vm2877, %v4626, 0.0
    %4629 = vadd.xlane.f32.xlu0 %v4628
    %v4630 = vpop.xlane.xlu0 %4629
    %v4631 = vsel %vm2877, %v4627, 0.0
    %4632 = vadd.xlane.f32.xlu0 %v4631
    %v4633 = vpop.xlane.xlu0 %4632
    %v4634 = vadd.f32 %v4623, %v4623
    %v4635 = vadd.f32 %v4625, %v4625
    %v4636 = vpack.c.bf16 %v4635, %v4634
    %v4638 = vsel %vm2877, %v4636, 0
    %4640 = vmatprep.subr.bf16.mxu0 0
    %4641 = vmatpush1.bf16.msra.mxu0 0
    %4642 = vmatprep.subr.bf16.mxu0 0
    %4643 = vmatpush1.bf16.msra.mxu0 0
    %4644 = vmatprep.subr.bf16.mxu0 0
    %4645 = vmatpush1.bf16.msra.mxu0 0
    %4646 = vmatprep.subr.bf16.mxu0 0
    %4647 = vmatpush1.bf16.msra.mxu0 0
    %4648 = vmatprep.subr.bf16.mxu0 0
    %4649 = vmatpush1.bf16.msra.mxu0 0
    %4650 = vmatprep.subr.bf16.mxu0 0
    %4651 = vmatpush1.bf16.msra.mxu0 0
    %4652 = vmatprep.subr.bf16.mxu0 0
    %4653 = vmatpush1.bf16.msra.mxu0 %v4327
    %4654 = vmatprep.subr.bf16.mxu0 0
    %4655 = vmatpush1.bf16.msra.mxu0 %v4326
    %4656 = vmatprep.subr.bf16.mxu0 0
    %4657 = vmatpush2.bf16.msra.mxu0 0
    %4658 = vmatprep.subr.bf16.mxu0 0
    %4659 = vmatpush2.bf16.msra.mxu0 0
    %4660 = vmatprep.subr.bf16.mxu0 0
    %4661 = vmatpush2.bf16.msra.mxu0 0
    %4662 = vmatprep.subr.bf16.mxu0 0
    %4663 = vmatpush2.bf16.msra.mxu0 0
    %4664 = vmatprep.subr.bf16.mxu0 0
    %4665 = vmatpush2.bf16.msra.mxu0 0
    %4666 = vmatprep.subr.bf16.mxu0 0
    %4667 = vmatpush2.bf16.msra.mxu0 0
    %4668 = vmatprep.subr.bf16.mxu0 0
    %4669 = vmatpush2.bf16.msra.mxu0 0
    %4670 = vmatprep.subr.bf16.mxu0 0
    %4671 = vmatpush2.bf16.msra.mxu0 0
    %4672 = vmatprep.mubr.bf16.mxu0 0
    %4673 = vmatmul.mubr.bf16.gmra.mxu0 %v4638
    %v4674 = vpop.f32.mrf.mxu0
    %v4675 = vadd.f32 0.0, %v4674
    %v4676 = vpop.f32.mrf.mxu0
    %v4677 = vpop.f32.mrf.mxu0
    %v4678 = vadd.f32 0.0, %v4677
    %v4679 = vpop.f32.mrf.mxu0
    %4680 = vdwg.mxu0
    %v4681 = vsub.f32 %v4675, %v4630
    %v4682 = vsub.f32 %v4678, %v4633
    %v4683 = vmax.f32 %v4681, %v4682
    %v4684 = vrot.slane %v4683, 4
    %v4685 = vmax.f32 %v4683, %v4684
    %v4686 = vrot.slane %v4685, 2
    %v4687 = vmax.f32 %v4685, %v4686
    %v4688 = vrot.slane %v4687, 1
    %v4689 = vmax.f32 %v4687, %v4688
    %v4690 = vsub.f32 %v4681, %v4689
    %v4691 = vsub.f32 %v4682, %v4689
    %v4692 = vmul.f32 %v4690, 1.442695
    %v4693 = vpow.pop %v4692
    %v4694 = vmul.f32 %v4691, 1.442695
    %v4695 = vpow.pop %v4694
    %v4696 = vadd.f32 %v4693, %v4695
    %v4697 = vrot.slane %v4696, 4
    %v4698 = vadd.f32 %v4696, %v4697
    %v4699 = vrot.slane %v4698, 2
    %v4700 = vadd.f32 %v4698, %v4699
    %v4701 = vrot.slane %v4700, 1
    %v4702 = vadd.f32 %v4700, %v4701
    %v4703 = vadd.f32 %v4702, 1e-16
    %v4704 = vrcp.pop %v4703
    %v4705 = vmul.f32 %v4693, %v4704
    %v4706 = vmul.f32 %v4695, %v4704
    %v4707 = vpack.c.bf16 %v4706, %v4705
    %4708 = vmatprep.subr.bf16.mxu0 0
    %4709 = vmatpush1.bf16.xpose.msra.mxu0 0
    %4710 = vmatprep.subr.bf16.mxu0 0
    %4711 = vmatpush1.bf16.xpose.msra.mxu0 0
    %4712 = vmatprep.subr.bf16.mxu0 0
    %4713 = vmatpush1.bf16.xpose.msra.mxu0 0
    %4714 = vmatprep.subr.bf16.mxu0 0
    %4715 = vmatpush1.bf16.xpose.msra.mxu0 0
    %4716 = vmatprep.subr.bf16.mxu0 0
    %4717 = vmatpush1.bf16.xpose.msra.mxu0 0
    %4718 = vmatprep.subr.bf16.mxu0 0
    %4719 = vmatpush1.bf16.xpose.msra.mxu0 0
    %4720 = vmatprep.subr.bf16.mxu0 0
    %4721 = vmatpush1.bf16.xpose.msra.mxu0 %v4327
    %4722 = vmatprep.subr.bf16.mxu0 0
    %4723 = vmatpush1.bf16.xpose.msra.mxu0 %v4326
    %4724 = vmatprep.subr.bf16.mxu0 0
    %4725 = vmatpush2.bf16.xpose.msra.mxu0 0
    %4726 = vmatprep.subr.bf16.mxu0 0
    %4727 = vmatpush2.bf16.xpose.msra.mxu0 0
    %4728 = vmatprep.subr.bf16.mxu0 0
    %4729 = vmatpush2.bf16.xpose.msra.mxu0 0
    %4730 = vmatprep.subr.bf16.mxu0 0
    %4731 = vmatpush2.bf16.xpose.msra.mxu0 0
    %4732 = vmatprep.subr.bf16.mxu0 0
    %4733 = vmatpush2.bf16.xpose.msra.mxu0 0
    %4734 = vmatprep.subr.bf16.mxu0 0
    %4735 = vmatpush2.bf16.xpose.msra.mxu0 0
    %4736 = vmatprep.subr.bf16.mxu0 0
    %4737 = vmatpush2.bf16.xpose.msra.mxu0 0
    %4738 = vmatprep.subr.bf16.mxu0 0
    %4739 = vmatpush2.bf16.xpose.msra.mxu0 0
    %4740 = vmatprep.mubr.bf16.mxu0 0
    %4741 = vmatmul.mubr.bf16.gmra.mxu0 %v4707
    %v4742 = vpop.f32.mrf.mxu0
    %v4743 = vadd.f32 0.0, %v4742
    %v4744 = vpop.f32.mrf.mxu0
    %v4745 = vpop.f32.mrf.mxu0
    %v4746 = vadd.f32 0.0, %v4745
    %v4747 = vpop.f32.mrf.mxu0
    %4748 = vdwg.mxu0
    %4749 = vadd.xlane.f32.xlu0 %v4705
    %v4750 = vpop.xlane.xlu0 %4749
    %4751 = vadd.xlane.f32.xlu0 %v4706
    %v4752 = vpop.xlane.xlu0 %4751
    %v4753 = vadd.f32 %v4750, 1e-08
    %v4754 = vadd.f32 %v4752, 1e-08
    %v4755 = vrcp.pop %v4753
    %v4756 = vmul.f32 %v4743, %v4755
    %v4757 = vrcp.pop %v4754
    %v4758 = vmul.f32 %v4746, %v4757
    %v4759 = vmul.f32 %v4756, %v4756
    %v4760 = vmul.f32 %v4758, %v4758
    %v4761 = vsel %vm2877, %v4759, 0.0
    %4762 = vadd.xlane.f32.xlu0 %v4761
    %v4763 = vpop.xlane.xlu0 %4762
    %v4764 = vsel %vm2877, %v4760, 0.0
    %4765 = vadd.xlane.f32.xlu0 %v4764
    %v4766 = vpop.xlane.xlu0 %4765
    %v4767 = vadd.f32 %v4756, %v4756
    %v4768 = vadd.f32 %v4758, %v4758
    %v4769 = vpack.c.bf16 %v4768, %v4767
    %v4771 = vsel %vm2877, %v4769, 0
    %4773 = vmatprep.subr.bf16.mxu0 0
    %4774 = vmatpush1.bf16.msra.mxu0 0
    %4775 = vmatprep.subr.bf16.mxu0 0
    %4776 = vmatpush1.bf16.msra.mxu0 0
    %4777 = vmatprep.subr.bf16.mxu0 0
    %4778 = vmatpush1.bf16.msra.mxu0 0
    %4779 = vmatprep.subr.bf16.mxu0 0
    %4780 = vmatpush1.bf16.msra.mxu0 0
    %4781 = vmatprep.subr.bf16.mxu0 0
    %4782 = vmatpush1.bf16.msra.mxu0 0
    %4783 = vmatprep.subr.bf16.mxu0 0
    %4784 = vmatpush1.bf16.msra.mxu0 0
    %4785 = vmatprep.subr.bf16.mxu0 0
    %4786 = vmatpush1.bf16.msra.mxu0 %v4327
    %4787 = vmatprep.subr.bf16.mxu0 0
    %4788 = vmatpush1.bf16.msra.mxu0 %v4326
    %4789 = vmatprep.subr.bf16.mxu0 0
    %4790 = vmatpush2.bf16.msra.mxu0 0
    %4791 = vmatprep.subr.bf16.mxu0 0
    %4792 = vmatpush2.bf16.msra.mxu0 0
    %4793 = vmatprep.subr.bf16.mxu0 0
    %4794 = vmatpush2.bf16.msra.mxu0 0
    %4795 = vmatprep.subr.bf16.mxu0 0
    %4796 = vmatpush2.bf16.msra.mxu0 0
    %4797 = vmatprep.subr.bf16.mxu0 0
    %4798 = vmatpush2.bf16.msra.mxu0 0
    %4799 = vmatprep.subr.bf16.mxu0 0
    %4800 = vmatpush2.bf16.msra.mxu0 0
    %4801 = vmatprep.subr.bf16.mxu0 0
    %4802 = vmatpush2.bf16.msra.mxu0 0
    %4803 = vmatprep.subr.bf16.mxu0 0
    %4804 = vmatpush2.bf16.msra.mxu0 0
    %4805 = vmatprep.mubr.bf16.mxu0 0
    %4806 = vmatmul.mubr.bf16.gmra.mxu0 %v4771
    %v4807 = vpop.f32.mrf.mxu0
    %v4808 = vadd.f32 0.0, %v4807
    %v4809 = vpop.f32.mrf.mxu0
    %v4810 = vpop.f32.mrf.mxu0
    %v4811 = vadd.f32 0.0, %v4810
    %v4812 = vpop.f32.mrf.mxu0
    %4813 = vdwg.mxu0
    %v4814 = vsub.f32 %v4808, %v4763
    %v4815 = vsub.f32 %v4811, %v4766
    %v4816 = vmax.f32 %v4814, %v4815
    %v4817 = vrot.slane %v4816, 4
    %v4818 = vmax.f32 %v4816, %v4817
    %v4819 = vrot.slane %v4818, 2
    %v4820 = vmax.f32 %v4818, %v4819
    %v4821 = vrot.slane %v4820, 1
    %v4822 = vmax.f32 %v4820, %v4821
    %v4823 = vsub.f32 %v4814, %v4822
    %v4824 = vsub.f32 %v4815, %v4822
    %v4825 = vmul.f32 %v4823, 1.442695
    %v4826 = vpow.pop %v4825
    %v4827 = vmul.f32 %v4824, 1.442695
    %v4828 = vpow.pop %v4827
    %v4829 = vadd.f32 %v4826, %v4828
    %v4830 = vrot.slane %v4829, 4
    %v4831 = vadd.f32 %v4829, %v4830
    %v4832 = vrot.slane %v4831, 2
    %v4833 = vadd.f32 %v4831, %v4832
    %v4834 = vrot.slane %v4833, 1
    %v4835 = vadd.f32 %v4833, %v4834
    %v4836 = vadd.f32 %v4835, 1e-16
    %v4837 = vrcp.pop %v4836
    %v4838 = vmul.f32 %v4826, %v4837
    %v4839 = vmul.f32 %v4828, %v4837
    %v4840 = vpack.c.bf16 %v4839, %v4838
    %4841 = vmatprep.subr.bf16.mxu0 0
    %4842 = vmatpush1.bf16.xpose.msra.mxu0 0
    %4843 = vmatprep.subr.bf16.mxu0 0
    %4844 = vmatpush1.bf16.xpose.msra.mxu0 0
    %4845 = vmatprep.subr.bf16.mxu0 0
    %4846 = vmatpush1.bf16.xpose.msra.mxu0 0
    %4847 = vmatprep.subr.bf16.mxu0 0
    %4848 = vmatpush1.bf16.xpose.msra.mxu0 0
    %4849 = vmatprep.subr.bf16.mxu0 0
    %4850 = vmatpush1.bf16.xpose.msra.mxu0 0
    %4851 = vmatprep.subr.bf16.mxu0 0
    %4852 = vmatpush1.bf16.xpose.msra.mxu0 0
    %4853 = vmatprep.subr.bf16.mxu0 0
    %4854 = vmatpush1.bf16.xpose.msra.mxu0 %v4327
    %4855 = vmatprep.subr.bf16.mxu0 0
    %4856 = vmatpush1.bf16.xpose.msra.mxu0 %v4326
    %4857 = vmatprep.subr.bf16.mxu0 0
    %4858 = vmatpush2.bf16.xpose.msra.mxu0 0
    %4859 = vmatprep.subr.bf16.mxu0 0
    %4860 = vmatpush2.bf16.xpose.msra.mxu0 0
    %4861 = vmatprep.subr.bf16.mxu0 0
    %4862 = vmatpush2.bf16.xpose.msra.mxu0 0
    %4863 = vmatprep.subr.bf16.mxu0 0
    %4864 = vmatpush2.bf16.xpose.msra.mxu0 0
    %4865 = vmatprep.subr.bf16.mxu0 0
    %4866 = vmatpush2.bf16.xpose.msra.mxu0 0
    %4867 = vmatprep.subr.bf16.mxu0 0
    %4868 = vmatpush2.bf16.xpose.msra.mxu0 0
    %4869 = vmatprep.subr.bf16.mxu0 0
    %4870 = vmatpush2.bf16.xpose.msra.mxu0 0
    %4871 = vmatprep.subr.bf16.mxu0 0
    %4872 = vmatpush2.bf16.xpose.msra.mxu0 0
    %4873 = vmatprep.mubr.bf16.mxu0 0
    %4874 = vmatmul.mubr.bf16.gmra.mxu0 %v4840
    %v4875 = vpop.f32.mrf.mxu0
    %v4876 = vadd.f32 0.0, %v4875
    %v4877 = vpop.f32.mrf.mxu0
    %v4878 = vpop.f32.mrf.mxu0
    %v4879 = vadd.f32 0.0, %v4878
    %v4880 = vpop.f32.mrf.mxu0
    %4881 = vdwg.mxu0
    %4882 = vadd.xlane.f32.xlu0 %v4838
    %v4883 = vpop.xlane.xlu0 %4882
    %4884 = vadd.xlane.f32.xlu0 %v4839
    %v4885 = vpop.xlane.xlu0 %4884
    %v4886 = vadd.f32 %v4883, 1e-08
    %v4887 = vadd.f32 %v4885, 1e-08
    %v4888 = vrcp.pop %v4886
    %v4889 = vmul.f32 %v4876, %v4888
    %v4890 = vrcp.pop %v4887
    %v4891 = vmul.f32 %v4879, %v4890
    %v4892 = vmul.f32 %v4889, %v4889
    %v4893 = vmul.f32 %v4891, %v4891
    %v4894 = vsel %vm2877, %v4892, 0.0
    %4895 = vadd.xlane.f32.xlu0 %v4894
    %v4896 = vpop.xlane.xlu0 %4895
    %v4897 = vsel %vm2877, %v4893, 0.0
    %4898 = vadd.xlane.f32.xlu0 %v4897
    %v4899 = vpop.xlane.xlu0 %4898
    %v4900 = vadd.f32 %v4889, %v4889
    %v4901 = vadd.f32 %v4891, %v4891
    %v4902 = vpack.c.bf16 %v4901, %v4900
    %v4904 = vsel %vm2877, %v4902, 0
    %4906 = vmatprep.subr.bf16.mxu0 0
    %4907 = vmatpush1.bf16.msra.mxu0 0
    %4908 = vmatprep.subr.bf16.mxu0 0
    %4909 = vmatpush1.bf16.msra.mxu0 0
    %4910 = vmatprep.subr.bf16.mxu0 0
    %4911 = vmatpush1.bf16.msra.mxu0 0
    %4912 = vmatprep.subr.bf16.mxu0 0
    %4913 = vmatpush1.bf16.msra.mxu0 0
    %4914 = vmatprep.subr.bf16.mxu0 0
    %4915 = vmatpush1.bf16.msra.mxu0 0
    %4916 = vmatprep.subr.bf16.mxu0 0
    %4917 = vmatpush1.bf16.msra.mxu0 0
    %4918 = vmatprep.subr.bf16.mxu0 0
    %4919 = vmatpush1.bf16.msra.mxu0 %v4327
    %4920 = vmatprep.subr.bf16.mxu0 0
    %4921 = vmatpush1.bf16.msra.mxu0 %v4326
    %4922 = vmatprep.subr.bf16.mxu0 0
    %4923 = vmatpush2.bf16.msra.mxu0 0
    %4924 = vmatprep.subr.bf16.mxu0 0
    %4925 = vmatpush2.bf16.msra.mxu0 0
    %4926 = vmatprep.subr.bf16.mxu0 0
    %4927 = vmatpush2.bf16.msra.mxu0 0
    %4928 = vmatprep.subr.bf16.mxu0 0
    %4929 = vmatpush2.bf16.msra.mxu0 0
    %4930 = vmatprep.subr.bf16.mxu0 0
    %4931 = vmatpush2.bf16.msra.mxu0 0
    %4932 = vmatprep.subr.bf16.mxu0 0
    %4933 = vmatpush2.bf16.msra.mxu0 0
    %4934 = vmatprep.subr.bf16.mxu0 0
    %4935 = vmatpush2.bf16.msra.mxu0 0
    %4936 = vmatprep.subr.bf16.mxu0 0
    %4937 = vmatpush2.bf16.msra.mxu0 0
    %4938 = vmatprep.mubr.bf16.mxu0 0
    %4939 = vmatmul.mubr.bf16.gmra.mxu0 %v4904
    %v4940 = vpop.f32.mrf.mxu0
    %v4941 = vadd.f32 0.0, %v4940
    %v4942 = vpop.f32.mrf.mxu0
    %v4943 = vpop.f32.mrf.mxu0
    %v4944 = vadd.f32 0.0, %v4943
    %v4945 = vpop.f32.mrf.mxu0
    %4946 = vdwg.mxu0
    %v4947 = vsub.f32 %v4941, %v4896
    %v4948 = vsub.f32 %v4944, %v4899
    %v4949 = vmax.f32 %v4947, %v4948
    %v4950 = vrot.slane %v4949, 4
    %v4951 = vmax.f32 %v4949, %v4950
    %v4952 = vrot.slane %v4951, 2
    %v4953 = vmax.f32 %v4951, %v4952
    %v4954 = vrot.slane %v4953, 1
    %v4955 = vmax.f32 %v4953, %v4954
    %v4956 = vsub.f32 %v4947, %v4955
    %v4957 = vsub.f32 %v4948, %v4955
    %v4958 = vmul.f32 %v4956, 1.442695
    %v4959 = vpow.pop %v4958
    %v4960 = vmul.f32 %v4957, 1.442695
    %v4961 = vpow.pop %v4960
    %v4962 = vadd.f32 %v4959, %v4961
    %v4963 = vrot.slane %v4962, 4
    %v4964 = vadd.f32 %v4962, %v4963
    %v4965 = vrot.slane %v4964, 2
    %v4966 = vadd.f32 %v4964, %v4965
    %v4967 = vrot.slane %v4966, 1
    %v4968 = vadd.f32 %v4966, %v4967
    %v4969 = vadd.f32 %v4968, 1e-16
    %v4970 = vrcp.pop %v4969
    %v4971 = vmul.f32 %v4959, %v4970
    %v4972 = vmul.f32 %v4961, %v4970
    %v4973 = vpack.c.bf16 %v4972, %v4971
    %4974 = vmatprep.subr.bf16.mxu0 0
    %4975 = vmatpush1.bf16.xpose.msra.mxu0 0
    %4976 = vmatprep.subr.bf16.mxu0 0
    %4977 = vmatpush1.bf16.xpose.msra.mxu0 0
    %4978 = vmatprep.subr.bf16.mxu0 0
    %4979 = vmatpush1.bf16.xpose.msra.mxu0 0
    %4980 = vmatprep.subr.bf16.mxu0 0
    %4981 = vmatpush1.bf16.xpose.msra.mxu0 0
    %4982 = vmatprep.subr.bf16.mxu0 0
    %4983 = vmatpush1.bf16.xpose.msra.mxu0 0
    %4984 = vmatprep.subr.bf16.mxu0 0
    %4985 = vmatpush1.bf16.xpose.msra.mxu0 0
    %4986 = vmatprep.subr.bf16.mxu0 0
    %4987 = vmatpush1.bf16.xpose.msra.mxu0 %v4327
    %4988 = vmatprep.subr.bf16.mxu0 0
    %4989 = vmatpush1.bf16.xpose.msra.mxu0 %v4326
    %4990 = vmatprep.subr.bf16.mxu0 0
    %4991 = vmatpush2.bf16.xpose.msra.mxu0 0
    %4992 = vmatprep.subr.bf16.mxu0 0
    %4993 = vmatpush2.bf16.xpose.msra.mxu0 0
    %4994 = vmatprep.subr.bf16.mxu0 0
    %4995 = vmatpush2.bf16.xpose.msra.mxu0 0
    %4996 = vmatprep.subr.bf16.mxu0 0
    %4997 = vmatpush2.bf16.xpose.msra.mxu0 0
    %4998 = vmatprep.subr.bf16.mxu0 0
    %4999 = vmatpush2.bf16.xpose.msra.mxu0 0
    %5000 = vmatprep.subr.bf16.mxu0 0
    %5001 = vmatpush2.bf16.xpose.msra.mxu0 0
    %5002 = vmatprep.subr.bf16.mxu0 0
    %5003 = vmatpush2.bf16.xpose.msra.mxu0 0
    %5004 = vmatprep.subr.bf16.mxu0 0
    %5005 = vmatpush2.bf16.xpose.msra.mxu0 0
    %5006 = vmatprep.mubr.bf16.mxu0 0
    %5007 = vmatmul.mubr.bf16.gmra.mxu0 %v4973
    %v5008 = vpop.f32.mrf.mxu0
    %v5009 = vadd.f32 0.0, %v5008
    %v5010 = vpop.f32.mrf.mxu0
    %v5011 = vpop.f32.mrf.mxu0
    %v5012 = vadd.f32 0.0, %v5011
    %v5013 = vpop.f32.mrf.mxu0
    %5014 = vdwg.mxu0
    %5015 = vadd.xlane.f32.xlu0 %v4971
    %v5016 = vpop.xlane.xlu0 %5015
    %5017 = vadd.xlane.f32.xlu0 %v4972
    %v5018 = vpop.xlane.xlu0 %5017
    %v5019 = vadd.f32 %v5016, 1e-08
    %v5020 = vadd.f32 %v5018, 1e-08
    %v5021 = vrcp.pop %v5019
    %v5022 = vmul.f32 %v5009, %v5021
    %v5023 = vrcp.pop %v5020
    %v5024 = vmul.f32 %v5012, %v5023
    %v5025 = vmul.f32 %v5022, %v5022
    %v5026 = vmul.f32 %v5024, %v5024
    %v5027 = vsel %vm2877, %v5025, 0.0
    %5028 = vadd.xlane.f32.xlu0 %v5027
    %v5029 = vpop.xlane.xlu0 %5028
    %v5030 = vsel %vm2877, %v5026, 0.0
    %5031 = vadd.xlane.f32.xlu0 %v5030
    %v5032 = vpop.xlane.xlu0 %5031
    %v5033 = vadd.f32 %v5022, %v5022
    %v5034 = vadd.f32 %v5024, %v5024
    %v5035 = vpack.c.bf16 %v5034, %v5033
    %v5037 = vsel %vm2877, %v5035, 0
    %5039 = vmatprep.subr.bf16.mxu0 0
    %5040 = vmatpush1.bf16.msra.mxu0 0
    %5041 = vmatprep.subr.bf16.mxu0 0
    %5042 = vmatpush1.bf16.msra.mxu0 0
    %5043 = vmatprep.subr.bf16.mxu0 0
    %5044 = vmatpush1.bf16.msra.mxu0 0
    %5045 = vmatprep.subr.bf16.mxu0 0
    %5046 = vmatpush1.bf16.msra.mxu0 0
    %5047 = vmatprep.subr.bf16.mxu0 0
    %5048 = vmatpush1.bf16.msra.mxu0 0
    %5049 = vmatprep.subr.bf16.mxu0 0
    %5050 = vmatpush1.bf16.msra.mxu0 0
    %5051 = vmatprep.subr.bf16.mxu0 0
    %5052 = vmatpush1.bf16.msra.mxu0 %v4327
    %5053 = vmatprep.subr.bf16.mxu0 0
    %5054 = vmatpush1.bf16.msra.mxu0 %v4326
    %5055 = vmatprep.subr.bf16.mxu0 0
    %5056 = vmatpush2.bf16.msra.mxu0 0
    %5057 = vmatprep.subr.bf16.mxu0 0
    %5058 = vmatpush2.bf16.msra.mxu0 0
    %5059 = vmatprep.subr.bf16.mxu0 0
    %5060 = vmatpush2.bf16.msra.mxu0 0
    %5061 = vmatprep.subr.bf16.mxu0 0
    %5062 = vmatpush2.bf16.msra.mxu0 0
    %5063 = vmatprep.subr.bf16.mxu0 0
    %5064 = vmatpush2.bf16.msra.mxu0 0
    %5065 = vmatprep.subr.bf16.mxu0 0
    %5066 = vmatpush2.bf16.msra.mxu0 0
    %5067 = vmatprep.subr.bf16.mxu0 0
    %5068 = vmatpush2.bf16.msra.mxu0 0
    %5069 = vmatprep.subr.bf16.mxu0 0
    %5070 = vmatpush2.bf16.msra.mxu0 0
    %5071 = vmatprep.mubr.bf16.mxu0 0
    %5072 = vmatmul.mubr.bf16.gmra.mxu0 %v5037
    %v5073 = vpop.f32.mrf.mxu0
    %v5074 = vadd.f32 0.0, %v5073
    %v5075 = vpop.f32.mrf.mxu0
    %v5076 = vpop.f32.mrf.mxu0
    %v5077 = vadd.f32 0.0, %v5076
    %v5078 = vpop.f32.mrf.mxu0
    %5079 = vdwg.mxu0
    %v5080 = vsub.f32 %v5074, %v5029
    %v5081 = vsub.f32 %v5077, %v5032
    %v5082 = vmax.f32 %v5080, %v5081
    %v5083 = vrot.slane %v5082, 4
    %v5084 = vmax.f32 %v5082, %v5083
    %v5085 = vrot.slane %v5084, 2
    %v5086 = vmax.f32 %v5084, %v5085
    %v5087 = vrot.slane %v5086, 1
    %v5088 = vmax.f32 %v5086, %v5087
    %v5089 = vsub.f32 %v5080, %v5088
    %v5090 = vsub.f32 %v5081, %v5088
    %v5091 = vmul.f32 %v5089, 1.442695
    %v5092 = vpow.pop %v5091
    %v5093 = vmul.f32 %v5090, 1.442695
    %v5094 = vpow.pop %v5093
    %v5095 = vadd.f32 %v5092, %v5094
    %v5096 = vrot.slane %v5095, 4
    %v5097 = vadd.f32 %v5095, %v5096
    %v5098 = vrot.slane %v5097, 2
    %v5099 = vadd.f32 %v5097, %v5098
    %v5100 = vrot.slane %v5099, 1
    %v5101 = vadd.f32 %v5099, %v5100
    %v5102 = vadd.f32 %v5101, 1e-16
    %v5103 = vrcp.pop %v5102
    %v5104 = vmul.f32 %v5092, %v5103
    %v5105 = vmul.f32 %v5094, %v5103
    %v5106 = vpack.c.bf16 %v5105, %v5104
    %5107 = vmatprep.subr.bf16.mxu0 0
    %5108 = vmatpush1.bf16.xpose.msra.mxu0 0
    %5109 = vmatprep.subr.bf16.mxu0 0
    %5110 = vmatpush1.bf16.xpose.msra.mxu0 0
    %5111 = vmatprep.subr.bf16.mxu0 0
    %5112 = vmatpush1.bf16.xpose.msra.mxu0 0
    %5113 = vmatprep.subr.bf16.mxu0 0
    %5114 = vmatpush1.bf16.xpose.msra.mxu0 0
    %5115 = vmatprep.subr.bf16.mxu0 0
    %5116 = vmatpush1.bf16.xpose.msra.mxu0 0
    %5117 = vmatprep.subr.bf16.mxu0 0
    %5118 = vmatpush1.bf16.xpose.msra.mxu0 0
    %5119 = vmatprep.subr.bf16.mxu0 0
    %5120 = vmatpush1.bf16.xpose.msra.mxu0 %v4327
    %5121 = vmatprep.subr.bf16.mxu0 0
    %5122 = vmatpush1.bf16.xpose.msra.mxu0 %v4326
    %5123 = vmatprep.subr.bf16.mxu0 0
    %5124 = vmatpush2.bf16.xpose.msra.mxu0 0
    %5125 = vmatprep.subr.bf16.mxu0 0
    %5126 = vmatpush2.bf16.xpose.msra.mxu0 0
    %5127 = vmatprep.subr.bf16.mxu0 0
    %5128 = vmatpush2.bf16.xpose.msra.mxu0 0
    %5129 = vmatprep.subr.bf16.mxu0 0
    %5130 = vmatpush2.bf16.xpose.msra.mxu0 0
    %5131 = vmatprep.subr.bf16.mxu0 0
    %5132 = vmatpush2.bf16.xpose.msra.mxu0 0
    %5133 = vmatprep.subr.bf16.mxu0 0
    %5134 = vmatpush2.bf16.xpose.msra.mxu0 0
    %5135 = vmatprep.subr.bf16.mxu0 0
    %5136 = vmatpush2.bf16.xpose.msra.mxu0 0
    %5137 = vmatprep.subr.bf16.mxu0 0
    %5138 = vmatpush2.bf16.xpose.msra.mxu0 0
    %5139 = vmatprep.mubr.bf16.mxu0 0
    %5140 = vmatmul.mubr.bf16.gmra.mxu0 %v5106
    %v5141 = vpop.f32.mrf.mxu0
    %v5142 = vadd.f32 0.0, %v5141
    %v5143 = vpop.f32.mrf.mxu0
    %v5144 = vpop.f32.mrf.mxu0
    %v5145 = vadd.f32 0.0, %v5144
    %v5146 = vpop.f32.mrf.mxu0
    %5147 = vdwg.mxu0
    %5148 = vadd.xlane.f32.xlu0 %v5104
    %v5149 = vpop.xlane.xlu0 %5148
    %5150 = vadd.xlane.f32.xlu0 %v5105
    %v5151 = vpop.xlane.xlu0 %5150
    %v5152 = vadd.f32 %v5149, 1e-08
    %v5153 = vadd.f32 %v5151, 1e-08
    %v5154 = vrcp.pop %v5152
    %v5155 = vmul.f32 %v5142, %v5154
    %v5156 = vrcp.pop %v5153
    %v5157 = vmul.f32 %v5145, %v5156
    %v5158 = vmul.f32 %v5155, %v5155
    %v5159 = vmul.f32 %v5157, %v5157
    %v5160 = vsel %vm2877, %v5158, 0.0
    %5161 = vadd.xlane.f32.xlu0 %v5160
    %v5162 = vpop.xlane.xlu0 %5161
    %v5163 = vsel %vm2877, %v5159, 0.0
    %5164 = vadd.xlane.f32.xlu0 %v5163
    %v5165 = vpop.xlane.xlu0 %5164
    %v5166 = vadd.f32 %v5155, %v5155
    %v5167 = vadd.f32 %v5157, %v5157
    %v5168 = vpack.c.bf16 %v5167, %v5166
    %v5170 = vsel %vm2877, %v5168, 0
    %5172 = vmatprep.subr.bf16.mxu0 0
    %5173 = vmatpush1.bf16.msra.mxu0 0
    %5174 = vmatprep.subr.bf16.mxu0 0
    %5175 = vmatpush1.bf16.msra.mxu0 0
    %5176 = vmatprep.subr.bf16.mxu0 0
    %5177 = vmatpush1.bf16.msra.mxu0 0
    %5178 = vmatprep.subr.bf16.mxu0 0
    %5179 = vmatpush1.bf16.msra.mxu0 0
    %5180 = vmatprep.subr.bf16.mxu0 0
    %5181 = vmatpush1.bf16.msra.mxu0 0
    %5182 = vmatprep.subr.bf16.mxu0 0
    %5183 = vmatpush1.bf16.msra.mxu0 0
    %5184 = vmatprep.subr.bf16.mxu0 0
    %5185 = vmatpush1.bf16.msra.mxu0 %v4327
    %5186 = vmatprep.subr.bf16.mxu0 0
    %5187 = vmatpush1.bf16.msra.mxu0 %v4326
    %5188 = vmatprep.subr.bf16.mxu0 0
    %5189 = vmatpush2.bf16.msra.mxu0 0
    %5190 = vmatprep.subr.bf16.mxu0 0
    %5191 = vmatpush2.bf16.msra.mxu0 0
    %5192 = vmatprep.subr.bf16.mxu0 0
    %5193 = vmatpush2.bf16.msra.mxu0 0
    %5194 = vmatprep.subr.bf16.mxu0 0
    %5195 = vmatpush2.bf16.msra.mxu0 0
    %5196 = vmatprep.subr.bf16.mxu0 0
    %5197 = vmatpush2.bf16.msra.mxu0 0
    %5198 = vmatprep.subr.bf16.mxu0 0
    %5199 = vmatpush2.bf16.msra.mxu0 0
    %5200 = vmatprep.subr.bf16.mxu0 0
    %5201 = vmatpush2.bf16.msra.mxu0 0
    %5202 = vmatprep.subr.bf16.mxu0 0
    %5203 = vmatpush2.bf16.msra.mxu0 0
    %5204 = vmatprep.mubr.bf16.mxu0 0
    %5205 = vmatmul.mubr.bf16.gmra.mxu0 %v5170
    %v5206 = vpop.f32.mrf.mxu0
    %v5207 = vadd.f32 0.0, %v5206
    %v5208 = vpop.f32.mrf.mxu0
    %v5209 = vpop.f32.mrf.mxu0
    %v5210 = vadd.f32 0.0, %v5209
    %v5211 = vpop.f32.mrf.mxu0
    %5212 = vdwg.mxu0
    %v5213 = vsub.f32 %v5207, %v5162
    %v5214 = vsub.f32 %v5210, %v5165
    %v5215 = vmax.f32 %v5213, %v5214
    %v5216 = vrot.slane %v5215, 4
    %v5217 = vmax.f32 %v5215, %v5216
    %v5218 = vrot.slane %v5217, 2
    %v5219 = vmax.f32 %v5217, %v5218
    %v5220 = vrot.slane %v5219, 1
    %v5221 = vmax.f32 %v5219, %v5220
    %v5222 = vsub.f32 %v5213, %v5221
    %v5223 = vsub.f32 %v5214, %v5221
    %v5224 = vmul.f32 %v5222, 1.442695
    %v5225 = vpow.pop %v5224
    %v5226 = vmul.f32 %v5223, 1.442695
    %v5227 = vpow.pop %v5226
    %v5228 = vadd.f32 %v5225, %v5227
    %v5229 = vrot.slane %v5228, 4
    %v5230 = vadd.f32 %v5228, %v5229
    %v5231 = vrot.slane %v5230, 2
    %v5232 = vadd.f32 %v5230, %v5231
    %v5233 = vrot.slane %v5232, 1
    %v5234 = vadd.f32 %v5232, %v5233
    %v5235 = vadd.f32 %v5234, 1e-16
    %v5236 = vrcp.pop %v5235
    %v5237 = vmul.f32 %v5225, %v5236
    %v5238 = vmul.f32 %v5227, %v5236
    %v5239 = vpack.c.bf16 %v5238, %v5237
    %5240 = vmatprep.subr.bf16.mxu0 0
    %5241 = vmatpush1.bf16.xpose.msra.mxu0 0
    %5242 = vmatprep.subr.bf16.mxu0 0
    %5243 = vmatpush1.bf16.xpose.msra.mxu0 0
    %5244 = vmatprep.subr.bf16.mxu0 0
    %5245 = vmatpush1.bf16.xpose.msra.mxu0 0
    %5246 = vmatprep.subr.bf16.mxu0 0
    %5247 = vmatpush1.bf16.xpose.msra.mxu0 0
    %5248 = vmatprep.subr.bf16.mxu0 0
    %5249 = vmatpush1.bf16.xpose.msra.mxu0 0
    %5250 = vmatprep.subr.bf16.mxu0 0
    %5251 = vmatpush1.bf16.xpose.msra.mxu0 0
    %5252 = vmatprep.subr.bf16.mxu0 0
    %5253 = vmatpush1.bf16.xpose.msra.mxu0 %v4327
    %5254 = vmatprep.subr.bf16.mxu0 0
    %5255 = vmatpush1.bf16.xpose.msra.mxu0 %v4326
    %5256 = vmatprep.subr.bf16.mxu0 0
    %5257 = vmatpush2.bf16.xpose.msra.mxu0 0
    %5258 = vmatprep.subr.bf16.mxu0 0
    %5259 = vmatpush2.bf16.xpose.msra.mxu0 0
    %5260 = vmatprep.subr.bf16.mxu0 0
    %5261 = vmatpush2.bf16.xpose.msra.mxu0 0
    %5262 = vmatprep.subr.bf16.mxu0 0
    %5263 = vmatpush2.bf16.xpose.msra.mxu0 0
    %5264 = vmatprep.subr.bf16.mxu0 0
    %5265 = vmatpush2.bf16.xpose.msra.mxu0 0
    %5266 = vmatprep.subr.bf16.mxu0 0
    %5267 = vmatpush2.bf16.xpose.msra.mxu0 0
    %5268 = vmatprep.subr.bf16.mxu0 0
    %5269 = vmatpush2.bf16.xpose.msra.mxu0 0
    %5270 = vmatprep.subr.bf16.mxu0 0
    %5271 = vmatpush2.bf16.xpose.msra.mxu0 0
    %5272 = vmatprep.mubr.bf16.mxu0 0
    %5273 = vmatmul.mubr.bf16.gmra.mxu0 %v5239
    %v5274 = vpop.f32.mrf.mxu0
    %v5275 = vadd.f32 0.0, %v5274
    %v5276 = vpop.f32.mrf.mxu0
    %v5277 = vpop.f32.mrf.mxu0
    %v5278 = vadd.f32 0.0, %v5277
    %v5279 = vpop.f32.mrf.mxu0
    %5280 = vdwg.mxu0
    %5281 = vadd.xlane.f32.xlu0 %v5237
    %v5282 = vpop.xlane.xlu0 %5281
    %5283 = vadd.xlane.f32.xlu0 %v5238
    %v5284 = vpop.xlane.xlu0 %5283
    %v5285 = vadd.f32 %v5282, 1e-08
    %v5286 = vadd.f32 %v5284, 1e-08
    %v5287 = vrcp.pop %v5285
    %v5288 = vmul.f32 %v5275, %v5287
    %v5289 = vrcp.pop %v5286
    %v5290 = vmul.f32 %v5278, %v5289
    %v5291 = vmul.f32 %v5288, %v5288
    %v5292 = vmul.f32 %v5290, %v5290
    %v5293 = vsel %vm2877, %v5291, 0.0
    %5294 = vadd.xlane.f32.xlu0 %v5293
    %v5295 = vpop.xlane.xlu0 %5294
    %v5296 = vsel %vm2877, %v5292, 0.0
    %5297 = vadd.xlane.f32.xlu0 %v5296
    %v5298 = vpop.xlane.xlu0 %5297
    %v5299 = vadd.f32 %v5288, %v5288
    %v5300 = vadd.f32 %v5290, %v5290
    %v5301 = vpack.c.bf16 %v5300, %v5299
    %v5303 = vsel %vm2877, %v5301, 0
    %5305 = vmatprep.subr.bf16.mxu0 0
    %5306 = vmatpush1.bf16.msra.mxu0 0
    %5307 = vmatprep.subr.bf16.mxu0 0
    %5308 = vmatpush1.bf16.msra.mxu0 0
    %5309 = vmatprep.subr.bf16.mxu0 0
    %5310 = vmatpush1.bf16.msra.mxu0 0
    %5311 = vmatprep.subr.bf16.mxu0 0
    %5312 = vmatpush1.bf16.msra.mxu0 0
    %5313 = vmatprep.subr.bf16.mxu0 0
    %5314 = vmatpush1.bf16.msra.mxu0 0
    %5315 = vmatprep.subr.bf16.mxu0 0
    %5316 = vmatpush1.bf16.msra.mxu0 0
    %5317 = vmatprep.subr.bf16.mxu0 0
    %5318 = vmatpush1.bf16.msra.mxu0 %v4327
    %5319 = vmatprep.subr.bf16.mxu0 0
    %5320 = vmatpush1.bf16.msra.mxu0 %v4326
    %5321 = vmatprep.subr.bf16.mxu0 0
    %5322 = vmatpush2.bf16.msra.mxu0 0
    %5323 = vmatprep.subr.bf16.mxu0 0
    %5324 = vmatpush2.bf16.msra.mxu0 0
    %5325 = vmatprep.subr.bf16.mxu0 0
    %5326 = vmatpush2.bf16.msra.mxu0 0
    %5327 = vmatprep.subr.bf16.mxu0 0
    %5328 = vmatpush2.bf16.msra.mxu0 0
    %5329 = vmatprep.subr.bf16.mxu0 0
    %5330 = vmatpush2.bf16.msra.mxu0 0
    %5331 = vmatprep.subr.bf16.mxu0 0
    %5332 = vmatpush2.bf16.msra.mxu0 0
    %5333 = vmatprep.subr.bf16.mxu0 0
    %5334 = vmatpush2.bf16.msra.mxu0 0
    %5335 = vmatprep.subr.bf16.mxu0 0
    %5336 = vmatpush2.bf16.msra.mxu0 0
    %5337 = vmatprep.mubr.bf16.mxu0 0
    %5338 = vmatmul.mubr.bf16.gmra.mxu0 %v5303
    %v5339 = vpop.f32.mrf.mxu0
    %v5340 = vadd.f32 0.0, %v5339
    %v5341 = vpop.f32.mrf.mxu0
    %v5342 = vpop.f32.mrf.mxu0
    %v5343 = vadd.f32 0.0, %v5342
    %v5344 = vpop.f32.mrf.mxu0
    %5345 = vdwg.mxu0
    %v5346 = vsub.f32 %v5340, %v5295
    %v5347 = vsub.f32 %v5343, %v5298
    %v5348 = vmax.f32 %v5346, %v5347
    %v5349 = vrot.slane %v5348, 4
    %v5350 = vmax.f32 %v5348, %v5349
    %v5351 = vrot.slane %v5350, 2
    %v5352 = vmax.f32 %v5350, %v5351
    %v5353 = vrot.slane %v5352, 1
    %v5354 = vmax.f32 %v5352, %v5353
    %v5355 = vsub.f32 %v5346, %v5354
    %v5356 = vsub.f32 %v5347, %v5354
    %v5357 = vmul.f32 %v5355, 1.442695
    %v5358 = vpow.pop %v5357
    %v5359 = vmul.f32 %v5356, 1.442695
    %v5360 = vpow.pop %v5359
    %v5361 = vadd.f32 %v5358, %v5360
    %v5362 = vrot.slane %v5361, 4
    %v5363 = vadd.f32 %v5361, %v5362
    %v5364 = vrot.slane %v5363, 2
    %v5365 = vadd.f32 %v5363, %v5364
    %v5366 = vrot.slane %v5365, 1
    %v5367 = vadd.f32 %v5365, %v5366
    %v5368 = vadd.f32 %v5367, 1e-16
    %v5369 = vrcp.pop %v5368
    %v5370 = vmul.f32 %v5358, %v5369
    %v5371 = vmul.f32 %v5360, %v5369
    %v5372 = vpack.c.bf16 %v5371, %v5370
    %5373 = vmatprep.subr.bf16.mxu0 0
    %5374 = vmatpush1.bf16.xpose.msra.mxu0 0
    %5375 = vmatprep.subr.bf16.mxu0 0
    %5376 = vmatpush1.bf16.xpose.msra.mxu0 0
    %5377 = vmatprep.subr.bf16.mxu0 0
    %5378 = vmatpush1.bf16.xpose.msra.mxu0 0
    %5379 = vmatprep.subr.bf16.mxu0 0
    %5380 = vmatpush1.bf16.xpose.msra.mxu0 0
    %5381 = vmatprep.subr.bf16.mxu0 0
    %5382 = vmatpush1.bf16.xpose.msra.mxu0 0
    %5383 = vmatprep.subr.bf16.mxu0 0
    %5384 = vmatpush1.bf16.xpose.msra.mxu0 0
    %5385 = vmatprep.subr.bf16.mxu0 0
    %5386 = vmatpush1.bf16.xpose.msra.mxu0 %v4327
    %5387 = vmatprep.subr.bf16.mxu0 0
    %5388 = vmatpush1.bf16.xpose.msra.mxu0 %v4326
    %5389 = vmatprep.subr.bf16.mxu0 0
    %5390 = vmatpush2.bf16.xpose.msra.mxu0 0
    %5391 = vmatprep.subr.bf16.mxu0 0
    %5392 = vmatpush2.bf16.xpose.msra.mxu0 0
    %5393 = vmatprep.subr.bf16.mxu0 0
    %5394 = vmatpush2.bf16.xpose.msra.mxu0 0
    %5395 = vmatprep.subr.bf16.mxu0 0
    %5396 = vmatpush2.bf16.xpose.msra.mxu0 0
    %5397 = vmatprep.subr.bf16.mxu0 0
    %5398 = vmatpush2.bf16.xpose.msra.mxu0 0
    %5399 = vmatprep.subr.bf16.mxu0 0
    %5400 = vmatpush2.bf16.xpose.msra.mxu0 0
    %5401 = vmatprep.subr.bf16.mxu0 0
    %5402 = vmatpush2.bf16.xpose.msra.mxu0 0
    %5403 = vmatprep.subr.bf16.mxu0 0
    %5404 = vmatpush2.bf16.xpose.msra.mxu0 0
    %5405 = vmatprep.mubr.bf16.mxu0 0
    %5406 = vmatmul.mubr.bf16.gmra.mxu0 %v5372
    %v5407 = vpop.f32.mrf.mxu0
    %v5408 = vadd.f32 0.0, %v5407
    %v5409 = vpop.f32.mrf.mxu0
    %v5410 = vpop.f32.mrf.mxu0
    %v5411 = vadd.f32 0.0, %v5410
    %v5412 = vpop.f32.mrf.mxu0
    %5413 = vdwg.mxu0
    %5414 = vadd.xlane.f32.xlu0 %v5370
    %v5415 = vpop.xlane.xlu0 %5414
    %5416 = vadd.xlane.f32.xlu0 %v5371
    %v5417 = vpop.xlane.xlu0 %5416
    %v5418 = vadd.f32 %v5415, 1e-08
    %v5419 = vadd.f32 %v5417, 1e-08
    %v5420 = vrcp.pop %v5418
    %v5421 = vmul.f32 %v5408, %v5420
    %v5422 = vrcp.pop %v5419
    %v5423 = vmul.f32 %v5411, %v5422
    %v5424 = vmul.f32 %v5421, %v5421
    %v5425 = vmul.f32 %v5423, %v5423
    %v5426 = vsel %vm2877, %v5424, 0.0
    %5427 = vadd.xlane.f32.xlu0 %v5426
    %v5428 = vpop.xlane.xlu0 %5427
    %v5429 = vsel %vm2877, %v5425, 0.0
    %5430 = vadd.xlane.f32.xlu0 %v5429
    %v5431 = vpop.xlane.xlu0 %5430
    %v5432 = vadd.f32 %v5421, %v5421
    %v5433 = vadd.f32 %v5423, %v5423
    %v5434 = vpack.c.bf16 %v5433, %v5432
    %v5436 = vsel %vm2877, %v5434, 0
    %5438 = vmatprep.subr.bf16.mxu0 0
    %5439 = vmatpush1.bf16.msra.mxu0 0
    %5440 = vmatprep.subr.bf16.mxu0 0
    %5441 = vmatpush1.bf16.msra.mxu0 0
    %5442 = vmatprep.subr.bf16.mxu0 0
    %5443 = vmatpush1.bf16.msra.mxu0 0
    %5444 = vmatprep.subr.bf16.mxu0 0
    %5445 = vmatpush1.bf16.msra.mxu0 0
    %5446 = vmatprep.subr.bf16.mxu0 0
    %5447 = vmatpush1.bf16.msra.mxu0 0
    %5448 = vmatprep.subr.bf16.mxu0 0
    %5449 = vmatpush1.bf16.msra.mxu0 0
    %5450 = vmatprep.subr.bf16.mxu0 0
    %5451 = vmatpush1.bf16.msra.mxu0 %v4327
    %5452 = vmatprep.subr.bf16.mxu0 0
    %5453 = vmatpush1.bf16.msra.mxu0 %v4326
    %5454 = vmatprep.subr.bf16.mxu0 0
    %5455 = vmatpush2.bf16.msra.mxu0 0
    %5456 = vmatprep.subr.bf16.mxu0 0
    %5457 = vmatpush2.bf16.msra.mxu0 0
    %5458 = vmatprep.subr.bf16.mxu0 0
    %5459 = vmatpush2.bf16.msra.mxu0 0
    %5460 = vmatprep.subr.bf16.mxu0 0
    %5461 = vmatpush2.bf16.msra.mxu0 0
    %5462 = vmatprep.subr.bf16.mxu0 0
    %5463 = vmatpush2.bf16.msra.mxu0 0
    %5464 = vmatprep.subr.bf16.mxu0 0
    %5465 = vmatpush2.bf16.msra.mxu0 0
    %5466 = vmatprep.subr.bf16.mxu0 0
    %5467 = vmatpush2.bf16.msra.mxu0 0
    %5468 = vmatprep.subr.bf16.mxu0 0
    %5469 = vmatpush2.bf16.msra.mxu0 0
    %5470 = vmatprep.mubr.bf16.mxu0 0
    %5471 = vmatmul.mubr.bf16.gmra.mxu0 %v5436
    %v5472 = vpop.f32.mrf.mxu0
    %v5473 = vadd.f32 0.0, %v5472
    %v5474 = vpop.f32.mrf.mxu0
    %v5475 = vpop.f32.mrf.mxu0
    %v5476 = vadd.f32 0.0, %v5475
    %v5477 = vpop.f32.mrf.mxu0
    %5478 = vdwg.mxu0
    %v5479 = vsub.f32 %v5473, %v5428
    %v5480 = vsub.f32 %v5476, %v5431
    %v5481 = vmax.f32 %v5479, %v5480
    %v5482 = vrot.slane %v5481, 4
    %v5483 = vmax.f32 %v5481, %v5482
    %v5484 = vrot.slane %v5483, 2
    %v5485 = vmax.f32 %v5483, %v5484
    %v5486 = vrot.slane %v5485, 1
    %v5487 = vmax.f32 %v5485, %v5486
    %v5488 = vsub.f32 %v5479, %v5487
    %v5489 = vsub.f32 %v5480, %v5487
    %v5490 = vmul.f32 %v5488, 1.442695
    %v5491 = vpow.pop %v5490
    %v5492 = vmul.f32 %v5489, 1.442695
    %v5493 = vpow.pop %v5492
    %v5494 = vadd.f32 %v5491, %v5493
    %v5495 = vrot.slane %v5494, 4
    %v5496 = vadd.f32 %v5494, %v5495
    %v5497 = vrot.slane %v5496, 2
    %v5498 = vadd.f32 %v5496, %v5497
    %v5499 = vrot.slane %v5498, 1
    %v5500 = vadd.f32 %v5498, %v5499
    %v5501 = vadd.f32 %v5500, 1e-16
    %v5502 = vrcp.pop %v5501
    %v5503 = vmul.f32 %v5491, %v5502
    %v5504 = vmul.f32 %v5493, %v5502
    %v5505 = vpack.c.bf16 %v5504, %v5503
    %5506 = vmatprep.subr.bf16.mxu0 0
    %5507 = vmatpush1.bf16.xpose.msra.mxu0 0
    %5508 = vmatprep.subr.bf16.mxu0 0
    %5509 = vmatpush1.bf16.xpose.msra.mxu0 0
    %5510 = vmatprep.subr.bf16.mxu0 0
    %5511 = vmatpush1.bf16.xpose.msra.mxu0 0
    %5512 = vmatprep.subr.bf16.mxu0 0
    %5513 = vmatpush1.bf16.xpose.msra.mxu0 0
    %5514 = vmatprep.subr.bf16.mxu0 0
    %5515 = vmatpush1.bf16.xpose.msra.mxu0 0
    %5516 = vmatprep.subr.bf16.mxu0 0
    %5517 = vmatpush1.bf16.xpose.msra.mxu0 0
    %5518 = vmatprep.subr.bf16.mxu0 0
    %5519 = vmatpush1.bf16.xpose.msra.mxu0 %v4327
    %5520 = vmatprep.subr.bf16.mxu0 0
    %5521 = vmatpush1.bf16.xpose.msra.mxu0 %v4326
    %5522 = vmatprep.subr.bf16.mxu0 0
    %5523 = vmatpush2.bf16.xpose.msra.mxu0 0
    %5524 = vmatprep.subr.bf16.mxu0 0
    %5525 = vmatpush2.bf16.xpose.msra.mxu0 0
    %5526 = vmatprep.subr.bf16.mxu0 0
    %5527 = vmatpush2.bf16.xpose.msra.mxu0 0
    %5528 = vmatprep.subr.bf16.mxu0 0
    %5529 = vmatpush2.bf16.xpose.msra.mxu0 0
    %5530 = vmatprep.subr.bf16.mxu0 0
    %5531 = vmatpush2.bf16.xpose.msra.mxu0 0
    %5532 = vmatprep.subr.bf16.mxu0 0
    %5533 = vmatpush2.bf16.xpose.msra.mxu0 0
    %5534 = vmatprep.subr.bf16.mxu0 0
    %5535 = vmatpush2.bf16.xpose.msra.mxu0 0
    %5536 = vmatprep.subr.bf16.mxu0 0
    %5537 = vmatpush2.bf16.xpose.msra.mxu0 0
    %5538 = vmatprep.mubr.bf16.mxu0 0
    %5539 = vmatmul.mubr.bf16.gmra.mxu0 %v5505
    %v5540 = vpop.f32.mrf.mxu0
    %v5541 = vadd.f32 0.0, %v5540
    %v5542 = vpop.f32.mrf.mxu0
    %v5543 = vpop.f32.mrf.mxu0
    %v5544 = vadd.f32 0.0, %v5543
    %v5545 = vpop.f32.mrf.mxu0
    %5546 = vdwg.mxu0
    %5547 = vadd.xlane.f32.xlu0 %v5503
    %v5548 = vpop.xlane.xlu0 %5547
    %5549 = vadd.xlane.f32.xlu0 %v5504
    %v5550 = vpop.xlane.xlu0 %5549
    %v5551 = vadd.f32 %v5548, 1e-08
    %v5552 = vadd.f32 %v5550, 1e-08
    %v5553 = vrcp.pop %v5551
    %v5554 = vmul.f32 %v5541, %v5553
    %v5555 = vrcp.pop %v5552
    %v5556 = vmul.f32 %v5544, %v5555
    %v5557 = vmul.f32 %v5554, %v5554
    %v5558 = vmul.f32 %v5556, %v5556
    %v5559 = vsel %vm2877, %v5557, 0.0
    %5560 = vadd.xlane.f32.xlu0 %v5559
    %v5561 = vpop.xlane.xlu0 %5560
    %v5562 = vsel %vm2877, %v5558, 0.0
    %5563 = vadd.xlane.f32.xlu0 %v5562
    %v5564 = vpop.xlane.xlu0 %5563
    %v5565 = vadd.f32 %v5554, %v5554
    %v5566 = vadd.f32 %v5556, %v5556
    %v5567 = vpack.c.bf16 %v5566, %v5565
    %v5569 = vsel %vm2877, %v5567, 0
    %5571 = vmatprep.subr.bf16.mxu0 0
    %5572 = vmatpush1.bf16.msra.mxu0 0
    %5573 = vmatprep.subr.bf16.mxu0 0
    %5574 = vmatpush1.bf16.msra.mxu0 0
    %5575 = vmatprep.subr.bf16.mxu0 0
    %5576 = vmatpush1.bf16.msra.mxu0 0
    %5577 = vmatprep.subr.bf16.mxu0 0
    %5578 = vmatpush1.bf16.msra.mxu0 0
    %5579 = vmatprep.subr.bf16.mxu0 0
    %5580 = vmatpush1.bf16.msra.mxu0 0
    %5581 = vmatprep.subr.bf16.mxu0 0
    %5582 = vmatpush1.bf16.msra.mxu0 0
    %5583 = vmatprep.subr.bf16.mxu0 0
    %5584 = vmatpush1.bf16.msra.mxu0 %v4327
    %5585 = vmatprep.subr.bf16.mxu0 0
    %5586 = vmatpush1.bf16.msra.mxu0 %v4326
    %5587 = vmatprep.subr.bf16.mxu0 0
    %5588 = vmatpush2.bf16.msra.mxu0 0
    %5589 = vmatprep.subr.bf16.mxu0 0
    %5590 = vmatpush2.bf16.msra.mxu0 0
    %5591 = vmatprep.subr.bf16.mxu0 0
    %5592 = vmatpush2.bf16.msra.mxu0 0
    %5593 = vmatprep.subr.bf16.mxu0 0
    %5594 = vmatpush2.bf16.msra.mxu0 0
    %5595 = vmatprep.subr.bf16.mxu0 0
    %5596 = vmatpush2.bf16.msra.mxu0 0
    %5597 = vmatprep.subr.bf16.mxu0 0
    %5598 = vmatpush2.bf16.msra.mxu0 0
    %5599 = vmatprep.subr.bf16.mxu0 0
    %5600 = vmatpush2.bf16.msra.mxu0 0
    %5601 = vmatprep.subr.bf16.mxu0 0
    %5602 = vmatpush2.bf16.msra.mxu0 0
    %5603 = vmatprep.mubr.bf16.mxu0 0
    %5604 = vmatmul.mubr.bf16.gmra.mxu0 %v5569
    %v5605 = vpop.f32.mrf.mxu0
    %v5606 = vadd.f32 0.0, %v5605
    %v5607 = vpop.f32.mrf.mxu0
    %v5608 = vpop.f32.mrf.mxu0
    %v5609 = vadd.f32 0.0, %v5608
    %v5610 = vpop.f32.mrf.mxu0
    %5611 = vdwg.mxu0
    %v5612 = vsub.f32 %v5606, %v5561
    %v5613 = vsub.f32 %v5609, %v5564
    %v5614 = vmax.f32 %v5612, %v5613
    %v5615 = vrot.slane %v5614, 4
    %v5616 = vmax.f32 %v5614, %v5615
    %v5617 = vrot.slane %v5616, 2
    %v5618 = vmax.f32 %v5616, %v5617
    %v5619 = vrot.slane %v5618, 1
    %v5620 = vmax.f32 %v5618, %v5619
    %v5621 = vsub.f32 %v5612, %v5620
    %v5622 = vsub.f32 %v5613, %v5620
    %v5623 = vmul.f32 %v5621, 1.442695
    %v5624 = vpow.pop %v5623
    %v5625 = vmul.f32 %v5622, 1.442695
    %v5626 = vpow.pop %v5625
    %v5627 = vadd.f32 %v5624, %v5626
    %v5628 = vrot.slane %v5627, 4
    %v5629 = vadd.f32 %v5627, %v5628
    %v5630 = vrot.slane %v5629, 2
    %v5631 = vadd.f32 %v5629, %v5630
    %v5632 = vrot.slane %v5631, 1
    %v5633 = vadd.f32 %v5631, %v5632
    %v5634 = vadd.f32 %v5633, 1e-16
    %v5635 = vrcp.pop %v5634
    %v5636 = vmul.f32 %v5624, %v5635
    %v5637 = vmul.f32 %v5626, %v5635
    %v5638 = vpack.c.bf16 %v5637, %v5636
    %5639 = vmatprep.subr.bf16.mxu0 0
    %5640 = vmatpush1.bf16.xpose.msra.mxu0 0
    %5641 = vmatprep.subr.bf16.mxu0 0
    %5642 = vmatpush1.bf16.xpose.msra.mxu0 0
    %5643 = vmatprep.subr.bf16.mxu0 0
    %5644 = vmatpush1.bf16.xpose.msra.mxu0 0
    %5645 = vmatprep.subr.bf16.mxu0 0
    %5646 = vmatpush1.bf16.xpose.msra.mxu0 0
    %5647 = vmatprep.subr.bf16.mxu0 0
    %5648 = vmatpush1.bf16.xpose.msra.mxu0 0
    %5649 = vmatprep.subr.bf16.mxu0 0
    %5650 = vmatpush1.bf16.xpose.msra.mxu0 0
    %5651 = vmatprep.subr.bf16.mxu0 0
    %5652 = vmatpush1.bf16.xpose.msra.mxu0 %v4327
    %5653 = vmatprep.subr.bf16.mxu0 0
    %5654 = vmatpush1.bf16.xpose.msra.mxu0 %v4326
    %5655 = vmatprep.subr.bf16.mxu0 0
    %5656 = vmatpush2.bf16.xpose.msra.mxu0 0
    %5657 = vmatprep.subr.bf16.mxu0 0
    %5658 = vmatpush2.bf16.xpose.msra.mxu0 0
    %5659 = vmatprep.subr.bf16.mxu0 0
    %5660 = vmatpush2.bf16.xpose.msra.mxu0 0
    %5661 = vmatprep.subr.bf16.mxu0 0
    %5662 = vmatpush2.bf16.xpose.msra.mxu0 0
    %5663 = vmatprep.subr.bf16.mxu0 0
    %5664 = vmatpush2.bf16.xpose.msra.mxu0 0
    %5665 = vmatprep.subr.bf16.mxu0 0
    %5666 = vmatpush2.bf16.xpose.msra.mxu0 0
    %5667 = vmatprep.subr.bf16.mxu0 0
    %5668 = vmatpush2.bf16.xpose.msra.mxu0 0
    %5669 = vmatprep.subr.bf16.mxu0 0
    %5670 = vmatpush2.bf16.xpose.msra.mxu0 0
    %5671 = vmatprep.mubr.bf16.mxu0 0
    %5672 = vmatmul.mubr.bf16.gmra.mxu0 %v5638
    %v5673 = vpop.f32.mrf.mxu0
    %v5674 = vadd.f32 0.0, %v5673
    %v5675 = vpop.f32.mrf.mxu0
    %v5676 = vpop.f32.mrf.mxu0
    %v5677 = vadd.f32 0.0, %v5676
    %v5678 = vpop.f32.mrf.mxu0
    %5679 = vdwg.mxu0
    %5680 = vadd.xlane.f32.xlu0 %v5636
    %v5681 = vpop.xlane.xlu0 %5680
    %5682 = vadd.xlane.f32.xlu0 %v5637
    %v5683 = vpop.xlane.xlu0 %5682
    %v5684 = vadd.f32 %v5681, 1e-08
    %v5685 = vadd.f32 %v5683, 1e-08
    %v5686 = vrcp.pop %v5684
    %v5687 = vmul.f32 %v5674, %v5686
    %v5688 = vrcp.pop %v5685
    %v5689 = vmul.f32 %v5677, %v5688
    %v5690 = vmul.f32 %v5687, %v5687
    %v5691 = vmul.f32 %v5689, %v5689
    %v5692 = vsel %vm2877, %v5690, 0.0
    %5693 = vadd.xlane.f32.xlu0 %v5692
    %v5694 = vpop.xlane.xlu0 %5693
    %v5695 = vsel %vm2877, %v5691, 0.0
    %5696 = vadd.xlane.f32.xlu0 %v5695
    %v5697 = vpop.xlane.xlu0 %5696
    %v5698 = vadd.f32 %v5687, %v5687
    %v5699 = vadd.f32 %v5689, %v5689
    %v5700 = vpack.c.bf16 %v5699, %v5698
    %v5702 = vsel %vm2877, %v5700, 0
    %5704 = vmatprep.subr.bf16.mxu0 0
    %5705 = vmatpush1.bf16.msra.mxu0 0
    %5706 = vmatprep.subr.bf16.mxu0 0
    %5707 = vmatpush1.bf16.msra.mxu0 0
    %5708 = vmatprep.subr.bf16.mxu0 0
    %5709 = vmatpush1.bf16.msra.mxu0 0
    %5710 = vmatprep.subr.bf16.mxu0 0
    %5711 = vmatpush1.bf16.msra.mxu0 0
    %5712 = vmatprep.subr.bf16.mxu0 0
    %5713 = vmatpush1.bf16.msra.mxu0 0
    %5714 = vmatprep.subr.bf16.mxu0 0
    %5715 = vmatpush1.bf16.msra.mxu0 0
    %5716 = vmatprep.subr.bf16.mxu0 0
    %5717 = vmatpush1.bf16.msra.mxu0 %v4327
    %5718 = vmatprep.subr.bf16.mxu0 0
    %5719 = vmatpush1.bf16.msra.mxu0 %v4326
    %5720 = vmatprep.subr.bf16.mxu0 0
    %5721 = vmatpush2.bf16.msra.mxu0 0
    %5722 = vmatprep.subr.bf16.mxu0 0
    %5723 = vmatpush2.bf16.msra.mxu0 0
    %5724 = vmatprep.subr.bf16.mxu0 0
    %5725 = vmatpush2.bf16.msra.mxu0 0
    %5726 = vmatprep.subr.bf16.mxu0 0
    %5727 = vmatpush2.bf16.msra.mxu0 0
    %5728 = vmatprep.subr.bf16.mxu0 0
    %5729 = vmatpush2.bf16.msra.mxu0 0
    %5730 = vmatprep.subr.bf16.mxu0 0
    %5731 = vmatpush2.bf16.msra.mxu0 0
    %5732 = vmatprep.subr.bf16.mxu0 0
    %5733 = vmatpush2.bf16.msra.mxu0 0
    %5734 = vmatprep.subr.bf16.mxu0 0
    %5735 = vmatpush2.bf16.msra.mxu0 0
    %5736 = vmatprep.mubr.bf16.mxu0 0
    %5737 = vmatmul.mubr.bf16.gmra.mxu0 %v5702
    %v5738 = vpop.f32.mrf.mxu0
    %v5739 = vadd.f32 0.0, %v5738
    %v5740 = vpop.f32.mrf.mxu0
    %v5741 = vpop.f32.mrf.mxu0
    %v5742 = vadd.f32 0.0, %v5741
    %v5743 = vpop.f32.mrf.mxu0
    %5744 = vdwg.mxu0
    %v5745 = vsub.f32 %v5739, %v5694
    %v5746 = vsub.f32 %v5742, %v5697
    %v5747 = vmax.f32 %v5745, %v5746
    %v5748 = vrot.slane %v5747, 4
    %v5749 = vmax.f32 %v5747, %v5748
    %v5750 = vrot.slane %v5749, 2
    %v5751 = vmax.f32 %v5749, %v5750
    %v5752 = vrot.slane %v5751, 1
    %v5753 = vmax.f32 %v5751, %v5752
    %v5754 = vsub.f32 %v5745, %v5753
    %v5755 = vsub.f32 %v5746, %v5753
    %v5756 = vmul.f32 %v5754, 1.442695
    %v5757 = vpow.pop %v5756
    %v5758 = vmul.f32 %v5755, 1.442695
    %v5759 = vpow.pop %v5758
    %v5760 = vadd.f32 %v5757, %v5759
    %v5761 = vrot.slane %v5760, 4
    %v5762 = vadd.f32 %v5760, %v5761
    %v5763 = vrot.slane %v5762, 2
    %v5764 = vadd.f32 %v5762, %v5763
    %v5765 = vrot.slane %v5764, 1
    %v5766 = vadd.f32 %v5764, %v5765
    %v5767 = vadd.f32 %v5766, 1e-16
    %v5768 = vrcp.pop %v5767
    %v5769 = vmul.f32 %v5757, %v5768
    %v5770 = vmul.f32 %v5759, %v5768
    %s5771 = scalar_lea.vmem [#allocation2], 16
    %5772 = vst [vmem:[%s5771] sm:$0xff] %v5769
    %5773 = vst [vmem:[%s5771 + $0x8] sm:$0xff] %v5770
    %5774 = vxpose.xlu0.b32.start [1/16] %v5687, 128
    %5775 = vxpose.xlu0.b32.cont [2/16] %v5689, 128
    %5776 = vxpose.xlu0.b32.cont [3/16] 0.0, 128
    %5777 = vxpose.xlu0.b32.cont [4/16] 0.0, 128
    %5778 = vxpose.xlu0.b32.cont [5/16] 0.0, 128
    %5779 = vxpose.xlu0.b32.cont [6/16] 0.0, 128
    %5780 = vxpose.xlu0.b32.cont [7/16] 0.0, 128
    %5781 = vxpose.xlu0.b32.cont [8/16] 0.0, 128
    %5782 = vxpose.xlu0.b32.cont [9/16] 0.0, 128
    %5783 = vxpose.xlu0.b32.cont [10/16] 0.0, 128
    %5784 = vxpose.xlu0.b32.cont [11/16] 0.0, 128
    %5785 = vxpose.xlu0.b32.cont [12/16] 0.0, 128
    %5786 = vxpose.xlu0.b32.cont [13/16] 0.0, 128
    %5787 = vxpose.xlu0.b32.cont [14/16] 0.0, 128
    %5788 = vxpose.xlu0.b32.cont [15/16] 0.0, 128
    %5789 = vxpose.xlu0.b32.end [16/16] 0.0, 128
    %v5790 = vpop.trf.xlu0
    %v5791 = vpop.trf.xlu0
    %v5792 = vpop.trf.xlu0
    %v5793 = vpop.trf.xlu0
    %v5794 = vpop.trf.xlu0
    %v5795 = vpop.trf.xlu0
    %v5796 = vpop.trf.xlu0
    %v5797 = vpop.trf.xlu0
    %v5798 = vpop.trf.xlu0
    %v5799 = vpop.trf.xlu0
    %v5800 = vpop.trf.xlu0
    %v5801 = vpop.trf.xlu0
    %v5802 = vpop.trf.xlu0
    %v5803 = vpop.trf.xlu0
    %v5804 = vpop.trf.xlu0
    %v5805 = vpop.trf.xlu0
    %s5806 = scalar_lea.vmem %s4, 32
    %5807 = vst.msk [vmem:[%s5806] sm:$0xff] %vm4321, %v5790
    %5808 = vst.msk [vmem:[%s5806 + $0x8] sm:$0xff] %vm4321, %v5791
    %5809 = vst.msk [vmem:[%s5806 + $0x10] sm:$0xff] %vm4321, %v5792
    %5810 = vst.msk [vmem:[%s5806 + $0x18] sm:$0xff] %vm4321, %v5793
    // Predicated region
    $region14: #{fused_forward.1} parent=1 // pred_check
      _
    $region15: #{fused_forward.1} parent=1 // pred_check_branch
      %5812 = sbr.rel (0) target = $region17
    $region16: #{fused_forward.1} parent=1 // pred_region
      %s5814 = ssub.s32 512, 512
      %5815 = vsyncadd [#allocation3], %s5814
      %s5816 = sshll.u32 [#allocation2], 4
      %s5817 = int_to_ptr.vmem [resolvable:$true] %s5816
      %5822 = dma.vmem_to_hbm [thread:$0]  %s5817, 512, %s3, [#allocation3], 128, 128, 8
    $region17: #{fused_forward.1} parent=1 // pred_fallthru
      _
    // Predicated region
    $region18: #{fused_forward.1} parent=1 // pred_check
      _
    $region19: #{fused_forward.1} parent=1 // pred_check_branch
      %5824 = sbr.rel (0) target = $region21
    $region20: #{fused_forward.1} parent=1 // pred_region
      _
    $region21: #{fused_forward.1} parent=1 // pred_fallthru
      _
    // Predicated region
    $region22: #{fused_forward.1} parent=1 // pred_check
      _
    $region23: #{fused_forward.1} parent=1 // pred_check_branch
      %5826 = sbr.rel (0) target = $region25
    $region24: #{fused_forward.1} parent=1 // pred_region
      %s5828 = ssub.s32 1024, 1024
      %5829 = vsyncadd [#allocation5], %s5828
      %s5830 = sshll.u32 [#allocation4], 4
      %s5831 = int_to_ptr.vmem [resolvable:$true] %s5830
      %5836 = dma.vmem_to_hbm [thread:$0]  %s5831, 1024, %s5, [#allocation5], 128, 128, 8
    $region25: #{fused_forward.1} parent=1 // pred_fallthru
      _
    // Predicated region
    $region26: #{fused_forward.1} parent=1 // pred_check
      _
    $region27: #{fused_forward.1} parent=1 // pred_check_branch
      %5838 = sbr.rel (0) target = $region29
    $region28: #{fused_forward.1} parent=1 // pred_region
      %5839 = dma.done [#allocation3], 512
    $region29: #{fused_forward.1} parent=1 // pred_fallthru
      _
    // Predicated region
    $region30: #{fused_forward.1} parent=1 // pred_check
      _
    $region31: #{fused_forward.1} parent=1 // pred_check_branch
      %5841 = sbr.rel (0) target = $region33
    $region32: #{fused_forward.1} parent=1 // pred_region
      _
    $region33: #{fused_forward.1} parent=1 // pred_fallthru
      _
    // Predicated region
    $region34: #{fused_forward.1} parent=1 // pred_check
      _
    $region35: #{fused_forward.1} parent=1 // pred_check_branch
      %5843 = sbr.rel (0) target = $region37
    $region36: #{fused_forward.1} parent=1 // pred_region
      %5844 = dma.done [#allocation5], 1024
    $region37: #{fused_forward.1} parent=1 // pred_fallthru
      _
    %5845 = vsyncpa [#allocation3], 1
    %5846 = vsyncpa [#allocation5], 1

</llo_original>
